<compile_context>
chip_gen: v7x
topology: tpu7x:2x2x1
jax: 0.10.0
libtpu: 0.0.40
codegen_flags: <defaults>
</compile_context>

<pallas_src>
import jax
import jax.numpy as jnp
from jax import lax
from jax.experimental import pallas as pl
from jax.experimental.pallas import tpu as pltpu


# ----------------------------------------------------------------------------
# Fused Pallas kernel
# ----------------------------------------------------------------------------
def _make_v3head_kernel(H, W, layer_specs):
    """layer_specs: tuple of (K, cin, cout, act) with act in {'leaky', 'sigmoid'}."""
    HW = H * W
    n_layers = len(layer_specs)

    def kernel(*refs):
        x_ref = refs[0]
        wb = refs[1:1 + 2 * n_layers]          # interleaved (w, b) per layer
        o_ref = refs[1 + 2 * n_layers]
        pad_ref = refs[2 + 2 * n_layers]       # (H+2, W+2, Cin3)  zero-padded input
        col_ref = refs[3 + 2 * n_layers]       # (H, W, 9*Cin3)    im2col columns

        # Zero the halo once per image; every 3x3 layer fully rewrites the
        # interior, so the border stays zero ("same" padding) for all of them.
        pad_ref[...] = jnp.zeros_like(pad_ref)

        x = x_ref[...]                         # (H*W, Cin0), fp32, channels-last
        for li, (K, cin, cout, act) in enumerate(layer_specs):
            w_ref, b_ref = wb[2 * li], wb[2 * li + 1]
            if K == 1:
                # 1x1 conv == plain matmul over channels.
                y = jnp.dot(x, w_ref[...], preferred_element_type=jnp.float32)
            else:
                # 3x3 'same' conv: pad in VMEM, im2col, ONE deep-contraction matmul.
                pad_ref[1:H + 1, 1:W + 1, :] = x.reshape(H, W, cin)
                for t in range(K * K):         # static tap loop (no roll / iota)
                    dy, dx = t // K, t % K
                    col_ref[:, :, t * cin:(t + 1) * cin] = \
                        pad_ref[dy:dy + H, dx:dx + W, :]
                col = col_ref[...].reshape(HW, K * K * cin)
                y = jnp.dot(col, w_ref[...], preferred_element_type=jnp.float32)
            y = y + b_ref[...]                 # (1, cout) broadcast bias
            if act == "leaky":
                x = jnp.where(y > 0, y, 0.1 * y)
            else:                              # final prediction layer
                x = 1.0 / (1.0 + jnp.exp(-y))  # exp on EUP; tiny exact divide
        o_ref[...] = x.astype(o_ref.dtype)

    return kernel


def v3head_forward(x_nchw, cbl_params, final_params):
    """Full V3Head forward. Input NCHW (like PyTorch); output NHWC == permute(0,2,3,1)."""
    N, C0, H, W = x_nchw.shape
    HW = H * W

    layers = list(cbl_params) + [final_params]
    layer_specs, flat, cin3 = [], [], None
    for i, p in enumerate(layers):
        w, b = p["w"], p["b"]
        K, _, cin, cout = w.shape
        if K == 3:
            assert cin3 is None or cin3 == cin, "all 3x3 layers must share Cin"
            cin3 = cin
        act = "leaky" if i < len(layers) - 1 else "sigmoid"
        layer_specs.append((K, cin, cout, act))
        flat.append(w.reshape(K * K * cin, cout))   # matmul-ready (im2col order)
        flat.append(b.reshape(1, cout))
    cout_final = layer_specs[-1][2]

    # Channels-last, flattened spatial: (N, H*W, C).  One tiny XLA transpose on
    # the input; the kernel output is already NHWC (PyTorch's permute(0,2,3,1)).
    x = jnp.transpose(x_nchw, (0, 2, 3, 1)).reshape(N, HW, C0)

    kernel = _make_v3head_kernel(H, W, tuple(layer_specs))

    in_specs = [pl.BlockSpec((None, HW, C0), lambda n: (n, 0, 0))]
    for a in flat:
        r, c = a.shape
        in_specs.append(pl.BlockSpec((r, c), lambda n: (0, 0)))

    out = pl.pallas_call(
        kernel,
        out_shape=jax.ShapeDtypeStruct((N, HW, cout_final), x.dtype),
        grid=(N,),
        in_specs=in_specs,
        out_specs=pl.BlockSpec((None, HW, cout_final), lambda n: (n, 0, 0)),
        scratch_shapes=[
            pltpu.VMEM((H + 2, W + 2, cin3), jnp.float32),   # padded 3x3 input
            pltpu.VMEM((H, W, 9 * cin3), jnp.float32),       # im2col columns
        ],
        compiler_params=pltpu.CompilerParams(dimension_semantics=("parallel",)),
    )(x, *flat)
    return out.reshape(N, H, W, cout_final)


# ----------------------------------------------------------------------------
# Parameters (BN folded, eval mode) and pure-JAX reference
# ----------------------------------------------------------------------------
def make_params(key, in_filters, filters_list, class_num,
                dtype=jnp.float32, eps=1e-5):
    f0, f1 = filters_list
    cbl_specs = [(1, in_filters, f0), (3, f0, f1), (1, f1, f0),
                 (3, f0, f1), (1, f1, f0),
                 (3, f0, f1)]                       # last = pred's conv2d(.., 3)
    cbl = []
    for k, cin, cout in cbl_specs:
        key, kw, kg, kb, km, kv = jax.random.split(key, 6)
        w = jax.random.normal(kw, (k, k, cin, cout), dtype) / jnp.sqrt(float(k * k * cin))
        gamma = 1.0 + 0.1 * jax.random.normal(kg, (cout,), dtype)
        beta = 0.1 * jax.random.normal(kb, (cout,), dtype)
        mean = 0.1 * jax.random.normal(km, (cout,), dtype)
        var = 1.0 + 0.1 * jnp.abs(jax.random.normal(kv, (cout,), dtype))
        scale = gamma / jnp.sqrt(var + eps)         # fold BN (eval mode)
        cbl.append({"w": w * scale.reshape(1, 1, 1, cout),
                    "b": beta - mean * scale})
    pred_c = 3 * (1 + 4 + class_num)
    key, kw, kb = jax.random.split(key, 3)
    final = {"w": jax.random.normal(kw, (1, 1, f1, pred_c), dtype) / jnp.sqrt(float(f1)),
             "b": 0.1 * jax.random.normal(kb, (pred_c,), dtype)}
    return cbl, final


def v3head_reference(x_nchw, cbl_params, final_params):
    dn = ("NHWC", "HWIO", "NHWC")
    x = jnp.transpose(x_nchw, (0, 2, 3, 1))
    for p in cbl_params:
        k = p["w"].shape[0]
        pad = (k - 1) // 2
        y = lax.conv_general_dilated(
            x, p["w"], (1, 1), ((pad, pad), (pad, pad)),
            dimension_numbers=dn, precision=lax.Precision.HIGHEST)
        y = y + p["b"].reshape(1, 1, 1, -1)
        x = jnp.where(y > 0, y, 0.1 * y)
    y = lax.conv_general_dilated(
        x, final_params["w"], (1, 1), ((0, 0), (0, 0)),
        dimension_numbers=dn, precision=lax.Precision.HIGHEST)
    y = y + final_params["b"].reshape(1, 1, 1, -1)
    return 1.0 / (1.0 + jnp.exp(-y))


# ----------------------------------------------------------------------------
if __name__ == "__main__":
    key = jax.random.PRNGKey(0)
    in_filters, filters_list, class_num = 32, (16, 32), 2
    N, H, W = 2, 16, 16
    pred_c = 3 * (1 + 4 + class_num)                # 21

    key, kx = jax.random.split(key)
    x = jax.random.normal(kx, (N, in_filters, H, W), dtype=jnp.float32)  # NCHW input

    cbl_params, final_params = make_params(key, in_filters, filters_list, class_num)

    fwd = jax.jit(v3head_forward)
    out = jax.block_until_ready(fwd(x, cbl_params, final_params))

    ref = v3head_reference(x, cbl_params, final_params)
    assert out.shape == (N, H, W, pred_c), out.shape
    max_diff = float(jnp.max(jnp.abs(out - ref)))
    assert jnp.allclose(out, ref, atol=2e-3, rtol=2e-3), f"mismatch, max diff {max_diff}"

    print("KERNEL_OK")
</pallas_src>

<mosaic_0001>
module attributes {stable_mosaic.version = 11 : i64} {
  func.func @kernel(%arg0: i32, %arg1: memref<1x256x32xf32, #tpu.memory_space<vmem>>, %arg2: memref<32x16xf32, #tpu.memory_space<vmem>>, %arg3: memref<1x16xf32, #tpu.memory_space<vmem>>, %arg4: memref<144x32xf32, #tpu.memory_space<vmem>>, %arg5: memref<1x32xf32, #tpu.memory_space<vmem>>, %arg6: memref<32x16xf32, #tpu.memory_space<vmem>>, %arg7: memref<1x16xf32, #tpu.memory_space<vmem>>, %arg8: memref<144x32xf32, #tpu.memory_space<vmem>>, %arg9: memref<1x32xf32, #tpu.memory_space<vmem>>, %arg10: memref<32x16xf32, #tpu.memory_space<vmem>>, %arg11: memref<1x16xf32, #tpu.memory_space<vmem>>, %arg12: memref<144x32xf32, #tpu.memory_space<vmem>>, %arg13: memref<1x32xf32, #tpu.memory_space<vmem>>, %arg14: memref<32x21xf32, #tpu.memory_space<vmem>>, %arg15: memref<1x21xf32, #tpu.memory_space<vmem>>, %arg16: memref<1x256x21xf32, #tpu.memory_space<vmem>>, %arg17: memref<18x18x16xf32, #tpu.memory_space<vmem>>, %arg18: memref<16x16x144xf32, #tpu.memory_space<vmem>>) attributes {dimension_semantics = [#tpu.dimension_semantics<parallel>], iteration_bounds = array<i64: 2>, scalar_prefetch = 0 : i64, scratch_operands = 2 : i64, tpu.core_type = #tpu.core_type<tc>, window_params = [{transform_indices = @transform_0, window_bounds = array<i64: 1, 256, 32>}, {pipeline_mode = #tpu.pipeline_mode<synchronous>, transform_indices = @transform_1, window_bounds = array<i64: 32, 16>}, {pipeline_mode = #tpu.pipeline_mode<synchronous>, transform_indices = @transform_2, window_bounds = array<i64: 1, 16>}, {pipeline_mode = #tpu.pipeline_mode<synchronous>, transform_indices = @transform_3, window_bounds = array<i64: 144, 32>}, {pipeline_mode = #tpu.pipeline_mode<synchronous>, transform_indices = @transform_4, window_bounds = array<i64: 1, 32>}, {pipeline_mode = #tpu.pipeline_mode<synchronous>, transform_indices = @transform_5, window_bounds = array<i64: 32, 16>}, {pipeline_mode = #tpu.pipeline_mode<synchronous>, transform_indices = @transform_6, window_bounds = array<i64: 1, 16>}, {pipeline_mode = #tpu.pipeline_mode<synchronous>, transform_indices = @transform_7, window_bounds = array<i64: 144, 32>}, {pipeline_mode = #tpu.pipeline_mode<synchronous>, transform_indices = @transform_8, window_bounds = array<i64: 1, 32>}, {pipeline_mode = #tpu.pipeline_mode<synchronous>, transform_indices = @transform_9, window_bounds = array<i64: 32, 16>}, {pipeline_mode = #tpu.pipeline_mode<synchronous>, transform_indices = @transform_10, window_bounds = array<i64: 1, 16>}, {pipeline_mode = #tpu.pipeline_mode<synchronous>, transform_indices = @transform_11, window_bounds = array<i64: 144, 32>}, {pipeline_mode = #tpu.pipeline_mode<synchronous>, transform_indices = @transform_12, window_bounds = array<i64: 1, 32>}, {pipeline_mode = #tpu.pipeline_mode<synchronous>, transform_indices = @transform_13, window_bounds = array<i64: 32, 21>}, {pipeline_mode = #tpu.pipeline_mode<synchronous>, transform_indices = @transform_14, window_bounds = array<i64: 1, 21>}, {transform_indices = @transform_15, window_bounds = array<i64: 1, 256, 21>}]} {
    %cst = arith.constant 0.000000e+00 : f32
    %0 = vector.broadcast %cst : f32 to vector<18x18x16xf32>
    %c0 = arith.constant 0 : index
    %c0_0 = arith.constant 0 : index
    %c0_1 = arith.constant 0 : index
    %1 = vector.load %arg17[%c0, %c0_0, %c0_1] : memref<18x18x16xf32, #tpu.memory_space<vmem>>, vector<18x18x16xf32>
    tpu.vector_store %arg17[%c0, %c0_0, %c0_1], %0 {strides = array<i32>} : memref<18x18x16xf32, #tpu.memory_space<vmem>>, vector<18x18x16xf32>,
    %c0_2 = arith.constant 0 : index
    %c0_3 = arith.constant 0 : index
    %c0_4 = arith.constant 0 : index
    %2 = vector.load %arg1[%c0_2, %c0_3, %c0_4] : memref<1x256x32xf32, #tpu.memory_space<vmem>>, vector<1x256x32xf32>
    %3 = vector.shape_cast %2 : vector<1x256x32xf32> to vector<256x32xf32>
    %c0_5 = arith.constant 0 : index
    %c0_6 = arith.constant 0 : index
    %4 = vector.load %arg2[%c0_5, %c0_6] : memref<32x16xf32, #tpu.memory_space<vmem>>, vector<32x16xf32>
    %cst_7 = arith.constant dense<0.000000e+00> : vector<256x16xf32>
    %5 = tpu.matmul %3, %4, %cst_7 {dimension_numbers = #tpu.dot_dimension_numbers<[1], [0], [0], [1], [0, 0, 1, 1], [], []>} : vector<256x32xf32>, vector<32x16xf32>, vector<256x16xf32> -> vector<256x16xf32>
    %c0_8 = arith.constant 0 : index
    %c0_9 = arith.constant 0 : index
    %6 = vector.load %arg3[%c0_8, %c0_9] : memref<1x16xf32, #tpu.memory_space<vmem>>, vector<1x16xf32>
    %7 = vector.broadcast %6 : vector<1x16xf32> to vector<256x16xf32>
    %8 = arith.addf %5, %7 : vector<256x16xf32>
    %cst_10 = arith.constant 0.000000e+00 : f32
    %9 = vector.broadcast %cst_10 : f32 to vector<256x16xf32>
    %10 = arith.cmpf ogt, %8, %9 : vector<256x16xf32>
    %cst_11 = arith.constant 1.000000e-01 : f32
    %11 = vector.broadcast %cst_11 : f32 to vector<256x16xf32>
    %12 = arith.mulf %11, %8 : vector<256x16xf32>
    %13 = arith.select %10, %8, %12 : vector<256x16xi1>, vector<256x16xf32>
    %14 = vector.shape_cast %13 : vector<256x16xf32> to vector<16x16x16xf32>
    %c1 = arith.constant 1 : index
    %c1_12 = arith.constant 1 : index
    %c0_13 = arith.constant 0 : index
    %15 = vector.load %arg17[%c1, %c1_12, %c0_13] : memref<18x18x16xf32, #tpu.memory_space<vmem>>, vector<16x16x16xf32>
    tpu.vector_store %arg17[%c1, %c1_12, %c0_13], %14 {strides = array<i32>} : memref<18x18x16xf32, #tpu.memory_space<vmem>>, vector<16x16x16xf32>,
    %c0_14 = arith.constant 0 : index
    %c0_15 = arith.constant 0 : index
    %c0_16 = arith.constant 0 : index
    %16 = vector.load %arg17[%c0_14, %c0_15, %c0_16] : memref<18x18x16xf32, #tpu.memory_space<vmem>>, vector<16x16x16xf32>
    %c0_17 = arith.constant 0 : index
    %c0_18 = arith.constant 0 : index
    %c0_19 = arith.constant 0 : index
    %17 = vector.load %arg18[%c0_17, %c0_18, %c0_19] : memref<16x16x144xf32, #tpu.memory_space<vmem>>, vector<16x16x16xf32>
    tpu.vector_store %arg18[%c0_17, %c0_18, %c0_19], %16 {strides = array<i32>} : memref<16x16x144xf32, #tpu.memory_space<vmem>>, vector<16x16x16xf32>,
    %c0_20 = arith.constant 0 : index
    %c1_21 = arith.constant 1 : index
    %c0_22 = arith.constant 0 : index
    %18 = vector.load %arg17[%c0_20, %c1_21, %c0_22] : memref<18x18x16xf32, #tpu.memory_space<vmem>>, vector<16x16x16xf32>
    %c0_23 = arith.constant 0 : index
    %c0_24 = arith.constant 0 : index
    %c16 = arith.constant 16 : index
    %19 = vector.load %arg18[%c0_23, %c0_24, %c16] : memref<16x16x144xf32, #tpu.memory_space<vmem>>, vector<16x16x16xf32>
    tpu.vector_store %arg18[%c0_23, %c0_24, %c16], %18 {strides = array<i32>} : memref<16x16x144xf32, #tpu.memory_space<vmem>>, vector<16x16x16xf32>,
    %c0_25 = arith.constant 0 : index
    %c2 = arith.constant 2 : index
    %c0_26 = arith.constant 0 : index
    %20 = vector.load %arg17[%c0_25, %c2, %c0_26] : memref<18x18x16xf32, #tpu.memory_space<vmem>>, vector<16x16x16xf32>
    %c0_27 = arith.constant 0 : index
    %c0_28 = arith.constant 0 : index
    %c32 = arith.constant 32 : index
    %21 = vector.load %arg18[%c0_27, %c0_28, %c32] : memref<16x16x144xf32, #tpu.memory_space<vmem>>, vector<16x16x16xf32>
    tpu.vector_store %arg18[%c0_27, %c0_28, %c32], %20 {strides = array<i32>} : memref<16x16x144xf32, #tpu.memory_space<vmem>>, vector<16x16x16xf32>,
    %c1_29 = arith.constant 1 : index
    %c0_30 = arith.constant 0 : index
    %c0_31 = arith.constant 0 : index
    %22 = vector.load %arg17[%c1_29, %c0_30, %c0_31] : memref<18x18x16xf32, #tpu.memory_space<vmem>>, vector<16x16x16xf32>
    %c0_32 = arith.constant 0 : index
    %c0_33 = arith.constant 0 : index
    %c48 = arith.constant 48 : index
    %23 = vector.load %arg18[%c0_32, %c0_33, %c48] : memref<16x16x144xf32, #tpu.memory_space<vmem>>, vector<16x16x16xf32>
    tpu.vector_store %arg18[%c0_32, %c0_33, %c48], %22 {strides = array<i32>} : memref<16x16x144xf32, #tpu.memory_space<vmem>>, vector<16x16x16xf32>,
    %c1_34 = arith.constant 1 : index
    %c1_35 = arith.constant 1 : index
    %c0_36 = arith.constant 0 : index
    %24 = vector.load %arg17[%c1_34, %c1_35, %c0_36] : memref<18x18x16xf32, #tpu.memory_space<vmem>>, vector<16x16x16xf32>
    %c0_37 = arith.constant 0 : index
    %c0_38 = arith.constant 0 : index
    %c64 = arith.constant 64 : index
    %25 = vector.load %arg18[%c0_37, %c0_38, %c64] : memref<16x16x144xf32, #tpu.memory_space<vmem>>, vector<16x16x16xf32>
    tpu.vector_store %arg18[%c0_37, %c0_38, %c64], %24 {strides = array<i32>} : memref<16x16x144xf32, #tpu.memory_space<vmem>>, vector<16x16x16xf32>,
    %c1_39 = arith.constant 1 : index
    %c2_40 = arith.constant 2 : index
    %c0_41 = arith.constant 0 : index
    %26 = vector.load %arg17[%c1_39, %c2_40, %c0_41] : memref<18x18x16xf32, #tpu.memory_space<vmem>>, vector<16x16x16xf32>
    %c0_42 = arith.constant 0 : index
    %c0_43 = arith.constant 0 : index
    %c80 = arith.constant 80 : index
    %27 = vector.load %arg18[%c0_42, %c0_43, %c80] : memref<16x16x144xf32, #tpu.memory_space<vmem>>, vector<16x16x16xf32>
    tpu.vector_store %arg18[%c0_42, %c0_43, %c80], %26 {strides = array<i32>} : memref<16x16x144xf32, #tpu.memory_space<vmem>>, vector<16x16x16xf32>,
    %c2_44 = arith.constant 2 : index
    %c0_45 = arith.constant 0 : index
    %c0_46 = arith.constant 0 : index
    %28 = vector.load %arg17[%c2_44, %c0_45, %c0_46] : memref<18x18x16xf32, #tpu.memory_space<vmem>>, vector<16x16x16xf32>
    %c0_47 = arith.constant 0 : index
    %c0_48 = arith.constant 0 : index
    %c96 = arith.constant 96 : index
    %29 = vector.load %arg18[%c0_47, %c0_48, %c96] : memref<16x16x144xf32, #tpu.memory_space<vmem>>, vector<16x16x16xf32>
    tpu.vector_store %arg18[%c0_47, %c0_48, %c96], %28 {strides = array<i32>} : memref<16x16x144xf32, #tpu.memory_space<vmem>>, vector<16x16x16xf32>,
    %c2_49 = arith.constant 2 : index
    %c1_50 = arith.constant 1 : index
    %c0_51 = arith.constant 0 : index
    %30 = vector.load %arg17[%c2_49, %c1_50, %c0_51] : memref<18x18x16xf32, #tpu.memory_space<vmem>>, vector<16x16x16xf32>
    %c0_52 = arith.constant 0 : index
    %c0_53 = arith.constant 0 : index
    %c112 = arith.constant 112 : index
    %31 = vector.load %arg18[%c0_52, %c0_53, %c112] : memref<16x16x144xf32, #tpu.memory_space<vmem>>, vector<16x16x16xf32>
    tpu.vector_store %arg18[%c0_52, %c0_53, %c112], %30 {strides = array<i32>} : memref<16x16x144xf32, #tpu.memory_space<vmem>>, vector<16x16x16xf32>,
    %c2_54 = arith.constant 2 : index
    %c2_55 = arith.constant 2 : index
    %c0_56 = arith.constant 0 : index
    %32 = vector.load %arg17[%c2_54, %c2_55, %c0_56] : memref<18x18x16xf32, #tpu.memory_space<vmem>>, vector<16x16x16xf32>
    %c0_57 = arith.constant 0 : index
    %c0_58 = arith.constant 0 : index
    %c128 = arith.constant 128 : index
    %33 = vector.load %arg18[%c0_57, %c0_58, %c128] : memref<16x16x144xf32, #tpu.memory_space<vmem>>, vector<16x16x16xf32>
    tpu.vector_store %arg18[%c0_57, %c0_58, %c128], %32 {strides = array<i32>} : memref<16x16x144xf32, #tpu.memory_space<vmem>>, vector<16x16x16xf32>,
    %c0_59 = arith.constant 0 : index
    %c0_60 = arith.constant 0 : index
    %c0_61 = arith.constant 0 : index
    %34 = vector.load %arg18[%c0_59, %c0_60, %c0_61] : memref<16x16x144xf32, #tpu.memory_space<vmem>>, vector<16x16x144xf32>
    %35 = vector.shape_cast %34 : vector<16x16x144xf32> to vector<256x144xf32>
    %c0_62 = arith.constant 0 : index
    %c0_63 = arith.constant 0 : index
    %36 = vector.load %arg4[%c0_62, %c0_63] : memref<144x32xf32, #tpu.memory_space<vmem>>, vector<144x32xf32>
    %cst_64 = arith.constant dense<0.000000e+00> : vector<256x32xf32>
    %37 = tpu.matmul %35, %36, %cst_64 {dimension_numbers = #tpu.dot_dimension_numbers<[1], [0], [0], [1], [0, 0, 1, 1], [], []>} : vector<256x144xf32>, vector<144x32xf32>, vector<256x32xf32> -> vector<256x32xf32>
    %c0_65 = arith.constant 0 : index
    %c0_66 = arith.constant 0 : index
    %38 = vector.load %arg5[%c0_65, %c0_66] : memref<1x32xf32, #tpu.memory_space<vmem>>, vector<1x32xf32>
    %39 = vector.broadcast %38 : vector<1x32xf32> to vector<256x32xf32>
    %40 = arith.addf %37, %39 : vector<256x32xf32>
    %cst_67 = arith.constant 0.000000e+00 : f32
    %41 = vector.broadcast %cst_67 : f32 to vector<256x32xf32>
    %42 = arith.cmpf ogt, %40, %41 : vector<256x32xf32>
    %cst_68 = arith.constant 1.000000e-01 : f32
    %43 = vector.broadcast %cst_68 : f32 to vector<256x32xf32>
    %44 = arith.mulf %43, %40 : vector<256x32xf32>
    %45 = arith.select %42, %40, %44 : vector<256x32xi1>, vector<256x32xf32>
    %c0_69 = arith.constant 0 : index
    %c0_70 = arith.constant 0 : index
    %46 = vector.load %arg6[%c0_69, %c0_70] : memref<32x16xf32, #tpu.memory_space<vmem>>, vector<32x16xf32>
    %cst_71 = arith.constant dense<0.000000e+00> : vector<256x16xf32>
    %47 = tpu.matmul %45, %46, %cst_71 {dimension_numbers = #tpu.dot_dimension_numbers<[1], [0], [0], [1], [0, 0, 1, 1], [], []>} : vector<256x32xf32>, vector<32x16xf32>, vector<256x16xf32> -> vector<256x16xf32>
    %c0_72 = arith.constant 0 : index
    %c0_73 = arith.constant 0 : index
    %48 = vector.load %arg7[%c0_72, %c0_73] : memref<1x16xf32, #tpu.memory_space<vmem>>, vector<1x16xf32>
    %49 = vector.broadcast %48 : vector<1x16xf32> to vector<256x16xf32>
    %50 = arith.addf %47, %49 : vector<256x16xf32>
    %cst_74 = arith.constant 0.000000e+00 : f32
    %51 = vector.broadcast %cst_74 : f32 to vector<256x16xf32>
    %52 = arith.cmpf ogt, %50, %51 : vector<256x16xf32>
    %cst_75 = arith.constant 1.000000e-01 : f32
    %53 = vector.broadcast %cst_75 : f32 to vector<256x16xf32>
    %54 = arith.mulf %53, %50 : vector<256x16xf32>
    %55 = arith.select %52, %50, %54 : vector<256x16xi1>, vector<256x16xf32>
    %56 = vector.shape_cast %55 : vector<256x16xf32> to vector<16x16x16xf32>
    %c1_76 = arith.constant 1 : index
    %c1_77 = arith.constant 1 : index
    %c0_78 = arith.constant 0 : index
    %57 = vector.load %arg17[%c1_76, %c1_77, %c0_78] : memref<18x18x16xf32, #tpu.memory_space<vmem>>, vector<16x16x16xf32>
    tpu.vector_store %arg17[%c1_76, %c1_77, %c0_78], %56 {strides = array<i32>} : memref<18x18x16xf32, #tpu.memory_space<vmem>>, vector<16x16x16xf32>,
    %c0_79 = arith.constant 0 : index
    %c0_80 = arith.constant 0 : index
    %c0_81 = arith.constant 0 : index
    %58 = vector.load %arg17[%c0_79, %c0_80, %c0_81] : memref<18x18x16xf32, #tpu.memory_space<vmem>>, vector<16x16x16xf32>
    %c0_82 = arith.constant 0 : index
    %c0_83 = arith.constant 0 : index
    %c0_84 = arith.constant 0 : index
    %59 = vector.load %arg18[%c0_82, %c0_83, %c0_84] : memref<16x16x144xf32, #tpu.memory_space<vmem>>, vector<16x16x16xf32>
    tpu.vector_store %arg18[%c0_82, %c0_83, %c0_84], %58 {strides = array<i32>} : memref<16x16x144xf32, #tpu.memory_space<vmem>>, vector<16x16x16xf32>,
    %c0_85 = arith.constant 0 : index
    %c1_86 = arith.constant 1 : index
    %c0_87 = arith.constant 0 : index
    %60 = vector.load %arg17[%c0_85, %c1_86, %c0_87] : memref<18x18x16xf32, #tpu.memory_space<vmem>>, vector<16x16x16xf32>
    %c0_88 = arith.constant 0 : index
    %c0_89 = arith.constant 0 : index
    %c16_90 = arith.constant 16 : index
    %61 = vector.load %arg18[%c0_88, %c0_89, %c16_90] : memref<16x16x144xf32, #tpu.memory_space<vmem>>, vector<16x16x16xf32>
    tpu.vector_store %arg18[%c0_88, %c0_89, %c16_90], %60 {strides = array<i32>} : memref<16x16x144xf32, #tpu.memory_space<vmem>>, vector<16x16x16xf32>,
    %c0_91 = arith.constant 0 : index
    %c2_92 = arith.constant 2 : index
    %c0_93 = arith.constant 0 : index
    %62 = vector.load %arg17[%c0_91, %c2_92, %c0_93] : memref<18x18x16xf32, #tpu.memory_space<vmem>>, vector<16x16x16xf32>
    %c0_94 = arith.constant 0 : index
    %c0_95 = arith.constant 0 : index
    %c32_96 = arith.constant 32 : index
    %63 = vector.load %arg18[%c0_94, %c0_95, %c32_96] : memref<16x16x144xf32, #tpu.memory_space<vmem>>, vector<16x16x16xf32>
    tpu.vector_store %arg18[%c0_94, %c0_95, %c32_96], %62 {strides = array<i32>} : memref<16x16x144xf32, #tpu.memory_space<vmem>>, vector<16x16x16xf32>,
    %c1_97 = arith.constant 1 : index
    %c0_98 = arith.constant 0 : index
    %c0_99 = arith.constant 0 : index
    %64 = vector.load %arg17[%c1_97, %c0_98, %c0_99] : memref<18x18x16xf32, #tpu.memory_space<vmem>>, vector<16x16x16xf32>
    %c0_100 = arith.constant 0 : index
    %c0_101 = arith.constant 0 : index
    %c48_102 = arith.constant 48 : index
    %65 = vector.load %arg18[%c0_100, %c0_101, %c48_102] : memref<16x16x144xf32, #tpu.memory_space<vmem>>, vector<16x16x16xf32>
    tpu.vector_store %arg18[%c0_100, %c0_101, %c48_102], %64 {strides = array<i32>} : memref<16x16x144xf32, #tpu.memory_space<vmem>>, vector<16x16x16xf32>,
    %c1_103 = arith.constant 1 : index
    %c1_104 = arith.constant 1 : index
    %c0_105 = arith.constant 0 : index
    %66 = vector.load %arg17[%c1_103, %c1_104, %c0_105] : memref<18x18x16xf32, #tpu.memory_space<vmem>>, vector<16x16x16xf32>
    %c0_106 = arith.constant 0 : index
    %c0_107 = arith.constant 0 : index
    %c64_108 = arith.constant 64 : index
    %67 = vector.load %arg18[%c0_106, %c0_107, %c64_108] : memref<16x16x144xf32, #tpu.memory_space<vmem>>, vector<16x16x16xf32>
    tpu.vector_store %arg18[%c0_106, %c0_107, %c64_108], %66 {strides = array<i32>} : memref<16x16x144xf32, #tpu.memory_space<vmem>>, vector<16x16x16xf32>,
    %c1_109 = arith.constant 1 : index
    %c2_110 = arith.constant 2 : index
    %c0_111 = arith.constant 0 : index
    %68 = vector.load %arg17[%c1_109, %c2_110, %c0_111] : memref<18x18x16xf32, #tpu.memory_space<vmem>>, vector<16x16x16xf32>
    %c0_112 = arith.constant 0 : index
    %c0_113 = arith.constant 0 : index
    %c80_114 = arith.constant 80 : index
    %69 = vector.load %arg18[%c0_112, %c0_113, %c80_114] : memref<16x16x144xf32, #tpu.memory_space<vmem>>, vector<16x16x16xf32>
    tpu.vector_store %arg18[%c0_112, %c0_113, %c80_114], %68 {strides = array<i32>} : memref<16x16x144xf32, #tpu.memory_space<vmem>>, vector<16x16x16xf32>,
    %c2_115 = arith.constant 2 : index
    %c0_116 = arith.constant 0 : index
    %c0_117 = arith.constant 0 : index
    %70 = vector.load %arg17[%c2_115, %c0_116, %c0_117] : memref<18x18x16xf32, #tpu.memory_space<vmem>>, vector<16x16x16xf32>
    %c0_118 = arith.constant 0 : index
    %c0_119 = arith.constant 0 : index
    %c96_120 = arith.constant 96 : index
    %71 = vector.load %arg18[%c0_118, %c0_119, %c96_120] : memref<16x16x144xf32, #tpu.memory_space<vmem>>, vector<16x16x16xf32>
    tpu.vector_store %arg18[%c0_118, %c0_119, %c96_120], %70 {strides = array<i32>} : memref<16x16x144xf32, #tpu.memory_space<vmem>>, vector<16x16x16xf32>,
    %c2_121 = arith.constant 2 : index
    %c1_122 = arith.constant 1 : index
    %c0_123 = arith.constant 0 : index
    %72 = vector.load %arg17[%c2_121, %c1_122, %c0_123] : memref<18x18x16xf32, #tpu.memory_space<vmem>>, vector<16x16x16xf32>
    %c0_124 = arith.constant 0 : index
    %c0_125 = arith.constant 0 : index
    %c112_126 = arith.constant 112 : index
    %73 = vector.load %arg18[%c0_124, %c0_125, %c112_126] : memref<16x16x144xf32, #tpu.memory_space<vmem>>, vector<16x16x16xf32>
    tpu.vector_store %arg18[%c0_124, %c0_125, %c112_126], %72 {strides = array<i32>} : memref<16x16x144xf32, #tpu.memory_space<vmem>>, vector<16x16x16xf32>,
    %c2_127 = arith.constant 2 : index
    %c2_128 = arith.constant 2 : index
    %c0_129 = arith.constant 0 : index
    %74 = vector.load %arg17[%c2_127, %c2_128, %c0_129] : memref<18x18x16xf32, #tpu.memory_space<vmem>>, vector<16x16x16xf32>
    %c0_130 = arith.constant 0 : index
    %c0_131 = arith.constant 0 : index
    %c128_132 = arith.constant 128 : index
    %75 = vector.load %arg18[%c0_130, %c0_131, %c128_132] : memref<16x16x144xf32, #tpu.memory_space<vmem>>, vector<16x16x16xf32>
    tpu.vector_store %arg18[%c0_130, %c0_131, %c128_132], %74 {strides = array<i32>} : memref<16x16x144xf32, #tpu.memory_space<vmem>>, vector<16x16x16xf32>,
    %c0_133 = arith.constant 0 : index
    %c0_134 = arith.constant 0 : index
    %c0_135 = arith.constant 0 : index
    %76 = vector.load %arg18[%c0_133, %c0_134, %c0_135] : memref<16x16x144xf32, #tpu.memory_space<vmem>>, vector<16x16x144xf32>
    %77 = vector.shape_cast %76 : vector<16x16x144xf32> to vector<256x144xf32>
    %c0_136 = arith.constant 0 : index
    %c0_137 = arith.constant 0 : index
    %78 = vector.load %arg8[%c0_136, %c0_137] : memref<144x32xf32, #tpu.memory_space<vmem>>, vector<144x32xf32>
    %cst_138 = arith.constant dense<0.000000e+00> : vector<256x32xf32>
    %79 = tpu.matmul %77, %78, %cst_138 {dimension_numbers = #tpu.dot_dimension_numbers<[1], [0], [0], [1], [0, 0, 1, 1], [], []>} : vector<256x144xf32>, vector<144x32xf32>, vector<256x32xf32> -> vector<256x32xf32>
    %c0_139 = arith.constant 0 : index
    %c0_140 = arith.constant 0 : index
    %80 = vector.load %arg9[%c0_139, %c0_140] : memref<1x32xf32, #tpu.memory_space<vmem>>, vector<1x32xf32>
    %81 = vector.broadcast %80 : vector<1x32xf32> to vector<256x32xf32>
    %82 = arith.addf %79, %81 : vector<256x32xf32>
    %cst_141 = arith.constant 0.000000e+00 : f32
    %83 = vector.broadcast %cst_141 : f32 to vector<256x32xf32>
    %84 = arith.cmpf ogt, %82, %83 : vector<256x32xf32>
    %cst_142 = arith.constant 1.000000e-01 : f32
    %85 = vector.broadcast %cst_142 : f32 to vector<256x32xf32>
    %86 = arith.mulf %85, %82 : vector<256x32xf32>
    %87 = arith.select %84, %82, %86 : vector<256x32xi1>, vector<256x32xf32>
    %c0_143 = arith.constant 0 : index
    %c0_144 = arith.constant 0 : index
    %88 = vector.load %arg10[%c0_143, %c0_144] : memref<32x16xf32, #tpu.memory_space<vmem>>, vector<32x16xf32>
    %cst_145 = arith.constant dense<0.000000e+00> : vector<256x16xf32>
    %89 = tpu.matmul %87, %88, %cst_145 {dimension_numbers = #tpu.dot_dimension_numbers<[1], [0], [0], [1], [0, 0, 1, 1], [], []>} : vector<256x32xf32>, vector<32x16xf32>, vector<256x16xf32> -> vector<256x16xf32>
    %c0_146 = arith.constant 0 : index
    %c0_147 = arith.constant 0 : index
    %90 = vector.load %arg11[%c0_146, %c0_147] : memref<1x16xf32, #tpu.memory_space<vmem>>, vector<1x16xf32>
    %91 = vector.broadcast %90 : vector<1x16xf32> to vector<256x16xf32>
    %92 = arith.addf %89, %91 : vector<256x16xf32>
    %cst_148 = arith.constant 0.000000e+00 : f32
    %93 = vector.broadcast %cst_148 : f32 to vector<256x16xf32>
    %94 = arith.cmpf ogt, %92, %93 : vector<256x16xf32>
    %cst_149 = arith.constant 1.000000e-01 : f32
    %95 = vector.broadcast %cst_149 : f32 to vector<256x16xf32>
    %96 = arith.mulf %95, %92 : vector<256x16xf32>
    %97 = arith.select %94, %92, %96 : vector<256x16xi1>, vector<256x16xf32>
    %98 = vector.shape_cast %97 : vector<256x16xf32> to vector<16x16x16xf32>
    %c1_150 = arith.constant 1 : index
    %c1_151 = arith.constant 1 : index
    %c0_152 = arith.constant 0 : index
    %99 = vector.load %arg17[%c1_150, %c1_151, %c0_152] : memref<18x18x16xf32, #tpu.memory_space<vmem>>, vector<16x16x16xf32>
    tpu.vector_store %arg17[%c1_150, %c1_151, %c0_152], %98 {strides = array<i32>} : memref<18x18x16xf32, #tpu.memory_space<vmem>>, vector<16x16x16xf32>,
    %c0_153 = arith.constant 0 : index
    %c0_154 = arith.constant 0 : index
    %c0_155 = arith.constant 0 : index
    %100 = vector.load %arg17[%c0_153, %c0_154, %c0_155] : memref<18x18x16xf32, #tpu.memory_space<vmem>>, vector<16x16x16xf32>
    %c0_156 = arith.constant 0 : index
    %c0_157 = arith.constant 0 : index
    %c0_158 = arith.constant 0 : index
    %101 = vector.load %arg18[%c0_156, %c0_157, %c0_158] : memref<16x16x144xf32, #tpu.memory_space<vmem>>, vector<16x16x16xf32>
    tpu.vector_store %arg18[%c0_156, %c0_157, %c0_158], %100 {strides = array<i32>} : memref<16x16x144xf32, #tpu.memory_space<vmem>>, vector<16x16x16xf32>,
    %c0_159 = arith.constant 0 : index
    %c1_160 = arith.constant 1 : index
    %c0_161 = arith.constant 0 : index
    %102 = vector.load %arg17[%c0_159, %c1_160, %c0_161] : memref<18x18x16xf32, #tpu.memory_space<vmem>>, vector<16x16x16xf32>
    %c0_162 = arith.constant 0 : index
    %c0_163 = arith.constant 0 : index
    %c16_164 = arith.constant 16 : index
    %103 = vector.load %arg18[%c0_162, %c0_163, %c16_164] : memref<16x16x144xf32, #tpu.memory_space<vmem>>, vector<16x16x16xf32>
    tpu.vector_store %arg18[%c0_162, %c0_163, %c16_164], %102 {strides = array<i32>} : memref<16x16x144xf32, #tpu.memory_space<vmem>>, vector<16x16x16xf32>,
    %c0_165 = arith.constant 0 : index
    %c2_166 = arith.constant 2 : index
    %c0_167 = arith.constant 0 : index
    %104 = vector.load %arg17[%c0_165, %c2_166, %c0_167] : memref<18x18x16xf32, #tpu.memory_space<vmem>>, vector<16x16x16xf32>
    %c0_168 = arith.constant 0 : index
    %c0_169 = arith.constant 0 : index
    %c32_170 = arith.constant 32 : index
    %105 = vector.load %arg18[%c0_168, %c0_169, %c32_170] : memref<16x16x144xf32, #tpu.memory_space<vmem>>, vector<16x16x16xf32>
    tpu.vector_store %arg18[%c0_168, %c0_169, %c32_170], %104 {strides = array<i32>} : memref<16x16x144xf32, #tpu.memory_space<vmem>>, vector<16x16x16xf32>,
    %c1_171 = arith.constant 1 : index
    %c0_172 = arith.constant 0 : index
    %c0_173 = arith.constant 0 : index
    %106 = vector.load %arg17[%c1_171, %c0_172, %c0_173] : memref<18x18x16xf32, #tpu.memory_space<vmem>>, vector<16x16x16xf32>
    %c0_174 = arith.constant 0 : index
    %c0_175 = arith.constant 0 : index
    %c48_176 = arith.constant 48 : index
    %107 = vector.load %arg18[%c0_174, %c0_175, %c48_176] : memref<16x16x144xf32, #tpu.memory_space<vmem>>, vector<16x16x16xf32>
    tpu.vector_store %arg18[%c0_174, %c0_175, %c48_176], %106 {strides = array<i32>} : memref<16x16x144xf32, #tpu.memory_space<vmem>>, vector<16x16x16xf32>,
    %c1_177 = arith.constant 1 : index
    %c1_178 = arith.constant 1 : index
    %c0_179 = arith.constant 0 : index
    %108 = vector.load %arg17[%c1_177, %c1_178, %c0_179] : memref<18x18x16xf32, #tpu.memory_space<vmem>>, vector<16x16x16xf32>
    %c0_180 = arith.constant 0 : index
    %c0_181 = arith.constant 0 : index
    %c64_182 = arith.constant 64 : index
    %109 = vector.load %arg18[%c0_180, %c0_181, %c64_182] : memref<16x16x144xf32, #tpu.memory_space<vmem>>, vector<16x16x16xf32>
    tpu.vector_store %arg18[%c0_180, %c0_181, %c64_182], %108 {strides = array<i32>} : memref<16x16x144xf32, #tpu.memory_space<vmem>>, vector<16x16x16xf32>,
    %c1_183 = arith.constant 1 : index
    %c2_184 = arith.constant 2 : index
    %c0_185 = arith.constant 0 : index
    %110 = vector.load %arg17[%c1_183, %c2_184, %c0_185] : memref<18x18x16xf32, #tpu.memory_space<vmem>>, vector<16x16x16xf32>
    %c0_186 = arith.constant 0 : index
    %c0_187 = arith.constant 0 : index
    %c80_188 = arith.constant 80 : index
    %111 = vector.load %arg18[%c0_186, %c0_187, %c80_188] : memref<16x16x144xf32, #tpu.memory_space<vmem>>, vector<16x16x16xf32>
    tpu.vector_store %arg18[%c0_186, %c0_187, %c80_188], %110 {strides = array<i32>} : memref<16x16x144xf32, #tpu.memory_space<vmem>>, vector<16x16x16xf32>,
    %c2_189 = arith.constant 2 : index
    %c0_190 = arith.constant 0 : index
    %c0_191 = arith.constant 0 : index
    %112 = vector.load %arg17[%c2_189, %c0_190, %c0_191] : memref<18x18x16xf32, #tpu.memory_space<vmem>>, vector<16x16x16xf32>
    %c0_192 = arith.constant 0 : index
    %c0_193 = arith.constant 0 : index
    %c96_194 = arith.constant 96 : index
    %113 = vector.load %arg18[%c0_192, %c0_193, %c96_194] : memref<16x16x144xf32, #tpu.memory_space<vmem>>, vector<16x16x16xf32>
    tpu.vector_store %arg18[%c0_192, %c0_193, %c96_194], %112 {strides = array<i32>} : memref<16x16x144xf32, #tpu.memory_space<vmem>>, vector<16x16x16xf32>,
    %c2_195 = arith.constant 2 : index
    %c1_196 = arith.constant 1 : index
    %c0_197 = arith.constant 0 : index
    %114 = vector.load %arg17[%c2_195, %c1_196, %c0_197] : memref<18x18x16xf32, #tpu.memory_space<vmem>>, vector<16x16x16xf32>
    %c0_198 = arith.constant 0 : index
    %c0_199 = arith.constant 0 : index
    %c112_200 = arith.constant 112 : index
    %115 = vector.load %arg18[%c0_198, %c0_199, %c112_200] : memref<16x16x144xf32, #tpu.memory_space<vmem>>, vector<16x16x16xf32>
    tpu.vector_store %arg18[%c0_198, %c0_199, %c112_200], %114 {strides = array<i32>} : memref<16x16x144xf32, #tpu.memory_space<vmem>>, vector<16x16x16xf32>,
    %c2_201 = arith.constant 2 : index
    %c2_202 = arith.constant 2 : index
    %c0_203 = arith.constant 0 : index
    %116 = vector.load %arg17[%c2_201, %c2_202, %c0_203] : memref<18x18x16xf32, #tpu.memory_space<vmem>>, vector<16x16x16xf32>
    %c0_204 = arith.constant 0 : index
    %c0_205 = arith.constant 0 : index
    %c128_206 = arith.constant 128 : index
    %117 = vector.load %arg18[%c0_204, %c0_205, %c128_206] : memref<16x16x144xf32, #tpu.memory_space<vmem>>, vector<16x16x16xf32>
    tpu.vector_store %arg18[%c0_204, %c0_205, %c128_206], %116 {strides = array<i32>} : memref<16x16x144xf32, #tpu.memory_space<vmem>>, vector<16x16x16xf32>,
    %c0_207 = arith.constant 0 : index
    %c0_208 = arith.constant 0 : index
    %c0_209 = arith.constant 0 : index
    %118 = vector.load %arg18[%c0_207, %c0_208, %c0_209] : memref<16x16x144xf32, #tpu.memory_space<vmem>>, vector<16x16x144xf32>
    %119 = vector.shape_cast %118 : vector<16x16x144xf32> to vector<256x144xf32>
    %c0_210 = arith.constant 0 : index
    %c0_211 = arith.constant 0 : index
    %120 = vector.load %arg12[%c0_210, %c0_211] : memref<144x32xf32, #tpu.memory_space<vmem>>, vector<144x32xf32>
    %cst_212 = arith.constant dense<0.000000e+00> : vector<256x32xf32>
    %121 = tpu.matmul %119, %120, %cst_212 {dimension_numbers = #tpu.dot_dimension_numbers<[1], [0], [0], [1], [0, 0, 1, 1], [], []>} : vector<256x144xf32>, vector<144x32xf32>, vector<256x32xf32> -> vector<256x32xf32>
    %c0_213 = arith.constant 0 : index
    %c0_214 = arith.constant 0 : index
    %122 = vector.load %arg13[%c0_213, %c0_214] : memref<1x32xf32, #tpu.memory_space<vmem>>, vector<1x32xf32>
    %123 = vector.broadcast %122 : vector<1x32xf32> to vector<256x32xf32>
    %124 = arith.addf %121, %123 : vector<256x32xf32>
    %cst_215 = arith.constant 0.000000e+00 : f32
    %125 = vector.broadcast %cst_215 : f32 to vector<256x32xf32>
    %126 = arith.cmpf ogt, %124, %125 : vector<256x32xf32>
    %cst_216 = arith.constant 1.000000e-01 : f32
    %127 = vector.broadcast %cst_216 : f32 to vector<256x32xf32>
    %128 = arith.mulf %127, %124 : vector<256x32xf32>
    %129 = arith.select %126, %124, %128 : vector<256x32xi1>, vector<256x32xf32>
    %c0_217 = arith.constant 0 : index
    %c0_218 = arith.constant 0 : index
    %130 = vector.load %arg14[%c0_217, %c0_218] : memref<32x21xf32, #tpu.memory_space<vmem>>, vector<32x21xf32>
    %cst_219 = arith.constant dense<0.000000e+00> : vector<256x21xf32>
    %131 = tpu.matmul %129, %130, %cst_219 {dimension_numbers = #tpu.dot_dimension_numbers<[1], [0], [0], [1], [0, 0, 1, 1], [], []>} : vector<256x32xf32>, vector<32x21xf32>, vector<256x21xf32> -> vector<256x21xf32>
    %c0_220 = arith.constant 0 : index
    %c0_221 = arith.constant 0 : index
    %132 = vector.load %arg15[%c0_220, %c0_221] : memref<1x21xf32, #tpu.memory_space<vmem>>, vector<1x21xf32>
    %133 = vector.broadcast %132 : vector<1x21xf32> to vector<256x21xf32>
    %134 = arith.addf %131, %133 : vector<256x21xf32>
    %cst_222 = arith.constant 0.000000e+00 : f32
    %135 = vector.broadcast %cst_222 : f32 to vector<256x21xf32>
    %136 = arith.subf %135, %134 : vector<256x21xf32>
    %137 = math.exp %136 : vector<256x21xf32>
    %cst_223 = arith.constant 1.000000e+00 : f32
    %138 = vector.broadcast %cst_223 : f32 to vector<256x21xf32>
    %139 = arith.addf %138, %137 : vector<256x21xf32>
    %cst_224 = arith.constant 1.000000e+00 : f32
    %140 = vector.broadcast %cst_224 : f32 to vector<256x21xf32>
    %141 = arith.divf %140, %139 : vector<256x21xf32>
    %c0_225 = arith.constant 0 : index
    %c0_226 = arith.constant 0 : index
    %c0_227 = arith.constant 0 : index
    %142 = vector.load %arg16[%c0_225, %c0_226, %c0_227] : memref<1x256x21xf32, #tpu.memory_space<vmem>>, vector<1x256x21xf32>
    %143 = vector.shape_cast %142 : vector<1x256x21xf32> to vector<256x21xf32>
    %144 = vector.shape_cast %141 : vector<256x21xf32> to vector<1x256x21xf32>
    tpu.vector_store %arg16[%c0_225, %c0_226, %c0_227], %144 {strides = array<i32>} : memref<1x256x21xf32, #tpu.memory_space<vmem>>, vector<1x256x21xf32>,
    return
  }
  func.func @transform_0(%arg0: i32) -> (i32, i32, i32) {
    %c0_i32 = arith.constant 0 : i32
    %c0_i32_0 = arith.constant 0 : i32
    %c0_i32_1 = arith.constant 0 : i32
    return %arg0, %c0_i32, %c0_i32_0 : i32, i32, i32
  }
  func.func @transform_1(%arg0: i32) -> (i32, i32) {
    %c0_i32 = arith.constant 0 : i32
    %c0_i32_0 = arith.constant 0 : i32
    %c0_i32_1 = arith.constant 0 : i32
    return %c0_i32, %c0_i32_0 : i32, i32
  }
  func.func @transform_2(%arg0: i32) -> (i32, i32) {
    %c0_i32 = arith.constant 0 : i32
    %c0_i32_0 = arith.constant 0 : i32
    %c0_i32_1 = arith.constant 0 : i32
    return %c0_i32, %c0_i32_0 : i32, i32
  }
  func.func @transform_3(%arg0: i32) -> (i32, i32) {
    %c0_i32 = arith.constant 0 : i32
    %c0_i32_0 = arith.constant 0 : i32
    %c0_i32_1 = arith.constant 0 : i32
    return %c0_i32, %c0_i32_0 : i32, i32
  }
  func.func @transform_4(%arg0: i32) -> (i32, i32) {
    %c0_i32 = arith.constant 0 : i32
    %c0_i32_0 = arith.constant 0 : i32
    %c0_i32_1 = arith.constant 0 : i32
    return %c0_i32, %c0_i32_0 : i32, i32
  }
  func.func @transform_5(%arg0: i32) -> (i32, i32) {
    %c0_i32 = arith.constant 0 : i32
    %c0_i32_0 = arith.constant 0 : i32
    %c0_i32_1 = arith.constant 0 : i32
    return %c0_i32, %c0_i32_0 : i32, i32
  }
  func.func @transform_6(%arg0: i32) -> (i32, i32) {
    %c0_i32 = arith.constant 0 : i32
    %c0_i32_0 = arith.constant 0 : i32
    %c0_i32_1 = arith.constant 0 : i32
    return %c0_i32, %c0_i32_0 : i32, i32
  }
  func.func @transform_7(%arg0: i32) -> (i32, i32) {
    %c0_i32 = arith.constant 0 : i32
    %c0_i32_0 = arith.constant 0 : i32
    %c0_i32_1 = arith.constant 0 : i32
    return %c0_i32, %c0_i32_0 : i32, i32
  }
  func.func @transform_8(%arg0: i32) -> (i32, i32) {
    %c0_i32 = arith.constant 0 : i32
    %c0_i32_0 = arith.constant 0 : i32
    %c0_i32_1 = arith.constant 0 : i32
    return %c0_i32, %c0_i32_0 : i32, i32
  }
  func.func @transform_9(%arg0: i32) -> (i32, i32) {
    %c0_i32 = arith.constant 0 : i32
    %c0_i32_0 = arith.constant 0 : i32
    %c0_i32_1 = arith.constant 0 : i32
    return %c0_i32, %c0_i32_0 : i32, i32
  }
  func.func @transform_10(%arg0: i32) -> (i32, i32) {
    %c0_i32 = arith.constant 0 : i32
    %c0_i32_0 = arith.constant 0 : i32
    %c0_i32_1 = arith.constant 0 : i32
    return %c0_i32, %c0_i32_0 : i32, i32
  }
  func.func @transform_11(%arg0: i32) -> (i32, i32) {
    %c0_i32 = arith.constant 0 : i32
    %c0_i32_0 = arith.constant 0 : i32
    %c0_i32_1 = arith.constant 0 : i32
    return %c0_i32, %c0_i32_0 : i32, i32
  }
  func.func @transform_12(%arg0: i32) -> (i32, i32) {
    %c0_i32 = arith.constant 0 : i32
    %c0_i32_0 = arith.constant 0 : i32
    %c0_i32_1 = arith.constant 0 : i32
    return %c0_i32, %c0_i32_0 : i32, i32
  }
  func.func @transform_13(%arg0: i32) -> (i32, i32) {
    %c0_i32 = arith.constant 0 : i32
    %c0_i32_0 = arith.constant 0 : i32
    %c0_i32_1 = arith.constant 0 : i32
    return %c0_i32, %c0_i32_0 : i32, i32
  }
  func.func @transform_14(%arg0: i32) -> (i32, i32) {
    %c0_i32 = arith.constant 0 : i32
    %c0_i32_0 = arith.constant 0 : i32
    %c0_i32_1 = arith.constant 0 : i32
    return %c0_i32, %c0_i32_0 : i32, i32
  }
  func.func @transform_15(%arg0: i32) -> (i32, i32, i32) {
    %c0_i32 = arith.constant 0 : i32
    %c0_i32_0 = arith.constant 0 : i32
    %c0_i32_1 = arith.constant 0 : i32
    return %arg0, %c0_i32, %c0_i32_0 : i32, i32, i32
  }
}

</mosaic_0001>

<llo_original>
// kernel: v3head_forward.1
$region0: #{v3head_forward.1}
  #allocation0 [shape = 'u32[]', space=smem, size = 0x4, offset = 0x4, fixed_abs, tag = 'smem constant byte address 0x4 - core index']
  #allocation1 [shape = 'u32[144,128]{1,0:T(1,128)}', space=vmem, size = 0x12000, scoped, tag = 'internal scratch']
  #allocation2 [shape = 'f32[18,18,16]{2,1,0:T(8,128)}', space=vmem, size = 0x36000, scoped, tag = 'scratch operand']
  #allocation3 [shape = 'f32[16,16,144]{2,1,0:T(8,128)}', space=vmem, size = 0x40000, scoped, tag = 'scratch operand']
  %s0 = inlined_call_operand.hbm [shape: f32[2,256,32], index: 0, kind: input, shape index: {}]
  %s1 = inlined_call_operand.vmem [shape: f32[32,16], index: 1, kind: input, shape index: {}]
  %s2 = inlined_call_operand.vmem [shape: f32[1,16], index: 2, kind: input, shape index: {}]
  %s3 = inlined_call_operand.vmem [shape: f32[144,32], index: 3, kind: input, shape index: {}]
  %s4 = inlined_call_operand.vmem [shape: f32[1,32], index: 4, kind: input, shape index: {}]
  %s5 = inlined_call_operand.vmem [shape: f32[32,16], index: 5, kind: input, shape index: {}]
  %s6 = inlined_call_operand.vmem [shape: f32[1,16], index: 6, kind: input, shape index: {}]
  %s7 = inlined_call_operand.hbm [shape: f32[144,32], index: 7, kind: input, shape index: {}]
  %s8 = inlined_call_operand.hbm [shape: f32[1,32], index: 8, kind: input, shape index: {}]
  %s9 = inlined_call_operand.vmem [shape: f32[32,16], index: 9, kind: input, shape index: {}]
  %s10 = inlined_call_operand.hbm [shape: f32[1,16], index: 10, kind: input, shape index: {}]
  %s11 = inlined_call_operand.vmem [shape: f32[144,32], index: 11, kind: input, shape index: {}]
  %s12 = inlined_call_operand.vmem [shape: f32[1,32], index: 12, kind: input, shape index: {}]
  %s13 = inlined_call_operand.vmem [shape: f32[32,21], index: 13, kind: input, shape index: {}]
  %s14 = inlined_call_operand.vmem [shape: f32[1,21], index: 14, kind: input, shape index: {}]
  %s15 = inlined_call_operand.hbm [shape: f32[2,256,21], index: 15, kind: output, shape index: {}]
  %s16 = sld [smem:[#allocation0]]
  $region109: #{v3head_forward.1} parent=0
    _
  %s18 = ssub.s32 1, %s16
  %s19 = scalar_select 0, %s18, %s16
  $region1: #{v3head_forward.1} parent=0
    #allocation4 [shape = 'u8[262144]{0}', space=vmem, size = 0x40000, scoped, tag = 'input window, operand 0']
    #allocation5 [shape = 's32[2]{0}', space=sflag, size = 0x8, scoped, tag = 'scoped memory for v3head_forward.1']
    #allocation6 [shape = 's32[2]{0}', space=sflag, size = 0x8, scoped, tag = 'scoped memory for v3head_forward.1']
    #allocation7 [shape = 'u8[73728]{0}', space=vmem, size = 0x12000, scoped, tag = 'input window, operand 7, single buffered']
    #allocation8 [shape = 's32[1]{0}', space=sflag, size = 0x4, scoped, tag = 'scoped memory for v3head_forward.1']
    #allocation9 [shape = 'u8[512]{0}', space=vmem, size = 0x400, scoped, tag = 'input window, operand 8, single buffered']
    #allocation10 [shape = 'u8[512]{0}', space=vmem, size = 0x400, scoped, tag = 'input window, operand 10, single buffered']
    #allocation11 [shape = 's32[1]{0}', space=sflag, size = 0x4, scoped, tag = 'scoped memory for v3head_forward.1']
    #allocation12 [shape = 'u8[262144]{0}', space=vmem, size = 0x40000, scoped, tag = 'output window, operand 0']
    %20 = vsyncpa [#allocation5], 0
    %s21 = scalar_lea.sflag [#allocation5], 1
    %22 = vsyncpa %s21, 0
    %23 = vsyncpa [#allocation8], 0
    %24 = vsyncpa [#allocation11], 0
    %25 = vsyncpa [#allocation6], 0
    %s26 = scalar_lea.sflag [#allocation6], 1
    %27 = vsyncpa %s26, 0
    loop: start=0, step=1, limit=4
    $region2: #{v3head_forward.1} parent=1 // loop_pre_header
      _
    $region3: #{v3head_forward.1} parent=1 // loop_header
      %s29 = sphi 0, %s33
      %p30 = scmp.ge.s32.totalorder %s29, 4
      %s39 = sphi 0, %s41
      %s42 = sphi 0, %s39
      %s43 = sphi 0, %s42
      %s59 = sphi 0, %s43
      %s63 = sphi 0, %s63
      %s65 = sphi 0, %s63
      %s66 = sphi 0, %s65
      %s80 = sphi 0, %s66
      %s84 = sphi 0, %s84
      %s86 = sphi 0, %s84
      %s87 = sphi 0, %s86
      %s101 = sphi 0, %s87
      %s105 = sphi 0, %s105
      %s107 = sphi 0, %s105
      %s108 = sphi 0, %s107
      %s122 = sphi 0, %s108
      %s126 = sphi 0, %s126
      %s128 = sphi 0, %s126
      %s129 = sphi 0, %s128
      %s143 = sphi 0, %s129
      %s147 = sphi 0, %s147
      %s149 = sphi 0, %s147
      %s150 = sphi 0, %s149
      %s164 = sphi 0, %s150
      %s168 = sphi 0, %s168
      %s170 = sphi 0, %s168
      %s171 = sphi 0, %s170
      %s185 = sphi 0, %s171
      %s189 = sphi 0, %s189
      %s191 = sphi 0, %s189
      %s192 = sphi 0, %s191
      %s206 = sphi 0, %s192
      %s210 = sphi 0, %s210
      %s212 = sphi 0, %s210
      %s213 = sphi 0, %s212
      %s227 = sphi 0, %s213
      %s231 = sphi 0, %s231
      %s233 = sphi 0, %s231
      %s234 = sphi 0, %s233
      %s248 = sphi 0, %s234
      %s252 = sphi 0, %s252
      %s254 = sphi 0, %s252
      %s255 = sphi 0, %s254
      %s269 = sphi 0, %s255
      %s273 = sphi 0, %s273
      %s275 = sphi 0, %s273
      %s276 = sphi 0, %s275
      %s290 = sphi 0, %s276
      %s294 = sphi 0, %s294
      %s296 = sphi 0, %s294
      %s297 = sphi 0, %s296
      %s311 = sphi 0, %s297
      %s315 = sphi 0, %s315
      %s317 = sphi 0, %s315
      %s318 = sphi 0, %s317
      %s332 = sphi 0, %s318
      %s336 = sphi 0, %s336
      %s338 = sphi 0, %s336
      %s339 = sphi 0, %s338
      %s353 = sphi 0, %s339
      %s359 = sphi 0, %s361
      %s362 = sphi 0, %s359
      %s363 = sphi 0, %s362
      %s379 = sphi 0, %s363
    $region4: #{v3head_forward.1} parent=1 // loop_header_branch
      %32 = sbr.rel (%p30) target = $region8
    $region5: #{v3head_forward.1} parent=1 // loop_body
      %s34 = ssub.s32 %s29, 1
      %s35 = ssub.s32 %s29, 2
      %s36 = sadd.s32 %s29, 1
      %s37 = ssub.s32 %s29, %s36
      %p38 = scmp.eq.s32.totalorder %s37, 0
      %s40 = sadd.s32 %s39, 1
      %s41 = scalar_select %p38, %s39, %s40
      %p44 = pneg %p38
      %p45 = scmp.eq.s32.totalorder %s29, 1
      %p46 = por %p44, %p45
      %p47 = scmp.ne.s32.totalorder %s39, %s42
      %p48 = scmp.eq.s32.totalorder %s29, 0
      %p49 = por %p47, %p48
      %p50 = scmp.ne.s32.totalorder %s39, %s42
      %p51 = scmp.eq.s32.totalorder %s34, 1
      %p52 = por %p50, %p51
      %p53 = scmp.ne.s32.totalorder %s42, %s43
      %p54 = scmp.eq.s32.totalorder %s34, 0
      %p55 = por %p53, %p54
      %p56 = scmp.ne.s32.totalorder %s42, %s43
      %p57 = scmp.eq.s32.totalorder %s35, 1
      %p58 = por %p56, %p57
      %p60 = scmp.ne.s32.totalorder %s43, %s59
      %p61 = scmp.eq.s32.totalorder %s35, 0
      %p62 = por %p60, %p61
      %s64 = sadd.s32 %s63, 1
      %p67 = scmp.eq.s32.totalorder %s29, 1
      %p68 = scmp.ne.s32.totalorder %s63, %s65
      %p69 = scmp.eq.s32.totalorder %s29, 0
      %p70 = por %p68, %p69
      %p71 = scmp.ne.s32.totalorder %s63, %s65
      %p72 = scmp.eq.s32.totalorder %s34, 1
      %p73 = por %p71, %p72
      %p74 = scmp.ne.s32.totalorder %s65, %s66
      %p75 = scmp.eq.s32.totalorder %s34, 0
      %p76 = por %p74, %p75
      %p77 = scmp.ne.s32.totalorder %s65, %s66
      %p78 = scmp.eq.s32.totalorder %s35, 1
      %p79 = por %p77, %p78
      %p81 = scmp.ne.s32.totalorder %s66, %s80
      %p82 = scmp.eq.s32.totalorder %s35, 0
      %p83 = por %p81, %p82
      %s85 = sadd.s32 %s84, 1
      %p88 = scmp.eq.s32.totalorder %s29, 1
      %p89 = scmp.ne.s32.totalorder %s84, %s86
      %p90 = scmp.eq.s32.totalorder %s29, 0
      %p91 = por %p89, %p90
      %p92 = scmp.ne.s32.totalorder %s84, %s86
      %p93 = scmp.eq.s32.totalorder %s34, 1
      %p94 = por %p92, %p93
      %p95 = scmp.ne.s32.totalorder %s86, %s87
      %p96 = scmp.eq.s32.totalorder %s34, 0
      %p97 = por %p95, %p96
      %p98 = scmp.ne.s32.totalorder %s86, %s87
      %p99 = scmp.eq.s32.totalorder %s35, 1
      %p100 = por %p98, %p99
      %p102 = scmp.ne.s32.totalorder %s87, %s101
      %p103 = scmp.eq.s32.totalorder %s35, 0
      %p104 = por %p102, %p103
      %s106 = sadd.s32 %s105, 1
      %p109 = scmp.eq.s32.totalorder %s29, 1
      %p110 = scmp.ne.s32.totalorder %s105, %s107
      %p111 = scmp.eq.s32.totalorder %s29, 0
      %p112 = por %p110, %p111
      %p113 = scmp.ne.s32.totalorder %s105, %s107
      %p114 = scmp.eq.s32.totalorder %s34, 1
      %p115 = por %p113, %p114
      %p116 = scmp.ne.s32.totalorder %s107, %s108
      %p117 = scmp.eq.s32.totalorder %s34, 0
      %p118 = por %p116, %p117
      %p119 = scmp.ne.s32.totalorder %s107, %s108
      %p120 = scmp.eq.s32.totalorder %s35, 1
      %p121 = por %p119, %p120
      %p123 = scmp.ne.s32.totalorder %s108, %s122
      %p124 = scmp.eq.s32.totalorder %s35, 0
      %p125 = por %p123, %p124
      %s127 = sadd.s32 %s126, 1
      %p130 = scmp.eq.s32.totalorder %s29, 1
      %p131 = scmp.ne.s32.totalorder %s126, %s128
      %p132 = scmp.eq.s32.totalorder %s29, 0
      %p133 = por %p131, %p132
      %p134 = scmp.ne.s32.totalorder %s126, %s128
      %p135 = scmp.eq.s32.totalorder %s34, 1
      %p136 = por %p134, %p135
      %p137 = scmp.ne.s32.totalorder %s128, %s129
      %p138 = scmp.eq.s32.totalorder %s34, 0
      %p139 = por %p137, %p138
      %p140 = scmp.ne.s32.totalorder %s128, %s129
      %p141 = scmp.eq.s32.totalorder %s35, 1
      %p142 = por %p140, %p141
      %p144 = scmp.ne.s32.totalorder %s129, %s143
      %p145 = scmp.eq.s32.totalorder %s35, 0
      %p146 = por %p144, %p145
      %s148 = sadd.s32 %s147, 1
      %p151 = scmp.eq.s32.totalorder %s29, 1
      %p152 = scmp.ne.s32.totalorder %s147, %s149
      %p153 = scmp.eq.s32.totalorder %s29, 0
      %p154 = por %p152, %p153
      %p155 = scmp.ne.s32.totalorder %s147, %s149
      %p156 = scmp.eq.s32.totalorder %s34, 1
      %p157 = por %p155, %p156
      %p158 = scmp.ne.s32.totalorder %s149, %s150
      %p159 = scmp.eq.s32.totalorder %s34, 0
      %p160 = por %p158, %p159
      %p161 = scmp.ne.s32.totalorder %s149, %s150
      %p162 = scmp.eq.s32.totalorder %s35, 1
      %p163 = por %p161, %p162
      %p165 = scmp.ne.s32.totalorder %s150, %s164
      %p166 = scmp.eq.s32.totalorder %s35, 0
      %p167 = por %p165, %p166
      %s169 = sadd.s32 %s168, 1
      %p172 = scmp.eq.s32.totalorder %s29, 1
      %p173 = scmp.ne.s32.totalorder %s168, %s170
      %p174 = scmp.eq.s32.totalorder %s29, 0
      %p175 = por %p173, %p174
      %p176 = scmp.ne.s32.totalorder %s168, %s170
      %p177 = scmp.eq.s32.totalorder %s34, 1
      %p178 = por %p176, %p177
      %p179 = scmp.ne.s32.totalorder %s170, %s171
      %p180 = scmp.eq.s32.totalorder %s34, 0
      %p181 = por %p179, %p180
      %p182 = scmp.ne.s32.totalorder %s170, %s171
      %p183 = scmp.eq.s32.totalorder %s35, 1
      %p184 = por %p182, %p183
      %p186 = scmp.ne.s32.totalorder %s171, %s185
      %p187 = scmp.eq.s32.totalorder %s35, 0
      %p188 = por %p186, %p187
      %s190 = sadd.s32 %s189, 1
      %p193 = scmp.eq.s32.totalorder %s29, 1
      %p194 = scmp.ne.s32.totalorder %s189, %s191
      %p195 = scmp.eq.s32.totalorder %s29, 0
      %p196 = por %p194, %p195
      %p197 = scmp.ne.s32.totalorder %s189, %s191
      %p198 = scmp.eq.s32.totalorder %s34, 1
      %p199 = por %p197, %p198
      %p200 = scmp.ne.s32.totalorder %s191, %s192
      %p201 = scmp.eq.s32.totalorder %s34, 0
      %p202 = por %p200, %p201
      %p203 = scmp.ne.s32.totalorder %s191, %s192
      %p204 = scmp.eq.s32.totalorder %s35, 1
      %p205 = por %p203, %p204
      %p207 = scmp.ne.s32.totalorder %s192, %s206
      %p208 = scmp.eq.s32.totalorder %s35, 0
      %p209 = por %p207, %p208
      %s211 = sadd.s32 %s210, 1
      %p214 = scmp.eq.s32.totalorder %s29, 1
      %p215 = scmp.ne.s32.totalorder %s210, %s212
      %p216 = scmp.eq.s32.totalorder %s29, 0
      %p217 = por %p215, %p216
      %p218 = scmp.ne.s32.totalorder %s210, %s212
      %p219 = scmp.eq.s32.totalorder %s34, 1
      %p220 = por %p218, %p219
      %p221 = scmp.ne.s32.totalorder %s212, %s213
      %p222 = scmp.eq.s32.totalorder %s34, 0
      %p223 = por %p221, %p222
      %p224 = scmp.ne.s32.totalorder %s212, %s213
      %p225 = scmp.eq.s32.totalorder %s35, 1
      %p226 = por %p224, %p225
      %p228 = scmp.ne.s32.totalorder %s213, %s227
      %p229 = scmp.eq.s32.totalorder %s35, 0
      %p230 = por %p228, %p229
      %s232 = sadd.s32 %s231, 1
      %p235 = scmp.eq.s32.totalorder %s29, 1
      %p236 = scmp.ne.s32.totalorder %s231, %s233
      %p237 = scmp.eq.s32.totalorder %s29, 0
      %p238 = por %p236, %p237
      %p239 = scmp.ne.s32.totalorder %s231, %s233
      %p240 = scmp.eq.s32.totalorder %s34, 1
      %p241 = por %p239, %p240
      %p242 = scmp.ne.s32.totalorder %s233, %s234
      %p243 = scmp.eq.s32.totalorder %s34, 0
      %p244 = por %p242, %p243
      %p245 = scmp.ne.s32.totalorder %s233, %s234
      %p246 = scmp.eq.s32.totalorder %s35, 1
      %p247 = por %p245, %p246
      %p249 = scmp.ne.s32.totalorder %s234, %s248
      %p250 = scmp.eq.s32.totalorder %s35, 0
      %p251 = por %p249, %p250
      %s253 = sadd.s32 %s252, 1
      %p256 = scmp.eq.s32.totalorder %s29, 1
      %p257 = scmp.ne.s32.totalorder %s252, %s254
      %p258 = scmp.eq.s32.totalorder %s29, 0
      %p259 = por %p257, %p258
      %p260 = scmp.ne.s32.totalorder %s252, %s254
      %p261 = scmp.eq.s32.totalorder %s34, 1
      %p262 = por %p260, %p261
      %p263 = scmp.ne.s32.totalorder %s254, %s255
      %p264 = scmp.eq.s32.totalorder %s34, 0
      %p265 = por %p263, %p264
      %p266 = scmp.ne.s32.totalorder %s254, %s255
      %p267 = scmp.eq.s32.totalorder %s35, 1
      %p268 = por %p266, %p267
      %p270 = scmp.ne.s32.totalorder %s255, %s269
      %p271 = scmp.eq.s32.totalorder %s35, 0
      %p272 = por %p270, %p271
      %s274 = sadd.s32 %s273, 1
      %p277 = scmp.eq.s32.totalorder %s29, 1
      %p278 = scmp.ne.s32.totalorder %s273, %s275
      %p279 = scmp.eq.s32.totalorder %s29, 0
      %p280 = por %p278, %p279
      %p281 = scmp.ne.s32.totalorder %s273, %s275
      %p282 = scmp.eq.s32.totalorder %s34, 1
      %p283 = por %p281, %p282
      %p284 = scmp.ne.s32.totalorder %s275, %s276
      %p285 = scmp.eq.s32.totalorder %s34, 0
      %p286 = por %p284, %p285
      %p287 = scmp.ne.s32.totalorder %s275, %s276
      %p288 = scmp.eq.s32.totalorder %s35, 1
      %p289 = por %p287, %p288
      %p291 = scmp.ne.s32.totalorder %s276, %s290
      %p292 = scmp.eq.s32.totalorder %s35, 0
      %p293 = por %p291, %p292
      %s295 = sadd.s32 %s294, 1
      %p298 = scmp.eq.s32.totalorder %s29, 1
      %p299 = scmp.ne.s32.totalorder %s294, %s296
      %p300 = scmp.eq.s32.totalorder %s29, 0
      %p301 = por %p299, %p300
      %p302 = scmp.ne.s32.totalorder %s294, %s296
      %p303 = scmp.eq.s32.totalorder %s34, 1
      %p304 = por %p302, %p303
      %p305 = scmp.ne.s32.totalorder %s296, %s297
      %p306 = scmp.eq.s32.totalorder %s34, 0
      %p307 = por %p305, %p306
      %p308 = scmp.ne.s32.totalorder %s296, %s297
      %p309 = scmp.eq.s32.totalorder %s35, 1
      %p310 = por %p308, %p309
      %p312 = scmp.ne.s32.totalorder %s297, %s311
      %p313 = scmp.eq.s32.totalorder %s35, 0
      %p314 = por %p312, %p313
      %s316 = sadd.s32 %s315, 1
      %p319 = scmp.eq.s32.totalorder %s29, 1
      %p320 = scmp.ne.s32.totalorder %s315, %s317
      %p321 = scmp.eq.s32.totalorder %s29, 0
      %p322 = por %p320, %p321
      %p323 = scmp.ne.s32.totalorder %s315, %s317
      %p324 = scmp.eq.s32.totalorder %s34, 1
      %p325 = por %p323, %p324
      %p326 = scmp.ne.s32.totalorder %s317, %s318
      %p327 = scmp.eq.s32.totalorder %s34, 0
      %p328 = por %p326, %p327
      %p329 = scmp.ne.s32.totalorder %s317, %s318
      %p330 = scmp.eq.s32.totalorder %s35, 1
      %p331 = por %p329, %p330
      %p333 = scmp.ne.s32.totalorder %s318, %s332
      %p334 = scmp.eq.s32.totalorder %s35, 0
      %p335 = por %p333, %p334
      %s337 = sadd.s32 %s336, 1
      %p340 = scmp.eq.s32.totalorder %s29, 1
      %p341 = scmp.ne.s32.totalorder %s336, %s338
      %p342 = scmp.eq.s32.totalorder %s29, 0
      %p343 = por %p341, %p342
      %p344 = scmp.ne.s32.totalorder %s336, %s338
      %p345 = scmp.eq.s32.totalorder %s34, 1
      %p346 = por %p344, %p345
      %p347 = scmp.ne.s32.totalorder %s338, %s339
      %p348 = scmp.eq.s32.totalorder %s34, 0
      %p349 = por %p347, %p348
      %p350 = scmp.ne.s32.totalorder %s338, %s339
      %p351 = scmp.eq.s32.totalorder %s35, 1
      %p352 = por %p350, %p351
      %p354 = scmp.ne.s32.totalorder %s339, %s353
      %p355 = scmp.eq.s32.totalorder %s35, 0
      %p356 = por %p354, %p355
      %s357 = ssub.s32 %s29, %s36
      %p358 = scmp.eq.s32.totalorder %s357, 0
      %s360 = sadd.s32 %s359, 1
      %s361 = scalar_select %p358, %s359, %s360
      %p364 = pneg %p358
      %p365 = scmp.eq.s32.totalorder %s29, 1
      %p366 = por %p364, %p365
      %p367 = scmp.ne.s32.totalorder %s359, %s362
      %p368 = scmp.eq.s32.totalorder %s29, 0
      %p369 = por %p367, %p368
      %p370 = scmp.ne.s32.totalorder %s359, %s362
      %p371 = scmp.eq.s32.totalorder %s34, 1
      %p372 = por %p370, %p371
      %p373 = scmp.ne.s32.totalorder %s362, %s363
      %p374 = scmp.eq.s32.totalorder %s34, 0
      %p375 = por %p373, %p374
      %p376 = scmp.ne.s32.totalorder %s362, %s363
      %p377 = scmp.eq.s32.totalorder %s35, 1
      %p378 = por %p376, %p377
      %p380 = scmp.ne.s32.totalorder %s363, %s379
      %p381 = scmp.eq.s32.totalorder %s35, 0
      %p382 = por %p380, %p381
      %p383 = scmp.le.s32.totalorder 1, %s29
      %p384 = scmp.lt.s32.totalorder %s29, 3
      %p385 = pnand %p383, %p384
      %p386 = pneg %p385
      // Predicated region
      $region9: #{v3head_forward.1} parent=5 // pred_check
        _
      $region10: #{v3head_forward.1} parent=5 // pred_check_branch
        %388 = sbr.rel (%p385) target = $region12
      $region11: #{v3head_forward.1} parent=5 // pred_region
        %s389 = ssub.s32 %s29, 1
        // Predicated region
        $region13: #{v3head_forward.1} parent=11 // pred_check
          %p390 = pneg %p76
        $region14: #{v3head_forward.1} parent=11 // pred_check_branch
          %392 = sbr.rel (%p390) target = $region16
        $region15: #{v3head_forward.1} parent=11 // pred_region
          _
        $region16: #{v3head_forward.1} parent=11 // pred_fallthru
          _
        // Predicated region
        $region17: #{v3head_forward.1} parent=11 // pred_check
          %p393 = pneg %p97
        $region18: #{v3head_forward.1} parent=11 // pred_check_branch
          %395 = sbr.rel (%p393) target = $region20
        $region19: #{v3head_forward.1} parent=11 // pred_region
          _
        $region20: #{v3head_forward.1} parent=11 // pred_fallthru
          _
        // Predicated region
        $region21: #{v3head_forward.1} parent=11 // pred_check
          %p396 = pneg %p118
        $region22: #{v3head_forward.1} parent=11 // pred_check_branch
          %398 = sbr.rel (%p396) target = $region24
        $region23: #{v3head_forward.1} parent=11 // pred_region
          _
        $region24: #{v3head_forward.1} parent=11 // pred_fallthru
          _
        // Predicated region
        $region25: #{v3head_forward.1} parent=11 // pred_check
          %p399 = pneg %p139
        $region26: #{v3head_forward.1} parent=11 // pred_check_branch
          %401 = sbr.rel (%p399) target = $region28
        $region27: #{v3head_forward.1} parent=11 // pred_region
          _
        $region28: #{v3head_forward.1} parent=11 // pred_fallthru
          _
        // Predicated region
        $region29: #{v3head_forward.1} parent=11 // pred_check
          %p402 = pneg %p160
        $region30: #{v3head_forward.1} parent=11 // pred_check_branch
          %404 = sbr.rel (%p402) target = $region32
        $region31: #{v3head_forward.1} parent=11 // pred_region
          _
        $region32: #{v3head_forward.1} parent=11 // pred_fallthru
          _
        // Predicated region
        $region33: #{v3head_forward.1} parent=11 // pred_check
          %p405 = pneg %p181
        $region34: #{v3head_forward.1} parent=11 // pred_check_branch
          %407 = sbr.rel (%p405) target = $region36
        $region35: #{v3head_forward.1} parent=11 // pred_region
          _
        $region36: #{v3head_forward.1} parent=11 // pred_fallthru
          _
        // Predicated region
        $region37: #{v3head_forward.1} parent=11 // pred_check
          %p408 = pneg %p202
        $region38: #{v3head_forward.1} parent=11 // pred_check_branch
          %410 = sbr.rel (%p408) target = $region40
        $region39: #{v3head_forward.1} parent=11 // pred_region
          %s412 = ssub.s32 2304, 2304
          %413 = vsyncadd [#allocation8], %s412
          %s414 = sshll.u32 [#allocation7], 4
          %s415 = int_to_ptr.vmem [resolvable:$true] %s414
          %420 = dma.hbm_to_vmem [thread:$0]  %s7, 2304, %s415, [#allocation8], 128, 128, 8
        $region40: #{v3head_forward.1} parent=11 // pred_fallthru
          _
        // Predicated region
        $region41: #{v3head_forward.1} parent=11 // pred_check
          %p421 = pneg %p223
        $region42: #{v3head_forward.1} parent=11 // pred_check_branch
          %423 = sbr.rel (%p421) target = $region44
        $region43: #{v3head_forward.1} parent=11 // pred_region
          %s425 = ssub.s32 16, 16
          %426 = vsyncadd [#allocation8], %s425
          %s428 = sshll.u32 [#allocation9], 4
          %s429 = int_to_ptr.vmem [resolvable:$true] %s428
          %431 = dma.hbm_to_vmem [thread:$0]  %s8, 16, %s429, [#allocation8]
        $region44: #{v3head_forward.1} parent=11 // pred_fallthru
          _
        // Predicated region
        $region45: #{v3head_forward.1} parent=11 // pred_check
          %p432 = pneg %p244
        $region46: #{v3head_forward.1} parent=11 // pred_check_branch
          %434 = sbr.rel (%p432) target = $region48
        $region47: #{v3head_forward.1} parent=11 // pred_region
          _
        $region48: #{v3head_forward.1} parent=11 // pred_fallthru
          _
        // Predicated region
        $region49: #{v3head_forward.1} parent=11 // pred_check
          %p435 = pneg %p265
        $region50: #{v3head_forward.1} parent=11 // pred_check_branch
          %437 = sbr.rel (%p435) target = $region52
        $region51: #{v3head_forward.1} parent=11 // pred_region
          %s439 = ssub.s32 16, 16
          %440 = vsyncadd [#allocation11], %s439
          %s442 = sshll.u32 [#allocation10], 4
          %s443 = int_to_ptr.vmem [resolvable:$true] %s442
          %445 = dma.hbm_to_vmem [thread:$0]  %s10, 16, %s443, [#allocation11]
        $region52: #{v3head_forward.1} parent=11 // pred_fallthru
          _
        // Predicated region
        $region53: #{v3head_forward.1} parent=11 // pred_check
          %p446 = pneg %p286
        $region54: #{v3head_forward.1} parent=11 // pred_check_branch
          %448 = sbr.rel (%p446) target = $region56
        $region55: #{v3head_forward.1} parent=11 // pred_region
          _
        $region56: #{v3head_forward.1} parent=11 // pred_fallthru
          _
        // Predicated region
        $region57: #{v3head_forward.1} parent=11 // pred_check
          %p449 = pneg %p307
        $region58: #{v3head_forward.1} parent=11 // pred_check_branch
          %451 = sbr.rel (%p449) target = $region60
        $region59: #{v3head_forward.1} parent=11 // pred_region
          _
        $region60: #{v3head_forward.1} parent=11 // pred_fallthru
          _
        // Predicated region
        $region61: #{v3head_forward.1} parent=11 // pred_check
          %p452 = pneg %p328
        $region62: #{v3head_forward.1} parent=11 // pred_check_branch
          %454 = sbr.rel (%p452) target = $region64
        $region63: #{v3head_forward.1} parent=11 // pred_region
          _
        $region64: #{v3head_forward.1} parent=11 // pred_fallthru
          _
        // Predicated region
        $region65: #{v3head_forward.1} parent=11 // pred_check
          %p455 = pneg %p349
        $region66: #{v3head_forward.1} parent=11 // pred_check_branch
          %457 = sbr.rel (%p455) target = $region68
        $region67: #{v3head_forward.1} parent=11 // pred_region
          _
        $region68: #{v3head_forward.1} parent=11 // pred_fallthru
          _
      $region12: #{v3head_forward.1} parent=5 // pred_fallthru
        _
      %p458 = scmp.lt.s32.totalorder %s29, 2
      // Predicated region
      $region69: #{v3head_forward.1} parent=5 // pred_check
        %p459 = pneg %p458
      $region70: #{v3head_forward.1} parent=5 // pred_check_branch
        %461 = sbr.rel (%p459) target = $region72
      $region71: #{v3head_forward.1} parent=5 // pred_region
        // Predicated region
        $region73: #{v3head_forward.1} parent=71 // pred_check
          %p462 = pneg %p49
        $region74: #{v3head_forward.1} parent=71 // pred_check_branch
          %464 = sbr.rel (%p462) target = $region76
        $region75: #{v3head_forward.1} parent=71 // pred_region
          %s465 = sand.u32 %s39, 1
          %s466 = scalar_lea.sflag [#allocation5], %s465
          %s467 = sand.u32 %s39, 1
          %s468 = smul.addr %s467, 256
          %s469 = scalar_lea.vmem [#allocation4], %s468
          %s471 = ssub.s32 4096, 4096
          %472 = vsyncadd %s466, %s471
          %s473 = smul.addr %s29, 32
          %s474 = smul.addr %s473, 128
          %s475 = scalar_lea.hbm %s0, %s474
          %s476 = sshll.u32 %s469, 4
          %s477 = int_to_ptr.vmem [resolvable:$true] %s476
          %482 = dma.hbm_to_vmem [thread:$0]  %s475, 4096, %s477, %s466, 128, 128, 8
        $region76: #{v3head_forward.1} parent=71 // pred_fallthru
          _
      $region72: #{v3head_forward.1} parent=5 // pred_fallthru
        _
      %p483 = scmp.le.s32.totalorder 1, %s29
      %p484 = scmp.lt.s32.totalorder %s29, 3
      %p485 = pnand %p483, %p484
      %p486 = pneg %p485
      // Predicated region
      $region77: #{v3head_forward.1} parent=5 // pred_check
        _
      $region78: #{v3head_forward.1} parent=5 // pred_check_branch
        %488 = sbr.rel (%p485) target = $region80
      $region79: #{v3head_forward.1} parent=5 // pred_region
        %s489 = ssub.s32 %s29, 1
        %s490 = sand.u32 %s42, 1
        %s491 = scalar_lea.sflag [#allocation5], %s490
        %s492 = sand.u32 %s42, 1
        %s493 = smul.addr %s492, 256
        %s494 = scalar_lea.vmem [#allocation4], %s493
        // Predicated region
        $region81: #{v3head_forward.1} parent=79 // pred_check
          %p495 = pneg %p55
        $region82: #{v3head_forward.1} parent=79 // pred_check_branch
          %497 = sbr.rel (%p495) target = $region84
        $region83: #{v3head_forward.1} parent=79 // pred_region
          %498 = dma.done %s491, 4096
        $region84: #{v3head_forward.1} parent=79 // pred_fallthru
          _
        // Predicated region
        $region85: #{v3head_forward.1} parent=79 // pred_check
          %p499 = pneg %p202
        $region86: #{v3head_forward.1} parent=79 // pred_check_branch
          %501 = sbr.rel (%p499) target = $region88
        $region87: #{v3head_forward.1} parent=79 // pred_region
          %502 = dma.done [#allocation8], 2304
        $region88: #{v3head_forward.1} parent=79 // pred_fallthru
          _
        // Predicated region
        $region89: #{v3head_forward.1} parent=79 // pred_check
          %p503 = pneg %p223
        $region90: #{v3head_forward.1} parent=79 // pred_check_branch
          %505 = sbr.rel (%p503) target = $region92
        $region91: #{v3head_forward.1} parent=79 // pred_region
          %506 = dma.done [#allocation8], 16
        $region92: #{v3head_forward.1} parent=79 // pred_fallthru
          _
        // Predicated region
        $region93: #{v3head_forward.1} parent=79 // pred_check
          %p507 = pneg %p265
        $region94: #{v3head_forward.1} parent=79 // pred_check_branch
          %509 = sbr.rel (%p507) target = $region96
        $region95: #{v3head_forward.1} parent=79 // pred_region
          %510 = dma.done [#allocation11], 16
        $region96: #{v3head_forward.1} parent=79 // pred_fallthru
          _
        %s511 = sand.u32 %s42, 1
        %s512 = scalar_lea.sflag [#allocation5], %s511
        %s513 = sand.u32 %s42, 1
        %s514 = smul.addr %s513, 256
        %s515 = scalar_lea.vmem [#allocation4], %s514
        %p516 = pneg %p55
        %p517 = pneg %p52
        %p518 = pneg %p76
        %p519 = pneg %p73
        %p520 = pneg %p97
        %p521 = pneg %p94
        %p522 = pneg %p118
        %p523 = pneg %p115
        %p524 = pneg %p139
        %p525 = pneg %p136
        %p526 = pneg %p160
        %p527 = pneg %p157
        %p528 = pneg %p181
        %p529 = pneg %p178
        %p530 = pneg %p202
        %p531 = pneg %p199
        %p532 = pneg %p223
        %p533 = pneg %p220
        %p534 = pneg %p244
        %p535 = pneg %p241
        %p536 = pneg %p265
        %p537 = pneg %p262
        %p538 = pneg %p286
        %p539 = pneg %p283
        %p540 = pneg %p307
        %p541 = pneg %p304
        %p542 = pneg %p328
        %p543 = pneg %p325
        %p544 = pneg %p349
        %p545 = pneg %p346
        %p546 = pneg %p375
        %p547 = pneg %p372
        %s548 = sand.u32 %s362, 1
        %s549 = scalar_lea.sflag [#allocation6], %s548
        %s550 = sand.u32 %s362, 1
        %s551 = smul.addr %s550, 256
        %s552 = scalar_lea.vmem [#allocation12], %s551
        %vm553 = vcmask 130048
        %554 = vst.msk [vmem:[#allocation2] sm:$0xff] %vm553, 0.0
        %555 = vst.msk [vmem:[#allocation2 + $0x8] sm:$0xff] %vm553, 0.0
        %vm556 = vcmask 123904
        %557 = vst.msk [vmem:[#allocation2 + $0x10] sm:$0x3] %vm556, 0.0
        %558 = vst.msk [vmem:[#allocation2 + $0x18] sm:$0xff] %vm553, 0.0
        %559 = vst.msk [vmem:[#allocation2 + $0x20] sm:$0xff] %vm553, 0.0
        %560 = vst.msk [vmem:[#allocation2 + $0x28] sm:$0x3] %vm556, 0.0
        %561 = vst.msk [vmem:[#allocation2 + $0x30] sm:$0xff] %vm553, 0.0
        %562 = vst.msk [vmem:[#allocation2 + $0x38] sm:$0xff] %vm553, 0.0
        %563 = vst.msk [vmem:[#allocation2 + $0x40] sm:$0x3] %vm556, 0.0
        %564 = vst.msk [vmem:[#allocation2 + $0x48] sm:$0xff] %vm553, 0.0
        %565 = vst.msk [vmem:[#allocation2 + $0x50] sm:$0xff] %vm553, 0.0
        %566 = vst.msk [vmem:[#allocation2 + $0x58] sm:$0x3] %vm556, 0.0
        %567 = vst.msk [vmem:[#allocation2 + $0x60] sm:$0xff] %vm553, 0.0
        %568 = vst.msk [vmem:[#allocation2 + $0x68] sm:$0xff] %vm553, 0.0
        %569 = vst.msk [vmem:[#allocation2 + $0x70] sm:$0x3] %vm556, 0.0
        %570 = vst.msk [vmem:[#allocation2 + $0x78] sm:$0xff] %vm553, 0.0
        %571 = vst.msk [vmem:[#allocation2 + $0x80] sm:$0xff] %vm553, 0.0
        %572 = vst.msk [vmem:[#allocation2 + $0x88] sm:$0x3] %vm556, 0.0
        %573 = vst.msk [vmem:[#allocation2 + $0x90] sm:$0xff] %vm553, 0.0
        %574 = vst.msk [vmem:[#allocation2 + $0x98] sm:$0xff] %vm553, 0.0
        %575 = vst.msk [vmem:[#allocation2 + $0xa0] sm:$0x3] %vm556, 0.0
        %576 = vst.msk [vmem:[#allocation2 + $0xa8] sm:$0xff] %vm553, 0.0
        %577 = vst.msk [vmem:[#allocation2 + $0xb0] sm:$0xff] %vm553, 0.0
        %578 = vst.msk [vmem:[#allocation2 + $0xb8] sm:$0x3] %vm556, 0.0
        %579 = vst.msk [vmem:[#allocation2 + $0xc0] sm:$0xff] %vm553, 0.0
        %580 = vst.msk [vmem:[#allocation2 + $0xc8] sm:$0xff] %vm553, 0.0
        %581 = vst.msk [vmem:[#allocation2 + $0xd0] sm:$0x3] %vm556, 0.0
        %582 = vst.msk [vmem:[#allocation2 + $0xd8] sm:$0xff] %vm553, 0.0
        %583 = vst.msk [vmem:[#allocation2 + $0xe0] sm:$0xff] %vm553, 0.0
        %584 = vst.msk [vmem:[#allocation2 + $0xe8] sm:$0x3] %vm556, 0.0
        %585 = vst.msk [vmem:[#allocation2 + $0xf0] sm:$0xff] %vm553, 0.0
        %586 = vst.msk [vmem:[#allocation2 + $0xf8] sm:$0xff] %vm553, 0.0
        %587 = vst.msk [vmem:[#allocation2 + $0x100] sm:$0x3] %vm556, 0.0
        %588 = vst.msk [vmem:[#allocation2 + $0x108] sm:$0xff] %vm553, 0.0
        %589 = vst.msk [vmem:[#allocation2 + $0x110] sm:$0xff] %vm553, 0.0
        %590 = vst.msk [vmem:[#allocation2 + $0x118] sm:$0x3] %vm556, 0.0
        %591 = vst.msk [vmem:[#allocation2 + $0x120] sm:$0xff] %vm553, 0.0
        %592 = vst.msk [vmem:[#allocation2 + $0x128] sm:$0xff] %vm553, 0.0
        %593 = vst.msk [vmem:[#allocation2 + $0x130] sm:$0x3] %vm556, 0.0
        %594 = vst.msk [vmem:[#allocation2 + $0x138] sm:$0xff] %vm553, 0.0
        %595 = vst.msk [vmem:[#allocation2 + $0x140] sm:$0xff] %vm553, 0.0
        %596 = vst.msk [vmem:[#allocation2 + $0x148] sm:$0x3] %vm556, 0.0
        %597 = vst.msk [vmem:[#allocation2 + $0x150] sm:$0xff] %vm553, 0.0
        %598 = vst.msk [vmem:[#allocation2 + $0x158] sm:$0xff] %vm553, 0.0
        %599 = vst.msk [vmem:[#allocation2 + $0x160] sm:$0x3] %vm556, 0.0
        %600 = vst.msk [vmem:[#allocation2 + $0x168] sm:$0xff] %vm553, 0.0
        %601 = vst.msk [vmem:[#allocation2 + $0x170] sm:$0xff] %vm553, 0.0
        %602 = vst.msk [vmem:[#allocation2 + $0x178] sm:$0x3] %vm556, 0.0
        %603 = vst.msk [vmem:[#allocation2 + $0x180] sm:$0xff] %vm553, 0.0
        %604 = vst.msk [vmem:[#allocation2 + $0x188] sm:$0xff] %vm553, 0.0
        %605 = vst.msk [vmem:[#allocation2 + $0x190] sm:$0x3] %vm556, 0.0
        %606 = vst.msk [vmem:[#allocation2 + $0x198] sm:$0xff] %vm553, 0.0
        %607 = vst.msk [vmem:[#allocation2 + $0x1a0] sm:$0xff] %vm553, 0.0
        %608 = vst.msk [vmem:[#allocation2 + $0x1a8] sm:$0x3] %vm556, 0.0
        %v609 = vld [vmem:[%s494] sm:$0xff]
        %v610 = vld [vmem:[%s494 + $0x8] sm:$0xff]
        %v611 = vld [vmem:[%s494 + $0x10] sm:$0xff]
        %v612 = vld [vmem:[%s494 + $0x18] sm:$0xff]
        %v613 = vld [vmem:[%s494 + $0x20] sm:$0xff]
        %v614 = vld [vmem:[%s494 + $0x28] sm:$0xff]
        %v615 = vld [vmem:[%s494 + $0x30] sm:$0xff]
        %v616 = vld [vmem:[%s494 + $0x38] sm:$0xff]
        %v617 = vld [vmem:[%s494 + $0x40] sm:$0xff]
        %v618 = vld [vmem:[%s494 + $0x48] sm:$0xff]
        %v619 = vld [vmem:[%s494 + $0x50] sm:$0xff]
        %v620 = vld [vmem:[%s494 + $0x58] sm:$0xff]
        %v621 = vld [vmem:[%s494 + $0x60] sm:$0xff]
        %v622 = vld [vmem:[%s494 + $0x68] sm:$0xff]
        %v623 = vld [vmem:[%s494 + $0x70] sm:$0xff]
        %v624 = vld [vmem:[%s494 + $0x78] sm:$0xff]
        %v625 = vld [vmem:[%s494 + $0x80] sm:$0xff]
        %v626 = vld [vmem:[%s494 + $0x88] sm:$0xff]
        %v627 = vld [vmem:[%s494 + $0x90] sm:$0xff]
        %v628 = vld [vmem:[%s494 + $0x98] sm:$0xff]
        %v629 = vld [vmem:[%s494 + $0xa0] sm:$0xff]
        %v630 = vld [vmem:[%s494 + $0xa8] sm:$0xff]
        %v631 = vld [vmem:[%s494 + $0xb0] sm:$0xff]
        %v632 = vld [vmem:[%s494 + $0xb8] sm:$0xff]
        %v633 = vld [vmem:[%s494 + $0xc0] sm:$0xff]
        %v634 = vld [vmem:[%s494 + $0xc8] sm:$0xff]
        %v635 = vld [vmem:[%s494 + $0xd0] sm:$0xff]
        %v636 = vld [vmem:[%s494 + $0xd8] sm:$0xff]
        %v637 = vld [vmem:[%s494 + $0xe0] sm:$0xff]
        %v638 = vld [vmem:[%s494 + $0xe8] sm:$0xff]
        %v639 = vld [vmem:[%s494 + $0xf0] sm:$0xff]
        %v640 = vld [vmem:[%s494 + $0xf8] sm:$0xff]
        %v641 = vld [vmem:[%s1] sm:$0xff]
        %v642 = vld [vmem:[%s1 + $0x8] sm:$0xff]
        %v643 = vld [vmem:[%s1 + $0x10] sm:$0xff]
        %v644 = vld [vmem:[%s1 + $0x18] sm:$0xff]
        %v645 = vld [vmem:[%s2] sm:$0x1]
        %v647 = vlaneseq
        %v648 = vshrl.u32 %v647, 7
        %v649 = vsub.s32 0, %v648
        %v650 = vrot.slane %v645, %v649
        %vm652 = vcmask 261120
        %v654 = vsel %vm652, %v609, 0
        %v657 = vsel %vm652, %v610, 0
        %v660 = vsel %vm652, %v611, 0
        %v663 = vsel %vm652, %v612, 0
        %v666 = vsel %vm652, %v613, 0
        %v669 = vsel %vm652, %v614, 0
        %v672 = vsel %vm652, %v615, 0
        %v675 = vsel %vm652, %v616, 0
        %v678 = vsel %vm652, %v617, 0
        %v681 = vsel %vm652, %v618, 0
        %v684 = vsel %vm652, %v619, 0
        %v687 = vsel %vm652, %v620, 0
        %v690 = vsel %vm652, %v621, 0
        %v693 = vsel %vm652, %v622, 0
        %v696 = vsel %vm652, %v623, 0
        %v699 = vsel %vm652, %v624, 0
        %v702 = vsel %vm652, %v625, 0
        %v705 = vsel %vm652, %v626, 0
        %v708 = vsel %vm652, %v627, 0
        %v711 = vsel %vm652, %v628, 0
        %v714 = vsel %vm652, %v629, 0
        %v717 = vsel %vm652, %v630, 0
        %v720 = vsel %vm652, %v631, 0
        %v723 = vsel %vm652, %v632, 0
        %v726 = vsel %vm652, %v633, 0
        %v729 = vsel %vm652, %v634, 0
        %v732 = vsel %vm652, %v635, 0
        %v735 = vsel %vm652, %v636, 0
        %v738 = vsel %vm652, %v637, 0
        %v741 = vsel %vm652, %v638, 0
        %v744 = vsel %vm652, %v639, 0
        %v747 = vsel %vm652, %v640, 0
        %749 = vmatprep.subr.mxu0 0.0
        %750 = vmatpush1.msra.mxu0 %v641
        %751 = vmatprep.subr.mxu0 0.0
        %752 = vmatpush1.msra.mxu0 %v642
        %753 = vmatprep.subr.mxu0 0.0
        %754 = vmatpush1.msra.mxu0 %v643
        %755 = vmatprep.subr.mxu0 0.0
        %756 = vmatpush1.msra.mxu0 %v644
        %757 = vmatprep.subr.mxu0 0.0
        %758 = vmatpush1.msra.mxu0 0.0
        %759 = vmatprep.subr.mxu0 0.0
        %760 = vmatpush1.msra.mxu0 0.0
        %761 = vmatprep.subr.mxu0 0.0
        %762 = vmatpush1.msra.mxu0 0.0
        %763 = vmatprep.subr.mxu0 0.0
        %764 = vmatpush1.msra.mxu0 0.0
        %765 = vmatprep.subr.mxu0 0.0
        %766 = vmatpush1.msra.mxu0 0.0
        %767 = vmatprep.subr.mxu0 0.0
        %768 = vmatpush1.msra.mxu0 0.0
        %769 = vmatprep.subr.mxu0 0.0
        %770 = vmatpush1.msra.mxu0 0.0
        %771 = vmatprep.subr.mxu0 0.0
        %772 = vmatpush1.msra.mxu0 0.0
        %773 = vmatprep.subr.mxu0 0.0
        %774 = vmatpush1.msra.mxu0 0.0
        %775 = vmatprep.subr.mxu0 0.0
        %776 = vmatpush1.msra.mxu0 0.0
        %777 = vmatprep.subr.mxu0 0.0
        %778 = vmatpush1.msra.mxu0 0.0
        %779 = vmatprep.subr.mxu0 0.0
        %780 = vmatpush1.msra.mxu0 0.0
        %781 = vmatprep.subr.mxu0 0.0
        %782 = vmatpush1.msra.mxu0 0.0
        %783 = vmatprep.subr.mxu0 0.0
        %784 = vmatpush1.msra.mxu0 0.0
        %785 = vmatprep.subr.mxu0 0.0
        %786 = vmatpush1.msra.mxu0 0.0
        %787 = vmatprep.subr.mxu0 0.0
        %788 = vmatpush1.msra.mxu0 0.0
        %789 = vmatprep.subr.mxu0 0.0
        %790 = vmatpush1.msra.mxu0 0.0
        %791 = vmatprep.subr.mxu0 0.0
        %792 = vmatpush1.msra.mxu0 0.0
        %793 = vmatprep.subr.mxu0 0.0
        %794 = vmatpush1.msra.mxu0 0.0
        %795 = vmatprep.subr.mxu0 0.0
        %796 = vmatpush1.msra.mxu0 0.0
        %797 = vmatprep.subr.mxu0 0.0
        %798 = vmatpush1.msra.mxu0 0.0
        %799 = vmatprep.subr.mxu0 0.0
        %800 = vmatpush1.msra.mxu0 0.0
        %801 = vmatprep.subr.mxu0 0.0
        %802 = vmatpush1.msra.mxu0 0.0
        %803 = vmatprep.subr.mxu0 0.0
        %804 = vmatpush1.msra.mxu0 0.0
        %805 = vmatprep.subr.mxu0 0.0
        %806 = vmatpush1.msra.mxu0 0.0
        %807 = vmatprep.subr.mxu0 0.0
        %808 = vmatpush1.msra.mxu0 0.0
        %809 = vmatprep.subr.mxu0 0.0
        %810 = vmatpush1.msra.mxu0 0.0
        %811 = vmatprep.subr.mxu0 0.0
        %812 = vmatpush1.msra.mxu0 0.0
        %813 = vmatprep.mubr.f32.mxu0 0.0
        %814 = vmatmul.mubr.f32.gmra.mrb[0].mxu0 %v654
        %v815 = vpop.f32.mrb[0].mxu0
        %v816 = vadd.f32 %v650, %v815
        %v817 = vpop.f32.mrb[0].mxu0
        %818 = vmatprep.mubr.f32.mxu0 0.0
        %819 = vmatmul.mubr.f32.gmra.mrb[0].mxu0 %v657
        %v820 = vpop.f32.mrb[0].mxu0
        %v821 = vadd.f32 %v650, %v820
        %v822 = vpop.f32.mrb[0].mxu0
        %823 = vmatprep.mubr.f32.mxu0 0.0
        %824 = vmatmul.mubr.f32.gmra.mrb[0].mxu0 %v660
        %v825 = vpop.f32.mrb[0].mxu0
        %v826 = vadd.f32 %v650, %v825
        %v827 = vpop.f32.mrb[0].mxu0
        %828 = vmatprep.mubr.f32.mxu0 0.0
        %829 = vmatmul.mubr.f32.gmra.mrb[0].mxu0 %v663
        %v830 = vpop.f32.mrb[0].mxu0
        %v831 = vadd.f32 %v650, %v830
        %v832 = vpop.f32.mrb[0].mxu0
        %833 = vmatprep.mubr.f32.mxu0 0.0
        %834 = vmatmul.mubr.f32.gmra.mrb[0].mxu0 %v666
        %v835 = vpop.f32.mrb[0].mxu0
        %v836 = vadd.f32 %v650, %v835
        %v837 = vpop.f32.mrb[0].mxu0
        %838 = vmatprep.mubr.f32.mxu0 0.0
        %839 = vmatmul.mubr.f32.gmra.mrb[0].mxu0 %v669
        %v840 = vpop.f32.mrb[0].mxu0
        %v841 = vadd.f32 %v650, %v840
        %v842 = vpop.f32.mrb[0].mxu0
        %843 = vmatprep.mubr.f32.mxu0 0.0
        %844 = vmatmul.mubr.f32.gmra.mrb[0].mxu0 %v672
        %v845 = vpop.f32.mrb[0].mxu0
        %v846 = vadd.f32 %v650, %v845
        %v847 = vpop.f32.mrb[0].mxu0
        %848 = vmatprep.mubr.f32.mxu0 0.0
        %849 = vmatmul.mubr.f32.gmra.mrb[0].mxu0 %v675
        %v850 = vpop.f32.mrb[0].mxu0
        %v851 = vadd.f32 %v650, %v850
        %v852 = vpop.f32.mrb[0].mxu0
        %853 = vmatprep.mubr.f32.mxu0 0.0
        %854 = vmatmul.mubr.f32.gmra.mrb[0].mxu0 %v678
        %v855 = vpop.f32.mrb[0].mxu0
        %v856 = vadd.f32 %v650, %v855
        %v857 = vpop.f32.mrb[0].mxu0
        %858 = vmatprep.mubr.f32.mxu0 0.0
        %859 = vmatmul.mubr.f32.gmra.mrb[0].mxu0 %v681
        %v860 = vpop.f32.mrb[0].mxu0
        %v861 = vadd.f32 %v650, %v860
        %v862 = vpop.f32.mrb[0].mxu0
        %863 = vmatprep.mubr.f32.mxu0 0.0
        %864 = vmatmul.mubr.f32.gmra.mrb[0].mxu0 %v684
        %v865 = vpop.f32.mrb[0].mxu0
        %v866 = vadd.f32 %v650, %v865
        %v867 = vpop.f32.mrb[0].mxu0
        %868 = vmatprep.mubr.f32.mxu0 0.0
        %869 = vmatmul.mubr.f32.gmra.mrb[0].mxu0 %v687
        %v870 = vpop.f32.mrb[0].mxu0
        %v871 = vadd.f32 %v650, %v870
        %v872 = vpop.f32.mrb[0].mxu0
        %873 = vmatprep.mubr.f32.mxu0 0.0
        %874 = vmatmul.mubr.f32.gmra.mrb[0].mxu0 %v690
        %v875 = vpop.f32.mrb[0].mxu0
        %v876 = vadd.f32 %v650, %v875
        %v877 = vpop.f32.mrb[0].mxu0
        %878 = vmatprep.mubr.f32.mxu0 0.0
        %879 = vmatmul.mubr.f32.gmra.mrb[0].mxu0 %v693
        %v880 = vpop.f32.mrb[0].mxu0
        %v881 = vadd.f32 %v650, %v880
        %v882 = vpop.f32.mrb[0].mxu0
        %883 = vmatprep.mubr.f32.mxu0 0.0
        %884 = vmatmul.mubr.f32.gmra.mrb[0].mxu0 %v696
        %v885 = vpop.f32.mrb[0].mxu0
        %v886 = vadd.f32 %v650, %v885
        %v887 = vpop.f32.mrb[0].mxu0
        %888 = vmatprep.mubr.f32.mxu0 0.0
        %889 = vmatmul.mubr.f32.gmra.mrb[0].mxu0 %v699
        %v890 = vpop.f32.mrb[0].mxu0
        %v891 = vadd.f32 %v650, %v890
        %v892 = vpop.f32.mrb[0].mxu0
        %893 = vmatprep.mubr.f32.mxu0 0.0
        %894 = vmatmul.mubr.f32.gmra.mrb[0].mxu0 %v702
        %v895 = vpop.f32.mrb[0].mxu0
        %v896 = vadd.f32 %v650, %v895
        %v897 = vpop.f32.mrb[0].mxu0
        %898 = vmatprep.mubr.f32.mxu0 0.0
        %899 = vmatmul.mubr.f32.gmra.mrb[0].mxu0 %v705
        %v900 = vpop.f32.mrb[0].mxu0
        %v901 = vadd.f32 %v650, %v900
        %v902 = vpop.f32.mrb[0].mxu0
        %903 = vmatprep.mubr.f32.mxu0 0.0
        %904 = vmatmul.mubr.f32.gmra.mrb[0].mxu0 %v708
        %v905 = vpop.f32.mrb[0].mxu0
        %v906 = vadd.f32 %v650, %v905
        %v907 = vpop.f32.mrb[0].mxu0
        %908 = vmatprep.mubr.f32.mxu0 0.0
        %909 = vmatmul.mubr.f32.gmra.mrb[0].mxu0 %v711
        %v910 = vpop.f32.mrb[0].mxu0
        %v911 = vadd.f32 %v650, %v910
        %v912 = vpop.f32.mrb[0].mxu0
        %913 = vmatprep.mubr.f32.mxu0 0.0
        %914 = vmatmul.mubr.f32.gmra.mrb[0].mxu0 %v714
        %v915 = vpop.f32.mrb[0].mxu0
        %v916 = vadd.f32 %v650, %v915
        %v917 = vpop.f32.mrb[0].mxu0
        %918 = vmatprep.mubr.f32.mxu0 0.0
        %919 = vmatmul.mubr.f32.gmra.mrb[0].mxu0 %v717
        %v920 = vpop.f32.mrb[0].mxu0
        %v921 = vadd.f32 %v650, %v920
        %v922 = vpop.f32.mrb[0].mxu0
        %923 = vmatprep.mubr.f32.mxu0 0.0
        %924 = vmatmul.mubr.f32.gmra.mrb[0].mxu0 %v720
        %v925 = vpop.f32.mrb[0].mxu0
        %v926 = vadd.f32 %v650, %v925
        %v927 = vpop.f32.mrb[0].mxu0
        %928 = vmatprep.mubr.f32.mxu0 0.0
        %929 = vmatmul.mubr.f32.gmra.mrb[0].mxu0 %v723
        %v930 = vpop.f32.mrb[0].mxu0
        %v931 = vadd.f32 %v650, %v930
        %v932 = vpop.f32.mrb[0].mxu0
        %933 = vmatprep.mubr.f32.mxu0 0.0
        %934 = vmatmul.mubr.f32.gmra.mrb[0].mxu0 %v726
        %v935 = vpop.f32.mrb[0].mxu0
        %v936 = vadd.f32 %v650, %v935
        %v937 = vpop.f32.mrb[0].mxu0
        %938 = vmatprep.mubr.f32.mxu0 0.0
        %939 = vmatmul.mubr.f32.gmra.mrb[0].mxu0 %v729
        %v940 = vpop.f32.mrb[0].mxu0
        %v941 = vadd.f32 %v650, %v940
        %v942 = vpop.f32.mrb[0].mxu0
        %943 = vmatprep.mubr.f32.mxu0 0.0
        %944 = vmatmul.mubr.f32.gmra.mrb[0].mxu0 %v732
        %v945 = vpop.f32.mrb[0].mxu0
        %v946 = vadd.f32 %v650, %v945
        %v947 = vpop.f32.mrb[0].mxu0
        %948 = vmatprep.mubr.f32.mxu0 0.0
        %949 = vmatmul.mubr.f32.gmra.mrb[0].mxu0 %v735
        %v950 = vpop.f32.mrb[0].mxu0
        %v951 = vadd.f32 %v650, %v950
        %v952 = vpop.f32.mrb[0].mxu0
        %953 = vmatprep.mubr.f32.mxu0 0.0
        %954 = vmatmul.mubr.f32.gmra.mrb[0].mxu0 %v738
        %v955 = vpop.f32.mrb[0].mxu0
        %v956 = vadd.f32 %v650, %v955
        %v957 = vpop.f32.mrb[0].mxu0
        %958 = vmatprep.mubr.f32.mxu0 0.0
        %959 = vmatmul.mubr.f32.gmra.mrb[0].mxu0 %v741
        %v960 = vpop.f32.mrb[0].mxu0
        %v961 = vadd.f32 %v650, %v960
        %v962 = vpop.f32.mrb[0].mxu0
        %963 = vmatprep.mubr.f32.mxu0 0.0
        %964 = vmatmul.mubr.f32.gmra.mrb[0].mxu0 %v744
        %v965 = vpop.f32.mrb[0].mxu0
        %v966 = vadd.f32 %v650, %v965
        %v967 = vpop.f32.mrb[0].mxu0
        %968 = vmatprep.mubr.f32.mxu0 0.0
        %969 = vmatmul.mubr.f32.gmra.mrb[0].mxu0 %v747
        %v970 = vpop.f32.mrb[0].mxu0
        %v971 = vadd.f32 %v650, %v970
        %v972 = vpop.f32.mrb[0].mxu0
        %973 = vdwg.mxu0
        %vm974 = vcmp.gt.f32.partialorder %v816, 0.0
        %vm975 = vcmp.gt.f32.partialorder %v821, 0.0
        %vm976 = vcmp.gt.f32.partialorder %v826, 0.0
        %vm977 = vcmp.gt.f32.partialorder %v831, 0.0
        %vm978 = vcmp.gt.f32.partialorder %v836, 0.0
        %vm979 = vcmp.gt.f32.partialorder %v841, 0.0
        %vm980 = vcmp.gt.f32.partialorder %v846, 0.0
        %vm981 = vcmp.gt.f32.partialorder %v851, 0.0
        %vm982 = vcmp.gt.f32.partialorder %v856, 0.0
        %vm983 = vcmp.gt.f32.partialorder %v861, 0.0
        %vm984 = vcmp.gt.f32.partialorder %v866, 0.0
        %vm985 = vcmp.gt.f32.partialorder %v871, 0.0
        %vm986 = vcmp.gt.f32.partialorder %v876, 0.0
        %vm987 = vcmp.gt.f32.partialorder %v881, 0.0
        %vm988 = vcmp.gt.f32.partialorder %v886, 0.0
        %vm989 = vcmp.gt.f32.partialorder %v891, 0.0
        %vm990 = vcmp.gt.f32.partialorder %v896, 0.0
        %vm991 = vcmp.gt.f32.partialorder %v901, 0.0
        %vm992 = vcmp.gt.f32.partialorder %v906, 0.0
        %vm993 = vcmp.gt.f32.partialorder %v911, 0.0
        %vm994 = vcmp.gt.f32.partialorder %v916, 0.0
        %vm995 = vcmp.gt.f32.partialorder %v921, 0.0
        %vm996 = vcmp.gt.f32.partialorder %v926, 0.0
        %vm997 = vcmp.gt.f32.partialorder %v931, 0.0
        %vm998 = vcmp.gt.f32.partialorder %v936, 0.0
        %vm999 = vcmp.gt.f32.partialorder %v941, 0.0
        %vm1000 = vcmp.gt.f32.partialorder %v946, 0.0
        %vm1001 = vcmp.gt.f32.partialorder %v951, 0.0
        %vm1002 = vcmp.gt.f32.partialorder %v956, 0.0
        %vm1003 = vcmp.gt.f32.partialorder %v961, 0.0
        %vm1004 = vcmp.gt.f32.partialorder %v966, 0.0
        %vm1005 = vcmp.gt.f32.partialorder %v971, 0.0
        %v1006 = vmul.f32 %v816, 0.1
        %v1007 = vmul.f32 %v821, 0.1
        %v1008 = vmul.f32 %v826, 0.1
        %v1009 = vmul.f32 %v831, 0.1
        %v1010 = vmul.f32 %v836, 0.1
        %v1011 = vmul.f32 %v841, 0.1
        %v1012 = vmul.f32 %v846, 0.1
        %v1013 = vmul.f32 %v851, 0.1
        %v1014 = vmul.f32 %v856, 0.1
        %v1015 = vmul.f32 %v861, 0.1
        %v1016 = vmul.f32 %v866, 0.1
        %v1017 = vmul.f32 %v871, 0.1
        %v1018 = vmul.f32 %v876, 0.1
        %v1019 = vmul.f32 %v881, 0.1
        %v1020 = vmul.f32 %v886, 0.1
        %v1021 = vmul.f32 %v891, 0.1
        %v1022 = vmul.f32 %v896, 0.1
        %v1023 = vmul.f32 %v901, 0.1
        %v1024 = vmul.f32 %v906, 0.1
        %v1025 = vmul.f32 %v911, 0.1
        %v1026 = vmul.f32 %v916, 0.1
        %v1027 = vmul.f32 %v921, 0.1
        %v1028 = vmul.f32 %v926, 0.1
        %v1029 = vmul.f32 %v931, 0.1
        %v1030 = vmul.f32 %v936, 0.1
        %v1031 = vmul.f32 %v941, 0.1
        %v1032 = vmul.f32 %v946, 0.1
        %v1033 = vmul.f32 %v951, 0.1
        %v1034 = vmul.f32 %v956, 0.1
        %v1035 = vmul.f32 %v961, 0.1
        %v1036 = vmul.f32 %v966, 0.1
        %v1037 = vmul.f32 %v971, 0.1
        %v1038 = vsel %vm974, %v816, %v1006
        %v1039 = vsel %vm975, %v821, %v1007
        %v1040 = vsel %vm976, %v826, %v1008
        %v1041 = vsel %vm977, %v831, %v1009
        %v1042 = vsel %vm978, %v836, %v1010
        %v1043 = vsel %vm979, %v841, %v1011
        %v1044 = vsel %vm980, %v846, %v1012
        %v1045 = vsel %vm981, %v851, %v1013
        %v1046 = vsel %vm982, %v856, %v1014
        %v1047 = vsel %vm983, %v861, %v1015
        %v1048 = vsel %vm984, %v866, %v1016
        %v1049 = vsel %vm985, %v871, %v1017
        %v1050 = vsel %vm986, %v876, %v1018
        %v1051 = vsel %vm987, %v881, %v1019
        %v1052 = vsel %vm988, %v886, %v1020
        %v1053 = vsel %vm989, %v891, %v1021
        %v1054 = vsel %vm990, %v896, %v1022
        %v1055 = vsel %vm991, %v901, %v1023
        %v1056 = vsel %vm992, %v906, %v1024
        %v1057 = vsel %vm993, %v911, %v1025
        %v1058 = vsel %vm994, %v916, %v1026
        %v1059 = vsel %vm995, %v921, %v1027
        %v1060 = vsel %vm996, %v926, %v1028
        %v1061 = vsel %vm997, %v931, %v1029
        %v1062 = vsel %vm998, %v936, %v1030
        %v1063 = vsel %vm999, %v941, %v1031
        %v1064 = vsel %vm1000, %v946, %v1032
        %v1065 = vsel %vm1001, %v951, %v1033
        %v1066 = vsel %vm1002, %v956, %v1034
        %v1067 = vsel %vm1003, %v961, %v1035
        %v1068 = vsel %vm1004, %v966, %v1036
        %v1069 = vsel %vm1005, %v971, %v1037
        %s1070 = scalar_lea.vmem [#allocation2], 24
        %1071 = vst.msk [vmem:[%s1070 + $0x1] sm:$0xff] %vm553, %v1038
        %1072 = vst.msk [vmem:[%s1070 + $0x9] sm:$0xff] %vm553, %v1039
        %1073 = vst.msk [vmem:[%s1070 + $0x19] sm:$0xff] %vm553, %v1040
        %1074 = vst.msk [vmem:[%s1070 + $0x21] sm:$0xff] %vm553, %v1041
        %1075 = vst.msk [vmem:[%s1070 + $0x31] sm:$0xff] %vm553, %v1042
        %1076 = vst.msk [vmem:[%s1070 + $0x39] sm:$0xff] %vm553, %v1043
        %1077 = vst.msk [vmem:[%s1070 + $0x49] sm:$0xff] %vm553, %v1044
        %1078 = vst.msk [vmem:[%s1070 + $0x51] sm:$0xff] %vm553, %v1045
        %1079 = vst.msk [vmem:[%s1070 + $0x61] sm:$0xff] %vm553, %v1046
        %1080 = vst.msk [vmem:[%s1070 + $0x69] sm:$0xff] %vm553, %v1047
        %1081 = vst.msk [vmem:[%s1070 + $0x79] sm:$0xff] %vm553, %v1048
        %1082 = vst.msk [vmem:[%s1070 + $0x81] sm:$0xff] %vm553, %v1049
        %1083 = vst.msk [vmem:[%s1070 + $0x91] sm:$0xff] %vm553, %v1050
        %1084 = vst.msk [vmem:[%s1070 + $0x99] sm:$0xff] %vm553, %v1051
        %1085 = vst.msk [vmem:[%s1070 + $0xa9] sm:$0xff] %vm553, %v1052
        %1086 = vst.msk [vmem:[%s1070 + $0xb1] sm:$0xff] %vm553, %v1053
        %1087 = vst.msk [vmem:[%s1070 + $0xc1] sm:$0xff] %vm553, %v1054
        %1088 = vst.msk [vmem:[%s1070 + $0xc9] sm:$0xff] %vm553, %v1055
        %1089 = vst.msk [vmem:[%s1070 + $0xd9] sm:$0xff] %vm553, %v1056
        %1090 = vst.msk [vmem:[%s1070 + $0xe1] sm:$0xff] %vm553, %v1057
        %1091 = vst.msk [vmem:[%s1070 + $0xf1] sm:$0xff] %vm553, %v1058
        %1092 = vst.msk [vmem:[%s1070 + $0xf9] sm:$0xff] %vm553, %v1059
        %1093 = vst.msk [vmem:[%s1070 + $0x109] sm:$0xff] %vm553, %v1060
        %1094 = vst.msk [vmem:[%s1070 + $0x111] sm:$0xff] %vm553, %v1061
        %1095 = vst.msk [vmem:[%s1070 + $0x121] sm:$0xff] %vm553, %v1062
        %1096 = vst.msk [vmem:[%s1070 + $0x129] sm:$0xff] %vm553, %v1063
        %1097 = vst.msk [vmem:[%s1070 + $0x139] sm:$0xff] %vm553, %v1064
        %1098 = vst.msk [vmem:[%s1070 + $0x141] sm:$0xff] %vm553, %v1065
        %1099 = vst.msk [vmem:[%s1070 + $0x151] sm:$0xff] %vm553, %v1066
        %1100 = vst.msk [vmem:[%s1070 + $0x159] sm:$0xff] %vm553, %v1067
        %1101 = vst.msk [vmem:[%s1070 + $0x169] sm:$0xff] %vm553, %v1068
        %1102 = vst.msk [vmem:[%s1070 + $0x171] sm:$0xff] %vm553, %v1069
        %v1103 = vld [vmem:[#allocation2] sm:$0xff]
        %v1104 = vld [vmem:[#allocation2 + $0x8] sm:$0xff]
        %v1105 = vld [vmem:[#allocation2 + $0x18] sm:$0xff]
        %v1106 = vld [vmem:[#allocation2 + $0x20] sm:$0xff]
        %v1107 = vld [vmem:[#allocation2 + $0x30] sm:$0xff]
        %v1108 = vld [vmem:[#allocation2 + $0x38] sm:$0xff]
        %v1109 = vld [vmem:[#allocation2 + $0x48] sm:$0xff]
        %v1110 = vld [vmem:[#allocation2 + $0x50] sm:$0xff]
        %v1111 = vld [vmem:[#allocation2 + $0x60] sm:$0xff]
        %v1112 = vld [vmem:[#allocation2 + $0x68] sm:$0xff]
        %v1113 = vld [vmem:[#allocation2 + $0x78] sm:$0xff]
        %v1114 = vld [vmem:[#allocation2 + $0x80] sm:$0xff]
        %v1115 = vld [vmem:[#allocation2 + $0x90] sm:$0xff]
        %v1116 = vld [vmem:[#allocation2 + $0x98] sm:$0xff]
        %v1117 = vld [vmem:[#allocation2 + $0xa8] sm:$0xff]
        %v1118 = vld [vmem:[#allocation2 + $0xb0] sm:$0xff]
        %v1119 = vld [vmem:[#allocation2 + $0xc0] sm:$0xff]
        %v1120 = vld [vmem:[#allocation2 + $0xc8] sm:$0xff]
        %v1121 = vld [vmem:[#allocation2 + $0xd8] sm:$0xff]
        %v1122 = vld [vmem:[#allocation2 + $0xe0] sm:$0xff]
        %v1123 = vld [vmem:[#allocation2 + $0xf0] sm:$0xff]
        %v1124 = vld [vmem:[#allocation2 + $0xf8] sm:$0xff]
        %v1125 = vld [vmem:[#allocation2 + $0x108] sm:$0xff]
        %v1126 = vld [vmem:[#allocation2 + $0x110] sm:$0xff]
        %v1127 = vld [vmem:[#allocation2 + $0x120] sm:$0xff]
        %v1128 = vld [vmem:[#allocation2 + $0x128] sm:$0xff]
        %v1129 = vld [vmem:[#allocation2 + $0x138] sm:$0xff]
        %v1130 = vld [vmem:[#allocation2 + $0x140] sm:$0xff]
        %v1131 = vld [vmem:[#allocation2 + $0x150] sm:$0xff]
        %v1132 = vld [vmem:[#allocation2 + $0x158] sm:$0xff]
        %v1133 = vld [vmem:[#allocation2 + $0x168] sm:$0xff]
        %v1134 = vld [vmem:[#allocation2 + $0x170] sm:$0xff]
        %1135 = vst.msk [vmem:[#allocation3] sm:$0xff] %vm553, %v1103
        %1136 = vst.msk [vmem:[#allocation3 + $0x10] sm:$0xff] %vm553, %v1104
        %1137 = vst.msk [vmem:[#allocation3 + $0x20] sm:$0xff] %vm553, %v1105
        %1138 = vst.msk [vmem:[#allocation3 + $0x30] sm:$0xff] %vm553, %v1106
        %1139 = vst.msk [vmem:[#allocation3 + $0x40] sm:$0xff] %vm553, %v1107
        %1140 = vst.msk [vmem:[#allocation3 + $0x50] sm:$0xff] %vm553, %v1108
        %1141 = vst.msk [vmem:[#allocation3 + $0x60] sm:$0xff] %vm553, %v1109
        %1142 = vst.msk [vmem:[#allocation3 + $0x70] sm:$0xff] %vm553, %v1110
        %1143 = vst.msk [vmem:[#allocation3 + $0x80] sm:$0xff] %vm553, %v1111
        %1144 = vst.msk [vmem:[#allocation3 + $0x90] sm:$0xff] %vm553, %v1112
        %1145 = vst.msk [vmem:[#allocation3 + $0xa0] sm:$0xff] %vm553, %v1113
        %1146 = vst.msk [vmem:[#allocation3 + $0xb0] sm:$0xff] %vm553, %v1114
        %1147 = vst.msk [vmem:[#allocation3 + $0xc0] sm:$0xff] %vm553, %v1115
        %1148 = vst.msk [vmem:[#allocation3 + $0xd0] sm:$0xff] %vm553, %v1116
        %1149 = vst.msk [vmem:[#allocation3 + $0xe0] sm:$0xff] %vm553, %v1117
        %1150 = vst.msk [vmem:[#allocation3 + $0xf0] sm:$0xff] %vm553, %v1118
        %1151 = vst.msk [vmem:[#allocation3 + $0x100] sm:$0xff] %vm553, %v1119
        %1152 = vst.msk [vmem:[#allocation3 + $0x110] sm:$0xff] %vm553, %v1120
        %1153 = vst.msk [vmem:[#allocation3 + $0x120] sm:$0xff] %vm553, %v1121
        %1154 = vst.msk [vmem:[#allocation3 + $0x130] sm:$0xff] %vm553, %v1122
        %1155 = vst.msk [vmem:[#allocation3 + $0x140] sm:$0xff] %vm553, %v1123
        %1156 = vst.msk [vmem:[#allocation3 + $0x150] sm:$0xff] %vm553, %v1124
        %1157 = vst.msk [vmem:[#allocation3 + $0x160] sm:$0xff] %vm553, %v1125
        %1158 = vst.msk [vmem:[#allocation3 + $0x170] sm:$0xff] %vm553, %v1126
        %1159 = vst.msk [vmem:[#allocation3 + $0x180] sm:$0xff] %vm553, %v1127
        %1160 = vst.msk [vmem:[#allocation3 + $0x190] sm:$0xff] %vm553, %v1128
        %1161 = vst.msk [vmem:[#allocation3 + $0x1a0] sm:$0xff] %vm553, %v1129
        %1162 = vst.msk [vmem:[#allocation3 + $0x1b0] sm:$0xff] %vm553, %v1130
        %1163 = vst.msk [vmem:[#allocation3 + $0x1c0] sm:$0xff] %vm553, %v1131
        %1164 = vst.msk [vmem:[#allocation3 + $0x1d0] sm:$0xff] %vm553, %v1132
        %1165 = vst.msk [vmem:[#allocation3 + $0x1e0] sm:$0xff] %vm553, %v1133
        %1166 = vst.msk [vmem:[#allocation3 + $0x1f0] sm:$0xff] %vm553, %v1134
        %v1167 = vld [vmem:[#allocation2 + $0x1] sm:$0xff]
        %v1168 = vld [vmem:[#allocation2 + $0x9] sm:$0xff]
        %v1169 = vld [vmem:[#allocation2 + $0x19] sm:$0xff]
        %v1170 = vld [vmem:[#allocation2 + $0x21] sm:$0xff]
        %v1171 = vld [vmem:[#allocation2 + $0x31] sm:$0xff]
        %v1172 = vld [vmem:[#allocation2 + $0x39] sm:$0xff]
        %v1173 = vld [vmem:[#allocation2 + $0x49] sm:$0xff]
        %v1174 = vld [vmem:[#allocation2 + $0x51] sm:$0xff]
        %v1175 = vld [vmem:[#allocation2 + $0x61] sm:$0xff]
        %v1176 = vld [vmem:[#allocation2 + $0x69] sm:$0xff]
        %v1177 = vld [vmem:[#allocation2 + $0x79] sm:$0xff]
        %v1178 = vld [vmem:[#allocation2 + $0x81] sm:$0xff]
        %v1179 = vld [vmem:[#allocation2 + $0x91] sm:$0xff]
        %v1180 = vld [vmem:[#allocation2 + $0x99] sm:$0xff]
        %v1181 = vld [vmem:[#allocation2 + $0xa9] sm:$0xff]
        %v1182 = vld [vmem:[#allocation2 + $0xb1] sm:$0xff]
        %v1183 = vld [vmem:[#allocation2 + $0xc1] sm:$0xff]
        %v1184 = vld [vmem:[#allocation2 + $0xc9] sm:$0xff]
        %v1185 = vld [vmem:[#allocation2 + $0xd9] sm:$0xff]
        %v1186 = vld [vmem:[#allocation2 + $0xe1] sm:$0xff]
        %v1187 = vld [vmem:[#allocation2 + $0xf1] sm:$0xff]
        %v1188 = vld [vmem:[#allocation2 + $0xf9] sm:$0xff]
        %v1189 = vld [vmem:[#allocation2 + $0x109] sm:$0xff]
        %v1190 = vld [vmem:[#allocation2 + $0x111] sm:$0xff]
        %v1191 = vld [vmem:[#allocation2 + $0x121] sm:$0xff]
        %v1192 = vld [vmem:[#allocation2 + $0x129] sm:$0xff]
        %v1193 = vld [vmem:[#allocation2 + $0x139] sm:$0xff]
        %v1194 = vld [vmem:[#allocation2 + $0x141] sm:$0xff]
        %v1195 = vld [vmem:[#allocation2 + $0x151] sm:$0xff]
        %v1196 = vld [vmem:[#allocation2 + $0x159] sm:$0xff]
        %v1197 = vld [vmem:[#allocation2 + $0x169] sm:$0xff]
        %v1198 = vld [vmem:[#allocation2 + $0x171] sm:$0xff]
        %1231 = vrot.lane.b32.xlu0 %v1167, 16
        %v1232 = vpop.permute.xlu0 %1231
        %1233 = vrot.lane.b32.xlu0 %v1168, 16
        %v1234 = vpop.permute.xlu0 %1233
        %1235 = vrot.lane.b32.xlu0 %v1169, 16
        %v1236 = vpop.permute.xlu0 %1235
        %1237 = vrot.lane.b32.xlu0 %v1170, 16
        %v1238 = vpop.permute.xlu0 %1237
        %1239 = vrot.lane.b32.xlu0 %v1171, 16
        %v1240 = vpop.permute.xlu0 %1239
        %1241 = vrot.lane.b32.xlu0 %v1172, 16
        %v1242 = vpop.permute.xlu0 %1241
        %1243 = vrot.lane.b32.xlu0 %v1173, 16
        %v1244 = vpop.permute.xlu0 %1243
        %1245 = vrot.lane.b32.xlu0 %v1174, 16
        %v1246 = vpop.permute.xlu0 %1245
        %1247 = vrot.lane.b32.xlu0 %v1175, 16
        %v1248 = vpop.permute.xlu0 %1247
        %1249 = vrot.lane.b32.xlu0 %v1176, 16
        %v1250 = vpop.permute.xlu0 %1249
        %1251 = vrot.lane.b32.xlu0 %v1177, 16
        %v1252 = vpop.permute.xlu0 %1251
        %1253 = vrot.lane.b32.xlu0 %v1178, 16
        %v1254 = vpop.permute.xlu0 %1253
        %1255 = vrot.lane.b32.xlu0 %v1179, 16
        %v1256 = vpop.permute.xlu0 %1255
        %1257 = vrot.lane.b32.xlu0 %v1180, 16
        %v1258 = vpop.permute.xlu0 %1257
        %1259 = vrot.lane.b32.xlu0 %v1181, 16
        %v1260 = vpop.permute.xlu0 %1259
        %1261 = vrot.lane.b32.xlu0 %v1182, 16
        %v1262 = vpop.permute.xlu0 %1261
        %1263 = vrot.lane.b32.xlu0 %v1183, 16
        %v1264 = vpop.permute.xlu0 %1263
        %1265 = vrot.lane.b32.xlu0 %v1184, 16
        %v1266 = vpop.permute.xlu0 %1265
        %1267 = vrot.lane.b32.xlu0 %v1185, 16
        %v1268 = vpop.permute.xlu0 %1267
        %1269 = vrot.lane.b32.xlu0 %v1186, 16
        %v1270 = vpop.permute.xlu0 %1269
        %1271 = vrot.lane.b32.xlu0 %v1187, 16
        %v1272 = vpop.permute.xlu0 %1271
        %1273 = vrot.lane.b32.xlu0 %v1188, 16
        %v1274 = vpop.permute.xlu0 %1273
        %1275 = vrot.lane.b32.xlu0 %v1189, 16
        %v1276 = vpop.permute.xlu0 %1275
        %1277 = vrot.lane.b32.xlu0 %v1190, 16
        %v1278 = vpop.permute.xlu0 %1277
        %1279 = vrot.lane.b32.xlu0 %v1191, 16
        %v1280 = vpop.permute.xlu0 %1279
        %1281 = vrot.lane.b32.xlu0 %v1192, 16
        %v1282 = vpop.permute.xlu0 %1281
        %1283 = vrot.lane.b32.xlu0 %v1193, 16
        %v1284 = vpop.permute.xlu0 %1283
        %1285 = vrot.lane.b32.xlu0 %v1194, 16
        %v1286 = vpop.permute.xlu0 %1285
        %1287 = vrot.lane.b32.xlu0 %v1195, 16
        %v1288 = vpop.permute.xlu0 %1287
        %1289 = vrot.lane.b32.xlu0 %v1196, 16
        %v1290 = vpop.permute.xlu0 %1289
        %1291 = vrot.lane.b32.xlu0 %v1197, 16
        %v1292 = vpop.permute.xlu0 %1291
        %1293 = vrot.lane.b32.xlu0 %v1198, 16
        %v1294 = vpop.permute.xlu0 %1293
        %vm1327 = vcmask 261248
        %1328 = vst.msk [vmem:[#allocation3] sm:$0xff] %vm1327, %v1232
        %1329 = vst.msk [vmem:[#allocation3 + $0x10] sm:$0xff] %vm1327, %v1234
        %1330 = vst.msk [vmem:[#allocation3 + $0x20] sm:$0xff] %vm1327, %v1236
        %1331 = vst.msk [vmem:[#allocation3 + $0x30] sm:$0xff] %vm1327, %v1238
        %1332 = vst.msk [vmem:[#allocation3 + $0x40] sm:$0xff] %vm1327, %v1240
        %1333 = vst.msk [vmem:[#allocation3 + $0x50] sm:$0xff] %vm1327, %v1242
        %1334 = vst.msk [vmem:[#allocation3 + $0x60] sm:$0xff] %vm1327, %v1244
        %1335 = vst.msk [vmem:[#allocation3 + $0x70] sm:$0xff] %vm1327, %v1246
        %1336 = vst.msk [vmem:[#allocation3 + $0x80] sm:$0xff] %vm1327, %v1248
        %1337 = vst.msk [vmem:[#allocation3 + $0x90] sm:$0xff] %vm1327, %v1250
        %1338 = vst.msk [vmem:[#allocation3 + $0xa0] sm:$0xff] %vm1327, %v1252
        %1339 = vst.msk [vmem:[#allocation3 + $0xb0] sm:$0xff] %vm1327, %v1254
        %1340 = vst.msk [vmem:[#allocation3 + $0xc0] sm:$0xff] %vm1327, %v1256
        %1341 = vst.msk [vmem:[#allocation3 + $0xd0] sm:$0xff] %vm1327, %v1258
        %1342 = vst.msk [vmem:[#allocation3 + $0xe0] sm:$0xff] %vm1327, %v1260
        %1343 = vst.msk [vmem:[#allocation3 + $0xf0] sm:$0xff] %vm1327, %v1262
        %1344 = vst.msk [vmem:[#allocation3 + $0x100] sm:$0xff] %vm1327, %v1264
        %1345 = vst.msk [vmem:[#allocation3 + $0x110] sm:$0xff] %vm1327, %v1266
        %1346 = vst.msk [vmem:[#allocation3 + $0x120] sm:$0xff] %vm1327, %v1268
        %1347 = vst.msk [vmem:[#allocation3 + $0x130] sm:$0xff] %vm1327, %v1270
        %1348 = vst.msk [vmem:[#allocation3 + $0x140] sm:$0xff] %vm1327, %v1272
        %1349 = vst.msk [vmem:[#allocation3 + $0x150] sm:$0xff] %vm1327, %v1274
        %1350 = vst.msk [vmem:[#allocation3 + $0x160] sm:$0xff] %vm1327, %v1276
        %1351 = vst.msk [vmem:[#allocation3 + $0x170] sm:$0xff] %vm1327, %v1278
        %1352 = vst.msk [vmem:[#allocation3 + $0x180] sm:$0xff] %vm1327, %v1280
        %1353 = vst.msk [vmem:[#allocation3 + $0x190] sm:$0xff] %vm1327, %v1282
        %1354 = vst.msk [vmem:[#allocation3 + $0x1a0] sm:$0xff] %vm1327, %v1284
        %1355 = vst.msk [vmem:[#allocation3 + $0x1b0] sm:$0xff] %vm1327, %v1286
        %1356 = vst.msk [vmem:[#allocation3 + $0x1c0] sm:$0xff] %vm1327, %v1288
        %1357 = vst.msk [vmem:[#allocation3 + $0x1d0] sm:$0xff] %vm1327, %v1290
        %1358 = vst.msk [vmem:[#allocation3 + $0x1e0] sm:$0xff] %vm1327, %v1292
        %1359 = vst.msk [vmem:[#allocation3 + $0x1f0] sm:$0xff] %vm1327, %v1294
        %v1360 = vld [vmem:[#allocation2 + $0x2] sm:$0xff]
        %v1361 = vld [vmem:[#allocation2 + $0xa] sm:$0xff]
        %v1362 = vld [vmem:[#allocation2 + $0x1a] sm:$0xff]
        %v1363 = vld [vmem:[#allocation2 + $0x22] sm:$0xff]
        %v1364 = vld [vmem:[#allocation2 + $0x32] sm:$0xff]
        %v1365 = vld [vmem:[#allocation2 + $0x3a] sm:$0xff]
        %v1366 = vld [vmem:[#allocation2 + $0x4a] sm:$0xff]
        %v1367 = vld [vmem:[#allocation2 + $0x52] sm:$0xff]
        %v1368 = vld [vmem:[#allocation2 + $0x62] sm:$0xff]
        %v1369 = vld [vmem:[#allocation2 + $0x6a] sm:$0xff]
        %v1370 = vld [vmem:[#allocation2 + $0x7a] sm:$0xff]
        %v1371 = vld [vmem:[#allocation2 + $0x82] sm:$0xff]
        %v1372 = vld [vmem:[#allocation2 + $0x92] sm:$0xff]
        %v1373 = vld [vmem:[#allocation2 + $0x9a] sm:$0xff]
        %v1374 = vld [vmem:[#allocation2 + $0xaa] sm:$0xff]
        %v1375 = vld [vmem:[#allocation2 + $0xb2] sm:$0xff]
        %v1376 = vld [vmem:[#allocation2 + $0xc2] sm:$0xff]
        %v1377 = vld [vmem:[#allocation2 + $0xca] sm:$0xff]
        %v1378 = vld [vmem:[#allocation2 + $0xda] sm:$0xff]
        %v1379 = vld [vmem:[#allocation2 + $0xe2] sm:$0xff]
        %v1380 = vld [vmem:[#allocation2 + $0xf2] sm:$0xff]
        %v1381 = vld [vmem:[#allocation2 + $0xfa] sm:$0xff]
        %v1382 = vld [vmem:[#allocation2 + $0x10a] sm:$0xff]
        %v1383 = vld [vmem:[#allocation2 + $0x112] sm:$0xff]
        %v1384 = vld [vmem:[#allocation2 + $0x122] sm:$0xff]
        %v1385 = vld [vmem:[#allocation2 + $0x12a] sm:$0xff]
        %v1386 = vld [vmem:[#allocation2 + $0x13a] sm:$0xff]
        %v1387 = vld [vmem:[#allocation2 + $0x142] sm:$0xff]
        %v1388 = vld [vmem:[#allocation2 + $0x152] sm:$0xff]
        %v1389 = vld [vmem:[#allocation2 + $0x15a] sm:$0xff]
        %v1390 = vld [vmem:[#allocation2 + $0x16a] sm:$0xff]
        %v1391 = vld [vmem:[#allocation2 + $0x172] sm:$0xff]
        %1424 = vrot.lane.b32.xlu0 %v1360, 32
        %v1425 = vpop.permute.xlu0 %1424
        %1426 = vrot.lane.b32.xlu0 %v1361, 32
        %v1427 = vpop.permute.xlu0 %1426
        %1428 = vrot.lane.b32.xlu0 %v1362, 32
        %v1429 = vpop.permute.xlu0 %1428
        %1430 = vrot.lane.b32.xlu0 %v1363, 32
        %v1431 = vpop.permute.xlu0 %1430
        %1432 = vrot.lane.b32.xlu0 %v1364, 32
        %v1433 = vpop.permute.xlu0 %1432
        %1434 = vrot.lane.b32.xlu0 %v1365, 32
        %v1435 = vpop.permute.xlu0 %1434
        %1436 = vrot.lane.b32.xlu0 %v1366, 32
        %v1437 = vpop.permute.xlu0 %1436
        %1438 = vrot.lane.b32.xlu0 %v1367, 32
        %v1439 = vpop.permute.xlu0 %1438
        %1440 = vrot.lane.b32.xlu0 %v1368, 32
        %v1441 = vpop.permute.xlu0 %1440
        %1442 = vrot.lane.b32.xlu0 %v1369, 32
        %v1443 = vpop.permute.xlu0 %1442
        %1444 = vrot.lane.b32.xlu0 %v1370, 32
        %v1445 = vpop.permute.xlu0 %1444
        %1446 = vrot.lane.b32.xlu0 %v1371, 32
        %v1447 = vpop.permute.xlu0 %1446
        %1448 = vrot.lane.b32.xlu0 %v1372, 32
        %v1449 = vpop.permute.xlu0 %1448
        %1450 = vrot.lane.b32.xlu0 %v1373, 32
        %v1451 = vpop.permute.xlu0 %1450
        %1452 = vrot.lane.b32.xlu0 %v1374, 32
        %v1453 = vpop.permute.xlu0 %1452
        %1454 = vrot.lane.b32.xlu0 %v1375, 32
        %v1455 = vpop.permute.xlu0 %1454
        %1456 = vrot.lane.b32.xlu0 %v1376, 32
        %v1457 = vpop.permute.xlu0 %1456
        %1458 = vrot.lane.b32.xlu0 %v1377, 32
        %v1459 = vpop.permute.xlu0 %1458
        %1460 = vrot.lane.b32.xlu0 %v1378, 32
        %v1461 = vpop.permute.xlu0 %1460
        %1462 = vrot.lane.b32.xlu0 %v1379, 32
        %v1463 = vpop.permute.xlu0 %1462
        %1464 = vrot.lane.b32.xlu0 %v1380, 32
        %v1465 = vpop.permute.xlu0 %1464
        %1466 = vrot.lane.b32.xlu0 %v1381, 32
        %v1467 = vpop.permute.xlu0 %1466
        %1468 = vrot.lane.b32.xlu0 %v1382, 32
        %v1469 = vpop.permute.xlu0 %1468
        %1470 = vrot.lane.b32.xlu0 %v1383, 32
        %v1471 = vpop.permute.xlu0 %1470
        %1472 = vrot.lane.b32.xlu0 %v1384, 32
        %v1473 = vpop.permute.xlu0 %1472
        %1474 = vrot.lane.b32.xlu0 %v1385, 32
        %v1475 = vpop.permute.xlu0 %1474
        %1476 = vrot.lane.b32.xlu0 %v1386, 32
        %v1477 = vpop.permute.xlu0 %1476
        %1478 = vrot.lane.b32.xlu0 %v1387, 32
        %v1479 = vpop.permute.xlu0 %1478
        %1480 = vrot.lane.b32.xlu0 %v1388, 32
        %v1481 = vpop.permute.xlu0 %1480
        %1482 = vrot.lane.b32.xlu0 %v1389, 32
        %v1483 = vpop.permute.xlu0 %1482
        %1484 = vrot.lane.b32.xlu0 %v1390, 32
        %v1485 = vpop.permute.xlu0 %1484
        %1486 = vrot.lane.b32.xlu0 %v1391, 32
        %v1487 = vpop.permute.xlu0 %1486
        %vm1520 = vcmask 392448
        %1521 = vst.msk [vmem:[#allocation3] sm:$0xff] %vm1520, %v1425
        %1522 = vst.msk [vmem:[#allocation3 + $0x10] sm:$0xff] %vm1520, %v1427
        %1523 = vst.msk [vmem:[#allocation3 + $0x20] sm:$0xff] %vm1520, %v1429
        %1524 = vst.msk [vmem:[#allocation3 + $0x30] sm:$0xff] %vm1520, %v1431
        %1525 = vst.msk [vmem:[#allocation3 + $0x40] sm:$0xff] %vm1520, %v1433
        %1526 = vst.msk [vmem:[#allocation3 + $0x50] sm:$0xff] %vm1520, %v1435
        %1527 = vst.msk [vmem:[#allocation3 + $0x60] sm:$0xff] %vm1520, %v1437
        %1528 = vst.msk [vmem:[#allocation3 + $0x70] sm:$0xff] %vm1520, %v1439
        %1529 = vst.msk [vmem:[#allocation3 + $0x80] sm:$0xff] %vm1520, %v1441
        %1530 = vst.msk [vmem:[#allocation3 + $0x90] sm:$0xff] %vm1520, %v1443
        %1531 = vst.msk [vmem:[#allocation3 + $0xa0] sm:$0xff] %vm1520, %v1445
        %1532 = vst.msk [vmem:[#allocation3 + $0xb0] sm:$0xff] %vm1520, %v1447
        %1533 = vst.msk [vmem:[#allocation3 + $0xc0] sm:$0xff] %vm1520, %v1449
        %1534 = vst.msk [vmem:[#allocation3 + $0xd0] sm:$0xff] %vm1520, %v1451
        %1535 = vst.msk [vmem:[#allocation3 + $0xe0] sm:$0xff] %vm1520, %v1453
        %1536 = vst.msk [vmem:[#allocation3 + $0xf0] sm:$0xff] %vm1520, %v1455
        %1537 = vst.msk [vmem:[#allocation3 + $0x100] sm:$0xff] %vm1520, %v1457
        %1538 = vst.msk [vmem:[#allocation3 + $0x110] sm:$0xff] %vm1520, %v1459
        %1539 = vst.msk [vmem:[#allocation3 + $0x120] sm:$0xff] %vm1520, %v1461
        %1540 = vst.msk [vmem:[#allocation3 + $0x130] sm:$0xff] %vm1520, %v1463
        %1541 = vst.msk [vmem:[#allocation3 + $0x140] sm:$0xff] %vm1520, %v1465
        %1542 = vst.msk [vmem:[#allocation3 + $0x150] sm:$0xff] %vm1520, %v1467
        %1543 = vst.msk [vmem:[#allocation3 + $0x160] sm:$0xff] %vm1520, %v1469
        %1544 = vst.msk [vmem:[#allocation3 + $0x170] sm:$0xff] %vm1520, %v1471
        %1545 = vst.msk [vmem:[#allocation3 + $0x180] sm:$0xff] %vm1520, %v1473
        %1546 = vst.msk [vmem:[#allocation3 + $0x190] sm:$0xff] %vm1520, %v1475
        %1547 = vst.msk [vmem:[#allocation3 + $0x1a0] sm:$0xff] %vm1520, %v1477
        %1548 = vst.msk [vmem:[#allocation3 + $0x1b0] sm:$0xff] %vm1520, %v1479
        %1549 = vst.msk [vmem:[#allocation3 + $0x1c0] sm:$0xff] %vm1520, %v1481
        %1550 = vst.msk [vmem:[#allocation3 + $0x1d0] sm:$0xff] %vm1520, %v1483
        %1551 = vst.msk [vmem:[#allocation3 + $0x1e0] sm:$0xff] %vm1520, %v1485
        %1552 = vst.msk [vmem:[#allocation3 + $0x1f0] sm:$0xff] %vm1520, %v1487
        %v1553 = vld [vmem:[%s1070] sm:$0xff]
        %v1554 = vld [vmem:[%s1070 + $0x8] sm:$0xff]
        %v1555 = vld [vmem:[%s1070 + $0x18] sm:$0xff]
        %v1556 = vld [vmem:[%s1070 + $0x20] sm:$0xff]
        %v1557 = vld [vmem:[%s1070 + $0x30] sm:$0xff]
        %v1558 = vld [vmem:[%s1070 + $0x38] sm:$0xff]
        %v1559 = vld [vmem:[%s1070 + $0x48] sm:$0xff]
        %v1560 = vld [vmem:[%s1070 + $0x50] sm:$0xff]
        %v1561 = vld [vmem:[%s1070 + $0x60] sm:$0xff]
        %v1562 = vld [vmem:[%s1070 + $0x68] sm:$0xff]
        %v1563 = vld [vmem:[%s1070 + $0x78] sm:$0xff]
        %v1564 = vld [vmem:[%s1070 + $0x80] sm:$0xff]
        %v1565 = vld [vmem:[%s1070 + $0x90] sm:$0xff]
        %v1566 = vld [vmem:[%s1070 + $0x98] sm:$0xff]
        %v1567 = vld [vmem:[%s1070 + $0xa8] sm:$0xff]
        %v1568 = vld [vmem:[%s1070 + $0xb0] sm:$0xff]
        %v1569 = vld [vmem:[%s1070 + $0xc0] sm:$0xff]
        %v1570 = vld [vmem:[%s1070 + $0xc8] sm:$0xff]
        %v1571 = vld [vmem:[%s1070 + $0xd8] sm:$0xff]
        %v1572 = vld [vmem:[%s1070 + $0xe0] sm:$0xff]
        %v1573 = vld [vmem:[%s1070 + $0xf0] sm:$0xff]
        %v1574 = vld [vmem:[%s1070 + $0xf8] sm:$0xff]
        %v1575 = vld [vmem:[%s1070 + $0x108] sm:$0xff]
        %v1576 = vld [vmem:[%s1070 + $0x110] sm:$0xff]
        %v1577 = vld [vmem:[%s1070 + $0x120] sm:$0xff]
        %v1578 = vld [vmem:[%s1070 + $0x128] sm:$0xff]
        %v1579 = vld [vmem:[%s1070 + $0x138] sm:$0xff]
        %v1580 = vld [vmem:[%s1070 + $0x140] sm:$0xff]
        %v1581 = vld [vmem:[%s1070 + $0x150] sm:$0xff]
        %v1582 = vld [vmem:[%s1070 + $0x158] sm:$0xff]
        %v1583 = vld [vmem:[%s1070 + $0x168] sm:$0xff]
        %v1584 = vld [vmem:[%s1070 + $0x170] sm:$0xff]
        %1617 = vrot.lane.b32.xlu0 %v1553, 48
        %v1618 = vpop.permute.xlu0 %1617
        %1619 = vrot.lane.b32.xlu0 %v1554, 48
        %v1620 = vpop.permute.xlu0 %1619
        %1621 = vrot.lane.b32.xlu0 %v1555, 48
        %v1622 = vpop.permute.xlu0 %1621
        %1623 = vrot.lane.b32.xlu0 %v1556, 48
        %v1624 = vpop.permute.xlu0 %1623
        %1625 = vrot.lane.b32.xlu0 %v1557, 48
        %v1626 = vpop.permute.xlu0 %1625
        %1627 = vrot.lane.b32.xlu0 %v1558, 48
        %v1628 = vpop.permute.xlu0 %1627
        %1629 = vrot.lane.b32.xlu0 %v1559, 48
        %v1630 = vpop.permute.xlu0 %1629
        %1631 = vrot.lane.b32.xlu0 %v1560, 48
        %v1632 = vpop.permute.xlu0 %1631
        %1633 = vrot.lane.b32.xlu0 %v1561, 48
        %v1634 = vpop.permute.xlu0 %1633
        %1635 = vrot.lane.b32.xlu0 %v1562, 48
        %v1636 = vpop.permute.xlu0 %1635
        %1637 = vrot.lane.b32.xlu0 %v1563, 48
        %v1638 = vpop.permute.xlu0 %1637
        %1639 = vrot.lane.b32.xlu0 %v1564, 48
        %v1640 = vpop.permute.xlu0 %1639
        %1641 = vrot.lane.b32.xlu0 %v1565, 48
        %v1642 = vpop.permute.xlu0 %1641
        %1643 = vrot.lane.b32.xlu0 %v1566, 48
        %v1644 = vpop.permute.xlu0 %1643
        %1645 = vrot.lane.b32.xlu0 %v1567, 48
        %v1646 = vpop.permute.xlu0 %1645
        %1647 = vrot.lane.b32.xlu0 %v1568, 48
        %v1648 = vpop.permute.xlu0 %1647
        %1649 = vrot.lane.b32.xlu0 %v1569, 48
        %v1650 = vpop.permute.xlu0 %1649
        %1651 = vrot.lane.b32.xlu0 %v1570, 48
        %v1652 = vpop.permute.xlu0 %1651
        %1653 = vrot.lane.b32.xlu0 %v1571, 48
        %v1654 = vpop.permute.xlu0 %1653
        %1655 = vrot.lane.b32.xlu0 %v1572, 48
        %v1656 = vpop.permute.xlu0 %1655
        %1657 = vrot.lane.b32.xlu0 %v1573, 48
        %v1658 = vpop.permute.xlu0 %1657
        %1659 = vrot.lane.b32.xlu0 %v1574, 48
        %v1660 = vpop.permute.xlu0 %1659
        %1661 = vrot.lane.b32.xlu0 %v1575, 48
        %v1662 = vpop.permute.xlu0 %1661
        %1663 = vrot.lane.b32.xlu0 %v1576, 48
        %v1664 = vpop.permute.xlu0 %1663
        %1665 = vrot.lane.b32.xlu0 %v1577, 48
        %v1666 = vpop.permute.xlu0 %1665
        %1667 = vrot.lane.b32.xlu0 %v1578, 48
        %v1668 = vpop.permute.xlu0 %1667
        %1669 = vrot.lane.b32.xlu0 %v1579, 48
        %v1670 = vpop.permute.xlu0 %1669
        %1671 = vrot.lane.b32.xlu0 %v1580, 48
        %v1672 = vpop.permute.xlu0 %1671
        %1673 = vrot.lane.b32.xlu0 %v1581, 48
        %v1674 = vpop.permute.xlu0 %1673
        %1675 = vrot.lane.b32.xlu0 %v1582, 48
        %v1676 = vpop.permute.xlu0 %1675
        %1677 = vrot.lane.b32.xlu0 %v1583, 48
        %v1678 = vpop.permute.xlu0 %1677
        %1679 = vrot.lane.b32.xlu0 %v1584, 48
        %v1680 = vpop.permute.xlu0 %1679
        %vm1713 = vcmask 523648
        %1714 = vst.msk [vmem:[#allocation3] sm:$0xff] %vm1713, %v1618
        %1715 = vst.msk [vmem:[#allocation3 + $0x10] sm:$0xff] %vm1713, %v1620
        %1716 = vst.msk [vmem:[#allocation3 + $0x20] sm:$0xff] %vm1713, %v1622
        %1717 = vst.msk [vmem:[#allocation3 + $0x30] sm:$0xff] %vm1713, %v1624
        %1718 = vst.msk [vmem:[#allocation3 + $0x40] sm:$0xff] %vm1713, %v1626
        %1719 = vst.msk [vmem:[#allocation3 + $0x50] sm:$0xff] %vm1713, %v1628
        %1720 = vst.msk [vmem:[#allocation3 + $0x60] sm:$0xff] %vm1713, %v1630
        %1721 = vst.msk [vmem:[#allocation3 + $0x70] sm:$0xff] %vm1713, %v1632
        %1722 = vst.msk [vmem:[#allocation3 + $0x80] sm:$0xff] %vm1713, %v1634
        %1723 = vst.msk [vmem:[#allocation3 + $0x90] sm:$0xff] %vm1713, %v1636
        %1724 = vst.msk [vmem:[#allocation3 + $0xa0] sm:$0xff] %vm1713, %v1638
        %1725 = vst.msk [vmem:[#allocation3 + $0xb0] sm:$0xff] %vm1713, %v1640
        %1726 = vst.msk [vmem:[#allocation3 + $0xc0] sm:$0xff] %vm1713, %v1642
        %1727 = vst.msk [vmem:[#allocation3 + $0xd0] sm:$0xff] %vm1713, %v1644
        %1728 = vst.msk [vmem:[#allocation3 + $0xe0] sm:$0xff] %vm1713, %v1646
        %1729 = vst.msk [vmem:[#allocation3 + $0xf0] sm:$0xff] %vm1713, %v1648
        %1730 = vst.msk [vmem:[#allocation3 + $0x100] sm:$0xff] %vm1713, %v1650
        %1731 = vst.msk [vmem:[#allocation3 + $0x110] sm:$0xff] %vm1713, %v1652
        %1732 = vst.msk [vmem:[#allocation3 + $0x120] sm:$0xff] %vm1713, %v1654
        %1733 = vst.msk [vmem:[#allocation3 + $0x130] sm:$0xff] %vm1713, %v1656
        %1734 = vst.msk [vmem:[#allocation3 + $0x140] sm:$0xff] %vm1713, %v1658
        %1735 = vst.msk [vmem:[#allocation3 + $0x150] sm:$0xff] %vm1713, %v1660
        %1736 = vst.msk [vmem:[#allocation3 + $0x160] sm:$0xff] %vm1713, %v1662
        %1737 = vst.msk [vmem:[#allocation3 + $0x170] sm:$0xff] %vm1713, %v1664
        %1738 = vst.msk [vmem:[#allocation3 + $0x180] sm:$0xff] %vm1713, %v1666
        %1739 = vst.msk [vmem:[#allocation3 + $0x190] sm:$0xff] %vm1713, %v1668
        %1740 = vst.msk [vmem:[#allocation3 + $0x1a0] sm:$0xff] %vm1713, %v1670
        %1741 = vst.msk [vmem:[#allocation3 + $0x1b0] sm:$0xff] %vm1713, %v1672
        %1742 = vst.msk [vmem:[#allocation3 + $0x1c0] sm:$0xff] %vm1713, %v1674
        %1743 = vst.msk [vmem:[#allocation3 + $0x1d0] sm:$0xff] %vm1713, %v1676
        %1744 = vst.msk [vmem:[#allocation3 + $0x1e0] sm:$0xff] %vm1713, %v1678
        %1745 = vst.msk [vmem:[#allocation3 + $0x1f0] sm:$0xff] %vm1713, %v1680
        %v1746 = vld [vmem:[%s1070 + $0x1] sm:$0xff]
        %v1747 = vld [vmem:[%s1070 + $0x9] sm:$0xff]
        %v1748 = vld [vmem:[%s1070 + $0x19] sm:$0xff]
        %v1749 = vld [vmem:[%s1070 + $0x21] sm:$0xff]
        %v1750 = vld [vmem:[%s1070 + $0x31] sm:$0xff]
        %v1751 = vld [vmem:[%s1070 + $0x39] sm:$0xff]
        %v1752 = vld [vmem:[%s1070 + $0x49] sm:$0xff]
        %v1753 = vld [vmem:[%s1070 + $0x51] sm:$0xff]
        %v1754 = vld [vmem:[%s1070 + $0x61] sm:$0xff]
        %v1755 = vld [vmem:[%s1070 + $0x69] sm:$0xff]
        %v1756 = vld [vmem:[%s1070 + $0x79] sm:$0xff]
        %v1757 = vld [vmem:[%s1070 + $0x81] sm:$0xff]
        %v1758 = vld [vmem:[%s1070 + $0x91] sm:$0xff]
        %v1759 = vld [vmem:[%s1070 + $0x99] sm:$0xff]
        %v1760 = vld [vmem:[%s1070 + $0xa9] sm:$0xff]
        %v1761 = vld [vmem:[%s1070 + $0xb1] sm:$0xff]
        %v1762 = vld [vmem:[%s1070 + $0xc1] sm:$0xff]
        %v1763 = vld [vmem:[%s1070 + $0xc9] sm:$0xff]
        %v1764 = vld [vmem:[%s1070 + $0xd9] sm:$0xff]
        %v1765 = vld [vmem:[%s1070 + $0xe1] sm:$0xff]
        %v1766 = vld [vmem:[%s1070 + $0xf1] sm:$0xff]
        %v1767 = vld [vmem:[%s1070 + $0xf9] sm:$0xff]
        %v1768 = vld [vmem:[%s1070 + $0x109] sm:$0xff]
        %v1769 = vld [vmem:[%s1070 + $0x111] sm:$0xff]
        %v1770 = vld [vmem:[%s1070 + $0x121] sm:$0xff]
        %v1771 = vld [vmem:[%s1070 + $0x129] sm:$0xff]
        %v1772 = vld [vmem:[%s1070 + $0x139] sm:$0xff]
        %v1773 = vld [vmem:[%s1070 + $0x141] sm:$0xff]
        %v1774 = vld [vmem:[%s1070 + $0x151] sm:$0xff]
        %v1775 = vld [vmem:[%s1070 + $0x159] sm:$0xff]
        %v1776 = vld [vmem:[%s1070 + $0x169] sm:$0xff]
        %v1777 = vld [vmem:[%s1070 + $0x171] sm:$0xff]
        %1810 = vrot.lane.b32.xlu0 %v1746, 64
        %v1811 = vpop.permute.xlu0 %1810
        %1812 = vrot.lane.b32.xlu0 %v1747, 64
        %v1813 = vpop.permute.xlu0 %1812
        %1814 = vrot.lane.b32.xlu0 %v1748, 64
        %v1815 = vpop.permute.xlu0 %1814
        %1816 = vrot.lane.b32.xlu0 %v1749, 64
        %v1817 = vpop.permute.xlu0 %1816
        %1818 = vrot.lane.b32.xlu0 %v1750, 64
        %v1819 = vpop.permute.xlu0 %1818
        %1820 = vrot.lane.b32.xlu0 %v1751, 64
        %v1821 = vpop.permute.xlu0 %1820
        %1822 = vrot.lane.b32.xlu0 %v1752, 64
        %v1823 = vpop.permute.xlu0 %1822
        %1824 = vrot.lane.b32.xlu0 %v1753, 64
        %v1825 = vpop.permute.xlu0 %1824
        %1826 = vrot.lane.b32.xlu0 %v1754, 64
        %v1827 = vpop.permute.xlu0 %1826
        %1828 = vrot.lane.b32.xlu0 %v1755, 64
        %v1829 = vpop.permute.xlu0 %1828
        %1830 = vrot.lane.b32.xlu0 %v1756, 64
        %v1831 = vpop.permute.xlu0 %1830
        %1832 = vrot.lane.b32.xlu0 %v1757, 64
        %v1833 = vpop.permute.xlu0 %1832
        %1834 = vrot.lane.b32.xlu0 %v1758, 64
        %v1835 = vpop.permute.xlu0 %1834
        %1836 = vrot.lane.b32.xlu0 %v1759, 64
        %v1837 = vpop.permute.xlu0 %1836
        %1838 = vrot.lane.b32.xlu0 %v1760, 64
        %v1839 = vpop.permute.xlu0 %1838
        %1840 = vrot.lane.b32.xlu0 %v1761, 64
        %v1841 = vpop.permute.xlu0 %1840
        %1842 = vrot.lane.b32.xlu0 %v1762, 64
        %v1843 = vpop.permute.xlu0 %1842
        %1844 = vrot.lane.b32.xlu0 %v1763, 64
        %v1845 = vpop.permute.xlu0 %1844
        %1846 = vrot.lane.b32.xlu0 %v1764, 64
        %v1847 = vpop.permute.xlu0 %1846
        %1848 = vrot.lane.b32.xlu0 %v1765, 64
        %v1849 = vpop.permute.xlu0 %1848
        %1850 = vrot.lane.b32.xlu0 %v1766, 64
        %v1851 = vpop.permute.xlu0 %1850
        %1852 = vrot.lane.b32.xlu0 %v1767, 64
        %v1853 = vpop.permute.xlu0 %1852
        %1854 = vrot.lane.b32.xlu0 %v1768, 64
        %v1855 = vpop.permute.xlu0 %1854
        %1856 = vrot.lane.b32.xlu0 %v1769, 64
        %v1857 = vpop.permute.xlu0 %1856
        %1858 = vrot.lane.b32.xlu0 %v1770, 64
        %v1859 = vpop.permute.xlu0 %1858
        %1860 = vrot.lane.b32.xlu0 %v1771, 64
        %v1861 = vpop.permute.xlu0 %1860
        %1862 = vrot.lane.b32.xlu0 %v1772, 64
        %v1863 = vpop.permute.xlu0 %1862
        %1864 = vrot.lane.b32.xlu0 %v1773, 64
        %v1865 = vpop.permute.xlu0 %1864
        %1866 = vrot.lane.b32.xlu0 %v1774, 64
        %v1867 = vpop.permute.xlu0 %1866
        %1868 = vrot.lane.b32.xlu0 %v1775, 64
        %v1869 = vpop.permute.xlu0 %1868
        %1870 = vrot.lane.b32.xlu0 %v1776, 64
        %v1871 = vpop.permute.xlu0 %1870
        %1872 = vrot.lane.b32.xlu0 %v1777, 64
        %v1873 = vpop.permute.xlu0 %1872
        %vm1906 = vcmask 654848
        %1907 = vst.msk [vmem:[#allocation3] sm:$0xff] %vm1906, %v1811
        %1908 = vst.msk [vmem:[#allocation3 + $0x10] sm:$0xff] %vm1906, %v1813
        %1909 = vst.msk [vmem:[#allocation3 + $0x20] sm:$0xff] %vm1906, %v1815
        %1910 = vst.msk [vmem:[#allocation3 + $0x30] sm:$0xff] %vm1906, %v1817
        %1911 = vst.msk [vmem:[#allocation3 + $0x40] sm:$0xff] %vm1906, %v1819
        %1912 = vst.msk [vmem:[#allocation3 + $0x50] sm:$0xff] %vm1906, %v1821
        %1913 = vst.msk [vmem:[#allocation3 + $0x60] sm:$0xff] %vm1906, %v1823
        %1914 = vst.msk [vmem:[#allocation3 + $0x70] sm:$0xff] %vm1906, %v1825
        %1915 = vst.msk [vmem:[#allocation3 + $0x80] sm:$0xff] %vm1906, %v1827
        %1916 = vst.msk [vmem:[#allocation3 + $0x90] sm:$0xff] %vm1906, %v1829
        %1917 = vst.msk [vmem:[#allocation3 + $0xa0] sm:$0xff] %vm1906, %v1831
        %1918 = vst.msk [vmem:[#allocation3 + $0xb0] sm:$0xff] %vm1906, %v1833
        %1919 = vst.msk [vmem:[#allocation3 + $0xc0] sm:$0xff] %vm1906, %v1835
        %1920 = vst.msk [vmem:[#allocation3 + $0xd0] sm:$0xff] %vm1906, %v1837
        %1921 = vst.msk [vmem:[#allocation3 + $0xe0] sm:$0xff] %vm1906, %v1839
        %1922 = vst.msk [vmem:[#allocation3 + $0xf0] sm:$0xff] %vm1906, %v1841
        %1923 = vst.msk [vmem:[#allocation3 + $0x100] sm:$0xff] %vm1906, %v1843
        %1924 = vst.msk [vmem:[#allocation3 + $0x110] sm:$0xff] %vm1906, %v1845
        %1925 = vst.msk [vmem:[#allocation3 + $0x120] sm:$0xff] %vm1906, %v1847
        %1926 = vst.msk [vmem:[#allocation3 + $0x130] sm:$0xff] %vm1906, %v1849
        %1927 = vst.msk [vmem:[#allocation3 + $0x140] sm:$0xff] %vm1906, %v1851
        %1928 = vst.msk [vmem:[#allocation3 + $0x150] sm:$0xff] %vm1906, %v1853
        %1929 = vst.msk [vmem:[#allocation3 + $0x160] sm:$0xff] %vm1906, %v1855
        %1930 = vst.msk [vmem:[#allocation3 + $0x170] sm:$0xff] %vm1906, %v1857
        %1931 = vst.msk [vmem:[#allocation3 + $0x180] sm:$0xff] %vm1906, %v1859
        %1932 = vst.msk [vmem:[#allocation3 + $0x190] sm:$0xff] %vm1906, %v1861
        %1933 = vst.msk [vmem:[#allocation3 + $0x1a0] sm:$0xff] %vm1906, %v1863
        %1934 = vst.msk [vmem:[#allocation3 + $0x1b0] sm:$0xff] %vm1906, %v1865
        %1935 = vst.msk [vmem:[#allocation3 + $0x1c0] sm:$0xff] %vm1906, %v1867
        %1936 = vst.msk [vmem:[#allocation3 + $0x1d0] sm:$0xff] %vm1906, %v1869
        %1937 = vst.msk [vmem:[#allocation3 + $0x1e0] sm:$0xff] %vm1906, %v1871
        %1938 = vst.msk [vmem:[#allocation3 + $0x1f0] sm:$0xff] %vm1906, %v1873
        %v1939 = vld [vmem:[%s1070 + $0x2] sm:$0xff]
        %v1940 = vld [vmem:[%s1070 + $0xa] sm:$0xff]
        %v1941 = vld [vmem:[%s1070 + $0x1a] sm:$0xff]
        %v1942 = vld [vmem:[%s1070 + $0x22] sm:$0xff]
        %v1943 = vld [vmem:[%s1070 + $0x32] sm:$0xff]
        %v1944 = vld [vmem:[%s1070 + $0x3a] sm:$0xff]
        %v1945 = vld [vmem:[%s1070 + $0x4a] sm:$0xff]
        %v1946 = vld [vmem:[%s1070 + $0x52] sm:$0xff]
        %v1947 = vld [vmem:[%s1070 + $0x62] sm:$0xff]
        %v1948 = vld [vmem:[%s1070 + $0x6a] sm:$0xff]
        %v1949 = vld [vmem:[%s1070 + $0x7a] sm:$0xff]
        %v1950 = vld [vmem:[%s1070 + $0x82] sm:$0xff]
        %v1951 = vld [vmem:[%s1070 + $0x92] sm:$0xff]
        %v1952 = vld [vmem:[%s1070 + $0x9a] sm:$0xff]
        %v1953 = vld [vmem:[%s1070 + $0xaa] sm:$0xff]
        %v1954 = vld [vmem:[%s1070 + $0xb2] sm:$0xff]
        %v1955 = vld [vmem:[%s1070 + $0xc2] sm:$0xff]
        %v1956 = vld [vmem:[%s1070 + $0xca] sm:$0xff]
        %v1957 = vld [vmem:[%s1070 + $0xda] sm:$0xff]
        %v1958 = vld [vmem:[%s1070 + $0xe2] sm:$0xff]
        %v1959 = vld [vmem:[%s1070 + $0xf2] sm:$0xff]
        %v1960 = vld [vmem:[%s1070 + $0xfa] sm:$0xff]
        %v1961 = vld [vmem:[%s1070 + $0x10a] sm:$0xff]
        %v1962 = vld [vmem:[%s1070 + $0x112] sm:$0xff]
        %v1963 = vld [vmem:[%s1070 + $0x122] sm:$0xff]
        %v1964 = vld [vmem:[%s1070 + $0x12a] sm:$0xff]
        %v1965 = vld [vmem:[%s1070 + $0x13a] sm:$0xff]
        %v1966 = vld [vmem:[%s1070 + $0x142] sm:$0xff]
        %v1967 = vld [vmem:[%s1070 + $0x152] sm:$0xff]
        %v1968 = vld [vmem:[%s1070 + $0x15a] sm:$0xff]
        %v1969 = vld [vmem:[%s1070 + $0x16a] sm:$0xff]
        %v1970 = vld [vmem:[%s1070 + $0x172] sm:$0xff]
        %2003 = vrot.lane.b32.xlu0 %v1939, 80
        %v2004 = vpop.permute.xlu0 %2003
        %2005 = vrot.lane.b32.xlu0 %v1940, 80
        %v2006 = vpop.permute.xlu0 %2005
        %2007 = vrot.lane.b32.xlu0 %v1941, 80
        %v2008 = vpop.permute.xlu0 %2007
        %2009 = vrot.lane.b32.xlu0 %v1942, 80
        %v2010 = vpop.permute.xlu0 %2009
        %2011 = vrot.lane.b32.xlu0 %v1943, 80
        %v2012 = vpop.permute.xlu0 %2011
        %2013 = vrot.lane.b32.xlu0 %v1944, 80
        %v2014 = vpop.permute.xlu0 %2013
        %2015 = vrot.lane.b32.xlu0 %v1945, 80
        %v2016 = vpop.permute.xlu0 %2015
        %2017 = vrot.lane.b32.xlu0 %v1946, 80
        %v2018 = vpop.permute.xlu0 %2017
        %2019 = vrot.lane.b32.xlu0 %v1947, 80
        %v2020 = vpop.permute.xlu0 %2019
        %2021 = vrot.lane.b32.xlu0 %v1948, 80
        %v2022 = vpop.permute.xlu0 %2021
        %2023 = vrot.lane.b32.xlu0 %v1949, 80
        %v2024 = vpop.permute.xlu0 %2023
        %2025 = vrot.lane.b32.xlu0 %v1950, 80
        %v2026 = vpop.permute.xlu0 %2025
        %2027 = vrot.lane.b32.xlu0 %v1951, 80
        %v2028 = vpop.permute.xlu0 %2027
        %2029 = vrot.lane.b32.xlu0 %v1952, 80
        %v2030 = vpop.permute.xlu0 %2029
        %2031 = vrot.lane.b32.xlu0 %v1953, 80
        %v2032 = vpop.permute.xlu0 %2031
        %2033 = vrot.lane.b32.xlu0 %v1954, 80
        %v2034 = vpop.permute.xlu0 %2033
        %2035 = vrot.lane.b32.xlu0 %v1955, 80
        %v2036 = vpop.permute.xlu0 %2035
        %2037 = vrot.lane.b32.xlu0 %v1956, 80
        %v2038 = vpop.permute.xlu0 %2037
        %2039 = vrot.lane.b32.xlu0 %v1957, 80
        %v2040 = vpop.permute.xlu0 %2039
        %2041 = vrot.lane.b32.xlu0 %v1958, 80
        %v2042 = vpop.permute.xlu0 %2041
        %2043 = vrot.lane.b32.xlu0 %v1959, 80
        %v2044 = vpop.permute.xlu0 %2043
        %2045 = vrot.lane.b32.xlu0 %v1960, 80
        %v2046 = vpop.permute.xlu0 %2045
        %2047 = vrot.lane.b32.xlu0 %v1961, 80
        %v2048 = vpop.permute.xlu0 %2047
        %2049 = vrot.lane.b32.xlu0 %v1962, 80
        %v2050 = vpop.permute.xlu0 %2049
        %2051 = vrot.lane.b32.xlu0 %v1963, 80
        %v2052 = vpop.permute.xlu0 %2051
        %2053 = vrot.lane.b32.xlu0 %v1964, 80
        %v2054 = vpop.permute.xlu0 %2053
        %2055 = vrot.lane.b32.xlu0 %v1965, 80
        %v2056 = vpop.permute.xlu0 %2055
        %2057 = vrot.lane.b32.xlu0 %v1966, 80
        %v2058 = vpop.permute.xlu0 %2057
        %2059 = vrot.lane.b32.xlu0 %v1967, 80
        %v2060 = vpop.permute.xlu0 %2059
        %2061 = vrot.lane.b32.xlu0 %v1968, 80
        %v2062 = vpop.permute.xlu0 %2061
        %2063 = vrot.lane.b32.xlu0 %v1969, 80
        %v2064 = vpop.permute.xlu0 %2063
        %2065 = vrot.lane.b32.xlu0 %v1970, 80
        %v2066 = vpop.permute.xlu0 %2065
        %vm2099 = vcmask 786048
        %2100 = vst.msk [vmem:[#allocation3] sm:$0xff] %vm2099, %v2004
        %2101 = vst.msk [vmem:[#allocation3 + $0x10] sm:$0xff] %vm2099, %v2006
        %2102 = vst.msk [vmem:[#allocation3 + $0x20] sm:$0xff] %vm2099, %v2008
        %2103 = vst.msk [vmem:[#allocation3 + $0x30] sm:$0xff] %vm2099, %v2010
        %2104 = vst.msk [vmem:[#allocation3 + $0x40] sm:$0xff] %vm2099, %v2012
        %2105 = vst.msk [vmem:[#allocation3 + $0x50] sm:$0xff] %vm2099, %v2014
        %2106 = vst.msk [vmem:[#allocation3 + $0x60] sm:$0xff] %vm2099, %v2016
        %2107 = vst.msk [vmem:[#allocation3 + $0x70] sm:$0xff] %vm2099, %v2018
        %2108 = vst.msk [vmem:[#allocation3 + $0x80] sm:$0xff] %vm2099, %v2020
        %2109 = vst.msk [vmem:[#allocation3 + $0x90] sm:$0xff] %vm2099, %v2022
        %2110 = vst.msk [vmem:[#allocation3 + $0xa0] sm:$0xff] %vm2099, %v2024
        %2111 = vst.msk [vmem:[#allocation3 + $0xb0] sm:$0xff] %vm2099, %v2026
        %2112 = vst.msk [vmem:[#allocation3 + $0xc0] sm:$0xff] %vm2099, %v2028
        %2113 = vst.msk [vmem:[#allocation3 + $0xd0] sm:$0xff] %vm2099, %v2030
        %2114 = vst.msk [vmem:[#allocation3 + $0xe0] sm:$0xff] %vm2099, %v2032
        %2115 = vst.msk [vmem:[#allocation3 + $0xf0] sm:$0xff] %vm2099, %v2034
        %2116 = vst.msk [vmem:[#allocation3 + $0x100] sm:$0xff] %vm2099, %v2036
        %2117 = vst.msk [vmem:[#allocation3 + $0x110] sm:$0xff] %vm2099, %v2038
        %2118 = vst.msk [vmem:[#allocation3 + $0x120] sm:$0xff] %vm2099, %v2040
        %2119 = vst.msk [vmem:[#allocation3 + $0x130] sm:$0xff] %vm2099, %v2042
        %2120 = vst.msk [vmem:[#allocation3 + $0x140] sm:$0xff] %vm2099, %v2044
        %2121 = vst.msk [vmem:[#allocation3 + $0x150] sm:$0xff] %vm2099, %v2046
        %2122 = vst.msk [vmem:[#allocation3 + $0x160] sm:$0xff] %vm2099, %v2048
        %2123 = vst.msk [vmem:[#allocation3 + $0x170] sm:$0xff] %vm2099, %v2050
        %2124 = vst.msk [vmem:[#allocation3 + $0x180] sm:$0xff] %vm2099, %v2052
        %2125 = vst.msk [vmem:[#allocation3 + $0x190] sm:$0xff] %vm2099, %v2054
        %2126 = vst.msk [vmem:[#allocation3 + $0x1a0] sm:$0xff] %vm2099, %v2056
        %2127 = vst.msk [vmem:[#allocation3 + $0x1b0] sm:$0xff] %vm2099, %v2058
        %2128 = vst.msk [vmem:[#allocation3 + $0x1c0] sm:$0xff] %vm2099, %v2060
        %2129 = vst.msk [vmem:[#allocation3 + $0x1d0] sm:$0xff] %vm2099, %v2062
        %2130 = vst.msk [vmem:[#allocation3 + $0x1e0] sm:$0xff] %vm2099, %v2064
        %2131 = vst.msk [vmem:[#allocation3 + $0x1f0] sm:$0xff] %vm2099, %v2066
        %s2132 = scalar_lea.vmem [#allocation2], 48
        %v2133 = vld [vmem:[%s2132] sm:$0xff]
        %v2134 = vld [vmem:[%s2132 + $0x8] sm:$0xff]
        %v2135 = vld [vmem:[%s2132 + $0x18] sm:$0xff]
        %v2136 = vld [vmem:[%s2132 + $0x20] sm:$0xff]
        %v2137 = vld [vmem:[%s2132 + $0x30] sm:$0xff]
        %v2138 = vld [vmem:[%s2132 + $0x38] sm:$0xff]
        %v2139 = vld [vmem:[%s2132 + $0x48] sm:$0xff]
        %v2140 = vld [vmem:[%s2132 + $0x50] sm:$0xff]
        %v2141 = vld [vmem:[%s2132 + $0x60] sm:$0xff]
        %v2142 = vld [vmem:[%s2132 + $0x68] sm:$0xff]
        %v2143 = vld [vmem:[%s2132 + $0x78] sm:$0xff]
        %v2144 = vld [vmem:[%s2132 + $0x80] sm:$0xff]
        %v2145 = vld [vmem:[%s2132 + $0x90] sm:$0xff]
        %v2146 = vld [vmem:[%s2132 + $0x98] sm:$0xff]
        %v2147 = vld [vmem:[%s2132 + $0xa8] sm:$0xff]
        %v2148 = vld [vmem:[%s2132 + $0xb0] sm:$0xff]
        %v2149 = vld [vmem:[%s2132 + $0xc0] sm:$0xff]
        %v2150 = vld [vmem:[%s2132 + $0xc8] sm:$0xff]
        %v2151 = vld [vmem:[%s2132 + $0xd8] sm:$0xff]
        %v2152 = vld [vmem:[%s2132 + $0xe0] sm:$0xff]
        %v2153 = vld [vmem:[%s2132 + $0xf0] sm:$0xff]
        %v2154 = vld [vmem:[%s2132 + $0xf8] sm:$0xff]
        %v2155 = vld [vmem:[%s2132 + $0x108] sm:$0xff]
        %v2156 = vld [vmem:[%s2132 + $0x110] sm:$0xff]
        %v2157 = vld [vmem:[%s2132 + $0x120] sm:$0xff]
        %v2158 = vld [vmem:[%s2132 + $0x128] sm:$0xff]
        %v2159 = vld [vmem:[%s2132 + $0x138] sm:$0xff]
        %v2160 = vld [vmem:[%s2132 + $0x140] sm:$0xff]
        %v2161 = vld [vmem:[%s2132 + $0x150] sm:$0xff]
        %v2162 = vld [vmem:[%s2132 + $0x158] sm:$0xff]
        %v2163 = vld [vmem:[%s2132 + $0x168] sm:$0xff]
        %v2164 = vld [vmem:[%s2132 + $0x170] sm:$0xff]
        %2197 = vrot.lane.b32.xlu0 %v2133, 96
        %v2198 = vpop.permute.xlu0 %2197
        %2199 = vrot.lane.b32.xlu0 %v2134, 96
        %v2200 = vpop.permute.xlu0 %2199
        %2201 = vrot.lane.b32.xlu0 %v2135, 96
        %v2202 = vpop.permute.xlu0 %2201
        %2203 = vrot.lane.b32.xlu0 %v2136, 96
        %v2204 = vpop.permute.xlu0 %2203
        %2205 = vrot.lane.b32.xlu0 %v2137, 96
        %v2206 = vpop.permute.xlu0 %2205
        %2207 = vrot.lane.b32.xlu0 %v2138, 96
        %v2208 = vpop.permute.xlu0 %2207
        %2209 = vrot.lane.b32.xlu0 %v2139, 96
        %v2210 = vpop.permute.xlu0 %2209
        %2211 = vrot.lane.b32.xlu0 %v2140, 96
        %v2212 = vpop.permute.xlu0 %2211
        %2213 = vrot.lane.b32.xlu0 %v2141, 96
        %v2214 = vpop.permute.xlu0 %2213
        %2215 = vrot.lane.b32.xlu0 %v2142, 96
        %v2216 = vpop.permute.xlu0 %2215
        %2217 = vrot.lane.b32.xlu0 %v2143, 96
        %v2218 = vpop.permute.xlu0 %2217
        %2219 = vrot.lane.b32.xlu0 %v2144, 96
        %v2220 = vpop.permute.xlu0 %2219
        %2221 = vrot.lane.b32.xlu0 %v2145, 96
        %v2222 = vpop.permute.xlu0 %2221
        %2223 = vrot.lane.b32.xlu0 %v2146, 96
        %v2224 = vpop.permute.xlu0 %2223
        %2225 = vrot.lane.b32.xlu0 %v2147, 96
        %v2226 = vpop.permute.xlu0 %2225
        %2227 = vrot.lane.b32.xlu0 %v2148, 96
        %v2228 = vpop.permute.xlu0 %2227
        %2229 = vrot.lane.b32.xlu0 %v2149, 96
        %v2230 = vpop.permute.xlu0 %2229
        %2231 = vrot.lane.b32.xlu0 %v2150, 96
        %v2232 = vpop.permute.xlu0 %2231
        %2233 = vrot.lane.b32.xlu0 %v2151, 96
        %v2234 = vpop.permute.xlu0 %2233
        %2235 = vrot.lane.b32.xlu0 %v2152, 96
        %v2236 = vpop.permute.xlu0 %2235
        %2237 = vrot.lane.b32.xlu0 %v2153, 96
        %v2238 = vpop.permute.xlu0 %2237
        %2239 = vrot.lane.b32.xlu0 %v2154, 96
        %v2240 = vpop.permute.xlu0 %2239
        %2241 = vrot.lane.b32.xlu0 %v2155, 96
        %v2242 = vpop.permute.xlu0 %2241
        %2243 = vrot.lane.b32.xlu0 %v2156, 96
        %v2244 = vpop.permute.xlu0 %2243
        %2245 = vrot.lane.b32.xlu0 %v2157, 96
        %v2246 = vpop.permute.xlu0 %2245
        %2247 = vrot.lane.b32.xlu0 %v2158, 96
        %v2248 = vpop.permute.xlu0 %2247
        %2249 = vrot.lane.b32.xlu0 %v2159, 96
        %v2250 = vpop.permute.xlu0 %2249
        %2251 = vrot.lane.b32.xlu0 %v2160, 96
        %v2252 = vpop.permute.xlu0 %2251
        %2253 = vrot.lane.b32.xlu0 %v2161, 96
        %v2254 = vpop.permute.xlu0 %2253
        %2255 = vrot.lane.b32.xlu0 %v2162, 96
        %v2256 = vpop.permute.xlu0 %2255
        %2257 = vrot.lane.b32.xlu0 %v2163, 96
        %v2258 = vpop.permute.xlu0 %2257
        %2259 = vrot.lane.b32.xlu0 %v2164, 96
        %v2260 = vpop.permute.xlu0 %2259
        %vm2293 = vcmask 917248
        %2294 = vst.msk [vmem:[#allocation3] sm:$0xff] %vm2293, %v2198
        %2295 = vst.msk [vmem:[#allocation3 + $0x10] sm:$0xff] %vm2293, %v2200
        %2296 = vst.msk [vmem:[#allocation3 + $0x20] sm:$0xff] %vm2293, %v2202
        %2297 = vst.msk [vmem:[#allocation3 + $0x30] sm:$0xff] %vm2293, %v2204
        %2298 = vst.msk [vmem:[#allocation3 + $0x40] sm:$0xff] %vm2293, %v2206
        %2299 = vst.msk [vmem:[#allocation3 + $0x50] sm:$0xff] %vm2293, %v2208
        %2300 = vst.msk [vmem:[#allocation3 + $0x60] sm:$0xff] %vm2293, %v2210
        %2301 = vst.msk [vmem:[#allocation3 + $0x70] sm:$0xff] %vm2293, %v2212
        %2302 = vst.msk [vmem:[#allocation3 + $0x80] sm:$0xff] %vm2293, %v2214
        %2303 = vst.msk [vmem:[#allocation3 + $0x90] sm:$0xff] %vm2293, %v2216
        %2304 = vst.msk [vmem:[#allocation3 + $0xa0] sm:$0xff] %vm2293, %v2218
        %2305 = vst.msk [vmem:[#allocation3 + $0xb0] sm:$0xff] %vm2293, %v2220
        %2306 = vst.msk [vmem:[#allocation3 + $0xc0] sm:$0xff] %vm2293, %v2222
        %2307 = vst.msk [vmem:[#allocation3 + $0xd0] sm:$0xff] %vm2293, %v2224
        %2308 = vst.msk [vmem:[#allocation3 + $0xe0] sm:$0xff] %vm2293, %v2226
        %2309 = vst.msk [vmem:[#allocation3 + $0xf0] sm:$0xff] %vm2293, %v2228
        %2310 = vst.msk [vmem:[#allocation3 + $0x100] sm:$0xff] %vm2293, %v2230
        %2311 = vst.msk [vmem:[#allocation3 + $0x110] sm:$0xff] %vm2293, %v2232
        %2312 = vst.msk [vmem:[#allocation3 + $0x120] sm:$0xff] %vm2293, %v2234
        %2313 = vst.msk [vmem:[#allocation3 + $0x130] sm:$0xff] %vm2293, %v2236
        %2314 = vst.msk [vmem:[#allocation3 + $0x140] sm:$0xff] %vm2293, %v2238
        %2315 = vst.msk [vmem:[#allocation3 + $0x150] sm:$0xff] %vm2293, %v2240
        %2316 = vst.msk [vmem:[#allocation3 + $0x160] sm:$0xff] %vm2293, %v2242
        %2317 = vst.msk [vmem:[#allocation3 + $0x170] sm:$0xff] %vm2293, %v2244
        %2318 = vst.msk [vmem:[#allocation3 + $0x180] sm:$0xff] %vm2293, %v2246
        %2319 = vst.msk [vmem:[#allocation3 + $0x190] sm:$0xff] %vm2293, %v2248
        %2320 = vst.msk [vmem:[#allocation3 + $0x1a0] sm:$0xff] %vm2293, %v2250
        %2321 = vst.msk [vmem:[#allocation3 + $0x1b0] sm:$0xff] %vm2293, %v2252
        %2322 = vst.msk [vmem:[#allocation3 + $0x1c0] sm:$0xff] %vm2293, %v2254
        %2323 = vst.msk [vmem:[#allocation3 + $0x1d0] sm:$0xff] %vm2293, %v2256
        %2324 = vst.msk [vmem:[#allocation3 + $0x1e0] sm:$0xff] %vm2293, %v2258
        %2325 = vst.msk [vmem:[#allocation3 + $0x1f0] sm:$0xff] %vm2293, %v2260
        %v2326 = vld [vmem:[%s2132 + $0x1] sm:$0xff]
        %v2327 = vld [vmem:[%s2132 + $0x9] sm:$0xff]
        %v2328 = vld [vmem:[%s2132 + $0x19] sm:$0xff]
        %v2329 = vld [vmem:[%s2132 + $0x21] sm:$0xff]
        %v2330 = vld [vmem:[%s2132 + $0x31] sm:$0xff]
        %v2331 = vld [vmem:[%s2132 + $0x39] sm:$0xff]
        %v2332 = vld [vmem:[%s2132 + $0x49] sm:$0xff]
        %v2333 = vld [vmem:[%s2132 + $0x51] sm:$0xff]
        %v2334 = vld [vmem:[%s2132 + $0x61] sm:$0xff]
        %v2335 = vld [vmem:[%s2132 + $0x69] sm:$0xff]
        %v2336 = vld [vmem:[%s2132 + $0x79] sm:$0xff]
        %v2337 = vld [vmem:[%s2132 + $0x81] sm:$0xff]
        %v2338 = vld [vmem:[%s2132 + $0x91] sm:$0xff]
        %v2339 = vld [vmem:[%s2132 + $0x99] sm:$0xff]
        %v2340 = vld [vmem:[%s2132 + $0xa9] sm:$0xff]
        %v2341 = vld [vmem:[%s2132 + $0xb1] sm:$0xff]
        %v2342 = vld [vmem:[%s2132 + $0xc1] sm:$0xff]
        %v2343 = vld [vmem:[%s2132 + $0xc9] sm:$0xff]
        %v2344 = vld [vmem:[%s2132 + $0xd9] sm:$0xff]
        %v2345 = vld [vmem:[%s2132 + $0xe1] sm:$0xff]
        %v2346 = vld [vmem:[%s2132 + $0xf1] sm:$0xff]
        %v2347 = vld [vmem:[%s2132 + $0xf9] sm:$0xff]
        %v2348 = vld [vmem:[%s2132 + $0x109] sm:$0xff]
        %v2349 = vld [vmem:[%s2132 + $0x111] sm:$0xff]
        %v2350 = vld [vmem:[%s2132 + $0x121] sm:$0xff]
        %v2351 = vld [vmem:[%s2132 + $0x129] sm:$0xff]
        %v2352 = vld [vmem:[%s2132 + $0x139] sm:$0xff]
        %v2353 = vld [vmem:[%s2132 + $0x141] sm:$0xff]
        %v2354 = vld [vmem:[%s2132 + $0x151] sm:$0xff]
        %v2355 = vld [vmem:[%s2132 + $0x159] sm:$0xff]
        %v2356 = vld [vmem:[%s2132 + $0x169] sm:$0xff]
        %v2357 = vld [vmem:[%s2132 + $0x171] sm:$0xff]
        %2390 = vrot.lane.b32.xlu0 %v2326, 112
        %v2391 = vpop.permute.xlu0 %2390
        %2392 = vrot.lane.b32.xlu0 %v2327, 112
        %v2393 = vpop.permute.xlu0 %2392
        %2394 = vrot.lane.b32.xlu0 %v2328, 112
        %v2395 = vpop.permute.xlu0 %2394
        %2396 = vrot.lane.b32.xlu0 %v2329, 112
        %v2397 = vpop.permute.xlu0 %2396
        %2398 = vrot.lane.b32.xlu0 %v2330, 112
        %v2399 = vpop.permute.xlu0 %2398
        %2400 = vrot.lane.b32.xlu0 %v2331, 112
        %v2401 = vpop.permute.xlu0 %2400
        %2402 = vrot.lane.b32.xlu0 %v2332, 112
        %v2403 = vpop.permute.xlu0 %2402
        %2404 = vrot.lane.b32.xlu0 %v2333, 112
        %v2405 = vpop.permute.xlu0 %2404
        %2406 = vrot.lane.b32.xlu0 %v2334, 112
        %v2407 = vpop.permute.xlu0 %2406
        %2408 = vrot.lane.b32.xlu0 %v2335, 112
        %v2409 = vpop.permute.xlu0 %2408
        %2410 = vrot.lane.b32.xlu0 %v2336, 112
        %v2411 = vpop.permute.xlu0 %2410
        %2412 = vrot.lane.b32.xlu0 %v2337, 112
        %v2413 = vpop.permute.xlu0 %2412
        %2414 = vrot.lane.b32.xlu0 %v2338, 112
        %v2415 = vpop.permute.xlu0 %2414
        %2416 = vrot.lane.b32.xlu0 %v2339, 112
        %v2417 = vpop.permute.xlu0 %2416
        %2418 = vrot.lane.b32.xlu0 %v2340, 112
        %v2419 = vpop.permute.xlu0 %2418
        %2420 = vrot.lane.b32.xlu0 %v2341, 112
        %v2421 = vpop.permute.xlu0 %2420
        %2422 = vrot.lane.b32.xlu0 %v2342, 112
        %v2423 = vpop.permute.xlu0 %2422
        %2424 = vrot.lane.b32.xlu0 %v2343, 112
        %v2425 = vpop.permute.xlu0 %2424
        %2426 = vrot.lane.b32.xlu0 %v2344, 112
        %v2427 = vpop.permute.xlu0 %2426
        %2428 = vrot.lane.b32.xlu0 %v2345, 112
        %v2429 = vpop.permute.xlu0 %2428
        %2430 = vrot.lane.b32.xlu0 %v2346, 112
        %v2431 = vpop.permute.xlu0 %2430
        %2432 = vrot.lane.b32.xlu0 %v2347, 112
        %v2433 = vpop.permute.xlu0 %2432
        %2434 = vrot.lane.b32.xlu0 %v2348, 112
        %v2435 = vpop.permute.xlu0 %2434
        %2436 = vrot.lane.b32.xlu0 %v2349, 112
        %v2437 = vpop.permute.xlu0 %2436
        %2438 = vrot.lane.b32.xlu0 %v2350, 112
        %v2439 = vpop.permute.xlu0 %2438
        %2440 = vrot.lane.b32.xlu0 %v2351, 112
        %v2441 = vpop.permute.xlu0 %2440
        %2442 = vrot.lane.b32.xlu0 %v2352, 112
        %v2443 = vpop.permute.xlu0 %2442
        %2444 = vrot.lane.b32.xlu0 %v2353, 112
        %v2445 = vpop.permute.xlu0 %2444
        %2446 = vrot.lane.b32.xlu0 %v2354, 112
        %v2447 = vpop.permute.xlu0 %2446
        %2448 = vrot.lane.b32.xlu0 %v2355, 112
        %v2449 = vpop.permute.xlu0 %2448
        %2450 = vrot.lane.b32.xlu0 %v2356, 112
        %v2451 = vpop.permute.xlu0 %2450
        %2452 = vrot.lane.b32.xlu0 %v2357, 112
        %v2453 = vpop.permute.xlu0 %2452
        %vm2486 = vcmask 1048448
        %2487 = vst.msk [vmem:[#allocation3] sm:$0xff] %vm2486, %v2391
        %2488 = vst.msk [vmem:[#allocation3 + $0x10] sm:$0xff] %vm2486, %v2393
        %2489 = vst.msk [vmem:[#allocation3 + $0x20] sm:$0xff] %vm2486, %v2395
        %2490 = vst.msk [vmem:[#allocation3 + $0x30] sm:$0xff] %vm2486, %v2397
        %2491 = vst.msk [vmem:[#allocation3 + $0x40] sm:$0xff] %vm2486, %v2399
        %2492 = vst.msk [vmem:[#allocation3 + $0x50] sm:$0xff] %vm2486, %v2401
        %2493 = vst.msk [vmem:[#allocation3 + $0x60] sm:$0xff] %vm2486, %v2403
        %2494 = vst.msk [vmem:[#allocation3 + $0x70] sm:$0xff] %vm2486, %v2405
        %2495 = vst.msk [vmem:[#allocation3 + $0x80] sm:$0xff] %vm2486, %v2407
        %2496 = vst.msk [vmem:[#allocation3 + $0x90] sm:$0xff] %vm2486, %v2409
        %2497 = vst.msk [vmem:[#allocation3 + $0xa0] sm:$0xff] %vm2486, %v2411
        %2498 = vst.msk [vmem:[#allocation3 + $0xb0] sm:$0xff] %vm2486, %v2413
        %2499 = vst.msk [vmem:[#allocation3 + $0xc0] sm:$0xff] %vm2486, %v2415
        %2500 = vst.msk [vmem:[#allocation3 + $0xd0] sm:$0xff] %vm2486, %v2417
        %2501 = vst.msk [vmem:[#allocation3 + $0xe0] sm:$0xff] %vm2486, %v2419
        %2502 = vst.msk [vmem:[#allocation3 + $0xf0] sm:$0xff] %vm2486, %v2421
        %2503 = vst.msk [vmem:[#allocation3 + $0x100] sm:$0xff] %vm2486, %v2423
        %2504 = vst.msk [vmem:[#allocation3 + $0x110] sm:$0xff] %vm2486, %v2425
        %2505 = vst.msk [vmem:[#allocation3 + $0x120] sm:$0xff] %vm2486, %v2427
        %2506 = vst.msk [vmem:[#allocation3 + $0x130] sm:$0xff] %vm2486, %v2429
        %2507 = vst.msk [vmem:[#allocation3 + $0x140] sm:$0xff] %vm2486, %v2431
        %2508 = vst.msk [vmem:[#allocation3 + $0x150] sm:$0xff] %vm2486, %v2433
        %2509 = vst.msk [vmem:[#allocation3 + $0x160] sm:$0xff] %vm2486, %v2435
        %2510 = vst.msk [vmem:[#allocation3 + $0x170] sm:$0xff] %vm2486, %v2437
        %2511 = vst.msk [vmem:[#allocation3 + $0x180] sm:$0xff] %vm2486, %v2439
        %2512 = vst.msk [vmem:[#allocation3 + $0x190] sm:$0xff] %vm2486, %v2441
        %2513 = vst.msk [vmem:[#allocation3 + $0x1a0] sm:$0xff] %vm2486, %v2443
        %2514 = vst.msk [vmem:[#allocation3 + $0x1b0] sm:$0xff] %vm2486, %v2445
        %2515 = vst.msk [vmem:[#allocation3 + $0x1c0] sm:$0xff] %vm2486, %v2447
        %2516 = vst.msk [vmem:[#allocation3 + $0x1d0] sm:$0xff] %vm2486, %v2449
        %2517 = vst.msk [vmem:[#allocation3 + $0x1e0] sm:$0xff] %vm2486, %v2451
        %2518 = vst.msk [vmem:[#allocation3 + $0x1f0] sm:$0xff] %vm2486, %v2453
        %v2519 = vld [vmem:[%s2132 + $0x2] sm:$0xff]
        %v2520 = vld [vmem:[%s2132 + $0xa] sm:$0xff]
        %v2521 = vld [vmem:[%s2132 + $0x1a] sm:$0xff]
        %v2522 = vld [vmem:[%s2132 + $0x22] sm:$0xff]
        %v2523 = vld [vmem:[%s2132 + $0x32] sm:$0xff]
        %v2524 = vld [vmem:[%s2132 + $0x3a] sm:$0xff]
        %v2525 = vld [vmem:[%s2132 + $0x4a] sm:$0xff]
        %v2526 = vld [vmem:[%s2132 + $0x52] sm:$0xff]
        %v2527 = vld [vmem:[%s2132 + $0x62] sm:$0xff]
        %v2528 = vld [vmem:[%s2132 + $0x6a] sm:$0xff]
        %v2529 = vld [vmem:[%s2132 + $0x7a] sm:$0xff]
        %v2530 = vld [vmem:[%s2132 + $0x82] sm:$0xff]
        %v2531 = vld [vmem:[%s2132 + $0x92] sm:$0xff]
        %v2532 = vld [vmem:[%s2132 + $0x9a] sm:$0xff]
        %v2533 = vld [vmem:[%s2132 + $0xaa] sm:$0xff]
        %v2534 = vld [vmem:[%s2132 + $0xb2] sm:$0xff]
        %v2535 = vld [vmem:[%s2132 + $0xc2] sm:$0xff]
        %v2536 = vld [vmem:[%s2132 + $0xca] sm:$0xff]
        %v2537 = vld [vmem:[%s2132 + $0xda] sm:$0xff]
        %v2538 = vld [vmem:[%s2132 + $0xe2] sm:$0xff]
        %v2539 = vld [vmem:[%s2132 + $0xf2] sm:$0xff]
        %v2540 = vld [vmem:[%s2132 + $0xfa] sm:$0xff]
        %v2541 = vld [vmem:[%s2132 + $0x10a] sm:$0xff]
        %v2542 = vld [vmem:[%s2132 + $0x112] sm:$0xff]
        %v2543 = vld [vmem:[%s2132 + $0x122] sm:$0xff]
        %v2544 = vld [vmem:[%s2132 + $0x12a] sm:$0xff]
        %v2545 = vld [vmem:[%s2132 + $0x13a] sm:$0xff]
        %v2546 = vld [vmem:[%s2132 + $0x142] sm:$0xff]
        %v2547 = vld [vmem:[%s2132 + $0x152] sm:$0xff]
        %v2548 = vld [vmem:[%s2132 + $0x15a] sm:$0xff]
        %v2549 = vld [vmem:[%s2132 + $0x16a] sm:$0xff]
        %v2550 = vld [vmem:[%s2132 + $0x172] sm:$0xff]
        %2551 = vst.msk [vmem:[#allocation3 + $0x8] sm:$0xff] %vm553, %v2519
        %2552 = vst.msk [vmem:[#allocation3 + $0x18] sm:$0xff] %vm553, %v2520
        %2553 = vst.msk [vmem:[#allocation3 + $0x28] sm:$0xff] %vm553, %v2521
        %2554 = vst.msk [vmem:[#allocation3 + $0x38] sm:$0xff] %vm553, %v2522
        %2555 = vst.msk [vmem:[#allocation3 + $0x48] sm:$0xff] %vm553, %v2523
        %2556 = vst.msk [vmem:[#allocation3 + $0x58] sm:$0xff] %vm553, %v2524
        %2557 = vst.msk [vmem:[#allocation3 + $0x68] sm:$0xff] %vm553, %v2525
        %2558 = vst.msk [vmem:[#allocation3 + $0x78] sm:$0xff] %vm553, %v2526
        %2559 = vst.msk [vmem:[#allocation3 + $0x88] sm:$0xff] %vm553, %v2527
        %2560 = vst.msk [vmem:[#allocation3 + $0x98] sm:$0xff] %vm553, %v2528
        %2561 = vst.msk [vmem:[#allocation3 + $0xa8] sm:$0xff] %vm553, %v2529
        %2562 = vst.msk [vmem:[#allocation3 + $0xb8] sm:$0xff] %vm553, %v2530
        %2563 = vst.msk [vmem:[#allocation3 + $0xc8] sm:$0xff] %vm553, %v2531
        %2564 = vst.msk [vmem:[#allocation3 + $0xd8] sm:$0xff] %vm553, %v2532
        %2565 = vst.msk [vmem:[#allocation3 + $0xe8] sm:$0xff] %vm553, %v2533
        %2566 = vst.msk [vmem:[#allocation3 + $0xf8] sm:$0xff] %vm553, %v2534
        %2567 = vst.msk [vmem:[#allocation3 + $0x108] sm:$0xff] %vm553, %v2535
        %2568 = vst.msk [vmem:[#allocation3 + $0x118] sm:$0xff] %vm553, %v2536
        %2569 = vst.msk [vmem:[#allocation3 + $0x128] sm:$0xff] %vm553, %v2537
        %2570 = vst.msk [vmem:[#allocation3 + $0x138] sm:$0xff] %vm553, %v2538
        %2571 = vst.msk [vmem:[#allocation3 + $0x148] sm:$0xff] %vm553, %v2539
        %2572 = vst.msk [vmem:[#allocation3 + $0x158] sm:$0xff] %vm553, %v2540
        %2573 = vst.msk [vmem:[#allocation3 + $0x168] sm:$0xff] %vm553, %v2541
        %2574 = vst.msk [vmem:[#allocation3 + $0x178] sm:$0xff] %vm553, %v2542
        %2575 = vst.msk [vmem:[#allocation3 + $0x188] sm:$0xff] %vm553, %v2543
        %2576 = vst.msk [vmem:[#allocation3 + $0x198] sm:$0xff] %vm553, %v2544
        %2577 = vst.msk [vmem:[#allocation3 + $0x1a8] sm:$0xff] %vm553, %v2545
        %2578 = vst.msk [vmem:[#allocation3 + $0x1b8] sm:$0xff] %vm553, %v2546
        %2579 = vst.msk [vmem:[#allocation3 + $0x1c8] sm:$0xff] %vm553, %v2547
        %2580 = vst.msk [vmem:[#allocation3 + $0x1d8] sm:$0xff] %vm553, %v2548
        %2581 = vst.msk [vmem:[#allocation3 + $0x1e8] sm:$0xff] %vm553, %v2549
        %2582 = vst.msk [vmem:[#allocation3 + $0x1f8] sm:$0xff] %vm553, %v2550
        %v2583 = vld [vmem:[#allocation3] sm:$0xff]
        %v2584 = vld [vmem:[#allocation3 + $0x8] sm:$0xff]
        %v2585 = vld [vmem:[#allocation3 + $0x10] sm:$0xff]
        %v2586 = vld [vmem:[#allocation3 + $0x18] sm:$0xff]
        %v2587 = vld [vmem:[#allocation3 + $0x20] sm:$0xff]
        %v2588 = vld [vmem:[#allocation3 + $0x28] sm:$0xff]
        %v2589 = vld [vmem:[#allocation3 + $0x30] sm:$0xff]
        %v2590 = vld [vmem:[#allocation3 + $0x38] sm:$0xff]
        %v2591 = vld [vmem:[#allocation3 + $0x40] sm:$0xff]
        %v2592 = vld [vmem:[#allocation3 + $0x48] sm:$0xff]
        %v2593 = vld [vmem:[#allocation3 + $0x50] sm:$0xff]
        %v2594 = vld [vmem:[#allocation3 + $0x58] sm:$0xff]
        %v2595 = vld [vmem:[#allocation3 + $0x60] sm:$0xff]
        %v2596 = vld [vmem:[#allocation3 + $0x68] sm:$0xff]
        %v2597 = vld [vmem:[#allocation3 + $0x70] sm:$0xff]
        %v2598 = vld [vmem:[#allocation3 + $0x78] sm:$0xff]
        %v2599 = vld [vmem:[#allocation3 + $0x80] sm:$0xff]
        %v2600 = vld [vmem:[#allocation3 + $0x88] sm:$0xff]
        %v2601 = vld [vmem:[#allocation3 + $0x90] sm:$0xff]
        %v2602 = vld [vmem:[#allocation3 + $0x98] sm:$0xff]
        %v2603 = vld [vmem:[#allocation3 + $0xa0] sm:$0xff]
        %v2604 = vld [vmem:[#allocation3 + $0xa8] sm:$0xff]
        %v2605 = vld [vmem:[#allocation3 + $0xb0] sm:$0xff]
        %v2606 = vld [vmem:[#allocation3 + $0xb8] sm:$0xff]
        %v2607 = vld [vmem:[#allocation3 + $0xc0] sm:$0xff]
        %v2608 = vld [vmem:[#allocation3 + $0xc8] sm:$0xff]
        %v2609 = vld [vmem:[#allocation3 + $0xd0] sm:$0xff]
        %v2610 = vld [vmem:[#allocation3 + $0xd8] sm:$0xff]
        %v2611 = vld [vmem:[#allocation3 + $0xe0] sm:$0xff]
        %v2612 = vld [vmem:[#allocation3 + $0xe8] sm:$0xff]
        %v2613 = vld [vmem:[#allocation3 + $0xf0] sm:$0xff]
        %v2614 = vld [vmem:[#allocation3 + $0xf8] sm:$0xff]
        %v2615 = vld [vmem:[#allocation3 + $0x100] sm:$0xff]
        %v2616 = vld [vmem:[#allocation3 + $0x108] sm:$0xff]
        %v2617 = vld [vmem:[#allocation3 + $0x110] sm:$0xff]
        %v2618 = vld [vmem:[#allocation3 + $0x118] sm:$0xff]
        %v2619 = vld [vmem:[#allocation3 + $0x120] sm:$0xff]
        %v2620 = vld [vmem:[#allocation3 + $0x128] sm:$0xff]
        %v2621 = vld [vmem:[#allocation3 + $0x130] sm:$0xff]
        %v2622 = vld [vmem:[#allocation3 + $0x138] sm:$0xff]
        %v2623 = vld [vmem:[#allocation3 + $0x140] sm:$0xff]
        %v2624 = vld [vmem:[#allocation3 + $0x148] sm:$0xff]
        %v2625 = vld [vmem:[#allocation3 + $0x150] sm:$0xff]
        %v2626 = vld [vmem:[#allocation3 + $0x158] sm:$0xff]
        %v2627 = vld [vmem:[#allocation3 + $0x160] sm:$0xff]
        %v2628 = vld [vmem:[#allocation3 + $0x168] sm:$0xff]
        %v2629 = vld [vmem:[#allocation3 + $0x170] sm:$0xff]
        %v2630 = vld [vmem:[#allocation3 + $0x178] sm:$0xff]
        %v2631 = vld [vmem:[#allocation3 + $0x180] sm:$0xff]
        %v2632 = vld [vmem:[#allocation3 + $0x188] sm:$0xff]
        %v2633 = vld [vmem:[#allocation3 + $0x190] sm:$0xff]
        %v2634 = vld [vmem:[#allocation3 + $0x198] sm:$0xff]
        %v2635 = vld [vmem:[#allocation3 + $0x1a0] sm:$0xff]
        %v2636 = vld [vmem:[#allocation3 + $0x1a8] sm:$0xff]
        %v2637 = vld [vmem:[#allocation3 + $0x1b0] sm:$0xff]
        %v2638 = vld [vmem:[#allocation3 + $0x1b8] sm:$0xff]
        %v2639 = vld [vmem:[#allocation3 + $0x1c0] sm:$0xff]
        %v2640 = vld [vmem:[#allocation3 + $0x1c8] sm:$0xff]
        %v2641 = vld [vmem:[#allocation3 + $0x1d0] sm:$0xff]
        %v2642 = vld [vmem:[#allocation3 + $0x1d8] sm:$0xff]
        %v2643 = vld [vmem:[#allocation3 + $0x1e0] sm:$0xff]
        %v2644 = vld [vmem:[#allocation3 + $0x1e8] sm:$0xff]
        %v2645 = vld [vmem:[#allocation3 + $0x1f0] sm:$0xff]
        %v2646 = vld [vmem:[#allocation3 + $0x1f8] sm:$0xff]
        %v2647 = vld [vmem:[%s3] sm:$0xff]
        %v2648 = vld [vmem:[%s3 + $0x8] sm:$0xff]
        %v2649 = vld [vmem:[%s3 + $0x10] sm:$0xff]
        %v2650 = vld [vmem:[%s3 + $0x18] sm:$0xff]
        %v2651 = vld [vmem:[%s3 + $0x20] sm:$0xff]
        %v2652 = vld [vmem:[%s3 + $0x28] sm:$0xff]
        %v2653 = vld [vmem:[%s3 + $0x30] sm:$0xff]
        %v2654 = vld [vmem:[%s3 + $0x38] sm:$0xff]
        %v2655 = vld [vmem:[%s3 + $0x40] sm:$0xff]
        %v2656 = vld [vmem:[%s3 + $0x48] sm:$0xff]
        %v2657 = vld [vmem:[%s3 + $0x50] sm:$0xff]
        %v2658 = vld [vmem:[%s3 + $0x58] sm:$0xff]
        %v2659 = vld [vmem:[%s3 + $0x60] sm:$0xff]
        %v2660 = vld [vmem:[%s3 + $0x68] sm:$0xff]
        %v2661 = vld [vmem:[%s3 + $0x70] sm:$0xff]
        %v2662 = vld [vmem:[%s3 + $0x78] sm:$0xff]
        %v2663 = vld [vmem:[%s3 + $0x80] sm:$0xff]
        %v2664 = vld [vmem:[%s3 + $0x88] sm:$0xff]
        %v2665 = vld [vmem:[%s4] sm:$0x1]
        %v2667 = vlaneseq
        %v2668 = vshrl.u32 %v2667, 7
        %v2669 = vsub.s32 0, %v2668
        %v2670 = vrot.slane %v2665, %v2669
        %v2673 = vsel %vm553, %v2584, 0
        %v2676 = vsel %vm553, %v2586, 0
        %v2679 = vsel %vm553, %v2588, 0
        %v2682 = vsel %vm553, %v2590, 0
        %v2685 = vsel %vm553, %v2592, 0
        %v2688 = vsel %vm553, %v2594, 0
        %v2691 = vsel %vm553, %v2596, 0
        %v2694 = vsel %vm553, %v2598, 0
        %v2697 = vsel %vm553, %v2600, 0
        %v2700 = vsel %vm553, %v2602, 0
        %v2703 = vsel %vm553, %v2604, 0
        %v2706 = vsel %vm553, %v2606, 0
        %v2709 = vsel %vm553, %v2608, 0
        %v2712 = vsel %vm553, %v2610, 0
        %v2715 = vsel %vm553, %v2612, 0
        %v2718 = vsel %vm553, %v2614, 0
        %v2721 = vsel %vm553, %v2616, 0
        %v2724 = vsel %vm553, %v2618, 0
        %v2727 = vsel %vm553, %v2620, 0
        %v2730 = vsel %vm553, %v2622, 0
        %v2733 = vsel %vm553, %v2624, 0
        %v2736 = vsel %vm553, %v2626, 0
        %v2739 = vsel %vm553, %v2628, 0
        %v2742 = vsel %vm553, %v2630, 0
        %v2745 = vsel %vm553, %v2632, 0
        %v2748 = vsel %vm553, %v2634, 0
        %v2751 = vsel %vm553, %v2636, 0
        %v2754 = vsel %vm553, %v2638, 0
        %v2757 = vsel %vm553, %v2640, 0
        %v2760 = vsel %vm553, %v2642, 0
        %v2763 = vsel %vm553, %v2644, 0
        %v2766 = vsel %vm553, %v2646, 0
        %2768 = vmatprep.subr.mxu0 0.0
        %2769 = vmatpush1.msra.mxu0 %v2647
        %2770 = vmatprep.subr.mxu0 0.0
        %2771 = vmatpush1.msra.mxu0 %v2648
        %2772 = vmatprep.subr.mxu0 0.0
        %2773 = vmatpush1.msra.mxu0 %v2649
        %2774 = vmatprep.subr.mxu0 0.0
        %2775 = vmatpush1.msra.mxu0 %v2650
        %2776 = vmatprep.subr.mxu0 0.0
        %2777 = vmatpush1.msra.mxu0 %v2651
        %2778 = vmatprep.subr.mxu0 0.0
        %2779 = vmatpush1.msra.mxu0 %v2652
        %2780 = vmatprep.subr.mxu0 0.0
        %2781 = vmatpush1.msra.mxu0 %v2653
        %2782 = vmatprep.subr.mxu0 0.0
        %2783 = vmatpush1.msra.mxu0 %v2654
        %2784 = vmatprep.subr.mxu0 0.0
        %2785 = vmatpush1.msra.mxu0 %v2655
        %2786 = vmatprep.subr.mxu0 0.0
        %2787 = vmatpush1.msra.mxu0 %v2656
        %2788 = vmatprep.subr.mxu0 0.0
        %2789 = vmatpush1.msra.mxu0 %v2657
        %2790 = vmatprep.subr.mxu0 0.0
        %2791 = vmatpush1.msra.mxu0 %v2658
        %2792 = vmatprep.subr.mxu0 0.0
        %2793 = vmatpush1.msra.mxu0 %v2659
        %2794 = vmatprep.subr.mxu0 0.0
        %2795 = vmatpush1.msra.mxu0 %v2660
        %2796 = vmatprep.subr.mxu0 0.0
        %2797 = vmatpush1.msra.mxu0 %v2661
        %2798 = vmatprep.subr.mxu0 0.0
        %2799 = vmatpush1.msra.mxu0 %v2662
        %2800 = vmatprep.subr.mxu0 0.0
        %2801 = vmatpush1.msra.mxu0 %v2663
        %2802 = vmatprep.subr.mxu0 0.0
        %2803 = vmatpush1.msra.mxu0 %v2664
        %2804 = vmatprep.subr.mxu0 0.0
        %2805 = vmatpush1.msra.mxu0 0.0
        %2806 = vmatprep.subr.mxu0 0.0
        %2807 = vmatpush1.msra.mxu0 0.0
        %2808 = vmatprep.subr.mxu0 0.0
        %2809 = vmatpush1.msra.mxu0 0.0
        %2810 = vmatprep.subr.mxu0 0.0
        %2811 = vmatpush1.msra.mxu0 0.0
        %2812 = vmatprep.subr.mxu0 0.0
        %2813 = vmatpush1.msra.mxu0 0.0
        %2814 = vmatprep.subr.mxu0 0.0
        %2815 = vmatpush1.msra.mxu0 0.0
        %2816 = vmatprep.subr.mxu0 0.0
        %2817 = vmatpush1.msra.mxu0 0.0
        %2818 = vmatprep.subr.mxu0 0.0
        %2819 = vmatpush1.msra.mxu0 0.0
        %2820 = vmatprep.subr.mxu0 0.0
        %2821 = vmatpush1.msra.mxu0 0.0
        %2822 = vmatprep.subr.mxu0 0.0
        %2823 = vmatpush1.msra.mxu0 0.0
        %2824 = vmatprep.subr.mxu0 0.0
        %2825 = vmatpush1.msra.mxu0 0.0
        %2826 = vmatprep.subr.mxu0 0.0
        %2827 = vmatpush1.msra.mxu0 0.0
        %2828 = vmatprep.subr.mxu0 0.0
        %2829 = vmatpush1.msra.mxu0 0.0
        %2830 = vmatprep.subr.mxu0 0.0
        %2831 = vmatpush1.msra.mxu0 0.0
        %2832 = vmatprep.mubr.f32.mxu0 %v2673
        %2833 = vmatmul.mubr.f32.gmra.mrb[0].mxu0 %v2583
        %v2834 = vpop.f32.mrb[0].mxu0
        %v2835 = vadd.f32 %v2670, %v2834
        %v2836 = vpop.f32.mrb[0].mxu0
        %2837 = vmatprep.mubr.f32.mxu0 %v2676
        %2838 = vmatmul.mubr.f32.gmra.mrb[0].mxu0 %v2585
        %v2839 = vpop.f32.mrb[0].mxu0
        %v2840 = vadd.f32 %v2670, %v2839
        %v2841 = vpop.f32.mrb[0].mxu0
        %2842 = vmatprep.mubr.f32.mxu0 %v2679
        %2843 = vmatmul.mubr.f32.gmra.mrb[0].mxu0 %v2587
        %v2844 = vpop.f32.mrb[0].mxu0
        %v2845 = vadd.f32 %v2670, %v2844
        %v2846 = vpop.f32.mrb[0].mxu0
        %2847 = vmatprep.mubr.f32.mxu0 %v2682
        %2848 = vmatmul.mubr.f32.gmra.mrb[0].mxu0 %v2589
        %v2849 = vpop.f32.mrb[0].mxu0
        %v2850 = vadd.f32 %v2670, %v2849
        %v2851 = vpop.f32.mrb[0].mxu0
        %2852 = vmatprep.mubr.f32.mxu0 %v2685
        %2853 = vmatmul.mubr.f32.gmra.mrb[0].mxu0 %v2591
        %v2854 = vpop.f32.mrb[0].mxu0
        %v2855 = vadd.f32 %v2670, %v2854
        %v2856 = vpop.f32.mrb[0].mxu0
        %2857 = vmatprep.mubr.f32.mxu0 %v2688
        %2858 = vmatmul.mubr.f32.gmra.mrb[0].mxu0 %v2593
        %v2859 = vpop.f32.mrb[0].mxu0
        %v2860 = vadd.f32 %v2670, %v2859
        %v2861 = vpop.f32.mrb[0].mxu0
        %2862 = vmatprep.mubr.f32.mxu0 %v2691
        %2863 = vmatmul.mubr.f32.gmra.mrb[0].mxu0 %v2595
        %v2864 = vpop.f32.mrb[0].mxu0
        %v2865 = vadd.f32 %v2670, %v2864
        %v2866 = vpop.f32.mrb[0].mxu0
        %2867 = vmatprep.mubr.f32.mxu0 %v2694
        %2868 = vmatmul.mubr.f32.gmra.mrb[0].mxu0 %v2597
        %v2869 = vpop.f32.mrb[0].mxu0
        %v2870 = vadd.f32 %v2670, %v2869
        %v2871 = vpop.f32.mrb[0].mxu0
        %2872 = vmatprep.mubr.f32.mxu0 %v2697
        %2873 = vmatmul.mubr.f32.gmra.mrb[0].mxu0 %v2599
        %v2874 = vpop.f32.mrb[0].mxu0
        %v2875 = vadd.f32 %v2670, %v2874
        %v2876 = vpop.f32.mrb[0].mxu0
        %2877 = vmatprep.mubr.f32.mxu0 %v2700
        %2878 = vmatmul.mubr.f32.gmra.mrb[0].mxu0 %v2601
        %v2879 = vpop.f32.mrb[0].mxu0
        %v2880 = vadd.f32 %v2670, %v2879
        %v2881 = vpop.f32.mrb[0].mxu0
        %2882 = vmatprep.mubr.f32.mxu0 %v2703
        %2883 = vmatmul.mubr.f32.gmra.mrb[0].mxu0 %v2603
        %v2884 = vpop.f32.mrb[0].mxu0
        %v2885 = vadd.f32 %v2670, %v2884
        %v2886 = vpop.f32.mrb[0].mxu0
        %2887 = vmatprep.mubr.f32.mxu0 %v2706
        %2888 = vmatmul.mubr.f32.gmra.mrb[0].mxu0 %v2605
        %v2889 = vpop.f32.mrb[0].mxu0
        %v2890 = vadd.f32 %v2670, %v2889
        %v2891 = vpop.f32.mrb[0].mxu0
        %2892 = vmatprep.mubr.f32.mxu0 %v2709
        %2893 = vmatmul.mubr.f32.gmra.mrb[0].mxu0 %v2607
        %v2894 = vpop.f32.mrb[0].mxu0
        %v2895 = vadd.f32 %v2670, %v2894
        %v2896 = vpop.f32.mrb[0].mxu0
        %2897 = vmatprep.mubr.f32.mxu0 %v2712
        %2898 = vmatmul.mubr.f32.gmra.mrb[0].mxu0 %v2609
        %v2899 = vpop.f32.mrb[0].mxu0
        %v2900 = vadd.f32 %v2670, %v2899
        %v2901 = vpop.f32.mrb[0].mxu0
        %2902 = vmatprep.mubr.f32.mxu0 %v2715
        %2903 = vmatmul.mubr.f32.gmra.mrb[0].mxu0 %v2611
        %v2904 = vpop.f32.mrb[0].mxu0
        %v2905 = vadd.f32 %v2670, %v2904
        %v2906 = vpop.f32.mrb[0].mxu0
        %2907 = vmatprep.mubr.f32.mxu0 %v2718
        %2908 = vmatmul.mubr.f32.gmra.mrb[0].mxu0 %v2613
        %v2909 = vpop.f32.mrb[0].mxu0
        %v2910 = vadd.f32 %v2670, %v2909
        %v2911 = vpop.f32.mrb[0].mxu0
        %2912 = vmatprep.mubr.f32.mxu0 %v2721
        %2913 = vmatmul.mubr.f32.gmra.mrb[0].mxu0 %v2615
        %v2914 = vpop.f32.mrb[0].mxu0
        %v2915 = vadd.f32 %v2670, %v2914
        %v2916 = vpop.f32.mrb[0].mxu0
        %2917 = vmatprep.mubr.f32.mxu0 %v2724
        %2918 = vmatmul.mubr.f32.gmra.mrb[0].mxu0 %v2617
        %v2919 = vpop.f32.mrb[0].mxu0
        %v2920 = vadd.f32 %v2670, %v2919
        %v2921 = vpop.f32.mrb[0].mxu0
        %2922 = vmatprep.mubr.f32.mxu0 %v2727
        %2923 = vmatmul.mubr.f32.gmra.mrb[0].mxu0 %v2619
        %v2924 = vpop.f32.mrb[0].mxu0
        %v2925 = vadd.f32 %v2670, %v2924
        %v2926 = vpop.f32.mrb[0].mxu0
        %2927 = vmatprep.mubr.f32.mxu0 %v2730
        %2928 = vmatmul.mubr.f32.gmra.mrb[0].mxu0 %v2621
        %v2929 = vpop.f32.mrb[0].mxu0
        %v2930 = vadd.f32 %v2670, %v2929
        %v2931 = vpop.f32.mrb[0].mxu0
        %2932 = vmatprep.mubr.f32.mxu0 %v2733
        %2933 = vmatmul.mubr.f32.gmra.mrb[0].mxu0 %v2623
        %v2934 = vpop.f32.mrb[0].mxu0
        %v2935 = vadd.f32 %v2670, %v2934
        %v2936 = vpop.f32.mrb[0].mxu0
        %2937 = vmatprep.mubr.f32.mxu0 %v2736
        %2938 = vmatmul.mubr.f32.gmra.mrb[0].mxu0 %v2625
        %v2939 = vpop.f32.mrb[0].mxu0
        %v2940 = vadd.f32 %v2670, %v2939
        %v2941 = vpop.f32.mrb[0].mxu0
        %2942 = vmatprep.mubr.f32.mxu0 %v2739
        %2943 = vmatmul.mubr.f32.gmra.mrb[0].mxu0 %v2627
        %v2944 = vpop.f32.mrb[0].mxu0
        %v2945 = vadd.f32 %v2670, %v2944
        %v2946 = vpop.f32.mrb[0].mxu0
        %2947 = vmatprep.mubr.f32.mxu0 %v2742
        %2948 = vmatmul.mubr.f32.gmra.mrb[0].mxu0 %v2629
        %v2949 = vpop.f32.mrb[0].mxu0
        %v2950 = vadd.f32 %v2670, %v2949
        %v2951 = vpop.f32.mrb[0].mxu0
        %2952 = vmatprep.mubr.f32.mxu0 %v2745
        %2953 = vmatmul.mubr.f32.gmra.mrb[0].mxu0 %v2631
        %v2954 = vpop.f32.mrb[0].mxu0
        %v2955 = vadd.f32 %v2670, %v2954
        %v2956 = vpop.f32.mrb[0].mxu0
        %2957 = vmatprep.mubr.f32.mxu0 %v2748
        %2958 = vmatmul.mubr.f32.gmra.mrb[0].mxu0 %v2633
        %v2959 = vpop.f32.mrb[0].mxu0
        %v2960 = vadd.f32 %v2670, %v2959
        %v2961 = vpop.f32.mrb[0].mxu0
        %2962 = vmatprep.mubr.f32.mxu0 %v2751
        %2963 = vmatmul.mubr.f32.gmra.mrb[0].mxu0 %v2635
        %v2964 = vpop.f32.mrb[0].mxu0
        %v2965 = vadd.f32 %v2670, %v2964
        %v2966 = vpop.f32.mrb[0].mxu0
        %2967 = vmatprep.mubr.f32.mxu0 %v2754
        %2968 = vmatmul.mubr.f32.gmra.mrb[0].mxu0 %v2637
        %v2969 = vpop.f32.mrb[0].mxu0
        %v2970 = vadd.f32 %v2670, %v2969
        %v2971 = vpop.f32.mrb[0].mxu0
        %2972 = vmatprep.mubr.f32.mxu0 %v2757
        %2973 = vmatmul.mubr.f32.gmra.mrb[0].mxu0 %v2639
        %v2974 = vpop.f32.mrb[0].mxu0
        %v2975 = vadd.f32 %v2670, %v2974
        %v2976 = vpop.f32.mrb[0].mxu0
        %2977 = vmatprep.mubr.f32.mxu0 %v2760
        %2978 = vmatmul.mubr.f32.gmra.mrb[0].mxu0 %v2641
        %v2979 = vpop.f32.mrb[0].mxu0
        %v2980 = vadd.f32 %v2670, %v2979
        %v2981 = vpop.f32.mrb[0].mxu0
        %2982 = vmatprep.mubr.f32.mxu0 %v2763
        %2983 = vmatmul.mubr.f32.gmra.mrb[0].mxu0 %v2643
        %v2984 = vpop.f32.mrb[0].mxu0
        %v2985 = vadd.f32 %v2670, %v2984
        %v2986 = vpop.f32.mrb[0].mxu0
        %2987 = vmatprep.mubr.f32.mxu0 %v2766
        %2988 = vmatmul.mubr.f32.gmra.mrb[0].mxu0 %v2645
        %v2989 = vpop.f32.mrb[0].mxu0
        %v2990 = vadd.f32 %v2670, %v2989
        %v2991 = vpop.f32.mrb[0].mxu0
        %2992 = vdwg.mxu0
        %vm2993 = vcmp.gt.f32.partialorder %v2835, 0.0
        %vm2994 = vcmp.gt.f32.partialorder %v2840, 0.0
        %vm2995 = vcmp.gt.f32.partialorder %v2845, 0.0
        %vm2996 = vcmp.gt.f32.partialorder %v2850, 0.0
        %vm2997 = vcmp.gt.f32.partialorder %v2855, 0.0
        %vm2998 = vcmp.gt.f32.partialorder %v2860, 0.0
        %vm2999 = vcmp.gt.f32.partialorder %v2865, 0.0
        %vm3000 = vcmp.gt.f32.partialorder %v2870, 0.0
        %vm3001 = vcmp.gt.f32.partialorder %v2875, 0.0
        %vm3002 = vcmp.gt.f32.partialorder %v2880, 0.0
        %vm3003 = vcmp.gt.f32.partialorder %v2885, 0.0
        %vm3004 = vcmp.gt.f32.partialorder %v2890, 0.0
        %vm3005 = vcmp.gt.f32.partialorder %v2895, 0.0
        %vm3006 = vcmp.gt.f32.partialorder %v2900, 0.0
        %vm3007 = vcmp.gt.f32.partialorder %v2905, 0.0
        %vm3008 = vcmp.gt.f32.partialorder %v2910, 0.0
        %vm3009 = vcmp.gt.f32.partialorder %v2915, 0.0
        %vm3010 = vcmp.gt.f32.partialorder %v2920, 0.0
        %vm3011 = vcmp.gt.f32.partialorder %v2925, 0.0
        %vm3012 = vcmp.gt.f32.partialorder %v2930, 0.0
        %vm3013 = vcmp.gt.f32.partialorder %v2935, 0.0
        %vm3014 = vcmp.gt.f32.partialorder %v2940, 0.0
        %vm3015 = vcmp.gt.f32.partialorder %v2945, 0.0
        %vm3016 = vcmp.gt.f32.partialorder %v2950, 0.0
        %vm3017 = vcmp.gt.f32.partialorder %v2955, 0.0
        %vm3018 = vcmp.gt.f32.partialorder %v2960, 0.0
        %vm3019 = vcmp.gt.f32.partialorder %v2965, 0.0
        %vm3020 = vcmp.gt.f32.partialorder %v2970, 0.0
        %vm3021 = vcmp.gt.f32.partialorder %v2975, 0.0
        %vm3022 = vcmp.gt.f32.partialorder %v2980, 0.0
        %vm3023 = vcmp.gt.f32.partialorder %v2985, 0.0
        %vm3024 = vcmp.gt.f32.partialorder %v2990, 0.0
        %v3025 = vmul.f32 %v2835, 0.1
        %v3026 = vmul.f32 %v2840, 0.1
        %v3027 = vmul.f32 %v2845, 0.1
        %v3028 = vmul.f32 %v2850, 0.1
        %v3029 = vmul.f32 %v2855, 0.1
        %v3030 = vmul.f32 %v2860, 0.1
        %v3031 = vmul.f32 %v2865, 0.1
        %v3032 = vmul.f32 %v2870, 0.1
        %v3033 = vmul.f32 %v2875, 0.1
        %v3034 = vmul.f32 %v2880, 0.1
        %v3035 = vmul.f32 %v2885, 0.1
        %v3036 = vmul.f32 %v2890, 0.1
        %v3037 = vmul.f32 %v2895, 0.1
        %v3038 = vmul.f32 %v2900, 0.1
        %v3039 = vmul.f32 %v2905, 0.1
        %v3040 = vmul.f32 %v2910, 0.1
        %v3041 = vmul.f32 %v2915, 0.1
        %v3042 = vmul.f32 %v2920, 0.1
        %v3043 = vmul.f32 %v2925, 0.1
        %v3044 = vmul.f32 %v2930, 0.1
        %v3045 = vmul.f32 %v2935, 0.1
        %v3046 = vmul.f32 %v2940, 0.1
        %v3047 = vmul.f32 %v2945, 0.1
        %v3048 = vmul.f32 %v2950, 0.1
        %v3049 = vmul.f32 %v2955, 0.1
        %v3050 = vmul.f32 %v2960, 0.1
        %v3051 = vmul.f32 %v2965, 0.1
        %v3052 = vmul.f32 %v2970, 0.1
        %v3053 = vmul.f32 %v2975, 0.1
        %v3054 = vmul.f32 %v2980, 0.1
        %v3055 = vmul.f32 %v2985, 0.1
        %v3056 = vmul.f32 %v2990, 0.1
        %v3057 = vsel %vm2993, %v2835, %v3025
        %v3058 = vsel %vm2994, %v2840, %v3026
        %v3059 = vsel %vm2995, %v2845, %v3027
        %v3060 = vsel %vm2996, %v2850, %v3028
        %v3061 = vsel %vm2997, %v2855, %v3029
        %v3062 = vsel %vm2998, %v2860, %v3030
        %v3063 = vsel %vm2999, %v2865, %v3031
        %v3064 = vsel %vm3000, %v2870, %v3032
        %v3065 = vsel %vm3001, %v2875, %v3033
        %v3066 = vsel %vm3002, %v2880, %v3034
        %v3067 = vsel %vm3003, %v2885, %v3035
        %v3068 = vsel %vm3004, %v2890, %v3036
        %v3069 = vsel %vm3005, %v2895, %v3037
        %v3070 = vsel %vm3006, %v2900, %v3038
        %v3071 = vsel %vm3007, %v2905, %v3039
        %v3072 = vsel %vm3008, %v2910, %v3040
        %v3073 = vsel %vm3009, %v2915, %v3041
        %v3074 = vsel %vm3010, %v2920, %v3042
        %v3075 = vsel %vm3011, %v2925, %v3043
        %v3076 = vsel %vm3012, %v2930, %v3044
        %v3077 = vsel %vm3013, %v2935, %v3045
        %v3078 = vsel %vm3014, %v2940, %v3046
        %v3079 = vsel %vm3015, %v2945, %v3047
        %v3080 = vsel %vm3016, %v2950, %v3048
        %v3081 = vsel %vm3017, %v2955, %v3049
        %v3082 = vsel %vm3018, %v2960, %v3050
        %v3083 = vsel %vm3019, %v2965, %v3051
        %v3084 = vsel %vm3020, %v2970, %v3052
        %v3085 = vsel %vm3021, %v2975, %v3053
        %v3086 = vsel %vm3022, %v2980, %v3054
        %v3087 = vsel %vm3023, %v2985, %v3055
        %v3088 = vsel %vm3024, %v2990, %v3056
        %v3089 = vld [vmem:[%s5] sm:$0xff]
        %v3090 = vld [vmem:[%s5 + $0x8] sm:$0xff]
        %v3091 = vld [vmem:[%s5 + $0x10] sm:$0xff]
        %v3092 = vld [vmem:[%s5 + $0x18] sm:$0xff]
        %v3093 = vld [vmem:[%s6] sm:$0x1]
        %v3095 = vlaneseq
        %v3096 = vshrl.u32 %v3095, 7
        %v3097 = vsub.s32 0, %v3096
        %v3098 = vrot.slane %v3093, %v3097
        %v3101 = vsel %vm652, %v3057, 0
        %v3104 = vsel %vm652, %v3058, 0
        %v3107 = vsel %vm652, %v3059, 0
        %v3110 = vsel %vm652, %v3060, 0
        %v3113 = vsel %vm652, %v3061, 0
        %v3116 = vsel %vm652, %v3062, 0
        %v3119 = vsel %vm652, %v3063, 0
        %v3122 = vsel %vm652, %v3064, 0
        %v3125 = vsel %vm652, %v3065, 0
        %v3128 = vsel %vm652, %v3066, 0
        %v3131 = vsel %vm652, %v3067, 0
        %v3134 = vsel %vm652, %v3068, 0
        %v3137 = vsel %vm652, %v3069, 0
        %v3140 = vsel %vm652, %v3070, 0
        %v3143 = vsel %vm652, %v3071, 0
        %v3146 = vsel %vm652, %v3072, 0
        %v3149 = vsel %vm652, %v3073, 0
        %v3152 = vsel %vm652, %v3074, 0
        %v3155 = vsel %vm652, %v3075, 0
        %v3158 = vsel %vm652, %v3076, 0
        %v3161 = vsel %vm652, %v3077, 0
        %v3164 = vsel %vm652, %v3078, 0
        %v3167 = vsel %vm652, %v3079, 0
        %v3170 = vsel %vm652, %v3080, 0
        %v3173 = vsel %vm652, %v3081, 0
        %v3176 = vsel %vm652, %v3082, 0
        %v3179 = vsel %vm652, %v3083, 0
        %v3182 = vsel %vm652, %v3084, 0
        %v3185 = vsel %vm652, %v3085, 0
        %v3188 = vsel %vm652, %v3086, 0
        %v3191 = vsel %vm652, %v3087, 0
        %v3194 = vsel %vm652, %v3088, 0
        %3196 = vmatprep.subr.mxu0 0.0
        %3197 = vmatpush1.msra.mxu0 %v3089
        %3198 = vmatprep.subr.mxu0 0.0
        %3199 = vmatpush1.msra.mxu0 %v3090
        %3200 = vmatprep.subr.mxu0 0.0
        %3201 = vmatpush1.msra.mxu0 %v3091
        %3202 = vmatprep.subr.mxu0 0.0
        %3203 = vmatpush1.msra.mxu0 %v3092
        %3204 = vmatprep.subr.mxu0 0.0
        %3205 = vmatpush1.msra.mxu0 0.0
        %3206 = vmatprep.subr.mxu0 0.0
        %3207 = vmatpush1.msra.mxu0 0.0
        %3208 = vmatprep.subr.mxu0 0.0
        %3209 = vmatpush1.msra.mxu0 0.0
        %3210 = vmatprep.subr.mxu0 0.0
        %3211 = vmatpush1.msra.mxu0 0.0
        %3212 = vmatprep.subr.mxu0 0.0
        %3213 = vmatpush1.msra.mxu0 0.0
        %3214 = vmatprep.subr.mxu0 0.0
        %3215 = vmatpush1.msra.mxu0 0.0
        %3216 = vmatprep.subr.mxu0 0.0
        %3217 = vmatpush1.msra.mxu0 0.0
        %3218 = vmatprep.subr.mxu0 0.0
        %3219 = vmatpush1.msra.mxu0 0.0
        %3220 = vmatprep.subr.mxu0 0.0
        %3221 = vmatpush1.msra.mxu0 0.0
        %3222 = vmatprep.subr.mxu0 0.0
        %3223 = vmatpush1.msra.mxu0 0.0
        %3224 = vmatprep.subr.mxu0 0.0
        %3225 = vmatpush1.msra.mxu0 0.0
        %3226 = vmatprep.subr.mxu0 0.0
        %3227 = vmatpush1.msra.mxu0 0.0
        %3228 = vmatprep.subr.mxu0 0.0
        %3229 = vmatpush1.msra.mxu0 0.0
        %3230 = vmatprep.subr.mxu0 0.0
        %3231 = vmatpush1.msra.mxu0 0.0
        %3232 = vmatprep.subr.mxu0 0.0
        %3233 = vmatpush1.msra.mxu0 0.0
        %3234 = vmatprep.subr.mxu0 0.0
        %3235 = vmatpush1.msra.mxu0 0.0
        %3236 = vmatprep.subr.mxu0 0.0
        %3237 = vmatpush1.msra.mxu0 0.0
        %3238 = vmatprep.subr.mxu0 0.0
        %3239 = vmatpush1.msra.mxu0 0.0
        %3240 = vmatprep.subr.mxu0 0.0
        %3241 = vmatpush1.msra.mxu0 0.0
        %3242 = vmatprep.subr.mxu0 0.0
        %3243 = vmatpush1.msra.mxu0 0.0
        %3244 = vmatprep.subr.mxu0 0.0
        %3245 = vmatpush1.msra.mxu0 0.0
        %3246 = vmatprep.subr.mxu0 0.0
        %3247 = vmatpush1.msra.mxu0 0.0
        %3248 = vmatprep.subr.mxu0 0.0
        %3249 = vmatpush1.msra.mxu0 0.0
        %3250 = vmatprep.subr.mxu0 0.0
        %3251 = vmatpush1.msra.mxu0 0.0
        %3252 = vmatprep.subr.mxu0 0.0
        %3253 = vmatpush1.msra.mxu0 0.0
        %3254 = vmatprep.subr.mxu0 0.0
        %3255 = vmatpush1.msra.mxu0 0.0
        %3256 = vmatprep.subr.mxu0 0.0
        %3257 = vmatpush1.msra.mxu0 0.0
        %3258 = vmatprep.subr.mxu0 0.0
        %3259 = vmatpush1.msra.mxu0 0.0
        %3260 = vmatprep.mubr.f32.mxu0 0.0
        %3261 = vmatmul.mubr.f32.gmra.mrb[0].mxu0 %v3101
        %v3262 = vpop.f32.mrb[0].mxu0
        %v3263 = vadd.f32 %v3098, %v3262
        %v3264 = vpop.f32.mrb[0].mxu0
        %3265 = vmatprep.mubr.f32.mxu0 0.0
        %3266 = vmatmul.mubr.f32.gmra.mrb[0].mxu0 %v3104
        %v3267 = vpop.f32.mrb[0].mxu0
        %v3268 = vadd.f32 %v3098, %v3267
        %v3269 = vpop.f32.mrb[0].mxu0
        %3270 = vmatprep.mubr.f32.mxu0 0.0
        %3271 = vmatmul.mubr.f32.gmra.mrb[0].mxu0 %v3107
        %v3272 = vpop.f32.mrb[0].mxu0
        %v3273 = vadd.f32 %v3098, %v3272
        %v3274 = vpop.f32.mrb[0].mxu0
        %3275 = vmatprep.mubr.f32.mxu0 0.0
        %3276 = vmatmul.mubr.f32.gmra.mrb[0].mxu0 %v3110
        %v3277 = vpop.f32.mrb[0].mxu0
        %v3278 = vadd.f32 %v3098, %v3277
        %v3279 = vpop.f32.mrb[0].mxu0
        %3280 = vmatprep.mubr.f32.mxu0 0.0
        %3281 = vmatmul.mubr.f32.gmra.mrb[0].mxu0 %v3113
        %v3282 = vpop.f32.mrb[0].mxu0
        %v3283 = vadd.f32 %v3098, %v3282
        %v3284 = vpop.f32.mrb[0].mxu0
        %3285 = vmatprep.mubr.f32.mxu0 0.0
        %3286 = vmatmul.mubr.f32.gmra.mrb[0].mxu0 %v3116
        %v3287 = vpop.f32.mrb[0].mxu0
        %v3288 = vadd.f32 %v3098, %v3287
        %v3289 = vpop.f32.mrb[0].mxu0
        %3290 = vmatprep.mubr.f32.mxu0 0.0
        %3291 = vmatmul.mubr.f32.gmra.mrb[0].mxu0 %v3119
        %v3292 = vpop.f32.mrb[0].mxu0
        %v3293 = vadd.f32 %v3098, %v3292
        %v3294 = vpop.f32.mrb[0].mxu0
        %3295 = vmatprep.mubr.f32.mxu0 0.0
        %3296 = vmatmul.mubr.f32.gmra.mrb[0].mxu0 %v3122
        %v3297 = vpop.f32.mrb[0].mxu0
        %v3298 = vadd.f32 %v3098, %v3297
        %v3299 = vpop.f32.mrb[0].mxu0
        %3300 = vmatprep.mubr.f32.mxu0 0.0
        %3301 = vmatmul.mubr.f32.gmra.mrb[0].mxu0 %v3125
        %v3302 = vpop.f32.mrb[0].mxu0
        %v3303 = vadd.f32 %v3098, %v3302
        %v3304 = vpop.f32.mrb[0].mxu0
        %3305 = vmatprep.mubr.f32.mxu0 0.0
        %3306 = vmatmul.mubr.f32.gmra.mrb[0].mxu0 %v3128
        %v3307 = vpop.f32.mrb[0].mxu0
        %v3308 = vadd.f32 %v3098, %v3307
        %v3309 = vpop.f32.mrb[0].mxu0
        %3310 = vmatprep.mubr.f32.mxu0 0.0
        %3311 = vmatmul.mubr.f32.gmra.mrb[0].mxu0 %v3131
        %v3312 = vpop.f32.mrb[0].mxu0
        %v3313 = vadd.f32 %v3098, %v3312
        %v3314 = vpop.f32.mrb[0].mxu0
        %3315 = vmatprep.mubr.f32.mxu0 0.0
        %3316 = vmatmul.mubr.f32.gmra.mrb[0].mxu0 %v3134
        %v3317 = vpop.f32.mrb[0].mxu0
        %v3318 = vadd.f32 %v3098, %v3317
        %v3319 = vpop.f32.mrb[0].mxu0
        %3320 = vmatprep.mubr.f32.mxu0 0.0
        %3321 = vmatmul.mubr.f32.gmra.mrb[0].mxu0 %v3137
        %v3322 = vpop.f32.mrb[0].mxu0
        %v3323 = vadd.f32 %v3098, %v3322
        %v3324 = vpop.f32.mrb[0].mxu0
        %3325 = vmatprep.mubr.f32.mxu0 0.0
        %3326 = vmatmul.mubr.f32.gmra.mrb[0].mxu0 %v3140
        %v3327 = vpop.f32.mrb[0].mxu0
        %v3328 = vadd.f32 %v3098, %v3327
        %v3329 = vpop.f32.mrb[0].mxu0
        %3330 = vmatprep.mubr.f32.mxu0 0.0
        %3331 = vmatmul.mubr.f32.gmra.mrb[0].mxu0 %v3143
        %v3332 = vpop.f32.mrb[0].mxu0
        %v3333 = vadd.f32 %v3098, %v3332
        %v3334 = vpop.f32.mrb[0].mxu0
        %3335 = vmatprep.mubr.f32.mxu0 0.0
        %3336 = vmatmul.mubr.f32.gmra.mrb[0].mxu0 %v3146
        %v3337 = vpop.f32.mrb[0].mxu0
        %v3338 = vadd.f32 %v3098, %v3337
        %v3339 = vpop.f32.mrb[0].mxu0
        %3340 = vmatprep.mubr.f32.mxu0 0.0
        %3341 = vmatmul.mubr.f32.gmra.mrb[0].mxu0 %v3149
        %v3342 = vpop.f32.mrb[0].mxu0
        %v3343 = vadd.f32 %v3098, %v3342
        %v3344 = vpop.f32.mrb[0].mxu0
        %3345 = vmatprep.mubr.f32.mxu0 0.0
        %3346 = vmatmul.mubr.f32.gmra.mrb[0].mxu0 %v3152
        %v3347 = vpop.f32.mrb[0].mxu0
        %v3348 = vadd.f32 %v3098, %v3347
        %v3349 = vpop.f32.mrb[0].mxu0
        %3350 = vmatprep.mubr.f32.mxu0 0.0
        %3351 = vmatmul.mubr.f32.gmra.mrb[0].mxu0 %v3155
        %v3352 = vpop.f32.mrb[0].mxu0
        %v3353 = vadd.f32 %v3098, %v3352
        %v3354 = vpop.f32.mrb[0].mxu0
        %3355 = vmatprep.mubr.f32.mxu0 0.0
        %3356 = vmatmul.mubr.f32.gmra.mrb[0].mxu0 %v3158
        %v3357 = vpop.f32.mrb[0].mxu0
        %v3358 = vadd.f32 %v3098, %v3357
        %v3359 = vpop.f32.mrb[0].mxu0
        %3360 = vmatprep.mubr.f32.mxu0 0.0
        %3361 = vmatmul.mubr.f32.gmra.mrb[0].mxu0 %v3161
        %v3362 = vpop.f32.mrb[0].mxu0
        %v3363 = vadd.f32 %v3098, %v3362
        %v3364 = vpop.f32.mrb[0].mxu0
        %3365 = vmatprep.mubr.f32.mxu0 0.0
        %3366 = vmatmul.mubr.f32.gmra.mrb[0].mxu0 %v3164
        %v3367 = vpop.f32.mrb[0].mxu0
        %v3368 = vadd.f32 %v3098, %v3367
        %v3369 = vpop.f32.mrb[0].mxu0
        %3370 = vmatprep.mubr.f32.mxu0 0.0
        %3371 = vmatmul.mubr.f32.gmra.mrb[0].mxu0 %v3167
        %v3372 = vpop.f32.mrb[0].mxu0
        %v3373 = vadd.f32 %v3098, %v3372
        %v3374 = vpop.f32.mrb[0].mxu0
        %3375 = vmatprep.mubr.f32.mxu0 0.0
        %3376 = vmatmul.mubr.f32.gmra.mrb[0].mxu0 %v3170
        %v3377 = vpop.f32.mrb[0].mxu0
        %v3378 = vadd.f32 %v3098, %v3377
        %v3379 = vpop.f32.mrb[0].mxu0
        %3380 = vmatprep.mubr.f32.mxu0 0.0
        %3381 = vmatmul.mubr.f32.gmra.mrb[0].mxu0 %v3173
        %v3382 = vpop.f32.mrb[0].mxu0
        %v3383 = vadd.f32 %v3098, %v3382
        %v3384 = vpop.f32.mrb[0].mxu0
        %3385 = vmatprep.mubr.f32.mxu0 0.0
        %3386 = vmatmul.mubr.f32.gmra.mrb[0].mxu0 %v3176
        %v3387 = vpop.f32.mrb[0].mxu0
        %v3388 = vadd.f32 %v3098, %v3387
        %v3389 = vpop.f32.mrb[0].mxu0
        %3390 = vmatprep.mubr.f32.mxu0 0.0
        %3391 = vmatmul.mubr.f32.gmra.mrb[0].mxu0 %v3179
        %v3392 = vpop.f32.mrb[0].mxu0
        %v3393 = vadd.f32 %v3098, %v3392
        %v3394 = vpop.f32.mrb[0].mxu0
        %3395 = vmatprep.mubr.f32.mxu0 0.0
        %3396 = vmatmul.mubr.f32.gmra.mrb[0].mxu0 %v3182
        %v3397 = vpop.f32.mrb[0].mxu0
        %v3398 = vadd.f32 %v3098, %v3397
        %v3399 = vpop.f32.mrb[0].mxu0
        %3400 = vmatprep.mubr.f32.mxu0 0.0
        %3401 = vmatmul.mubr.f32.gmra.mrb[0].mxu0 %v3185
        %v3402 = vpop.f32.mrb[0].mxu0
        %v3403 = vadd.f32 %v3098, %v3402
        %v3404 = vpop.f32.mrb[0].mxu0
        %3405 = vmatprep.mubr.f32.mxu0 0.0
        %3406 = vmatmul.mubr.f32.gmra.mrb[0].mxu0 %v3188
        %v3407 = vpop.f32.mrb[0].mxu0
        %v3408 = vadd.f32 %v3098, %v3407
        %v3409 = vpop.f32.mrb[0].mxu0
        %3410 = vmatprep.mubr.f32.mxu0 0.0
        %3411 = vmatmul.mubr.f32.gmra.mrb[0].mxu0 %v3191
        %v3412 = vpop.f32.mrb[0].mxu0
        %v3413 = vadd.f32 %v3098, %v3412
        %v3414 = vpop.f32.mrb[0].mxu0
        %3415 = vmatprep.mubr.f32.mxu0 0.0
        %3416 = vmatmul.mubr.f32.gmra.mrb[0].mxu0 %v3194
        %v3417 = vpop.f32.mrb[0].mxu0
        %v3418 = vadd.f32 %v3098, %v3417
        %v3419 = vpop.f32.mrb[0].mxu0
        %3420 = vdwg.mxu0
        %vm3421 = vcmp.gt.f32.partialorder %v3263, 0.0
        %vm3422 = vcmp.gt.f32.partialorder %v3268, 0.0
        %vm3423 = vcmp.gt.f32.partialorder %v3273, 0.0
        %vm3424 = vcmp.gt.f32.partialorder %v3278, 0.0
        %vm3425 = vcmp.gt.f32.partialorder %v3283, 0.0
        %vm3426 = vcmp.gt.f32.partialorder %v3288, 0.0
        %vm3427 = vcmp.gt.f32.partialorder %v3293, 0.0
        %vm3428 = vcmp.gt.f32.partialorder %v3298, 0.0
        %vm3429 = vcmp.gt.f32.partialorder %v3303, 0.0
        %vm3430 = vcmp.gt.f32.partialorder %v3308, 0.0
        %vm3431 = vcmp.gt.f32.partialorder %v3313, 0.0
        %vm3432 = vcmp.gt.f32.partialorder %v3318, 0.0
        %vm3433 = vcmp.gt.f32.partialorder %v3323, 0.0
        %vm3434 = vcmp.gt.f32.partialorder %v3328, 0.0
        %vm3435 = vcmp.gt.f32.partialorder %v3333, 0.0
        %vm3436 = vcmp.gt.f32.partialorder %v3338, 0.0
        %vm3437 = vcmp.gt.f32.partialorder %v3343, 0.0
        %vm3438 = vcmp.gt.f32.partialorder %v3348, 0.0
        %vm3439 = vcmp.gt.f32.partialorder %v3353, 0.0
        %vm3440 = vcmp.gt.f32.partialorder %v3358, 0.0
        %vm3441 = vcmp.gt.f32.partialorder %v3363, 0.0
        %vm3442 = vcmp.gt.f32.partialorder %v3368, 0.0
        %vm3443 = vcmp.gt.f32.partialorder %v3373, 0.0
        %vm3444 = vcmp.gt.f32.partialorder %v3378, 0.0
        %vm3445 = vcmp.gt.f32.partialorder %v3383, 0.0
        %vm3446 = vcmp.gt.f32.partialorder %v3388, 0.0
        %vm3447 = vcmp.gt.f32.partialorder %v3393, 0.0
        %vm3448 = vcmp.gt.f32.partialorder %v3398, 0.0
        %vm3449 = vcmp.gt.f32.partialorder %v3403, 0.0
        %vm3450 = vcmp.gt.f32.partialorder %v3408, 0.0
        %vm3451 = vcmp.gt.f32.partialorder %v3413, 0.0
        %vm3452 = vcmp.gt.f32.partialorder %v3418, 0.0
        %v3453 = vmul.f32 %v3263, 0.1
        %v3454 = vmul.f32 %v3268, 0.1
        %v3455 = vmul.f32 %v3273, 0.1
        %v3456 = vmul.f32 %v3278, 0.1
        %v3457 = vmul.f32 %v3283, 0.1
        %v3458 = vmul.f32 %v3288, 0.1
        %v3459 = vmul.f32 %v3293, 0.1
        %v3460 = vmul.f32 %v3298, 0.1
        %v3461 = vmul.f32 %v3303, 0.1
        %v3462 = vmul.f32 %v3308, 0.1
        %v3463 = vmul.f32 %v3313, 0.1
        %v3464 = vmul.f32 %v3318, 0.1
        %v3465 = vmul.f32 %v3323, 0.1
        %v3466 = vmul.f32 %v3328, 0.1
        %v3467 = vmul.f32 %v3333, 0.1
        %v3468 = vmul.f32 %v3338, 0.1
        %v3469 = vmul.f32 %v3343, 0.1
        %v3470 = vmul.f32 %v3348, 0.1
        %v3471 = vmul.f32 %v3353, 0.1
        %v3472 = vmul.f32 %v3358, 0.1
        %v3473 = vmul.f32 %v3363, 0.1
        %v3474 = vmul.f32 %v3368, 0.1
        %v3475 = vmul.f32 %v3373, 0.1
        %v3476 = vmul.f32 %v3378, 0.1
        %v3477 = vmul.f32 %v3383, 0.1
        %v3478 = vmul.f32 %v3388, 0.1
        %v3479 = vmul.f32 %v3393, 0.1
        %v3480 = vmul.f32 %v3398, 0.1
        %v3481 = vmul.f32 %v3403, 0.1
        %v3482 = vmul.f32 %v3408, 0.1
        %v3483 = vmul.f32 %v3413, 0.1
        %v3484 = vmul.f32 %v3418, 0.1
        %v3485 = vsel %vm3421, %v3263, %v3453
        %v3486 = vsel %vm3422, %v3268, %v3454
        %v3487 = vsel %vm3423, %v3273, %v3455
        %v3488 = vsel %vm3424, %v3278, %v3456
        %v3489 = vsel %vm3425, %v3283, %v3457
        %v3490 = vsel %vm3426, %v3288, %v3458
        %v3491 = vsel %vm3427, %v3293, %v3459
        %v3492 = vsel %vm3428, %v3298, %v3460
        %v3493 = vsel %vm3429, %v3303, %v3461
        %v3494 = vsel %vm3430, %v3308, %v3462
        %v3495 = vsel %vm3431, %v3313, %v3463
        %v3496 = vsel %vm3432, %v3318, %v3464
        %v3497 = vsel %vm3433, %v3323, %v3465
        %v3498 = vsel %vm3434, %v3328, %v3466
        %v3499 = vsel %vm3435, %v3333, %v3467
        %v3500 = vsel %vm3436, %v3338, %v3468
        %v3501 = vsel %vm3437, %v3343, %v3469
        %v3502 = vsel %vm3438, %v3348, %v3470
        %v3503 = vsel %vm3439, %v3353, %v3471
        %v3504 = vsel %vm3440, %v3358, %v3472
        %v3505 = vsel %vm3441, %v3363, %v3473
        %v3506 = vsel %vm3442, %v3368, %v3474
        %v3507 = vsel %vm3443, %v3373, %v3475
        %v3508 = vsel %vm3444, %v3378, %v3476
        %v3509 = vsel %vm3445, %v3383, %v3477
        %v3510 = vsel %vm3446, %v3388, %v3478
        %v3511 = vsel %vm3447, %v3393, %v3479
        %v3512 = vsel %vm3448, %v3398, %v3480
        %v3513 = vsel %vm3449, %v3403, %v3481
        %v3514 = vsel %vm3450, %v3408, %v3482
        %v3515 = vsel %vm3451, %v3413, %v3483
        %v3516 = vsel %vm3452, %v3418, %v3484
        %3517 = vst.msk [vmem:[%s1070 + $0x1] sm:$0xff] %vm553, %v3485
        %3518 = vst.msk [vmem:[%s1070 + $0x9] sm:$0xff] %vm553, %v3486
        %3519 = vst.msk [vmem:[%s1070 + $0x19] sm:$0xff] %vm553, %v3487
        %3520 = vst.msk [vmem:[%s1070 + $0x21] sm:$0xff] %vm553, %v3488
        %3521 = vst.msk [vmem:[%s1070 + $0x31] sm:$0xff] %vm553, %v3489
        %3522 = vst.msk [vmem:[%s1070 + $0x39] sm:$0xff] %vm553, %v3490
        %3523 = vst.msk [vmem:[%s1070 + $0x49] sm:$0xff] %vm553, %v3491
        %3524 = vst.msk [vmem:[%s1070 + $0x51] sm:$0xff] %vm553, %v3492
        %3525 = vst.msk [vmem:[%s1070 + $0x61] sm:$0xff] %vm553, %v3493
        %3526 = vst.msk [vmem:[%s1070 + $0x69] sm:$0xff] %vm553, %v3494
        %3527 = vst.msk [vmem:[%s1070 + $0x79] sm:$0xff] %vm553, %v3495
        %3528 = vst.msk [vmem:[%s1070 + $0x81] sm:$0xff] %vm553, %v3496
        %3529 = vst.msk [vmem:[%s1070 + $0x91] sm:$0xff] %vm553, %v3497
        %3530 = vst.msk [vmem:[%s1070 + $0x99] sm:$0xff] %vm553, %v3498
        %3531 = vst.msk [vmem:[%s1070 + $0xa9] sm:$0xff] %vm553, %v3499
        %3532 = vst.msk [vmem:[%s1070 + $0xb1] sm:$0xff] %vm553, %v3500
        %3533 = vst.msk [vmem:[%s1070 + $0xc1] sm:$0xff] %vm553, %v3501
        %3534 = vst.msk [vmem:[%s1070 + $0xc9] sm:$0xff] %vm553, %v3502
        %3535 = vst.msk [vmem:[%s1070 + $0xd9] sm:$0xff] %vm553, %v3503
        %3536 = vst.msk [vmem:[%s1070 + $0xe1] sm:$0xff] %vm553, %v3504
        %3537 = vst.msk [vmem:[%s1070 + $0xf1] sm:$0xff] %vm553, %v3505
        %3538 = vst.msk [vmem:[%s1070 + $0xf9] sm:$0xff] %vm553, %v3506
        %3539 = vst.msk [vmem:[%s1070 + $0x109] sm:$0xff] %vm553, %v3507
        %3540 = vst.msk [vmem:[%s1070 + $0x111] sm:$0xff] %vm553, %v3508
        %3541 = vst.msk [vmem:[%s1070 + $0x121] sm:$0xff] %vm553, %v3509
        %3542 = vst.msk [vmem:[%s1070 + $0x129] sm:$0xff] %vm553, %v3510
        %3543 = vst.msk [vmem:[%s1070 + $0x139] sm:$0xff] %vm553, %v3511
        %3544 = vst.msk [vmem:[%s1070 + $0x141] sm:$0xff] %vm553, %v3512
        %3545 = vst.msk [vmem:[%s1070 + $0x151] sm:$0xff] %vm553, %v3513
        %3546 = vst.msk [vmem:[%s1070 + $0x159] sm:$0xff] %vm553, %v3514
        %3547 = vst.msk [vmem:[%s1070 + $0x169] sm:$0xff] %vm553, %v3515
        %3548 = vst.msk [vmem:[%s1070 + $0x171] sm:$0xff] %vm553, %v3516
        %v3549 = vld [vmem:[#allocation2] sm:$0xff]
        %v3550 = vld [vmem:[#allocation2 + $0x8] sm:$0xff]
        %v3551 = vld [vmem:[#allocation2 + $0x18] sm:$0xff]
        %v3552 = vld [vmem:[#allocation2 + $0x20] sm:$0xff]
        %v3553 = vld [vmem:[#allocation2 + $0x30] sm:$0xff]
        %v3554 = vld [vmem:[#allocation2 + $0x38] sm:$0xff]
        %v3555 = vld [vmem:[#allocation2 + $0x48] sm:$0xff]
        %v3556 = vld [vmem:[#allocation2 + $0x50] sm:$0xff]
        %v3557 = vld [vmem:[#allocation2 + $0x60] sm:$0xff]
        %v3558 = vld [vmem:[#allocation2 + $0x68] sm:$0xff]
        %v3559 = vld [vmem:[#allocation2 + $0x78] sm:$0xff]
        %v3560 = vld [vmem:[#allocation2 + $0x80] sm:$0xff]
        %v3561 = vld [vmem:[#allocation2 + $0x90] sm:$0xff]
        %v3562 = vld [vmem:[#allocation2 + $0x98] sm:$0xff]
        %v3563 = vld [vmem:[#allocation2 + $0xa8] sm:$0xff]
        %v3564 = vld [vmem:[#allocation2 + $0xb0] sm:$0xff]
        %v3565 = vld [vmem:[#allocation2 + $0xc0] sm:$0xff]
        %v3566 = vld [vmem:[#allocation2 + $0xc8] sm:$0xff]
        %v3567 = vld [vmem:[#allocation2 + $0xd8] sm:$0xff]
        %v3568 = vld [vmem:[#allocation2 + $0xe0] sm:$0xff]
        %v3569 = vld [vmem:[#allocation2 + $0xf0] sm:$0xff]
        %v3570 = vld [vmem:[#allocation2 + $0xf8] sm:$0xff]
        %v3571 = vld [vmem:[#allocation2 + $0x108] sm:$0xff]
        %v3572 = vld [vmem:[#allocation2 + $0x110] sm:$0xff]
        %v3573 = vld [vmem:[#allocation2 + $0x120] sm:$0xff]
        %v3574 = vld [vmem:[#allocation2 + $0x128] sm:$0xff]
        %v3575 = vld [vmem:[#allocation2 + $0x138] sm:$0xff]
        %v3576 = vld [vmem:[#allocation2 + $0x140] sm:$0xff]
        %v3577 = vld [vmem:[#allocation2 + $0x150] sm:$0xff]
        %v3578 = vld [vmem:[#allocation2 + $0x158] sm:$0xff]
        %v3579 = vld [vmem:[#allocation2 + $0x168] sm:$0xff]
        %v3580 = vld [vmem:[#allocation2 + $0x170] sm:$0xff]
        %3581 = vst.msk [vmem:[#allocation3] sm:$0xff] %vm553, %v3549
        %3582 = vst.msk [vmem:[#allocation3 + $0x10] sm:$0xff] %vm553, %v3550
        %3583 = vst.msk [vmem:[#allocation3 + $0x20] sm:$0xff] %vm553, %v3551
        %3584 = vst.msk [vmem:[#allocation3 + $0x30] sm:$0xff] %vm553, %v3552
        %3585 = vst.msk [vmem:[#allocation3 + $0x40] sm:$0xff] %vm553, %v3553
        %3586 = vst.msk [vmem:[#allocation3 + $0x50] sm:$0xff] %vm553, %v3554
        %3587 = vst.msk [vmem:[#allocation3 + $0x60] sm:$0xff] %vm553, %v3555
        %3588 = vst.msk [vmem:[#allocation3 + $0x70] sm:$0xff] %vm553, %v3556
        %3589 = vst.msk [vmem:[#allocation3 + $0x80] sm:$0xff] %vm553, %v3557
        %3590 = vst.msk [vmem:[#allocation3 + $0x90] sm:$0xff] %vm553, %v3558
        %3591 = vst.msk [vmem:[#allocation3 + $0xa0] sm:$0xff] %vm553, %v3559
        %3592 = vst.msk [vmem:[#allocation3 + $0xb0] sm:$0xff] %vm553, %v3560
        %3593 = vst.msk [vmem:[#allocation3 + $0xc0] sm:$0xff] %vm553, %v3561
        %3594 = vst.msk [vmem:[#allocation3 + $0xd0] sm:$0xff] %vm553, %v3562
        %3595 = vst.msk [vmem:[#allocation3 + $0xe0] sm:$0xff] %vm553, %v3563
        %3596 = vst.msk [vmem:[#allocation3 + $0xf0] sm:$0xff] %vm553, %v3564
        %3597 = vst.msk [vmem:[#allocation3 + $0x100] sm:$0xff] %vm553, %v3565
        %3598 = vst.msk [vmem:[#allocation3 + $0x110] sm:$0xff] %vm553, %v3566
        %3599 = vst.msk [vmem:[#allocation3 + $0x120] sm:$0xff] %vm553, %v3567
        %3600 = vst.msk [vmem:[#allocation3 + $0x130] sm:$0xff] %vm553, %v3568
        %3601 = vst.msk [vmem:[#allocation3 + $0x140] sm:$0xff] %vm553, %v3569
        %3602 = vst.msk [vmem:[#allocation3 + $0x150] sm:$0xff] %vm553, %v3570
        %3603 = vst.msk [vmem:[#allocation3 + $0x160] sm:$0xff] %vm553, %v3571
        %3604 = vst.msk [vmem:[#allocation3 + $0x170] sm:$0xff] %vm553, %v3572
        %3605 = vst.msk [vmem:[#allocation3 + $0x180] sm:$0xff] %vm553, %v3573
        %3606 = vst.msk [vmem:[#allocation3 + $0x190] sm:$0xff] %vm553, %v3574
        %3607 = vst.msk [vmem:[#allocation3 + $0x1a0] sm:$0xff] %vm553, %v3575
        %3608 = vst.msk [vmem:[#allocation3 + $0x1b0] sm:$0xff] %vm553, %v3576
        %3609 = vst.msk [vmem:[#allocation3 + $0x1c0] sm:$0xff] %vm553, %v3577
        %3610 = vst.msk [vmem:[#allocation3 + $0x1d0] sm:$0xff] %vm553, %v3578
        %3611 = vst.msk [vmem:[#allocation3 + $0x1e0] sm:$0xff] %vm553, %v3579
        %3612 = vst.msk [vmem:[#allocation3 + $0x1f0] sm:$0xff] %vm553, %v3580
        %v3613 = vld [vmem:[#allocation2 + $0x1] sm:$0xff]
        %v3614 = vld [vmem:[#allocation2 + $0x9] sm:$0xff]
        %v3615 = vld [vmem:[#allocation2 + $0x19] sm:$0xff]
        %v3616 = vld [vmem:[#allocation2 + $0x21] sm:$0xff]
        %v3617 = vld [vmem:[#allocation2 + $0x31] sm:$0xff]
        %v3618 = vld [vmem:[#allocation2 + $0x39] sm:$0xff]
        %v3619 = vld [vmem:[#allocation2 + $0x49] sm:$0xff]
        %v3620 = vld [vmem:[#allocation2 + $0x51] sm:$0xff]
        %v3621 = vld [vmem:[#allocation2 + $0x61] sm:$0xff]
        %v3622 = vld [vmem:[#allocation2 + $0x69] sm:$0xff]
        %v3623 = vld [vmem:[#allocation2 + $0x79] sm:$0xff]
        %v3624 = vld [vmem:[#allocation2 + $0x81] sm:$0xff]
        %v3625 = vld [vmem:[#allocation2 + $0x91] sm:$0xff]
        %v3626 = vld [vmem:[#allocation2 + $0x99] sm:$0xff]
        %v3627 = vld [vmem:[#allocation2 + $0xa9] sm:$0xff]
        %v3628 = vld [vmem:[#allocation2 + $0xb1] sm:$0xff]
        %v3629 = vld [vmem:[#allocation2 + $0xc1] sm:$0xff]
        %v3630 = vld [vmem:[#allocation2 + $0xc9] sm:$0xff]
        %v3631 = vld [vmem:[#allocation2 + $0xd9] sm:$0xff]
        %v3632 = vld [vmem:[#allocation2 + $0xe1] sm:$0xff]
        %v3633 = vld [vmem:[#allocation2 + $0xf1] sm:$0xff]
        %v3634 = vld [vmem:[#allocation2 + $0xf9] sm:$0xff]
        %v3635 = vld [vmem:[#allocation2 + $0x109] sm:$0xff]
        %v3636 = vld [vmem:[#allocation2 + $0x111] sm:$0xff]
        %v3637 = vld [vmem:[#allocation2 + $0x121] sm:$0xff]
        %v3638 = vld [vmem:[#allocation2 + $0x129] sm:$0xff]
        %v3639 = vld [vmem:[#allocation2 + $0x139] sm:$0xff]
        %v3640 = vld [vmem:[#allocation2 + $0x141] sm:$0xff]
        %v3641 = vld [vmem:[#allocation2 + $0x151] sm:$0xff]
        %v3642 = vld [vmem:[#allocation2 + $0x159] sm:$0xff]
        %v3643 = vld [vmem:[#allocation2 + $0x169] sm:$0xff]
        %v3644 = vld [vmem:[#allocation2 + $0x171] sm:$0xff]
        %3677 = vrot.lane.b32.xlu0 %v3613, 16
        %v3678 = vpop.permute.xlu0 %3677
        %3679 = vrot.lane.b32.xlu0 %v3614, 16
        %v3680 = vpop.permute.xlu0 %3679
        %3681 = vrot.lane.b32.xlu0 %v3615, 16
        %v3682 = vpop.permute.xlu0 %3681
        %3683 = vrot.lane.b32.xlu0 %v3616, 16
        %v3684 = vpop.permute.xlu0 %3683
        %3685 = vrot.lane.b32.xlu0 %v3617, 16
        %v3686 = vpop.permute.xlu0 %3685
        %3687 = vrot.lane.b32.xlu0 %v3618, 16
        %v3688 = vpop.permute.xlu0 %3687
        %3689 = vrot.lane.b32.xlu0 %v3619, 16
        %v3690 = vpop.permute.xlu0 %3689
        %3691 = vrot.lane.b32.xlu0 %v3620, 16
        %v3692 = vpop.permute.xlu0 %3691
        %3693 = vrot.lane.b32.xlu0 %v3621, 16
        %v3694 = vpop.permute.xlu0 %3693
        %3695 = vrot.lane.b32.xlu0 %v3622, 16
        %v3696 = vpop.permute.xlu0 %3695
        %3697 = vrot.lane.b32.xlu0 %v3623, 16
        %v3698 = vpop.permute.xlu0 %3697
        %3699 = vrot.lane.b32.xlu0 %v3624, 16
        %v3700 = vpop.permute.xlu0 %3699
        %3701 = vrot.lane.b32.xlu0 %v3625, 16
        %v3702 = vpop.permute.xlu0 %3701
        %3703 = vrot.lane.b32.xlu0 %v3626, 16
        %v3704 = vpop.permute.xlu0 %3703
        %3705 = vrot.lane.b32.xlu0 %v3627, 16
        %v3706 = vpop.permute.xlu0 %3705
        %3707 = vrot.lane.b32.xlu0 %v3628, 16
        %v3708 = vpop.permute.xlu0 %3707
        %3709 = vrot.lane.b32.xlu0 %v3629, 16
        %v3710 = vpop.permute.xlu0 %3709
        %3711 = vrot.lane.b32.xlu0 %v3630, 16
        %v3712 = vpop.permute.xlu0 %3711
        %3713 = vrot.lane.b32.xlu0 %v3631, 16
        %v3714 = vpop.permute.xlu0 %3713
        %3715 = vrot.lane.b32.xlu0 %v3632, 16
        %v3716 = vpop.permute.xlu0 %3715
        %3717 = vrot.lane.b32.xlu0 %v3633, 16
        %v3718 = vpop.permute.xlu0 %3717
        %3719 = vrot.lane.b32.xlu0 %v3634, 16
        %v3720 = vpop.permute.xlu0 %3719
        %3721 = vrot.lane.b32.xlu0 %v3635, 16
        %v3722 = vpop.permute.xlu0 %3721
        %3723 = vrot.lane.b32.xlu0 %v3636, 16
        %v3724 = vpop.permute.xlu0 %3723
        %3725 = vrot.lane.b32.xlu0 %v3637, 16
        %v3726 = vpop.permute.xlu0 %3725
        %3727 = vrot.lane.b32.xlu0 %v3638, 16
        %v3728 = vpop.permute.xlu0 %3727
        %3729 = vrot.lane.b32.xlu0 %v3639, 16
        %v3730 = vpop.permute.xlu0 %3729
        %3731 = vrot.lane.b32.xlu0 %v3640, 16
        %v3732 = vpop.permute.xlu0 %3731
        %3733 = vrot.lane.b32.xlu0 %v3641, 16
        %v3734 = vpop.permute.xlu0 %3733
        %3735 = vrot.lane.b32.xlu0 %v3642, 16
        %v3736 = vpop.permute.xlu0 %3735
        %3737 = vrot.lane.b32.xlu0 %v3643, 16
        %v3738 = vpop.permute.xlu0 %3737
        %3739 = vrot.lane.b32.xlu0 %v3644, 16
        %v3740 = vpop.permute.xlu0 %3739
        %3773 = vst.msk [vmem:[#allocation3] sm:$0xff] %vm1327, %v3678
        %3774 = vst.msk [vmem:[#allocation3 + $0x10] sm:$0xff] %vm1327, %v3680
        %3775 = vst.msk [vmem:[#allocation3 + $0x20] sm:$0xff] %vm1327, %v3682
        %3776 = vst.msk [vmem:[#allocation3 + $0x30] sm:$0xff] %vm1327, %v3684
        %3777 = vst.msk [vmem:[#allocation3 + $0x40] sm:$0xff] %vm1327, %v3686
        %3778 = vst.msk [vmem:[#allocation3 + $0x50] sm:$0xff] %vm1327, %v3688
        %3779 = vst.msk [vmem:[#allocation3 + $0x60] sm:$0xff] %vm1327, %v3690
        %3780 = vst.msk [vmem:[#allocation3 + $0x70] sm:$0xff] %vm1327, %v3692
        %3781 = vst.msk [vmem:[#allocation3 + $0x80] sm:$0xff] %vm1327, %v3694
        %3782 = vst.msk [vmem:[#allocation3 + $0x90] sm:$0xff] %vm1327, %v3696
        %3783 = vst.msk [vmem:[#allocation3 + $0xa0] sm:$0xff] %vm1327, %v3698
        %3784 = vst.msk [vmem:[#allocation3 + $0xb0] sm:$0xff] %vm1327, %v3700
        %3785 = vst.msk [vmem:[#allocation3 + $0xc0] sm:$0xff] %vm1327, %v3702
        %3786 = vst.msk [vmem:[#allocation3 + $0xd0] sm:$0xff] %vm1327, %v3704
        %3787 = vst.msk [vmem:[#allocation3 + $0xe0] sm:$0xff] %vm1327, %v3706
        %3788 = vst.msk [vmem:[#allocation3 + $0xf0] sm:$0xff] %vm1327, %v3708
        %3789 = vst.msk [vmem:[#allocation3 + $0x100] sm:$0xff] %vm1327, %v3710
        %3790 = vst.msk [vmem:[#allocation3 + $0x110] sm:$0xff] %vm1327, %v3712
        %3791 = vst.msk [vmem:[#allocation3 + $0x120] sm:$0xff] %vm1327, %v3714
        %3792 = vst.msk [vmem:[#allocation3 + $0x130] sm:$0xff] %vm1327, %v3716
        %3793 = vst.msk [vmem:[#allocation3 + $0x140] sm:$0xff] %vm1327, %v3718
        %3794 = vst.msk [vmem:[#allocation3 + $0x150] sm:$0xff] %vm1327, %v3720
        %3795 = vst.msk [vmem:[#allocation3 + $0x160] sm:$0xff] %vm1327, %v3722
        %3796 = vst.msk [vmem:[#allocation3 + $0x170] sm:$0xff] %vm1327, %v3724
        %3797 = vst.msk [vmem:[#allocation3 + $0x180] sm:$0xff] %vm1327, %v3726
        %3798 = vst.msk [vmem:[#allocation3 + $0x190] sm:$0xff] %vm1327, %v3728
        %3799 = vst.msk [vmem:[#allocation3 + $0x1a0] sm:$0xff] %vm1327, %v3730
        %3800 = vst.msk [vmem:[#allocation3 + $0x1b0] sm:$0xff] %vm1327, %v3732
        %3801 = vst.msk [vmem:[#allocation3 + $0x1c0] sm:$0xff] %vm1327, %v3734
        %3802 = vst.msk [vmem:[#allocation3 + $0x1d0] sm:$0xff] %vm1327, %v3736
        %3803 = vst.msk [vmem:[#allocation3 + $0x1e0] sm:$0xff] %vm1327, %v3738
        %3804 = vst.msk [vmem:[#allocation3 + $0x1f0] sm:$0xff] %vm1327, %v3740
        %v3805 = vld [vmem:[#allocation2 + $0x2] sm:$0xff]
        %v3806 = vld [vmem:[#allocation2 + $0xa] sm:$0xff]
        %v3807 = vld [vmem:[#allocation2 + $0x1a] sm:$0xff]
        %v3808 = vld [vmem:[#allocation2 + $0x22] sm:$0xff]
        %v3809 = vld [vmem:[#allocation2 + $0x32] sm:$0xff]
        %v3810 = vld [vmem:[#allocation2 + $0x3a] sm:$0xff]
        %v3811 = vld [vmem:[#allocation2 + $0x4a] sm:$0xff]
        %v3812 = vld [vmem:[#allocation2 + $0x52] sm:$0xff]
        %v3813 = vld [vmem:[#allocation2 + $0x62] sm:$0xff]
        %v3814 = vld [vmem:[#allocation2 + $0x6a] sm:$0xff]
        %v3815 = vld [vmem:[#allocation2 + $0x7a] sm:$0xff]
        %v3816 = vld [vmem:[#allocation2 + $0x82] sm:$0xff]
        %v3817 = vld [vmem:[#allocation2 + $0x92] sm:$0xff]
        %v3818 = vld [vmem:[#allocation2 + $0x9a] sm:$0xff]
        %v3819 = vld [vmem:[#allocation2 + $0xaa] sm:$0xff]
        %v3820 = vld [vmem:[#allocation2 + $0xb2] sm:$0xff]
        %v3821 = vld [vmem:[#allocation2 + $0xc2] sm:$0xff]
        %v3822 = vld [vmem:[#allocation2 + $0xca] sm:$0xff]
        %v3823 = vld [vmem:[#allocation2 + $0xda] sm:$0xff]
        %v3824 = vld [vmem:[#allocation2 + $0xe2] sm:$0xff]
        %v3825 = vld [vmem:[#allocation2 + $0xf2] sm:$0xff]
        %v3826 = vld [vmem:[#allocation2 + $0xfa] sm:$0xff]
        %v3827 = vld [vmem:[#allocation2 + $0x10a] sm:$0xff]
        %v3828 = vld [vmem:[#allocation2 + $0x112] sm:$0xff]
        %v3829 = vld [vmem:[#allocation2 + $0x122] sm:$0xff]
        %v3830 = vld [vmem:[#allocation2 + $0x12a] sm:$0xff]
        %v3831 = vld [vmem:[#allocation2 + $0x13a] sm:$0xff]
        %v3832 = vld [vmem:[#allocation2 + $0x142] sm:$0xff]
        %v3833 = vld [vmem:[#allocation2 + $0x152] sm:$0xff]
        %v3834 = vld [vmem:[#allocation2 + $0x15a] sm:$0xff]
        %v3835 = vld [vmem:[#allocation2 + $0x16a] sm:$0xff]
        %v3836 = vld [vmem:[#allocation2 + $0x172] sm:$0xff]
        %3869 = vrot.lane.b32.xlu0 %v3805, 32
        %v3870 = vpop.permute.xlu0 %3869
        %3871 = vrot.lane.b32.xlu0 %v3806, 32
        %v3872 = vpop.permute.xlu0 %3871
        %3873 = vrot.lane.b32.xlu0 %v3807, 32
        %v3874 = vpop.permute.xlu0 %3873
        %3875 = vrot.lane.b32.xlu0 %v3808, 32
        %v3876 = vpop.permute.xlu0 %3875
        %3877 = vrot.lane.b32.xlu0 %v3809, 32
        %v3878 = vpop.permute.xlu0 %3877
        %3879 = vrot.lane.b32.xlu0 %v3810, 32
        %v3880 = vpop.permute.xlu0 %3879
        %3881 = vrot.lane.b32.xlu0 %v3811, 32
        %v3882 = vpop.permute.xlu0 %3881
        %3883 = vrot.lane.b32.xlu0 %v3812, 32
        %v3884 = vpop.permute.xlu0 %3883
        %3885 = vrot.lane.b32.xlu0 %v3813, 32
        %v3886 = vpop.permute.xlu0 %3885
        %3887 = vrot.lane.b32.xlu0 %v3814, 32
        %v3888 = vpop.permute.xlu0 %3887
        %3889 = vrot.lane.b32.xlu0 %v3815, 32
        %v3890 = vpop.permute.xlu0 %3889
        %3891 = vrot.lane.b32.xlu0 %v3816, 32
        %v3892 = vpop.permute.xlu0 %3891
        %3893 = vrot.lane.b32.xlu0 %v3817, 32
        %v3894 = vpop.permute.xlu0 %3893
        %3895 = vrot.lane.b32.xlu0 %v3818, 32
        %v3896 = vpop.permute.xlu0 %3895
        %3897 = vrot.lane.b32.xlu0 %v3819, 32
        %v3898 = vpop.permute.xlu0 %3897
        %3899 = vrot.lane.b32.xlu0 %v3820, 32
        %v3900 = vpop.permute.xlu0 %3899
        %3901 = vrot.lane.b32.xlu0 %v3821, 32
        %v3902 = vpop.permute.xlu0 %3901
        %3903 = vrot.lane.b32.xlu0 %v3822, 32
        %v3904 = vpop.permute.xlu0 %3903
        %3905 = vrot.lane.b32.xlu0 %v3823, 32
        %v3906 = vpop.permute.xlu0 %3905
        %3907 = vrot.lane.b32.xlu0 %v3824, 32
        %v3908 = vpop.permute.xlu0 %3907
        %3909 = vrot.lane.b32.xlu0 %v3825, 32
        %v3910 = vpop.permute.xlu0 %3909
        %3911 = vrot.lane.b32.xlu0 %v3826, 32
        %v3912 = vpop.permute.xlu0 %3911
        %3913 = vrot.lane.b32.xlu0 %v3827, 32
        %v3914 = vpop.permute.xlu0 %3913
        %3915 = vrot.lane.b32.xlu0 %v3828, 32
        %v3916 = vpop.permute.xlu0 %3915
        %3917 = vrot.lane.b32.xlu0 %v3829, 32
        %v3918 = vpop.permute.xlu0 %3917
        %3919 = vrot.lane.b32.xlu0 %v3830, 32
        %v3920 = vpop.permute.xlu0 %3919
        %3921 = vrot.lane.b32.xlu0 %v3831, 32
        %v3922 = vpop.permute.xlu0 %3921
        %3923 = vrot.lane.b32.xlu0 %v3832, 32
        %v3924 = vpop.permute.xlu0 %3923
        %3925 = vrot.lane.b32.xlu0 %v3833, 32
        %v3926 = vpop.permute.xlu0 %3925
        %3927 = vrot.lane.b32.xlu0 %v3834, 32
        %v3928 = vpop.permute.xlu0 %3927
        %3929 = vrot.lane.b32.xlu0 %v3835, 32
        %v3930 = vpop.permute.xlu0 %3929
        %3931 = vrot.lane.b32.xlu0 %v3836, 32
        %v3932 = vpop.permute.xlu0 %3931
        %3965 = vst.msk [vmem:[#allocation3] sm:$0xff] %vm1520, %v3870
        %3966 = vst.msk [vmem:[#allocation3 + $0x10] sm:$0xff] %vm1520, %v3872
        %3967 = vst.msk [vmem:[#allocation3 + $0x20] sm:$0xff] %vm1520, %v3874
        %3968 = vst.msk [vmem:[#allocation3 + $0x30] sm:$0xff] %vm1520, %v3876
        %3969 = vst.msk [vmem:[#allocation3 + $0x40] sm:$0xff] %vm1520, %v3878
        %3970 = vst.msk [vmem:[#allocation3 + $0x50] sm:$0xff] %vm1520, %v3880
        %3971 = vst.msk [vmem:[#allocation3 + $0x60] sm:$0xff] %vm1520, %v3882
        %3972 = vst.msk [vmem:[#allocation3 + $0x70] sm:$0xff] %vm1520, %v3884
        %3973 = vst.msk [vmem:[#allocation3 + $0x80] sm:$0xff] %vm1520, %v3886
        %3974 = vst.msk [vmem:[#allocation3 + $0x90] sm:$0xff] %vm1520, %v3888
        %3975 = vst.msk [vmem:[#allocation3 + $0xa0] sm:$0xff] %vm1520, %v3890
        %3976 = vst.msk [vmem:[#allocation3 + $0xb0] sm:$0xff] %vm1520, %v3892
        %3977 = vst.msk [vmem:[#allocation3 + $0xc0] sm:$0xff] %vm1520, %v3894
        %3978 = vst.msk [vmem:[#allocation3 + $0xd0] sm:$0xff] %vm1520, %v3896
        %3979 = vst.msk [vmem:[#allocation3 + $0xe0] sm:$0xff] %vm1520, %v3898
        %3980 = vst.msk [vmem:[#allocation3 + $0xf0] sm:$0xff] %vm1520, %v3900
        %3981 = vst.msk [vmem:[#allocation3 + $0x100] sm:$0xff] %vm1520, %v3902
        %3982 = vst.msk [vmem:[#allocation3 + $0x110] sm:$0xff] %vm1520, %v3904
        %3983 = vst.msk [vmem:[#allocation3 + $0x120] sm:$0xff] %vm1520, %v3906
        %3984 = vst.msk [vmem:[#allocation3 + $0x130] sm:$0xff] %vm1520, %v3908
        %3985 = vst.msk [vmem:[#allocation3 + $0x140] sm:$0xff] %vm1520, %v3910
        %3986 = vst.msk [vmem:[#allocation3 + $0x150] sm:$0xff] %vm1520, %v3912
        %3987 = vst.msk [vmem:[#allocation3 + $0x160] sm:$0xff] %vm1520, %v3914
        %3988 = vst.msk [vmem:[#allocation3 + $0x170] sm:$0xff] %vm1520, %v3916
        %3989 = vst.msk [vmem:[#allocation3 + $0x180] sm:$0xff] %vm1520, %v3918
        %3990 = vst.msk [vmem:[#allocation3 + $0x190] sm:$0xff] %vm1520, %v3920
        %3991 = vst.msk [vmem:[#allocation3 + $0x1a0] sm:$0xff] %vm1520, %v3922
        %3992 = vst.msk [vmem:[#allocation3 + $0x1b0] sm:$0xff] %vm1520, %v3924
        %3993 = vst.msk [vmem:[#allocation3 + $0x1c0] sm:$0xff] %vm1520, %v3926
        %3994 = vst.msk [vmem:[#allocation3 + $0x1d0] sm:$0xff] %vm1520, %v3928
        %3995 = vst.msk [vmem:[#allocation3 + $0x1e0] sm:$0xff] %vm1520, %v3930
        %3996 = vst.msk [vmem:[#allocation3 + $0x1f0] sm:$0xff] %vm1520, %v3932
        %v3997 = vld [vmem:[%s1070] sm:$0xff]
        %v3998 = vld [vmem:[%s1070 + $0x8] sm:$0xff]
        %v3999 = vld [vmem:[%s1070 + $0x18] sm:$0xff]
        %v4000 = vld [vmem:[%s1070 + $0x20] sm:$0xff]
        %v4001 = vld [vmem:[%s1070 + $0x30] sm:$0xff]
        %v4002 = vld [vmem:[%s1070 + $0x38] sm:$0xff]
        %v4003 = vld [vmem:[%s1070 + $0x48] sm:$0xff]
        %v4004 = vld [vmem:[%s1070 + $0x50] sm:$0xff]
        %v4005 = vld [vmem:[%s1070 + $0x60] sm:$0xff]
        %v4006 = vld [vmem:[%s1070 + $0x68] sm:$0xff]
        %v4007 = vld [vmem:[%s1070 + $0x78] sm:$0xff]
        %v4008 = vld [vmem:[%s1070 + $0x80] sm:$0xff]
        %v4009 = vld [vmem:[%s1070 + $0x90] sm:$0xff]
        %v4010 = vld [vmem:[%s1070 + $0x98] sm:$0xff]
        %v4011 = vld [vmem:[%s1070 + $0xa8] sm:$0xff]
        %v4012 = vld [vmem:[%s1070 + $0xb0] sm:$0xff]
        %v4013 = vld [vmem:[%s1070 + $0xc0] sm:$0xff]
        %v4014 = vld [vmem:[%s1070 + $0xc8] sm:$0xff]
        %v4015 = vld [vmem:[%s1070 + $0xd8] sm:$0xff]
        %v4016 = vld [vmem:[%s1070 + $0xe0] sm:$0xff]
        %v4017 = vld [vmem:[%s1070 + $0xf0] sm:$0xff]
        %v4018 = vld [vmem:[%s1070 + $0xf8] sm:$0xff]
        %v4019 = vld [vmem:[%s1070 + $0x108] sm:$0xff]
        %v4020 = vld [vmem:[%s1070 + $0x110] sm:$0xff]
        %v4021 = vld [vmem:[%s1070 + $0x120] sm:$0xff]
        %v4022 = vld [vmem:[%s1070 + $0x128] sm:$0xff]
        %v4023 = vld [vmem:[%s1070 + $0x138] sm:$0xff]
        %v4024 = vld [vmem:[%s1070 + $0x140] sm:$0xff]
        %v4025 = vld [vmem:[%s1070 + $0x150] sm:$0xff]
        %v4026 = vld [vmem:[%s1070 + $0x158] sm:$0xff]
        %v4027 = vld [vmem:[%s1070 + $0x168] sm:$0xff]
        %v4028 = vld [vmem:[%s1070 + $0x170] sm:$0xff]
        %4061 = vrot.lane.b32.xlu0 %v3997, 48
        %v4062 = vpop.permute.xlu0 %4061
        %4063 = vrot.lane.b32.xlu0 %v3998, 48
        %v4064 = vpop.permute.xlu0 %4063
        %4065 = vrot.lane.b32.xlu0 %v3999, 48
        %v4066 = vpop.permute.xlu0 %4065
        %4067 = vrot.lane.b32.xlu0 %v4000, 48
        %v4068 = vpop.permute.xlu0 %4067
        %4069 = vrot.lane.b32.xlu0 %v4001, 48
        %v4070 = vpop.permute.xlu0 %4069
        %4071 = vrot.lane.b32.xlu0 %v4002, 48
        %v4072 = vpop.permute.xlu0 %4071
        %4073 = vrot.lane.b32.xlu0 %v4003, 48
        %v4074 = vpop.permute.xlu0 %4073
        %4075 = vrot.lane.b32.xlu0 %v4004, 48
        %v4076 = vpop.permute.xlu0 %4075
        %4077 = vrot.lane.b32.xlu0 %v4005, 48
        %v4078 = vpop.permute.xlu0 %4077
        %4079 = vrot.lane.b32.xlu0 %v4006, 48
        %v4080 = vpop.permute.xlu0 %4079
        %4081 = vrot.lane.b32.xlu0 %v4007, 48
        %v4082 = vpop.permute.xlu0 %4081
        %4083 = vrot.lane.b32.xlu0 %v4008, 48
        %v4084 = vpop.permute.xlu0 %4083
        %4085 = vrot.lane.b32.xlu0 %v4009, 48
        %v4086 = vpop.permute.xlu0 %4085
        %4087 = vrot.lane.b32.xlu0 %v4010, 48
        %v4088 = vpop.permute.xlu0 %4087
        %4089 = vrot.lane.b32.xlu0 %v4011, 48
        %v4090 = vpop.permute.xlu0 %4089
        %4091 = vrot.lane.b32.xlu0 %v4012, 48
        %v4092 = vpop.permute.xlu0 %4091
        %4093 = vrot.lane.b32.xlu0 %v4013, 48
        %v4094 = vpop.permute.xlu0 %4093
        %4095 = vrot.lane.b32.xlu0 %v4014, 48
        %v4096 = vpop.permute.xlu0 %4095
        %4097 = vrot.lane.b32.xlu0 %v4015, 48
        %v4098 = vpop.permute.xlu0 %4097
        %4099 = vrot.lane.b32.xlu0 %v4016, 48
        %v4100 = vpop.permute.xlu0 %4099
        %4101 = vrot.lane.b32.xlu0 %v4017, 48
        %v4102 = vpop.permute.xlu0 %4101
        %4103 = vrot.lane.b32.xlu0 %v4018, 48
        %v4104 = vpop.permute.xlu0 %4103
        %4105 = vrot.lane.b32.xlu0 %v4019, 48
        %v4106 = vpop.permute.xlu0 %4105
        %4107 = vrot.lane.b32.xlu0 %v4020, 48
        %v4108 = vpop.permute.xlu0 %4107
        %4109 = vrot.lane.b32.xlu0 %v4021, 48
        %v4110 = vpop.permute.xlu0 %4109
        %4111 = vrot.lane.b32.xlu0 %v4022, 48
        %v4112 = vpop.permute.xlu0 %4111
        %4113 = vrot.lane.b32.xlu0 %v4023, 48
        %v4114 = vpop.permute.xlu0 %4113
        %4115 = vrot.lane.b32.xlu0 %v4024, 48
        %v4116 = vpop.permute.xlu0 %4115
        %4117 = vrot.lane.b32.xlu0 %v4025, 48
        %v4118 = vpop.permute.xlu0 %4117
        %4119 = vrot.lane.b32.xlu0 %v4026, 48
        %v4120 = vpop.permute.xlu0 %4119
        %4121 = vrot.lane.b32.xlu0 %v4027, 48
        %v4122 = vpop.permute.xlu0 %4121
        %4123 = vrot.lane.b32.xlu0 %v4028, 48
        %v4124 = vpop.permute.xlu0 %4123
        %4157 = vst.msk [vmem:[#allocation3] sm:$0xff] %vm1713, %v4062
        %4158 = vst.msk [vmem:[#allocation3 + $0x10] sm:$0xff] %vm1713, %v4064
        %4159 = vst.msk [vmem:[#allocation3 + $0x20] sm:$0xff] %vm1713, %v4066
        %4160 = vst.msk [vmem:[#allocation3 + $0x30] sm:$0xff] %vm1713, %v4068
        %4161 = vst.msk [vmem:[#allocation3 + $0x40] sm:$0xff] %vm1713, %v4070
        %4162 = vst.msk [vmem:[#allocation3 + $0x50] sm:$0xff] %vm1713, %v4072
        %4163 = vst.msk [vmem:[#allocation3 + $0x60] sm:$0xff] %vm1713, %v4074
        %4164 = vst.msk [vmem:[#allocation3 + $0x70] sm:$0xff] %vm1713, %v4076
        %4165 = vst.msk [vmem:[#allocation3 + $0x80] sm:$0xff] %vm1713, %v4078
        %4166 = vst.msk [vmem:[#allocation3 + $0x90] sm:$0xff] %vm1713, %v4080
        %4167 = vst.msk [vmem:[#allocation3 + $0xa0] sm:$0xff] %vm1713, %v4082
        %4168 = vst.msk [vmem:[#allocation3 + $0xb0] sm:$0xff] %vm1713, %v4084
        %4169 = vst.msk [vmem:[#allocation3 + $0xc0] sm:$0xff] %vm1713, %v4086
        %4170 = vst.msk [vmem:[#allocation3 + $0xd0] sm:$0xff] %vm1713, %v4088
        %4171 = vst.msk [vmem:[#allocation3 + $0xe0] sm:$0xff] %vm1713, %v4090
        %4172 = vst.msk [vmem:[#allocation3 + $0xf0] sm:$0xff] %vm1713, %v4092
        %4173 = vst.msk [vmem:[#allocation3 + $0x100] sm:$0xff] %vm1713, %v4094
        %4174 = vst.msk [vmem:[#allocation3 + $0x110] sm:$0xff] %vm1713, %v4096
        %4175 = vst.msk [vmem:[#allocation3 + $0x120] sm:$0xff] %vm1713, %v4098
        %4176 = vst.msk [vmem:[#allocation3 + $0x130] sm:$0xff] %vm1713, %v4100
        %4177 = vst.msk [vmem:[#allocation3 + $0x140] sm:$0xff] %vm1713, %v4102
        %4178 = vst.msk [vmem:[#allocation3 + $0x150] sm:$0xff] %vm1713, %v4104
        %4179 = vst.msk [vmem:[#allocation3 + $0x160] sm:$0xff] %vm1713, %v4106
        %4180 = vst.msk [vmem:[#allocation3 + $0x170] sm:$0xff] %vm1713, %v4108
        %4181 = vst.msk [vmem:[#allocation3 + $0x180] sm:$0xff] %vm1713, %v4110
        %4182 = vst.msk [vmem:[#allocation3 + $0x190] sm:$0xff] %vm1713, %v4112
        %4183 = vst.msk [vmem:[#allocation3 + $0x1a0] sm:$0xff] %vm1713, %v4114
        %4184 = vst.msk [vmem:[#allocation3 + $0x1b0] sm:$0xff] %vm1713, %v4116
        %4185 = vst.msk [vmem:[#allocation3 + $0x1c0] sm:$0xff] %vm1713, %v4118
        %4186 = vst.msk [vmem:[#allocation3 + $0x1d0] sm:$0xff] %vm1713, %v4120
        %4187 = vst.msk [vmem:[#allocation3 + $0x1e0] sm:$0xff] %vm1713, %v4122
        %4188 = vst.msk [vmem:[#allocation3 + $0x1f0] sm:$0xff] %vm1713, %v4124
        %v4189 = vld [vmem:[%s1070 + $0x1] sm:$0xff]
        %v4190 = vld [vmem:[%s1070 + $0x9] sm:$0xff]
        %v4191 = vld [vmem:[%s1070 + $0x19] sm:$0xff]
        %v4192 = vld [vmem:[%s1070 + $0x21] sm:$0xff]
        %v4193 = vld [vmem:[%s1070 + $0x31] sm:$0xff]
        %v4194 = vld [vmem:[%s1070 + $0x39] sm:$0xff]
        %v4195 = vld [vmem:[%s1070 + $0x49] sm:$0xff]
        %v4196 = vld [vmem:[%s1070 + $0x51] sm:$0xff]
        %v4197 = vld [vmem:[%s1070 + $0x61] sm:$0xff]
        %v4198 = vld [vmem:[%s1070 + $0x69] sm:$0xff]
        %v4199 = vld [vmem:[%s1070 + $0x79] sm:$0xff]
        %v4200 = vld [vmem:[%s1070 + $0x81] sm:$0xff]
        %v4201 = vld [vmem:[%s1070 + $0x91] sm:$0xff]
        %v4202 = vld [vmem:[%s1070 + $0x99] sm:$0xff]
        %v4203 = vld [vmem:[%s1070 + $0xa9] sm:$0xff]
        %v4204 = vld [vmem:[%s1070 + $0xb1] sm:$0xff]
        %v4205 = vld [vmem:[%s1070 + $0xc1] sm:$0xff]
        %v4206 = vld [vmem:[%s1070 + $0xc9] sm:$0xff]
        %v4207 = vld [vmem:[%s1070 + $0xd9] sm:$0xff]
        %v4208 = vld [vmem:[%s1070 + $0xe1] sm:$0xff]
        %v4209 = vld [vmem:[%s1070 + $0xf1] sm:$0xff]
        %v4210 = vld [vmem:[%s1070 + $0xf9] sm:$0xff]
        %v4211 = vld [vmem:[%s1070 + $0x109] sm:$0xff]
        %v4212 = vld [vmem:[%s1070 + $0x111] sm:$0xff]
        %v4213 = vld [vmem:[%s1070 + $0x121] sm:$0xff]
        %v4214 = vld [vmem:[%s1070 + $0x129] sm:$0xff]
        %v4215 = vld [vmem:[%s1070 + $0x139] sm:$0xff]
        %v4216 = vld [vmem:[%s1070 + $0x141] sm:$0xff]
        %v4217 = vld [vmem:[%s1070 + $0x151] sm:$0xff]
        %v4218 = vld [vmem:[%s1070 + $0x159] sm:$0xff]
        %v4219 = vld [vmem:[%s1070 + $0x169] sm:$0xff]
        %v4220 = vld [vmem:[%s1070 + $0x171] sm:$0xff]
        %4253 = vrot.lane.b32.xlu0 %v4189, 64
        %v4254 = vpop.permute.xlu0 %4253
        %4255 = vrot.lane.b32.xlu0 %v4190, 64
        %v4256 = vpop.permute.xlu0 %4255
        %4257 = vrot.lane.b32.xlu0 %v4191, 64
        %v4258 = vpop.permute.xlu0 %4257
        %4259 = vrot.lane.b32.xlu0 %v4192, 64
        %v4260 = vpop.permute.xlu0 %4259
        %4261 = vrot.lane.b32.xlu0 %v4193, 64
        %v4262 = vpop.permute.xlu0 %4261
        %4263 = vrot.lane.b32.xlu0 %v4194, 64
        %v4264 = vpop.permute.xlu0 %4263
        %4265 = vrot.lane.b32.xlu0 %v4195, 64
        %v4266 = vpop.permute.xlu0 %4265
        %4267 = vrot.lane.b32.xlu0 %v4196, 64
        %v4268 = vpop.permute.xlu0 %4267
        %4269 = vrot.lane.b32.xlu0 %v4197, 64
        %v4270 = vpop.permute.xlu0 %4269
        %4271 = vrot.lane.b32.xlu0 %v4198, 64
        %v4272 = vpop.permute.xlu0 %4271
        %4273 = vrot.lane.b32.xlu0 %v4199, 64
        %v4274 = vpop.permute.xlu0 %4273
        %4275 = vrot.lane.b32.xlu0 %v4200, 64
        %v4276 = vpop.permute.xlu0 %4275
        %4277 = vrot.lane.b32.xlu0 %v4201, 64
        %v4278 = vpop.permute.xlu0 %4277
        %4279 = vrot.lane.b32.xlu0 %v4202, 64
        %v4280 = vpop.permute.xlu0 %4279
        %4281 = vrot.lane.b32.xlu0 %v4203, 64
        %v4282 = vpop.permute.xlu0 %4281
        %4283 = vrot.lane.b32.xlu0 %v4204, 64
        %v4284 = vpop.permute.xlu0 %4283
        %4285 = vrot.lane.b32.xlu0 %v4205, 64
        %v4286 = vpop.permute.xlu0 %4285
        %4287 = vrot.lane.b32.xlu0 %v4206, 64
        %v4288 = vpop.permute.xlu0 %4287
        %4289 = vrot.lane.b32.xlu0 %v4207, 64
        %v4290 = vpop.permute.xlu0 %4289
        %4291 = vrot.lane.b32.xlu0 %v4208, 64
        %v4292 = vpop.permute.xlu0 %4291
        %4293 = vrot.lane.b32.xlu0 %v4209, 64
        %v4294 = vpop.permute.xlu0 %4293
        %4295 = vrot.lane.b32.xlu0 %v4210, 64
        %v4296 = vpop.permute.xlu0 %4295
        %4297 = vrot.lane.b32.xlu0 %v4211, 64
        %v4298 = vpop.permute.xlu0 %4297
        %4299 = vrot.lane.b32.xlu0 %v4212, 64
        %v4300 = vpop.permute.xlu0 %4299
        %4301 = vrot.lane.b32.xlu0 %v4213, 64
        %v4302 = vpop.permute.xlu0 %4301
        %4303 = vrot.lane.b32.xlu0 %v4214, 64
        %v4304 = vpop.permute.xlu0 %4303
        %4305 = vrot.lane.b32.xlu0 %v4215, 64
        %v4306 = vpop.permute.xlu0 %4305
        %4307 = vrot.lane.b32.xlu0 %v4216, 64
        %v4308 = vpop.permute.xlu0 %4307
        %4309 = vrot.lane.b32.xlu0 %v4217, 64
        %v4310 = vpop.permute.xlu0 %4309
        %4311 = vrot.lane.b32.xlu0 %v4218, 64
        %v4312 = vpop.permute.xlu0 %4311
        %4313 = vrot.lane.b32.xlu0 %v4219, 64
        %v4314 = vpop.permute.xlu0 %4313
        %4315 = vrot.lane.b32.xlu0 %v4220, 64
        %v4316 = vpop.permute.xlu0 %4315
        %4349 = vst.msk [vmem:[#allocation3] sm:$0xff] %vm1906, %v4254
        %4350 = vst.msk [vmem:[#allocation3 + $0x10] sm:$0xff] %vm1906, %v4256
        %4351 = vst.msk [vmem:[#allocation3 + $0x20] sm:$0xff] %vm1906, %v4258
        %4352 = vst.msk [vmem:[#allocation3 + $0x30] sm:$0xff] %vm1906, %v4260
        %4353 = vst.msk [vmem:[#allocation3 + $0x40] sm:$0xff] %vm1906, %v4262
        %4354 = vst.msk [vmem:[#allocation3 + $0x50] sm:$0xff] %vm1906, %v4264
        %4355 = vst.msk [vmem:[#allocation3 + $0x60] sm:$0xff] %vm1906, %v4266
        %4356 = vst.msk [vmem:[#allocation3 + $0x70] sm:$0xff] %vm1906, %v4268
        %4357 = vst.msk [vmem:[#allocation3 + $0x80] sm:$0xff] %vm1906, %v4270
        %4358 = vst.msk [vmem:[#allocation3 + $0x90] sm:$0xff] %vm1906, %v4272
        %4359 = vst.msk [vmem:[#allocation3 + $0xa0] sm:$0xff] %vm1906, %v4274
        %4360 = vst.msk [vmem:[#allocation3 + $0xb0] sm:$0xff] %vm1906, %v4276
        %4361 = vst.msk [vmem:[#allocation3 + $0xc0] sm:$0xff] %vm1906, %v4278
        %4362 = vst.msk [vmem:[#allocation3 + $0xd0] sm:$0xff] %vm1906, %v4280
        %4363 = vst.msk [vmem:[#allocation3 + $0xe0] sm:$0xff] %vm1906, %v4282
        %4364 = vst.msk [vmem:[#allocation3 + $0xf0] sm:$0xff] %vm1906, %v4284
        %4365 = vst.msk [vmem:[#allocation3 + $0x100] sm:$0xff] %vm1906, %v4286
        %4366 = vst.msk [vmem:[#allocation3 + $0x110] sm:$0xff] %vm1906, %v4288
        %4367 = vst.msk [vmem:[#allocation3 + $0x120] sm:$0xff] %vm1906, %v4290
        %4368 = vst.msk [vmem:[#allocation3 + $0x130] sm:$0xff] %vm1906, %v4292
        %4369 = vst.msk [vmem:[#allocation3 + $0x140] sm:$0xff] %vm1906, %v4294
        %4370 = vst.msk [vmem:[#allocation3 + $0x150] sm:$0xff] %vm1906, %v4296
        %4371 = vst.msk [vmem:[#allocation3 + $0x160] sm:$0xff] %vm1906, %v4298
        %4372 = vst.msk [vmem:[#allocation3 + $0x170] sm:$0xff] %vm1906, %v4300
        %4373 = vst.msk [vmem:[#allocation3 + $0x180] sm:$0xff] %vm1906, %v4302
        %4374 = vst.msk [vmem:[#allocation3 + $0x190] sm:$0xff] %vm1906, %v4304
        %4375 = vst.msk [vmem:[#allocation3 + $0x1a0] sm:$0xff] %vm1906, %v4306
        %4376 = vst.msk [vmem:[#allocation3 + $0x1b0] sm:$0xff] %vm1906, %v4308
        %4377 = vst.msk [vmem:[#allocation3 + $0x1c0] sm:$0xff] %vm1906, %v4310
        %4378 = vst.msk [vmem:[#allocation3 + $0x1d0] sm:$0xff] %vm1906, %v4312
        %4379 = vst.msk [vmem:[#allocation3 + $0x1e0] sm:$0xff] %vm1906, %v4314
        %4380 = vst.msk [vmem:[#allocation3 + $0x1f0] sm:$0xff] %vm1906, %v4316
        %v4381 = vld [vmem:[%s1070 + $0x2] sm:$0xff]
        %v4382 = vld [vmem:[%s1070 + $0xa] sm:$0xff]
        %v4383 = vld [vmem:[%s1070 + $0x1a] sm:$0xff]
        %v4384 = vld [vmem:[%s1070 + $0x22] sm:$0xff]
        %v4385 = vld [vmem:[%s1070 + $0x32] sm:$0xff]
        %v4386 = vld [vmem:[%s1070 + $0x3a] sm:$0xff]
        %v4387 = vld [vmem:[%s1070 + $0x4a] sm:$0xff]
        %v4388 = vld [vmem:[%s1070 + $0x52] sm:$0xff]
        %v4389 = vld [vmem:[%s1070 + $0x62] sm:$0xff]
        %v4390 = vld [vmem:[%s1070 + $0x6a] sm:$0xff]
        %v4391 = vld [vmem:[%s1070 + $0x7a] sm:$0xff]
        %v4392 = vld [vmem:[%s1070 + $0x82] sm:$0xff]
        %v4393 = vld [vmem:[%s1070 + $0x92] sm:$0xff]
        %v4394 = vld [vmem:[%s1070 + $0x9a] sm:$0xff]
        %v4395 = vld [vmem:[%s1070 + $0xaa] sm:$0xff]
        %v4396 = vld [vmem:[%s1070 + $0xb2] sm:$0xff]
        %v4397 = vld [vmem:[%s1070 + $0xc2] sm:$0xff]
        %v4398 = vld [vmem:[%s1070 + $0xca] sm:$0xff]
        %v4399 = vld [vmem:[%s1070 + $0xda] sm:$0xff]
        %v4400 = vld [vmem:[%s1070 + $0xe2] sm:$0xff]
        %v4401 = vld [vmem:[%s1070 + $0xf2] sm:$0xff]
        %v4402 = vld [vmem:[%s1070 + $0xfa] sm:$0xff]
        %v4403 = vld [vmem:[%s1070 + $0x10a] sm:$0xff]
        %v4404 = vld [vmem:[%s1070 + $0x112] sm:$0xff]
        %v4405 = vld [vmem:[%s1070 + $0x122] sm:$0xff]
        %v4406 = vld [vmem:[%s1070 + $0x12a] sm:$0xff]
        %v4407 = vld [vmem:[%s1070 + $0x13a] sm:$0xff]
        %v4408 = vld [vmem:[%s1070 + $0x142] sm:$0xff]
        %v4409 = vld [vmem:[%s1070 + $0x152] sm:$0xff]
        %v4410 = vld [vmem:[%s1070 + $0x15a] sm:$0xff]
        %v4411 = vld [vmem:[%s1070 + $0x16a] sm:$0xff]
        %v4412 = vld [vmem:[%s1070 + $0x172] sm:$0xff]
        %4445 = vrot.lane.b32.xlu0 %v4381, 80
        %v4446 = vpop.permute.xlu0 %4445
        %4447 = vrot.lane.b32.xlu0 %v4382, 80
        %v4448 = vpop.permute.xlu0 %4447
        %4449 = vrot.lane.b32.xlu0 %v4383, 80
        %v4450 = vpop.permute.xlu0 %4449
        %4451 = vrot.lane.b32.xlu0 %v4384, 80
        %v4452 = vpop.permute.xlu0 %4451
        %4453 = vrot.lane.b32.xlu0 %v4385, 80
        %v4454 = vpop.permute.xlu0 %4453
        %4455 = vrot.lane.b32.xlu0 %v4386, 80
        %v4456 = vpop.permute.xlu0 %4455
        %4457 = vrot.lane.b32.xlu0 %v4387, 80
        %v4458 = vpop.permute.xlu0 %4457
        %4459 = vrot.lane.b32.xlu0 %v4388, 80
        %v4460 = vpop.permute.xlu0 %4459
        %4461 = vrot.lane.b32.xlu0 %v4389, 80
        %v4462 = vpop.permute.xlu0 %4461
        %4463 = vrot.lane.b32.xlu0 %v4390, 80
        %v4464 = vpop.permute.xlu0 %4463
        %4465 = vrot.lane.b32.xlu0 %v4391, 80
        %v4466 = vpop.permute.xlu0 %4465
        %4467 = vrot.lane.b32.xlu0 %v4392, 80
        %v4468 = vpop.permute.xlu0 %4467
        %4469 = vrot.lane.b32.xlu0 %v4393, 80
        %v4470 = vpop.permute.xlu0 %4469
        %4471 = vrot.lane.b32.xlu0 %v4394, 80
        %v4472 = vpop.permute.xlu0 %4471
        %4473 = vrot.lane.b32.xlu0 %v4395, 80
        %v4474 = vpop.permute.xlu0 %4473
        %4475 = vrot.lane.b32.xlu0 %v4396, 80
        %v4476 = vpop.permute.xlu0 %4475
        %4477 = vrot.lane.b32.xlu0 %v4397, 80
        %v4478 = vpop.permute.xlu0 %4477
        %4479 = vrot.lane.b32.xlu0 %v4398, 80
        %v4480 = vpop.permute.xlu0 %4479
        %4481 = vrot.lane.b32.xlu0 %v4399, 80
        %v4482 = vpop.permute.xlu0 %4481
        %4483 = vrot.lane.b32.xlu0 %v4400, 80
        %v4484 = vpop.permute.xlu0 %4483
        %4485 = vrot.lane.b32.xlu0 %v4401, 80
        %v4486 = vpop.permute.xlu0 %4485
        %4487 = vrot.lane.b32.xlu0 %v4402, 80
        %v4488 = vpop.permute.xlu0 %4487
        %4489 = vrot.lane.b32.xlu0 %v4403, 80
        %v4490 = vpop.permute.xlu0 %4489
        %4491 = vrot.lane.b32.xlu0 %v4404, 80
        %v4492 = vpop.permute.xlu0 %4491
        %4493 = vrot.lane.b32.xlu0 %v4405, 80
        %v4494 = vpop.permute.xlu0 %4493
        %4495 = vrot.lane.b32.xlu0 %v4406, 80
        %v4496 = vpop.permute.xlu0 %4495
        %4497 = vrot.lane.b32.xlu0 %v4407, 80
        %v4498 = vpop.permute.xlu0 %4497
        %4499 = vrot.lane.b32.xlu0 %v4408, 80
        %v4500 = vpop.permute.xlu0 %4499
        %4501 = vrot.lane.b32.xlu0 %v4409, 80
        %v4502 = vpop.permute.xlu0 %4501
        %4503 = vrot.lane.b32.xlu0 %v4410, 80
        %v4504 = vpop.permute.xlu0 %4503
        %4505 = vrot.lane.b32.xlu0 %v4411, 80
        %v4506 = vpop.permute.xlu0 %4505
        %4507 = vrot.lane.b32.xlu0 %v4412, 80
        %v4508 = vpop.permute.xlu0 %4507
        %4541 = vst.msk [vmem:[#allocation3] sm:$0xff] %vm2099, %v4446
        %4542 = vst.msk [vmem:[#allocation3 + $0x10] sm:$0xff] %vm2099, %v4448
        %4543 = vst.msk [vmem:[#allocation3 + $0x20] sm:$0xff] %vm2099, %v4450
        %4544 = vst.msk [vmem:[#allocation3 + $0x30] sm:$0xff] %vm2099, %v4452
        %4545 = vst.msk [vmem:[#allocation3 + $0x40] sm:$0xff] %vm2099, %v4454
        %4546 = vst.msk [vmem:[#allocation3 + $0x50] sm:$0xff] %vm2099, %v4456
        %4547 = vst.msk [vmem:[#allocation3 + $0x60] sm:$0xff] %vm2099, %v4458
        %4548 = vst.msk [vmem:[#allocation3 + $0x70] sm:$0xff] %vm2099, %v4460
        %4549 = vst.msk [vmem:[#allocation3 + $0x80] sm:$0xff] %vm2099, %v4462
        %4550 = vst.msk [vmem:[#allocation3 + $0x90] sm:$0xff] %vm2099, %v4464
        %4551 = vst.msk [vmem:[#allocation3 + $0xa0] sm:$0xff] %vm2099, %v4466
        %4552 = vst.msk [vmem:[#allocation3 + $0xb0] sm:$0xff] %vm2099, %v4468
        %4553 = vst.msk [vmem:[#allocation3 + $0xc0] sm:$0xff] %vm2099, %v4470
        %4554 = vst.msk [vmem:[#allocation3 + $0xd0] sm:$0xff] %vm2099, %v4472
        %4555 = vst.msk [vmem:[#allocation3 + $0xe0] sm:$0xff] %vm2099, %v4474
        %4556 = vst.msk [vmem:[#allocation3 + $0xf0] sm:$0xff] %vm2099, %v4476
        %4557 = vst.msk [vmem:[#allocation3 + $0x100] sm:$0xff] %vm2099, %v4478
        %4558 = vst.msk [vmem:[#allocation3 + $0x110] sm:$0xff] %vm2099, %v4480
        %4559 = vst.msk [vmem:[#allocation3 + $0x120] sm:$0xff] %vm2099, %v4482
        %4560 = vst.msk [vmem:[#allocation3 + $0x130] sm:$0xff] %vm2099, %v4484
        %4561 = vst.msk [vmem:[#allocation3 + $0x140] sm:$0xff] %vm2099, %v4486
        %4562 = vst.msk [vmem:[#allocation3 + $0x150] sm:$0xff] %vm2099, %v4488
        %4563 = vst.msk [vmem:[#allocation3 + $0x160] sm:$0xff] %vm2099, %v4490
        %4564 = vst.msk [vmem:[#allocation3 + $0x170] sm:$0xff] %vm2099, %v4492
        %4565 = vst.msk [vmem:[#allocation3 + $0x180] sm:$0xff] %vm2099, %v4494
        %4566 = vst.msk [vmem:[#allocation3 + $0x190] sm:$0xff] %vm2099, %v4496
        %4567 = vst.msk [vmem:[#allocation3 + $0x1a0] sm:$0xff] %vm2099, %v4498
        %4568 = vst.msk [vmem:[#allocation3 + $0x1b0] sm:$0xff] %vm2099, %v4500
        %4569 = vst.msk [vmem:[#allocation3 + $0x1c0] sm:$0xff] %vm2099, %v4502
        %4570 = vst.msk [vmem:[#allocation3 + $0x1d0] sm:$0xff] %vm2099, %v4504
        %4571 = vst.msk [vmem:[#allocation3 + $0x1e0] sm:$0xff] %vm2099, %v4506
        %4572 = vst.msk [vmem:[#allocation3 + $0x1f0] sm:$0xff] %vm2099, %v4508
        %v4573 = vld [vmem:[%s2132] sm:$0xff]
        %v4574 = vld [vmem:[%s2132 + $0x8] sm:$0xff]
        %v4575 = vld [vmem:[%s2132 + $0x18] sm:$0xff]
        %v4576 = vld [vmem:[%s2132 + $0x20] sm:$0xff]
        %v4577 = vld [vmem:[%s2132 + $0x30] sm:$0xff]
        %v4578 = vld [vmem:[%s2132 + $0x38] sm:$0xff]
        %v4579 = vld [vmem:[%s2132 + $0x48] sm:$0xff]
        %v4580 = vld [vmem:[%s2132 + $0x50] sm:$0xff]
        %v4581 = vld [vmem:[%s2132 + $0x60] sm:$0xff]
        %v4582 = vld [vmem:[%s2132 + $0x68] sm:$0xff]
        %v4583 = vld [vmem:[%s2132 + $0x78] sm:$0xff]
        %v4584 = vld [vmem:[%s2132 + $0x80] sm:$0xff]
        %v4585 = vld [vmem:[%s2132 + $0x90] sm:$0xff]
        %v4586 = vld [vmem:[%s2132 + $0x98] sm:$0xff]
        %v4587 = vld [vmem:[%s2132 + $0xa8] sm:$0xff]
        %v4588 = vld [vmem:[%s2132 + $0xb0] sm:$0xff]
        %v4589 = vld [vmem:[%s2132 + $0xc0] sm:$0xff]
        %v4590 = vld [vmem:[%s2132 + $0xc8] sm:$0xff]
        %v4591 = vld [vmem:[%s2132 + $0xd8] sm:$0xff]
        %v4592 = vld [vmem:[%s2132 + $0xe0] sm:$0xff]
        %v4593 = vld [vmem:[%s2132 + $0xf0] sm:$0xff]
        %v4594 = vld [vmem:[%s2132 + $0xf8] sm:$0xff]
        %v4595 = vld [vmem:[%s2132 + $0x108] sm:$0xff]
        %v4596 = vld [vmem:[%s2132 + $0x110] sm:$0xff]
        %v4597 = vld [vmem:[%s2132 + $0x120] sm:$0xff]
        %v4598 = vld [vmem:[%s2132 + $0x128] sm:$0xff]
        %v4599 = vld [vmem:[%s2132 + $0x138] sm:$0xff]
        %v4600 = vld [vmem:[%s2132 + $0x140] sm:$0xff]
        %v4601 = vld [vmem:[%s2132 + $0x150] sm:$0xff]
        %v4602 = vld [vmem:[%s2132 + $0x158] sm:$0xff]
        %v4603 = vld [vmem:[%s2132 + $0x168] sm:$0xff]
        %v4604 = vld [vmem:[%s2132 + $0x170] sm:$0xff]
        %4637 = vrot.lane.b32.xlu0 %v4573, 96
        %v4638 = vpop.permute.xlu0 %4637
        %4639 = vrot.lane.b32.xlu0 %v4574, 96
        %v4640 = vpop.permute.xlu0 %4639
        %4641 = vrot.lane.b32.xlu0 %v4575, 96
        %v4642 = vpop.permute.xlu0 %4641
        %4643 = vrot.lane.b32.xlu0 %v4576, 96
        %v4644 = vpop.permute.xlu0 %4643
        %4645 = vrot.lane.b32.xlu0 %v4577, 96
        %v4646 = vpop.permute.xlu0 %4645
        %4647 = vrot.lane.b32.xlu0 %v4578, 96
        %v4648 = vpop.permute.xlu0 %4647
        %4649 = vrot.lane.b32.xlu0 %v4579, 96
        %v4650 = vpop.permute.xlu0 %4649
        %4651 = vrot.lane.b32.xlu0 %v4580, 96
        %v4652 = vpop.permute.xlu0 %4651
        %4653 = vrot.lane.b32.xlu0 %v4581, 96
        %v4654 = vpop.permute.xlu0 %4653
        %4655 = vrot.lane.b32.xlu0 %v4582, 96
        %v4656 = vpop.permute.xlu0 %4655
        %4657 = vrot.lane.b32.xlu0 %v4583, 96
        %v4658 = vpop.permute.xlu0 %4657
        %4659 = vrot.lane.b32.xlu0 %v4584, 96
        %v4660 = vpop.permute.xlu0 %4659
        %4661 = vrot.lane.b32.xlu0 %v4585, 96
        %v4662 = vpop.permute.xlu0 %4661
        %4663 = vrot.lane.b32.xlu0 %v4586, 96
        %v4664 = vpop.permute.xlu0 %4663
        %4665 = vrot.lane.b32.xlu0 %v4587, 96
        %v4666 = vpop.permute.xlu0 %4665
        %4667 = vrot.lane.b32.xlu0 %v4588, 96
        %v4668 = vpop.permute.xlu0 %4667
        %4669 = vrot.lane.b32.xlu0 %v4589, 96
        %v4670 = vpop.permute.xlu0 %4669
        %4671 = vrot.lane.b32.xlu0 %v4590, 96
        %v4672 = vpop.permute.xlu0 %4671
        %4673 = vrot.lane.b32.xlu0 %v4591, 96
        %v4674 = vpop.permute.xlu0 %4673
        %4675 = vrot.lane.b32.xlu0 %v4592, 96
        %v4676 = vpop.permute.xlu0 %4675
        %4677 = vrot.lane.b32.xlu0 %v4593, 96
        %v4678 = vpop.permute.xlu0 %4677
        %4679 = vrot.lane.b32.xlu0 %v4594, 96
        %v4680 = vpop.permute.xlu0 %4679
        %4681 = vrot.lane.b32.xlu0 %v4595, 96
        %v4682 = vpop.permute.xlu0 %4681
        %4683 = vrot.lane.b32.xlu0 %v4596, 96
        %v4684 = vpop.permute.xlu0 %4683
        %4685 = vrot.lane.b32.xlu0 %v4597, 96
        %v4686 = vpop.permute.xlu0 %4685
        %4687 = vrot.lane.b32.xlu0 %v4598, 96
        %v4688 = vpop.permute.xlu0 %4687
        %4689 = vrot.lane.b32.xlu0 %v4599, 96
        %v4690 = vpop.permute.xlu0 %4689
        %4691 = vrot.lane.b32.xlu0 %v4600, 96
        %v4692 = vpop.permute.xlu0 %4691
        %4693 = vrot.lane.b32.xlu0 %v4601, 96
        %v4694 = vpop.permute.xlu0 %4693
        %4695 = vrot.lane.b32.xlu0 %v4602, 96
        %v4696 = vpop.permute.xlu0 %4695
        %4697 = vrot.lane.b32.xlu0 %v4603, 96
        %v4698 = vpop.permute.xlu0 %4697
        %4699 = vrot.lane.b32.xlu0 %v4604, 96
        %v4700 = vpop.permute.xlu0 %4699
        %4733 = vst.msk [vmem:[#allocation3] sm:$0xff] %vm2293, %v4638
        %4734 = vst.msk [vmem:[#allocation3 + $0x10] sm:$0xff] %vm2293, %v4640
        %4735 = vst.msk [vmem:[#allocation3 + $0x20] sm:$0xff] %vm2293, %v4642
        %4736 = vst.msk [vmem:[#allocation3 + $0x30] sm:$0xff] %vm2293, %v4644
        %4737 = vst.msk [vmem:[#allocation3 + $0x40] sm:$0xff] %vm2293, %v4646
        %4738 = vst.msk [vmem:[#allocation3 + $0x50] sm:$0xff] %vm2293, %v4648
        %4739 = vst.msk [vmem:[#allocation3 + $0x60] sm:$0xff] %vm2293, %v4650
        %4740 = vst.msk [vmem:[#allocation3 + $0x70] sm:$0xff] %vm2293, %v4652
        %4741 = vst.msk [vmem:[#allocation3 + $0x80] sm:$0xff] %vm2293, %v4654
        %4742 = vst.msk [vmem:[#allocation3 + $0x90] sm:$0xff] %vm2293, %v4656
        %4743 = vst.msk [vmem:[#allocation3 + $0xa0] sm:$0xff] %vm2293, %v4658
        %4744 = vst.msk [vmem:[#allocation3 + $0xb0] sm:$0xff] %vm2293, %v4660
        %4745 = vst.msk [vmem:[#allocation3 + $0xc0] sm:$0xff] %vm2293, %v4662
        %4746 = vst.msk [vmem:[#allocation3 + $0xd0] sm:$0xff] %vm2293, %v4664
        %4747 = vst.msk [vmem:[#allocation3 + $0xe0] sm:$0xff] %vm2293, %v4666
        %4748 = vst.msk [vmem:[#allocation3 + $0xf0] sm:$0xff] %vm2293, %v4668
        %4749 = vst.msk [vmem:[#allocation3 + $0x100] sm:$0xff] %vm2293, %v4670
        %4750 = vst.msk [vmem:[#allocation3 + $0x110] sm:$0xff] %vm2293, %v4672
        %4751 = vst.msk [vmem:[#allocation3 + $0x120] sm:$0xff] %vm2293, %v4674
        %4752 = vst.msk [vmem:[#allocation3 + $0x130] sm:$0xff] %vm2293, %v4676
        %4753 = vst.msk [vmem:[#allocation3 + $0x140] sm:$0xff] %vm2293, %v4678
        %4754 = vst.msk [vmem:[#allocation3 + $0x150] sm:$0xff] %vm2293, %v4680
        %4755 = vst.msk [vmem:[#allocation3 + $0x160] sm:$0xff] %vm2293, %v4682
        %4756 = vst.msk [vmem:[#allocation3 + $0x170] sm:$0xff] %vm2293, %v4684
        %4757 = vst.msk [vmem:[#allocation3 + $0x180] sm:$0xff] %vm2293, %v4686
        %4758 = vst.msk [vmem:[#allocation3 + $0x190] sm:$0xff] %vm2293, %v4688
        %4759 = vst.msk [vmem:[#allocation3 + $0x1a0] sm:$0xff] %vm2293, %v4690
        %4760 = vst.msk [vmem:[#allocation3 + $0x1b0] sm:$0xff] %vm2293, %v4692
        %4761 = vst.msk [vmem:[#allocation3 + $0x1c0] sm:$0xff] %vm2293, %v4694
        %4762 = vst.msk [vmem:[#allocation3 + $0x1d0] sm:$0xff] %vm2293, %v4696
        %4763 = vst.msk [vmem:[#allocation3 + $0x1e0] sm:$0xff] %vm2293, %v4698
        %4764 = vst.msk [vmem:[#allocation3 + $0x1f0] sm:$0xff] %vm2293, %v4700
        %v4765 = vld [vmem:[%s2132 + $0x1] sm:$0xff]
        %v4766 = vld [vmem:[%s2132 + $0x9] sm:$0xff]
        %v4767 = vld [vmem:[%s2132 + $0x19] sm:$0xff]
        %v4768 = vld [vmem:[%s2132 + $0x21] sm:$0xff]
        %v4769 = vld [vmem:[%s2132 + $0x31] sm:$0xff]
        %v4770 = vld [vmem:[%s2132 + $0x39] sm:$0xff]
        %v4771 = vld [vmem:[%s2132 + $0x49] sm:$0xff]
        %v4772 = vld [vmem:[%s2132 + $0x51] sm:$0xff]
        %v4773 = vld [vmem:[%s2132 + $0x61] sm:$0xff]
        %v4774 = vld [vmem:[%s2132 + $0x69] sm:$0xff]
        %v4775 = vld [vmem:[%s2132 + $0x79] sm:$0xff]
        %v4776 = vld [vmem:[%s2132 + $0x81] sm:$0xff]
        %v4777 = vld [vmem:[%s2132 + $0x91] sm:$0xff]
        %v4778 = vld [vmem:[%s2132 + $0x99] sm:$0xff]
        %v4779 = vld [vmem:[%s2132 + $0xa9] sm:$0xff]
        %v4780 = vld [vmem:[%s2132 + $0xb1] sm:$0xff]
        %v4781 = vld [vmem:[%s2132 + $0xc1] sm:$0xff]
        %v4782 = vld [vmem:[%s2132 + $0xc9] sm:$0xff]
        %v4783 = vld [vmem:[%s2132 + $0xd9] sm:$0xff]
        %v4784 = vld [vmem:[%s2132 + $0xe1] sm:$0xff]
        %v4785 = vld [vmem:[%s2132 + $0xf1] sm:$0xff]
        %v4786 = vld [vmem:[%s2132 + $0xf9] sm:$0xff]
        %v4787 = vld [vmem:[%s2132 + $0x109] sm:$0xff]
        %v4788 = vld [vmem:[%s2132 + $0x111] sm:$0xff]
        %v4789 = vld [vmem:[%s2132 + $0x121] sm:$0xff]
        %v4790 = vld [vmem:[%s2132 + $0x129] sm:$0xff]
        %v4791 = vld [vmem:[%s2132 + $0x139] sm:$0xff]
        %v4792 = vld [vmem:[%s2132 + $0x141] sm:$0xff]
        %v4793 = vld [vmem:[%s2132 + $0x151] sm:$0xff]
        %v4794 = vld [vmem:[%s2132 + $0x159] sm:$0xff]
        %v4795 = vld [vmem:[%s2132 + $0x169] sm:$0xff]
        %v4796 = vld [vmem:[%s2132 + $0x171] sm:$0xff]
        %4829 = vrot.lane.b32.xlu0 %v4765, 112
        %v4830 = vpop.permute.xlu0 %4829
        %4831 = vrot.lane.b32.xlu0 %v4766, 112
        %v4832 = vpop.permute.xlu0 %4831
        %4833 = vrot.lane.b32.xlu0 %v4767, 112
        %v4834 = vpop.permute.xlu0 %4833
        %4835 = vrot.lane.b32.xlu0 %v4768, 112
        %v4836 = vpop.permute.xlu0 %4835
        %4837 = vrot.lane.b32.xlu0 %v4769, 112
        %v4838 = vpop.permute.xlu0 %4837
        %4839 = vrot.lane.b32.xlu0 %v4770, 112
        %v4840 = vpop.permute.xlu0 %4839
        %4841 = vrot.lane.b32.xlu0 %v4771, 112
        %v4842 = vpop.permute.xlu0 %4841
        %4843 = vrot.lane.b32.xlu0 %v4772, 112
        %v4844 = vpop.permute.xlu0 %4843
        %4845 = vrot.lane.b32.xlu0 %v4773, 112
        %v4846 = vpop.permute.xlu0 %4845
        %4847 = vrot.lane.b32.xlu0 %v4774, 112
        %v4848 = vpop.permute.xlu0 %4847
        %4849 = vrot.lane.b32.xlu0 %v4775, 112
        %v4850 = vpop.permute.xlu0 %4849
        %4851 = vrot.lane.b32.xlu0 %v4776, 112
        %v4852 = vpop.permute.xlu0 %4851
        %4853 = vrot.lane.b32.xlu0 %v4777, 112
        %v4854 = vpop.permute.xlu0 %4853
        %4855 = vrot.lane.b32.xlu0 %v4778, 112
        %v4856 = vpop.permute.xlu0 %4855
        %4857 = vrot.lane.b32.xlu0 %v4779, 112
        %v4858 = vpop.permute.xlu0 %4857
        %4859 = vrot.lane.b32.xlu0 %v4780, 112
        %v4860 = vpop.permute.xlu0 %4859
        %4861 = vrot.lane.b32.xlu0 %v4781, 112
        %v4862 = vpop.permute.xlu0 %4861
        %4863 = vrot.lane.b32.xlu0 %v4782, 112
        %v4864 = vpop.permute.xlu0 %4863
        %4865 = vrot.lane.b32.xlu0 %v4783, 112
        %v4866 = vpop.permute.xlu0 %4865
        %4867 = vrot.lane.b32.xlu0 %v4784, 112
        %v4868 = vpop.permute.xlu0 %4867
        %4869 = vrot.lane.b32.xlu0 %v4785, 112
        %v4870 = vpop.permute.xlu0 %4869
        %4871 = vrot.lane.b32.xlu0 %v4786, 112
        %v4872 = vpop.permute.xlu0 %4871
        %4873 = vrot.lane.b32.xlu0 %v4787, 112
        %v4874 = vpop.permute.xlu0 %4873
        %4875 = vrot.lane.b32.xlu0 %v4788, 112
        %v4876 = vpop.permute.xlu0 %4875
        %4877 = vrot.lane.b32.xlu0 %v4789, 112
        %v4878 = vpop.permute.xlu0 %4877
        %4879 = vrot.lane.b32.xlu0 %v4790, 112
        %v4880 = vpop.permute.xlu0 %4879
        %4881 = vrot.lane.b32.xlu0 %v4791, 112
        %v4882 = vpop.permute.xlu0 %4881
        %4883 = vrot.lane.b32.xlu0 %v4792, 112
        %v4884 = vpop.permute.xlu0 %4883
        %4885 = vrot.lane.b32.xlu0 %v4793, 112
        %v4886 = vpop.permute.xlu0 %4885
        %4887 = vrot.lane.b32.xlu0 %v4794, 112
        %v4888 = vpop.permute.xlu0 %4887
        %4889 = vrot.lane.b32.xlu0 %v4795, 112
        %v4890 = vpop.permute.xlu0 %4889
        %4891 = vrot.lane.b32.xlu0 %v4796, 112
        %v4892 = vpop.permute.xlu0 %4891
        %4925 = vst.msk [vmem:[#allocation3] sm:$0xff] %vm2486, %v4830
        %4926 = vst.msk [vmem:[#allocation3 + $0x10] sm:$0xff] %vm2486, %v4832
        %4927 = vst.msk [vmem:[#allocation3 + $0x20] sm:$0xff] %vm2486, %v4834
        %4928 = vst.msk [vmem:[#allocation3 + $0x30] sm:$0xff] %vm2486, %v4836
        %4929 = vst.msk [vmem:[#allocation3 + $0x40] sm:$0xff] %vm2486, %v4838
        %4930 = vst.msk [vmem:[#allocation3 + $0x50] sm:$0xff] %vm2486, %v4840
        %4931 = vst.msk [vmem:[#allocation3 + $0x60] sm:$0xff] %vm2486, %v4842
        %4932 = vst.msk [vmem:[#allocation3 + $0x70] sm:$0xff] %vm2486, %v4844
        %4933 = vst.msk [vmem:[#allocation3 + $0x80] sm:$0xff] %vm2486, %v4846
        %4934 = vst.msk [vmem:[#allocation3 + $0x90] sm:$0xff] %vm2486, %v4848
        %4935 = vst.msk [vmem:[#allocation3 + $0xa0] sm:$0xff] %vm2486, %v4850
        %4936 = vst.msk [vmem:[#allocation3 + $0xb0] sm:$0xff] %vm2486, %v4852
        %4937 = vst.msk [vmem:[#allocation3 + $0xc0] sm:$0xff] %vm2486, %v4854
        %4938 = vst.msk [vmem:[#allocation3 + $0xd0] sm:$0xff] %vm2486, %v4856
        %4939 = vst.msk [vmem:[#allocation3 + $0xe0] sm:$0xff] %vm2486, %v4858
        %4940 = vst.msk [vmem:[#allocation3 + $0xf0] sm:$0xff] %vm2486, %v4860
        %4941 = vst.msk [vmem:[#allocation3 + $0x100] sm:$0xff] %vm2486, %v4862
        %4942 = vst.msk [vmem:[#allocation3 + $0x110] sm:$0xff] %vm2486, %v4864
        %4943 = vst.msk [vmem:[#allocation3 + $0x120] sm:$0xff] %vm2486, %v4866
        %4944 = vst.msk [vmem:[#allocation3 + $0x130] sm:$0xff] %vm2486, %v4868
        %4945 = vst.msk [vmem:[#allocation3 + $0x140] sm:$0xff] %vm2486, %v4870
        %4946 = vst.msk [vmem:[#allocation3 + $0x150] sm:$0xff] %vm2486, %v4872
        %4947 = vst.msk [vmem:[#allocation3 + $0x160] sm:$0xff] %vm2486, %v4874
        %4948 = vst.msk [vmem:[#allocation3 + $0x170] sm:$0xff] %vm2486, %v4876
        %4949 = vst.msk [vmem:[#allocation3 + $0x180] sm:$0xff] %vm2486, %v4878
        %4950 = vst.msk [vmem:[#allocation3 + $0x190] sm:$0xff] %vm2486, %v4880
        %4951 = vst.msk [vmem:[#allocation3 + $0x1a0] sm:$0xff] %vm2486, %v4882
        %4952 = vst.msk [vmem:[#allocation3 + $0x1b0] sm:$0xff] %vm2486, %v4884
        %4953 = vst.msk [vmem:[#allocation3 + $0x1c0] sm:$0xff] %vm2486, %v4886
        %4954 = vst.msk [vmem:[#allocation3 + $0x1d0] sm:$0xff] %vm2486, %v4888
        %4955 = vst.msk [vmem:[#allocation3 + $0x1e0] sm:$0xff] %vm2486, %v4890
        %4956 = vst.msk [vmem:[#allocation3 + $0x1f0] sm:$0xff] %vm2486, %v4892
        %v4957 = vld [vmem:[%s2132 + $0x2] sm:$0xff]
        %v4958 = vld [vmem:[%s2132 + $0xa] sm:$0xff]
        %v4959 = vld [vmem:[%s2132 + $0x1a] sm:$0xff]
        %v4960 = vld [vmem:[%s2132 + $0x22] sm:$0xff]
        %v4961 = vld [vmem:[%s2132 + $0x32] sm:$0xff]
        %v4962 = vld [vmem:[%s2132 + $0x3a] sm:$0xff]
        %v4963 = vld [vmem:[%s2132 + $0x4a] sm:$0xff]
        %v4964 = vld [vmem:[%s2132 + $0x52] sm:$0xff]
        %v4965 = vld [vmem:[%s2132 + $0x62] sm:$0xff]
        %v4966 = vld [vmem:[%s2132 + $0x6a] sm:$0xff]
        %v4967 = vld [vmem:[%s2132 + $0x7a] sm:$0xff]
        %v4968 = vld [vmem:[%s2132 + $0x82] sm:$0xff]
        %v4969 = vld [vmem:[%s2132 + $0x92] sm:$0xff]
        %v4970 = vld [vmem:[%s2132 + $0x9a] sm:$0xff]
        %v4971 = vld [vmem:[%s2132 + $0xaa] sm:$0xff]
        %v4972 = vld [vmem:[%s2132 + $0xb2] sm:$0xff]
        %v4973 = vld [vmem:[%s2132 + $0xc2] sm:$0xff]
        %v4974 = vld [vmem:[%s2132 + $0xca] sm:$0xff]
        %v4975 = vld [vmem:[%s2132 + $0xda] sm:$0xff]
        %v4976 = vld [vmem:[%s2132 + $0xe2] sm:$0xff]
        %v4977 = vld [vmem:[%s2132 + $0xf2] sm:$0xff]
        %v4978 = vld [vmem:[%s2132 + $0xfa] sm:$0xff]
        %v4979 = vld [vmem:[%s2132 + $0x10a] sm:$0xff]
        %v4980 = vld [vmem:[%s2132 + $0x112] sm:$0xff]
        %v4981 = vld [vmem:[%s2132 + $0x122] sm:$0xff]
        %v4982 = vld [vmem:[%s2132 + $0x12a] sm:$0xff]
        %v4983 = vld [vmem:[%s2132 + $0x13a] sm:$0xff]
        %v4984 = vld [vmem:[%s2132 + $0x142] sm:$0xff]
        %v4985 = vld [vmem:[%s2132 + $0x152] sm:$0xff]
        %v4986 = vld [vmem:[%s2132 + $0x15a] sm:$0xff]
        %v4987 = vld [vmem:[%s2132 + $0x16a] sm:$0xff]
        %v4988 = vld [vmem:[%s2132 + $0x172] sm:$0xff]
        %4989 = vst.msk [vmem:[#allocation3 + $0x8] sm:$0xff] %vm553, %v4957
        %4990 = vst.msk [vmem:[#allocation3 + $0x18] sm:$0xff] %vm553, %v4958
        %4991 = vst.msk [vmem:[#allocation3 + $0x28] sm:$0xff] %vm553, %v4959
        %4992 = vst.msk [vmem:[#allocation3 + $0x38] sm:$0xff] %vm553, %v4960
        %4993 = vst.msk [vmem:[#allocation3 + $0x48] sm:$0xff] %vm553, %v4961
        %4994 = vst.msk [vmem:[#allocation3 + $0x58] sm:$0xff] %vm553, %v4962
        %4995 = vst.msk [vmem:[#allocation3 + $0x68] sm:$0xff] %vm553, %v4963
        %4996 = vst.msk [vmem:[#allocation3 + $0x78] sm:$0xff] %vm553, %v4964
        %4997 = vst.msk [vmem:[#allocation3 + $0x88] sm:$0xff] %vm553, %v4965
        %4998 = vst.msk [vmem:[#allocation3 + $0x98] sm:$0xff] %vm553, %v4966
        %4999 = vst.msk [vmem:[#allocation3 + $0xa8] sm:$0xff] %vm553, %v4967
        %5000 = vst.msk [vmem:[#allocation3 + $0xb8] sm:$0xff] %vm553, %v4968
        %5001 = vst.msk [vmem:[#allocation3 + $0xc8] sm:$0xff] %vm553, %v4969
        %5002 = vst.msk [vmem:[#allocation3 + $0xd8] sm:$0xff] %vm553, %v4970
        %5003 = vst.msk [vmem:[#allocation3 + $0xe8] sm:$0xff] %vm553, %v4971
        %5004 = vst.msk [vmem:[#allocation3 + $0xf8] sm:$0xff] %vm553, %v4972
        %5005 = vst.msk [vmem:[#allocation3 + $0x108] sm:$0xff] %vm553, %v4973
        %5006 = vst.msk [vmem:[#allocation3 + $0x118] sm:$0xff] %vm553, %v4974
        %5007 = vst.msk [vmem:[#allocation3 + $0x128] sm:$0xff] %vm553, %v4975
        %5008 = vst.msk [vmem:[#allocation3 + $0x138] sm:$0xff] %vm553, %v4976
        %5009 = vst.msk [vmem:[#allocation3 + $0x148] sm:$0xff] %vm553, %v4977
        %5010 = vst.msk [vmem:[#allocation3 + $0x158] sm:$0xff] %vm553, %v4978
        %5011 = vst.msk [vmem:[#allocation3 + $0x168] sm:$0xff] %vm553, %v4979
        %5012 = vst.msk [vmem:[#allocation3 + $0x178] sm:$0xff] %vm553, %v4980
        %5013 = vst.msk [vmem:[#allocation3 + $0x188] sm:$0xff] %vm553, %v4981
        %5014 = vst.msk [vmem:[#allocation3 + $0x198] sm:$0xff] %vm553, %v4982
        %5015 = vst.msk [vmem:[#allocation3 + $0x1a8] sm:$0xff] %vm553, %v4983
        %5016 = vst.msk [vmem:[#allocation3 + $0x1b8] sm:$0xff] %vm553, %v4984
        %5017 = vst.msk [vmem:[#allocation3 + $0x1c8] sm:$0xff] %vm553, %v4985
        %5018 = vst.msk [vmem:[#allocation3 + $0x1d8] sm:$0xff] %vm553, %v4986
        %5019 = vst.msk [vmem:[#allocation3 + $0x1e8] sm:$0xff] %vm553, %v4987
        %5020 = vst.msk [vmem:[#allocation3 + $0x1f8] sm:$0xff] %vm553, %v4988
        %v5021 = vld [vmem:[#allocation3] sm:$0xff]
        %v5022 = vld [vmem:[#allocation3 + $0x8] sm:$0xff]
        %v5023 = vld [vmem:[#allocation3 + $0x10] sm:$0xff]
        %v5024 = vld [vmem:[#allocation3 + $0x18] sm:$0xff]
        %v5025 = vld [vmem:[#allocation3 + $0x20] sm:$0xff]
        %v5026 = vld [vmem:[#allocation3 + $0x28] sm:$0xff]
        %v5027 = vld [vmem:[#allocation3 + $0x30] sm:$0xff]
        %v5028 = vld [vmem:[#allocation3 + $0x38] sm:$0xff]
        %v5029 = vld [vmem:[#allocation3 + $0x40] sm:$0xff]
        %v5030 = vld [vmem:[#allocation3 + $0x48] sm:$0xff]
        %v5031 = vld [vmem:[#allocation3 + $0x50] sm:$0xff]
        %v5032 = vld [vmem:[#allocation3 + $0x58] sm:$0xff]
        %v5033 = vld [vmem:[#allocation3 + $0x60] sm:$0xff]
        %v5034 = vld [vmem:[#allocation3 + $0x68] sm:$0xff]
        %v5035 = vld [vmem:[#allocation3 + $0x70] sm:$0xff]
        %v5036 = vld [vmem:[#allocation3 + $0x78] sm:$0xff]
        %v5037 = vld [vmem:[#allocation3 + $0x80] sm:$0xff]
        %v5038 = vld [vmem:[#allocation3 + $0x88] sm:$0xff]
        %v5039 = vld [vmem:[#allocation3 + $0x90] sm:$0xff]
        %v5040 = vld [vmem:[#allocation3 + $0x98] sm:$0xff]
        %v5041 = vld [vmem:[#allocation3 + $0xa0] sm:$0xff]
        %v5042 = vld [vmem:[#allocation3 + $0xa8] sm:$0xff]
        %v5043 = vld [vmem:[#allocation3 + $0xb0] sm:$0xff]
        %v5044 = vld [vmem:[#allocation3 + $0xb8] sm:$0xff]
        %v5045 = vld [vmem:[#allocation3 + $0xc0] sm:$0xff]
        %v5046 = vld [vmem:[#allocation3 + $0xc8] sm:$0xff]
        %v5047 = vld [vmem:[#allocation3 + $0xd0] sm:$0xff]
        %v5048 = vld [vmem:[#allocation3 + $0xd8] sm:$0xff]
        %v5049 = vld [vmem:[#allocation3 + $0xe0] sm:$0xff]
        %v5050 = vld [vmem:[#allocation3 + $0xe8] sm:$0xff]
        %v5051 = vld [vmem:[#allocation3 + $0xf0] sm:$0xff]
        %v5052 = vld [vmem:[#allocation3 + $0xf8] sm:$0xff]
        %v5053 = vld [vmem:[#allocation3 + $0x100] sm:$0xff]
        %v5054 = vld [vmem:[#allocation3 + $0x108] sm:$0xff]
        %v5055 = vld [vmem:[#allocation3 + $0x110] sm:$0xff]
        %v5056 = vld [vmem:[#allocation3 + $0x118] sm:$0xff]
        %v5057 = vld [vmem:[#allocation3 + $0x120] sm:$0xff]
        %v5058 = vld [vmem:[#allocation3 + $0x128] sm:$0xff]
        %v5059 = vld [vmem:[#allocation3 + $0x130] sm:$0xff]
        %v5060 = vld [vmem:[#allocation3 + $0x138] sm:$0xff]
        %v5061 = vld [vmem:[#allocation3 + $0x140] sm:$0xff]
        %v5062 = vld [vmem:[#allocation3 + $0x148] sm:$0xff]
        %v5063 = vld [vmem:[#allocation3 + $0x150] sm:$0xff]
        %v5064 = vld [vmem:[#allocation3 + $0x158] sm:$0xff]
        %v5065 = vld [vmem:[#allocation3 + $0x160] sm:$0xff]
        %v5066 = vld [vmem:[#allocation3 + $0x168] sm:$0xff]
        %v5067 = vld [vmem:[#allocation3 + $0x170] sm:$0xff]
        %v5068 = vld [vmem:[#allocation3 + $0x178] sm:$0xff]
        %v5069 = vld [vmem:[#allocation3 + $0x180] sm:$0xff]
        %v5070 = vld [vmem:[#allocation3 + $0x188] sm:$0xff]
        %v5071 = vld [vmem:[#allocation3 + $0x190] sm:$0xff]
        %v5072 = vld [vmem:[#allocation3 + $0x198] sm:$0xff]
        %v5073 = vld [vmem:[#allocation3 + $0x1a0] sm:$0xff]
        %v5074 = vld [vmem:[#allocation3 + $0x1a8] sm:$0xff]
        %v5075 = vld [vmem:[#allocation3 + $0x1b0] sm:$0xff]
        %v5076 = vld [vmem:[#allocation3 + $0x1b8] sm:$0xff]
        %v5077 = vld [vmem:[#allocation3 + $0x1c0] sm:$0xff]
        %v5078 = vld [vmem:[#allocation3 + $0x1c8] sm:$0xff]
        %v5079 = vld [vmem:[#allocation3 + $0x1d0] sm:$0xff]
        %v5080 = vld [vmem:[#allocation3 + $0x1d8] sm:$0xff]
        %v5081 = vld [vmem:[#allocation3 + $0x1e0] sm:$0xff]
        %v5082 = vld [vmem:[#allocation3 + $0x1e8] sm:$0xff]
        %v5083 = vld [vmem:[#allocation3 + $0x1f0] sm:$0xff]
        %v5084 = vld [vmem:[#allocation3 + $0x1f8] sm:$0xff]
        %v5085 = vld [vmem:[#allocation7] sm:$0xff]
        %v5086 = vld [vmem:[#allocation7 + $0x8] sm:$0xff]
        %v5087 = vld [vmem:[#allocation7 + $0x10] sm:$0xff]
        %v5088 = vld [vmem:[#allocation7 + $0x18] sm:$0xff]
        %v5089 = vld [vmem:[#allocation7 + $0x20] sm:$0xff]
        %v5090 = vld [vmem:[#allocation7 + $0x28] sm:$0xff]
        %v5091 = vld [vmem:[#allocation7 + $0x30] sm:$0xff]
        %v5092 = vld [vmem:[#allocation7 + $0x38] sm:$0xff]
        %v5093 = vld [vmem:[#allocation7 + $0x40] sm:$0xff]
        %v5094 = vld [vmem:[#allocation7 + $0x48] sm:$0xff]
        %v5095 = vld [vmem:[#allocation7 + $0x50] sm:$0xff]
        %v5096 = vld [vmem:[#allocation7 + $0x58] sm:$0xff]
        %v5097 = vld [vmem:[#allocation7 + $0x60] sm:$0xff]
        %v5098 = vld [vmem:[#allocation7 + $0x68] sm:$0xff]
        %v5099 = vld [vmem:[#allocation7 + $0x70] sm:$0xff]
        %v5100 = vld [vmem:[#allocation7 + $0x78] sm:$0xff]
        %v5101 = vld [vmem:[#allocation7 + $0x80] sm:$0xff]
        %v5102 = vld [vmem:[#allocation7 + $0x88] sm:$0xff]
        %v5103 = vld [vmem:[#allocation9] sm:$0x1]
        %v5105 = vlaneseq
        %v5106 = vshrl.u32 %v5105, 7
        %v5107 = vsub.s32 0, %v5106
        %v5108 = vrot.slane %v5103, %v5107
        %v5111 = vsel %vm553, %v5022, 0
        %v5114 = vsel %vm553, %v5024, 0
        %v5117 = vsel %vm553, %v5026, 0
        %v5120 = vsel %vm553, %v5028, 0
        %v5123 = vsel %vm553, %v5030, 0
        %v5126 = vsel %vm553, %v5032, 0
        %v5129 = vsel %vm553, %v5034, 0
        %v5132 = vsel %vm553, %v5036, 0
        %v5135 = vsel %vm553, %v5038, 0
        %v5138 = vsel %vm553, %v5040, 0
        %v5141 = vsel %vm553, %v5042, 0
        %v5144 = vsel %vm553, %v5044, 0
        %v5147 = vsel %vm553, %v5046, 0
        %v5150 = vsel %vm553, %v5048, 0
        %v5153 = vsel %vm553, %v5050, 0
        %v5156 = vsel %vm553, %v5052, 0
        %v5159 = vsel %vm553, %v5054, 0
        %v5162 = vsel %vm553, %v5056, 0
        %v5165 = vsel %vm553, %v5058, 0
        %v5168 = vsel %vm553, %v5060, 0
        %v5171 = vsel %vm553, %v5062, 0
        %v5174 = vsel %vm553, %v5064, 0
        %v5177 = vsel %vm553, %v5066, 0
        %v5180 = vsel %vm553, %v5068, 0
        %v5183 = vsel %vm553, %v5070, 0
        %v5186 = vsel %vm553, %v5072, 0
        %v5189 = vsel %vm553, %v5074, 0
        %v5192 = vsel %vm553, %v5076, 0
        %v5195 = vsel %vm553, %v5078, 0
        %v5198 = vsel %vm553, %v5080, 0
        %v5201 = vsel %vm553, %v5082, 0
        %v5204 = vsel %vm553, %v5084, 0
        %5206 = vmatprep.subr.mxu0 0.0
        %5207 = vmatpush1.msra.mxu0 %v5085
        %5208 = vmatprep.subr.mxu0 0.0
        %5209 = vmatpush1.msra.mxu0 %v5086
        %5210 = vmatprep.subr.mxu0 0.0
        %5211 = vmatpush1.msra.mxu0 %v5087
        %5212 = vmatprep.subr.mxu0 0.0
        %5213 = vmatpush1.msra.mxu0 %v5088
        %5214 = vmatprep.subr.mxu0 0.0
        %5215 = vmatpush1.msra.mxu0 %v5089
        %5216 = vmatprep.subr.mxu0 0.0
        %5217 = vmatpush1.msra.mxu0 %v5090
        %5218 = vmatprep.subr.mxu0 0.0
        %5219 = vmatpush1.msra.mxu0 %v5091
        %5220 = vmatprep.subr.mxu0 0.0
        %5221 = vmatpush1.msra.mxu0 %v5092
        %5222 = vmatprep.subr.mxu0 0.0
        %5223 = vmatpush1.msra.mxu0 %v5093
        %5224 = vmatprep.subr.mxu0 0.0
        %5225 = vmatpush1.msra.mxu0 %v5094
        %5226 = vmatprep.subr.mxu0 0.0
        %5227 = vmatpush1.msra.mxu0 %v5095
        %5228 = vmatprep.subr.mxu0 0.0
        %5229 = vmatpush1.msra.mxu0 %v5096
        %5230 = vmatprep.subr.mxu0 0.0
        %5231 = vmatpush1.msra.mxu0 %v5097
        %5232 = vmatprep.subr.mxu0 0.0
        %5233 = vmatpush1.msra.mxu0 %v5098
        %5234 = vmatprep.subr.mxu0 0.0
        %5235 = vmatpush1.msra.mxu0 %v5099
        %5236 = vmatprep.subr.mxu0 0.0
        %5237 = vmatpush1.msra.mxu0 %v5100
        %5238 = vmatprep.subr.mxu0 0.0
        %5239 = vmatpush1.msra.mxu0 %v5101
        %5240 = vmatprep.subr.mxu0 0.0
        %5241 = vmatpush1.msra.mxu0 %v5102
        %5242 = vmatprep.subr.mxu0 0.0
        %5243 = vmatpush1.msra.mxu0 0.0
        %5244 = vmatprep.subr.mxu0 0.0
        %5245 = vmatpush1.msra.mxu0 0.0
        %5246 = vmatprep.subr.mxu0 0.0
        %5247 = vmatpush1.msra.mxu0 0.0
        %5248 = vmatprep.subr.mxu0 0.0
        %5249 = vmatpush1.msra.mxu0 0.0
        %5250 = vmatprep.subr.mxu0 0.0
        %5251 = vmatpush1.msra.mxu0 0.0
        %5252 = vmatprep.subr.mxu0 0.0
        %5253 = vmatpush1.msra.mxu0 0.0
        %5254 = vmatprep.subr.mxu0 0.0
        %5255 = vmatpush1.msra.mxu0 0.0
        %5256 = vmatprep.subr.mxu0 0.0
        %5257 = vmatpush1.msra.mxu0 0.0
        %5258 = vmatprep.subr.mxu0 0.0
        %5259 = vmatpush1.msra.mxu0 0.0
        %5260 = vmatprep.subr.mxu0 0.0
        %5261 = vmatpush1.msra.mxu0 0.0
        %5262 = vmatprep.subr.mxu0 0.0
        %5263 = vmatpush1.msra.mxu0 0.0
        %5264 = vmatprep.subr.mxu0 0.0
        %5265 = vmatpush1.msra.mxu0 0.0
        %5266 = vmatprep.subr.mxu0 0.0
        %5267 = vmatpush1.msra.mxu0 0.0
        %5268 = vmatprep.subr.mxu0 0.0
        %5269 = vmatpush1.msra.mxu0 0.0
        %5270 = vmatprep.mubr.f32.mxu0 %v5111
        %5271 = vmatmul.mubr.f32.gmra.mrb[0].mxu0 %v5021
        %v5272 = vpop.f32.mrb[0].mxu0
        %v5273 = vadd.f32 %v5108, %v5272
        %v5274 = vpop.f32.mrb[0].mxu0
        %5275 = vmatprep.mubr.f32.mxu0 %v5114
        %5276 = vmatmul.mubr.f32.gmra.mrb[0].mxu0 %v5023
        %v5277 = vpop.f32.mrb[0].mxu0
        %v5278 = vadd.f32 %v5108, %v5277
        %v5279 = vpop.f32.mrb[0].mxu0
        %5280 = vmatprep.mubr.f32.mxu0 %v5117
        %5281 = vmatmul.mubr.f32.gmra.mrb[0].mxu0 %v5025
        %v5282 = vpop.f32.mrb[0].mxu0
        %v5283 = vadd.f32 %v5108, %v5282
        %v5284 = vpop.f32.mrb[0].mxu0
        %5285 = vmatprep.mubr.f32.mxu0 %v5120
        %5286 = vmatmul.mubr.f32.gmra.mrb[0].mxu0 %v5027
        %v5287 = vpop.f32.mrb[0].mxu0
        %v5288 = vadd.f32 %v5108, %v5287
        %v5289 = vpop.f32.mrb[0].mxu0
        %5290 = vmatprep.mubr.f32.mxu0 %v5123
        %5291 = vmatmul.mubr.f32.gmra.mrb[0].mxu0 %v5029
        %v5292 = vpop.f32.mrb[0].mxu0
        %v5293 = vadd.f32 %v5108, %v5292
        %v5294 = vpop.f32.mrb[0].mxu0
        %5295 = vmatprep.mubr.f32.mxu0 %v5126
        %5296 = vmatmul.mubr.f32.gmra.mrb[0].mxu0 %v5031
        %v5297 = vpop.f32.mrb[0].mxu0
        %v5298 = vadd.f32 %v5108, %v5297
        %v5299 = vpop.f32.mrb[0].mxu0
        %5300 = vmatprep.mubr.f32.mxu0 %v5129
        %5301 = vmatmul.mubr.f32.gmra.mrb[0].mxu0 %v5033
        %v5302 = vpop.f32.mrb[0].mxu0
        %v5303 = vadd.f32 %v5108, %v5302
        %v5304 = vpop.f32.mrb[0].mxu0
        %5305 = vmatprep.mubr.f32.mxu0 %v5132
        %5306 = vmatmul.mubr.f32.gmra.mrb[0].mxu0 %v5035
        %v5307 = vpop.f32.mrb[0].mxu0
        %v5308 = vadd.f32 %v5108, %v5307
        %v5309 = vpop.f32.mrb[0].mxu0
        %5310 = vmatprep.mubr.f32.mxu0 %v5135
        %5311 = vmatmul.mubr.f32.gmra.mrb[0].mxu0 %v5037
        %v5312 = vpop.f32.mrb[0].mxu0
        %v5313 = vadd.f32 %v5108, %v5312
        %v5314 = vpop.f32.mrb[0].mxu0
        %5315 = vmatprep.mubr.f32.mxu0 %v5138
        %5316 = vmatmul.mubr.f32.gmra.mrb[0].mxu0 %v5039
        %v5317 = vpop.f32.mrb[0].mxu0
        %v5318 = vadd.f32 %v5108, %v5317
        %v5319 = vpop.f32.mrb[0].mxu0
        %5320 = vmatprep.mubr.f32.mxu0 %v5141
        %5321 = vmatmul.mubr.f32.gmra.mrb[0].mxu0 %v5041
        %v5322 = vpop.f32.mrb[0].mxu0
        %v5323 = vadd.f32 %v5108, %v5322
        %v5324 = vpop.f32.mrb[0].mxu0
        %5325 = vmatprep.mubr.f32.mxu0 %v5144
        %5326 = vmatmul.mubr.f32.gmra.mrb[0].mxu0 %v5043
        %v5327 = vpop.f32.mrb[0].mxu0
        %v5328 = vadd.f32 %v5108, %v5327
        %v5329 = vpop.f32.mrb[0].mxu0
        %5330 = vmatprep.mubr.f32.mxu0 %v5147
        %5331 = vmatmul.mubr.f32.gmra.mrb[0].mxu0 %v5045
        %v5332 = vpop.f32.mrb[0].mxu0
        %v5333 = vadd.f32 %v5108, %v5332
        %v5334 = vpop.f32.mrb[0].mxu0
        %5335 = vmatprep.mubr.f32.mxu0 %v5150
        %5336 = vmatmul.mubr.f32.gmra.mrb[0].mxu0 %v5047
        %v5337 = vpop.f32.mrb[0].mxu0
        %v5338 = vadd.f32 %v5108, %v5337
        %v5339 = vpop.f32.mrb[0].mxu0
        %5340 = vmatprep.mubr.f32.mxu0 %v5153
        %5341 = vmatmul.mubr.f32.gmra.mrb[0].mxu0 %v5049
        %v5342 = vpop.f32.mrb[0].mxu0
        %v5343 = vadd.f32 %v5108, %v5342
        %v5344 = vpop.f32.mrb[0].mxu0
        %5345 = vmatprep.mubr.f32.mxu0 %v5156
        %5346 = vmatmul.mubr.f32.gmra.mrb[0].mxu0 %v5051
        %v5347 = vpop.f32.mrb[0].mxu0
        %v5348 = vadd.f32 %v5108, %v5347
        %v5349 = vpop.f32.mrb[0].mxu0
        %5350 = vmatprep.mubr.f32.mxu0 %v5159
        %5351 = vmatmul.mubr.f32.gmra.mrb[0].mxu0 %v5053
        %v5352 = vpop.f32.mrb[0].mxu0
        %v5353 = vadd.f32 %v5108, %v5352
        %v5354 = vpop.f32.mrb[0].mxu0
        %5355 = vmatprep.mubr.f32.mxu0 %v5162
        %5356 = vmatmul.mubr.f32.gmra.mrb[0].mxu0 %v5055
        %v5357 = vpop.f32.mrb[0].mxu0
        %v5358 = vadd.f32 %v5108, %v5357
        %v5359 = vpop.f32.mrb[0].mxu0
        %5360 = vmatprep.mubr.f32.mxu0 %v5165
        %5361 = vmatmul.mubr.f32.gmra.mrb[0].mxu0 %v5057
        %v5362 = vpop.f32.mrb[0].mxu0
        %v5363 = vadd.f32 %v5108, %v5362
        %v5364 = vpop.f32.mrb[0].mxu0
        %5365 = vmatprep.mubr.f32.mxu0 %v5168
        %5366 = vmatmul.mubr.f32.gmra.mrb[0].mxu0 %v5059
        %v5367 = vpop.f32.mrb[0].mxu0
        %v5368 = vadd.f32 %v5108, %v5367
        %v5369 = vpop.f32.mrb[0].mxu0
        %5370 = vmatprep.mubr.f32.mxu0 %v5171
        %5371 = vmatmul.mubr.f32.gmra.mrb[0].mxu0 %v5061
        %v5372 = vpop.f32.mrb[0].mxu0
        %v5373 = vadd.f32 %v5108, %v5372
        %v5374 = vpop.f32.mrb[0].mxu0
        %5375 = vmatprep.mubr.f32.mxu0 %v5174
        %5376 = vmatmul.mubr.f32.gmra.mrb[0].mxu0 %v5063
        %v5377 = vpop.f32.mrb[0].mxu0
        %v5378 = vadd.f32 %v5108, %v5377
        %v5379 = vpop.f32.mrb[0].mxu0
        %5380 = vmatprep.mubr.f32.mxu0 %v5177
        %5381 = vmatmul.mubr.f32.gmra.mrb[0].mxu0 %v5065
        %v5382 = vpop.f32.mrb[0].mxu0
        %v5383 = vadd.f32 %v5108, %v5382
        %v5384 = vpop.f32.mrb[0].mxu0
        %5385 = vmatprep.mubr.f32.mxu0 %v5180
        %5386 = vmatmul.mubr.f32.gmra.mrb[0].mxu0 %v5067
        %v5387 = vpop.f32.mrb[0].mxu0
        %v5388 = vadd.f32 %v5108, %v5387
        %v5389 = vpop.f32.mrb[0].mxu0
        %5390 = vmatprep.mubr.f32.mxu0 %v5183
        %5391 = vmatmul.mubr.f32.gmra.mrb[0].mxu0 %v5069
        %v5392 = vpop.f32.mrb[0].mxu0
        %v5393 = vadd.f32 %v5108, %v5392
        %v5394 = vpop.f32.mrb[0].mxu0
        %5395 = vmatprep.mubr.f32.mxu0 %v5186
        %5396 = vmatmul.mubr.f32.gmra.mrb[0].mxu0 %v5071
        %v5397 = vpop.f32.mrb[0].mxu0
        %v5398 = vadd.f32 %v5108, %v5397
        %v5399 = vpop.f32.mrb[0].mxu0
        %5400 = vmatprep.mubr.f32.mxu0 %v5189
        %5401 = vmatmul.mubr.f32.gmra.mrb[0].mxu0 %v5073
        %v5402 = vpop.f32.mrb[0].mxu0
        %v5403 = vadd.f32 %v5108, %v5402
        %v5404 = vpop.f32.mrb[0].mxu0
        %5405 = vmatprep.mubr.f32.mxu0 %v5192
        %5406 = vmatmul.mubr.f32.gmra.mrb[0].mxu0 %v5075
        %v5407 = vpop.f32.mrb[0].mxu0
        %v5408 = vadd.f32 %v5108, %v5407
        %v5409 = vpop.f32.mrb[0].mxu0
        %5410 = vmatprep.mubr.f32.mxu0 %v5195
        %5411 = vmatmul.mubr.f32.gmra.mrb[0].mxu0 %v5077
        %v5412 = vpop.f32.mrb[0].mxu0
        %v5413 = vadd.f32 %v5108, %v5412
        %v5414 = vpop.f32.mrb[0].mxu0
        %5415 = vmatprep.mubr.f32.mxu0 %v5198
        %5416 = vmatmul.mubr.f32.gmra.mrb[0].mxu0 %v5079
        %v5417 = vpop.f32.mrb[0].mxu0
        %v5418 = vadd.f32 %v5108, %v5417
        %v5419 = vpop.f32.mrb[0].mxu0
        %5420 = vmatprep.mubr.f32.mxu0 %v5201
        %5421 = vmatmul.mubr.f32.gmra.mrb[0].mxu0 %v5081
        %v5422 = vpop.f32.mrb[0].mxu0
        %v5423 = vadd.f32 %v5108, %v5422
        %v5424 = vpop.f32.mrb[0].mxu0
        %5425 = vmatprep.mubr.f32.mxu0 %v5204
        %5426 = vmatmul.mubr.f32.gmra.mrb[0].mxu0 %v5083
        %v5427 = vpop.f32.mrb[0].mxu0
        %v5428 = vadd.f32 %v5108, %v5427
        %v5429 = vpop.f32.mrb[0].mxu0
        %5430 = vdwg.mxu0
        %vm5431 = vcmp.gt.f32.partialorder %v5273, 0.0
        %vm5432 = vcmp.gt.f32.partialorder %v5278, 0.0
        %vm5433 = vcmp.gt.f32.partialorder %v5283, 0.0
        %vm5434 = vcmp.gt.f32.partialorder %v5288, 0.0
        %vm5435 = vcmp.gt.f32.partialorder %v5293, 0.0
        %vm5436 = vcmp.gt.f32.partialorder %v5298, 0.0
        %vm5437 = vcmp.gt.f32.partialorder %v5303, 0.0
        %vm5438 = vcmp.gt.f32.partialorder %v5308, 0.0
        %vm5439 = vcmp.gt.f32.partialorder %v5313, 0.0
        %vm5440 = vcmp.gt.f32.partialorder %v5318, 0.0
        %vm5441 = vcmp.gt.f32.partialorder %v5323, 0.0
        %vm5442 = vcmp.gt.f32.partialorder %v5328, 0.0
        %vm5443 = vcmp.gt.f32.partialorder %v5333, 0.0
        %vm5444 = vcmp.gt.f32.partialorder %v5338, 0.0
        %vm5445 = vcmp.gt.f32.partialorder %v5343, 0.0
        %vm5446 = vcmp.gt.f32.partialorder %v5348, 0.0
        %vm5447 = vcmp.gt.f32.partialorder %v5353, 0.0
        %vm5448 = vcmp.gt.f32.partialorder %v5358, 0.0
        %vm5449 = vcmp.gt.f32.partialorder %v5363, 0.0
        %vm5450 = vcmp.gt.f32.partialorder %v5368, 0.0
        %vm5451 = vcmp.gt.f32.partialorder %v5373, 0.0
        %vm5452 = vcmp.gt.f32.partialorder %v5378, 0.0
        %vm5453 = vcmp.gt.f32.partialorder %v5383, 0.0
        %vm5454 = vcmp.gt.f32.partialorder %v5388, 0.0
        %vm5455 = vcmp.gt.f32.partialorder %v5393, 0.0
        %vm5456 = vcmp.gt.f32.partialorder %v5398, 0.0
        %vm5457 = vcmp.gt.f32.partialorder %v5403, 0.0
        %vm5458 = vcmp.gt.f32.partialorder %v5408, 0.0
        %vm5459 = vcmp.gt.f32.partialorder %v5413, 0.0
        %vm5460 = vcmp.gt.f32.partialorder %v5418, 0.0
        %vm5461 = vcmp.gt.f32.partialorder %v5423, 0.0
        %vm5462 = vcmp.gt.f32.partialorder %v5428, 0.0
        %v5463 = vmul.f32 %v5273, 0.1
        %v5464 = vmul.f32 %v5278, 0.1
        %v5465 = vmul.f32 %v5283, 0.1
        %v5466 = vmul.f32 %v5288, 0.1
        %v5467 = vmul.f32 %v5293, 0.1
        %v5468 = vmul.f32 %v5298, 0.1
        %v5469 = vmul.f32 %v5303, 0.1
        %v5470 = vmul.f32 %v5308, 0.1
        %v5471 = vmul.f32 %v5313, 0.1
        %v5472 = vmul.f32 %v5318, 0.1
        %v5473 = vmul.f32 %v5323, 0.1
        %v5474 = vmul.f32 %v5328, 0.1
        %v5475 = vmul.f32 %v5333, 0.1
        %v5476 = vmul.f32 %v5338, 0.1
        %v5477 = vmul.f32 %v5343, 0.1
        %v5478 = vmul.f32 %v5348, 0.1
        %v5479 = vmul.f32 %v5353, 0.1
        %v5480 = vmul.f32 %v5358, 0.1
        %v5481 = vmul.f32 %v5363, 0.1
        %v5482 = vmul.f32 %v5368, 0.1
        %v5483 = vmul.f32 %v5373, 0.1
        %v5484 = vmul.f32 %v5378, 0.1
        %v5485 = vmul.f32 %v5383, 0.1
        %v5486 = vmul.f32 %v5388, 0.1
        %v5487 = vmul.f32 %v5393, 0.1
        %v5488 = vmul.f32 %v5398, 0.1
        %v5489 = vmul.f32 %v5403, 0.1
        %v5490 = vmul.f32 %v5408, 0.1
        %v5491 = vmul.f32 %v5413, 0.1
        %v5492 = vmul.f32 %v5418, 0.1
        %v5493 = vmul.f32 %v5423, 0.1
        %v5494 = vmul.f32 %v5428, 0.1
        %v5495 = vsel %vm5431, %v5273, %v5463
        %v5496 = vsel %vm5432, %v5278, %v5464
        %v5497 = vsel %vm5433, %v5283, %v5465
        %v5498 = vsel %vm5434, %v5288, %v5466
        %v5499 = vsel %vm5435, %v5293, %v5467
        %v5500 = vsel %vm5436, %v5298, %v5468
        %v5501 = vsel %vm5437, %v5303, %v5469
        %v5502 = vsel %vm5438, %v5308, %v5470
        %v5503 = vsel %vm5439, %v5313, %v5471
        %v5504 = vsel %vm5440, %v5318, %v5472
        %v5505 = vsel %vm5441, %v5323, %v5473
        %v5506 = vsel %vm5442, %v5328, %v5474
        %v5507 = vsel %vm5443, %v5333, %v5475
        %v5508 = vsel %vm5444, %v5338, %v5476
        %v5509 = vsel %vm5445, %v5343, %v5477
        %v5510 = vsel %vm5446, %v5348, %v5478
        %v5511 = vsel %vm5447, %v5353, %v5479
        %v5512 = vsel %vm5448, %v5358, %v5480
        %v5513 = vsel %vm5449, %v5363, %v5481
        %v5514 = vsel %vm5450, %v5368, %v5482
        %v5515 = vsel %vm5451, %v5373, %v5483
        %v5516 = vsel %vm5452, %v5378, %v5484
        %v5517 = vsel %vm5453, %v5383, %v5485
        %v5518 = vsel %vm5454, %v5388, %v5486
        %v5519 = vsel %vm5455, %v5393, %v5487
        %v5520 = vsel %vm5456, %v5398, %v5488
        %v5521 = vsel %vm5457, %v5403, %v5489
        %v5522 = vsel %vm5458, %v5408, %v5490
        %v5523 = vsel %vm5459, %v5413, %v5491
        %v5524 = vsel %vm5460, %v5418, %v5492
        %v5525 = vsel %vm5461, %v5423, %v5493
        %v5526 = vsel %vm5462, %v5428, %v5494
        %v5527 = vld [vmem:[%s9] sm:$0xff]
        %v5528 = vld [vmem:[%s9 + $0x8] sm:$0xff]
        %v5529 = vld [vmem:[%s9 + $0x10] sm:$0xff]
        %v5530 = vld [vmem:[%s9 + $0x18] sm:$0xff]
        %v5531 = vld [vmem:[#allocation10] sm:$0x1]
        %v5533 = vlaneseq
        %v5534 = vshrl.u32 %v5533, 7
        %v5535 = vsub.s32 0, %v5534
        %v5536 = vrot.slane %v5531, %v5535
        %v5539 = vsel %vm652, %v5495, 0
        %v5542 = vsel %vm652, %v5496, 0
        %v5545 = vsel %vm652, %v5497, 0
        %v5548 = vsel %vm652, %v5498, 0
        %v5551 = vsel %vm652, %v5499, 0
        %v5554 = vsel %vm652, %v5500, 0
        %v5557 = vsel %vm652, %v5501, 0
        %v5560 = vsel %vm652, %v5502, 0
        %v5563 = vsel %vm652, %v5503, 0
        %v5566 = vsel %vm652, %v5504, 0
        %v5569 = vsel %vm652, %v5505, 0
        %v5572 = vsel %vm652, %v5506, 0
        %v5575 = vsel %vm652, %v5507, 0
        %v5578 = vsel %vm652, %v5508, 0
        %v5581 = vsel %vm652, %v5509, 0
        %v5584 = vsel %vm652, %v5510, 0
        %v5587 = vsel %vm652, %v5511, 0
        %v5590 = vsel %vm652, %v5512, 0
        %v5593 = vsel %vm652, %v5513, 0
        %v5596 = vsel %vm652, %v5514, 0
        %v5599 = vsel %vm652, %v5515, 0
        %v5602 = vsel %vm652, %v5516, 0
        %v5605 = vsel %vm652, %v5517, 0
        %v5608 = vsel %vm652, %v5518, 0
        %v5611 = vsel %vm652, %v5519, 0
        %v5614 = vsel %vm652, %v5520, 0
        %v5617 = vsel %vm652, %v5521, 0
        %v5620 = vsel %vm652, %v5522, 0
        %v5623 = vsel %vm652, %v5523, 0
        %v5626 = vsel %vm652, %v5524, 0
        %v5629 = vsel %vm652, %v5525, 0
        %v5632 = vsel %vm652, %v5526, 0
        %5634 = vmatprep.subr.mxu0 0.0
        %5635 = vmatpush1.msra.mxu0 %v5527
        %5636 = vmatprep.subr.mxu0 0.0
        %5637 = vmatpush1.msra.mxu0 %v5528
        %5638 = vmatprep.subr.mxu0 0.0
        %5639 = vmatpush1.msra.mxu0 %v5529
        %5640 = vmatprep.subr.mxu0 0.0
        %5641 = vmatpush1.msra.mxu0 %v5530
        %5642 = vmatprep.subr.mxu0 0.0
        %5643 = vmatpush1.msra.mxu0 0.0
        %5644 = vmatprep.subr.mxu0 0.0
        %5645 = vmatpush1.msra.mxu0 0.0
        %5646 = vmatprep.subr.mxu0 0.0
        %5647 = vmatpush1.msra.mxu0 0.0
        %5648 = vmatprep.subr.mxu0 0.0
        %5649 = vmatpush1.msra.mxu0 0.0
        %5650 = vmatprep.subr.mxu0 0.0
        %5651 = vmatpush1.msra.mxu0 0.0
        %5652 = vmatprep.subr.mxu0 0.0
        %5653 = vmatpush1.msra.mxu0 0.0
        %5654 = vmatprep.subr.mxu0 0.0
        %5655 = vmatpush1.msra.mxu0 0.0
        %5656 = vmatprep.subr.mxu0 0.0
        %5657 = vmatpush1.msra.mxu0 0.0
        %5658 = vmatprep.subr.mxu0 0.0
        %5659 = vmatpush1.msra.mxu0 0.0
        %5660 = vmatprep.subr.mxu0 0.0
        %5661 = vmatpush1.msra.mxu0 0.0
        %5662 = vmatprep.subr.mxu0 0.0
        %5663 = vmatpush1.msra.mxu0 0.0
        %5664 = vmatprep.subr.mxu0 0.0
        %5665 = vmatpush1.msra.mxu0 0.0
        %5666 = vmatprep.subr.mxu0 0.0
        %5667 = vmatpush1.msra.mxu0 0.0
        %5668 = vmatprep.subr.mxu0 0.0
        %5669 = vmatpush1.msra.mxu0 0.0
        %5670 = vmatprep.subr.mxu0 0.0
        %5671 = vmatpush1.msra.mxu0 0.0
        %5672 = vmatprep.subr.mxu0 0.0
        %5673 = vmatpush1.msra.mxu0 0.0
        %5674 = vmatprep.subr.mxu0 0.0
        %5675 = vmatpush1.msra.mxu0 0.0
        %5676 = vmatprep.subr.mxu0 0.0
        %5677 = vmatpush1.msra.mxu0 0.0
        %5678 = vmatprep.subr.mxu0 0.0
        %5679 = vmatpush1.msra.mxu0 0.0
        %5680 = vmatprep.subr.mxu0 0.0
        %5681 = vmatpush1.msra.mxu0 0.0
        %5682 = vmatprep.subr.mxu0 0.0
        %5683 = vmatpush1.msra.mxu0 0.0
        %5684 = vmatprep.subr.mxu0 0.0
        %5685 = vmatpush1.msra.mxu0 0.0
        %5686 = vmatprep.subr.mxu0 0.0
        %5687 = vmatpush1.msra.mxu0 0.0
        %5688 = vmatprep.subr.mxu0 0.0
        %5689 = vmatpush1.msra.mxu0 0.0
        %5690 = vmatprep.subr.mxu0 0.0
        %5691 = vmatpush1.msra.mxu0 0.0
        %5692 = vmatprep.subr.mxu0 0.0
        %5693 = vmatpush1.msra.mxu0 0.0
        %5694 = vmatprep.subr.mxu0 0.0
        %5695 = vmatpush1.msra.mxu0 0.0
        %5696 = vmatprep.subr.mxu0 0.0
        %5697 = vmatpush1.msra.mxu0 0.0
        %5698 = vmatprep.mubr.f32.mxu0 0.0
        %5699 = vmatmul.mubr.f32.gmra.mrb[0].mxu0 %v5539
        %v5700 = vpop.f32.mrb[0].mxu0
        %v5701 = vadd.f32 %v5536, %v5700
        %v5702 = vpop.f32.mrb[0].mxu0
        %5703 = vmatprep.mubr.f32.mxu0 0.0
        %5704 = vmatmul.mubr.f32.gmra.mrb[0].mxu0 %v5542
        %v5705 = vpop.f32.mrb[0].mxu0
        %v5706 = vadd.f32 %v5536, %v5705
        %v5707 = vpop.f32.mrb[0].mxu0
        %5708 = vmatprep.mubr.f32.mxu0 0.0
        %5709 = vmatmul.mubr.f32.gmra.mrb[0].mxu0 %v5545
        %v5710 = vpop.f32.mrb[0].mxu0
        %v5711 = vadd.f32 %v5536, %v5710
        %v5712 = vpop.f32.mrb[0].mxu0
        %5713 = vmatprep.mubr.f32.mxu0 0.0
        %5714 = vmatmul.mubr.f32.gmra.mrb[0].mxu0 %v5548
        %v5715 = vpop.f32.mrb[0].mxu0
        %v5716 = vadd.f32 %v5536, %v5715
        %v5717 = vpop.f32.mrb[0].mxu0
        %5718 = vmatprep.mubr.f32.mxu0 0.0
        %5719 = vmatmul.mubr.f32.gmra.mrb[0].mxu0 %v5551
        %v5720 = vpop.f32.mrb[0].mxu0
        %v5721 = vadd.f32 %v5536, %v5720
        %v5722 = vpop.f32.mrb[0].mxu0
        %5723 = vmatprep.mubr.f32.mxu0 0.0
        %5724 = vmatmul.mubr.f32.gmra.mrb[0].mxu0 %v5554
        %v5725 = vpop.f32.mrb[0].mxu0
        %v5726 = vadd.f32 %v5536, %v5725
        %v5727 = vpop.f32.mrb[0].mxu0
        %5728 = vmatprep.mubr.f32.mxu0 0.0
        %5729 = vmatmul.mubr.f32.gmra.mrb[0].mxu0 %v5557
        %v5730 = vpop.f32.mrb[0].mxu0
        %v5731 = vadd.f32 %v5536, %v5730
        %v5732 = vpop.f32.mrb[0].mxu0
        %5733 = vmatprep.mubr.f32.mxu0 0.0
        %5734 = vmatmul.mubr.f32.gmra.mrb[0].mxu0 %v5560
        %v5735 = vpop.f32.mrb[0].mxu0
        %v5736 = vadd.f32 %v5536, %v5735
        %v5737 = vpop.f32.mrb[0].mxu0
        %5738 = vmatprep.mubr.f32.mxu0 0.0
        %5739 = vmatmul.mubr.f32.gmra.mrb[0].mxu0 %v5563
        %v5740 = vpop.f32.mrb[0].mxu0
        %v5741 = vadd.f32 %v5536, %v5740
        %v5742 = vpop.f32.mrb[0].mxu0
        %5743 = vmatprep.mubr.f32.mxu0 0.0
        %5744 = vmatmul.mubr.f32.gmra.mrb[0].mxu0 %v5566
        %v5745 = vpop.f32.mrb[0].mxu0
        %v5746 = vadd.f32 %v5536, %v5745
        %v5747 = vpop.f32.mrb[0].mxu0
        %5748 = vmatprep.mubr.f32.mxu0 0.0
        %5749 = vmatmul.mubr.f32.gmra.mrb[0].mxu0 %v5569
        %v5750 = vpop.f32.mrb[0].mxu0
        %v5751 = vadd.f32 %v5536, %v5750
        %v5752 = vpop.f32.mrb[0].mxu0
        %5753 = vmatprep.mubr.f32.mxu0 0.0
        %5754 = vmatmul.mubr.f32.gmra.mrb[0].mxu0 %v5572
        %v5755 = vpop.f32.mrb[0].mxu0
        %v5756 = vadd.f32 %v5536, %v5755
        %v5757 = vpop.f32.mrb[0].mxu0
        %5758 = vmatprep.mubr.f32.mxu0 0.0
        %5759 = vmatmul.mubr.f32.gmra.mrb[0].mxu0 %v5575
        %v5760 = vpop.f32.mrb[0].mxu0
        %v5761 = vadd.f32 %v5536, %v5760
        %v5762 = vpop.f32.mrb[0].mxu0
        %5763 = vmatprep.mubr.f32.mxu0 0.0
        %5764 = vmatmul.mubr.f32.gmra.mrb[0].mxu0 %v5578
        %v5765 = vpop.f32.mrb[0].mxu0
        %v5766 = vadd.f32 %v5536, %v5765
        %v5767 = vpop.f32.mrb[0].mxu0
        %5768 = vmatprep.mubr.f32.mxu0 0.0
        %5769 = vmatmul.mubr.f32.gmra.mrb[0].mxu0 %v5581
        %v5770 = vpop.f32.mrb[0].mxu0
        %v5771 = vadd.f32 %v5536, %v5770
        %v5772 = vpop.f32.mrb[0].mxu0
        %5773 = vmatprep.mubr.f32.mxu0 0.0
        %5774 = vmatmul.mubr.f32.gmra.mrb[0].mxu0 %v5584
        %v5775 = vpop.f32.mrb[0].mxu0
        %v5776 = vadd.f32 %v5536, %v5775
        %v5777 = vpop.f32.mrb[0].mxu0
        %5778 = vmatprep.mubr.f32.mxu0 0.0
        %5779 = vmatmul.mubr.f32.gmra.mrb[0].mxu0 %v5587
        %v5780 = vpop.f32.mrb[0].mxu0
        %v5781 = vadd.f32 %v5536, %v5780
        %v5782 = vpop.f32.mrb[0].mxu0
        %5783 = vmatprep.mubr.f32.mxu0 0.0
        %5784 = vmatmul.mubr.f32.gmra.mrb[0].mxu0 %v5590
        %v5785 = vpop.f32.mrb[0].mxu0
        %v5786 = vadd.f32 %v5536, %v5785
        %v5787 = vpop.f32.mrb[0].mxu0
        %5788 = vmatprep.mubr.f32.mxu0 0.0
        %5789 = vmatmul.mubr.f32.gmra.mrb[0].mxu0 %v5593
        %v5790 = vpop.f32.mrb[0].mxu0
        %v5791 = vadd.f32 %v5536, %v5790
        %v5792 = vpop.f32.mrb[0].mxu0
        %5793 = vmatprep.mubr.f32.mxu0 0.0
        %5794 = vmatmul.mubr.f32.gmra.mrb[0].mxu0 %v5596
        %v5795 = vpop.f32.mrb[0].mxu0
        %v5796 = vadd.f32 %v5536, %v5795
        %v5797 = vpop.f32.mrb[0].mxu0
        %5798 = vmatprep.mubr.f32.mxu0 0.0
        %5799 = vmatmul.mubr.f32.gmra.mrb[0].mxu0 %v5599
        %v5800 = vpop.f32.mrb[0].mxu0
        %v5801 = vadd.f32 %v5536, %v5800
        %v5802 = vpop.f32.mrb[0].mxu0
        %5803 = vmatprep.mubr.f32.mxu0 0.0
        %5804 = vmatmul.mubr.f32.gmra.mrb[0].mxu0 %v5602
        %v5805 = vpop.f32.mrb[0].mxu0
        %v5806 = vadd.f32 %v5536, %v5805
        %v5807 = vpop.f32.mrb[0].mxu0
        %5808 = vmatprep.mubr.f32.mxu0 0.0
        %5809 = vmatmul.mubr.f32.gmra.mrb[0].mxu0 %v5605
        %v5810 = vpop.f32.mrb[0].mxu0
        %v5811 = vadd.f32 %v5536, %v5810
        %v5812 = vpop.f32.mrb[0].mxu0
        %5813 = vmatprep.mubr.f32.mxu0 0.0
        %5814 = vmatmul.mubr.f32.gmra.mrb[0].mxu0 %v5608
        %v5815 = vpop.f32.mrb[0].mxu0
        %v5816 = vadd.f32 %v5536, %v5815
        %v5817 = vpop.f32.mrb[0].mxu0
        %5818 = vmatprep.mubr.f32.mxu0 0.0
        %5819 = vmatmul.mubr.f32.gmra.mrb[0].mxu0 %v5611
        %v5820 = vpop.f32.mrb[0].mxu0
        %v5821 = vadd.f32 %v5536, %v5820
        %v5822 = vpop.f32.mrb[0].mxu0
        %5823 = vmatprep.mubr.f32.mxu0 0.0
        %5824 = vmatmul.mubr.f32.gmra.mrb[0].mxu0 %v5614
        %v5825 = vpop.f32.mrb[0].mxu0
        %v5826 = vadd.f32 %v5536, %v5825
        %v5827 = vpop.f32.mrb[0].mxu0
        %5828 = vmatprep.mubr.f32.mxu0 0.0
        %5829 = vmatmul.mubr.f32.gmra.mrb[0].mxu0 %v5617
        %v5830 = vpop.f32.mrb[0].mxu0
        %v5831 = vadd.f32 %v5536, %v5830
        %v5832 = vpop.f32.mrb[0].mxu0
        %5833 = vmatprep.mubr.f32.mxu0 0.0
        %5834 = vmatmul.mubr.f32.gmra.mrb[0].mxu0 %v5620
        %v5835 = vpop.f32.mrb[0].mxu0
        %v5836 = vadd.f32 %v5536, %v5835
        %v5837 = vpop.f32.mrb[0].mxu0
        %5838 = vmatprep.mubr.f32.mxu0 0.0
        %5839 = vmatmul.mubr.f32.gmra.mrb[0].mxu0 %v5623
        %v5840 = vpop.f32.mrb[0].mxu0
        %v5841 = vadd.f32 %v5536, %v5840
        %v5842 = vpop.f32.mrb[0].mxu0
        %5843 = vmatprep.mubr.f32.mxu0 0.0
        %5844 = vmatmul.mubr.f32.gmra.mrb[0].mxu0 %v5626
        %v5845 = vpop.f32.mrb[0].mxu0
        %v5846 = vadd.f32 %v5536, %v5845
        %v5847 = vpop.f32.mrb[0].mxu0
        %5848 = vmatprep.mubr.f32.mxu0 0.0
        %5849 = vmatmul.mubr.f32.gmra.mrb[0].mxu0 %v5629
        %v5850 = vpop.f32.mrb[0].mxu0
        %v5851 = vadd.f32 %v5536, %v5850
        %v5852 = vpop.f32.mrb[0].mxu0
        %5853 = vmatprep.mubr.f32.mxu0 0.0
        %5854 = vmatmul.mubr.f32.gmra.mrb[0].mxu0 %v5632
        %v5855 = vpop.f32.mrb[0].mxu0
        %v5856 = vadd.f32 %v5536, %v5855
        %v5857 = vpop.f32.mrb[0].mxu0
        %5858 = vdwg.mxu0
        %vm5859 = vcmp.gt.f32.partialorder %v5701, 0.0
        %vm5860 = vcmp.gt.f32.partialorder %v5706, 0.0
        %vm5861 = vcmp.gt.f32.partialorder %v5711, 0.0
        %vm5862 = vcmp.gt.f32.partialorder %v5716, 0.0
        %vm5863 = vcmp.gt.f32.partialorder %v5721, 0.0
        %vm5864 = vcmp.gt.f32.partialorder %v5726, 0.0
        %vm5865 = vcmp.gt.f32.partialorder %v5731, 0.0
        %vm5866 = vcmp.gt.f32.partialorder %v5736, 0.0
        %vm5867 = vcmp.gt.f32.partialorder %v5741, 0.0
        %vm5868 = vcmp.gt.f32.partialorder %v5746, 0.0
        %vm5869 = vcmp.gt.f32.partialorder %v5751, 0.0
        %vm5870 = vcmp.gt.f32.partialorder %v5756, 0.0
        %vm5871 = vcmp.gt.f32.partialorder %v5761, 0.0
        %vm5872 = vcmp.gt.f32.partialorder %v5766, 0.0
        %vm5873 = vcmp.gt.f32.partialorder %v5771, 0.0
        %vm5874 = vcmp.gt.f32.partialorder %v5776, 0.0
        %vm5875 = vcmp.gt.f32.partialorder %v5781, 0.0
        %vm5876 = vcmp.gt.f32.partialorder %v5786, 0.0
        %vm5877 = vcmp.gt.f32.partialorder %v5791, 0.0
        %vm5878 = vcmp.gt.f32.partialorder %v5796, 0.0
        %vm5879 = vcmp.gt.f32.partialorder %v5801, 0.0
        %vm5880 = vcmp.gt.f32.partialorder %v5806, 0.0
        %vm5881 = vcmp.gt.f32.partialorder %v5811, 0.0
        %vm5882 = vcmp.gt.f32.partialorder %v5816, 0.0
        %vm5883 = vcmp.gt.f32.partialorder %v5821, 0.0
        %vm5884 = vcmp.gt.f32.partialorder %v5826, 0.0
        %vm5885 = vcmp.gt.f32.partialorder %v5831, 0.0
        %vm5886 = vcmp.gt.f32.partialorder %v5836, 0.0
        %vm5887 = vcmp.gt.f32.partialorder %v5841, 0.0
        %vm5888 = vcmp.gt.f32.partialorder %v5846, 0.0
        %vm5889 = vcmp.gt.f32.partialorder %v5851, 0.0
        %vm5890 = vcmp.gt.f32.partialorder %v5856, 0.0
        %v5891 = vmul.f32 %v5701, 0.1
        %v5892 = vmul.f32 %v5706, 0.1
        %v5893 = vmul.f32 %v5711, 0.1
        %v5894 = vmul.f32 %v5716, 0.1
        %v5895 = vmul.f32 %v5721, 0.1
        %v5896 = vmul.f32 %v5726, 0.1
        %v5897 = vmul.f32 %v5731, 0.1
        %v5898 = vmul.f32 %v5736, 0.1
        %v5899 = vmul.f32 %v5741, 0.1
        %v5900 = vmul.f32 %v5746, 0.1
        %v5901 = vmul.f32 %v5751, 0.1
        %v5902 = vmul.f32 %v5756, 0.1
        %v5903 = vmul.f32 %v5761, 0.1
        %v5904 = vmul.f32 %v5766, 0.1
        %v5905 = vmul.f32 %v5771, 0.1
        %v5906 = vmul.f32 %v5776, 0.1
        %v5907 = vmul.f32 %v5781, 0.1
        %v5908 = vmul.f32 %v5786, 0.1
        %v5909 = vmul.f32 %v5791, 0.1
        %v5910 = vmul.f32 %v5796, 0.1
        %v5911 = vmul.f32 %v5801, 0.1
        %v5912 = vmul.f32 %v5806, 0.1
        %v5913 = vmul.f32 %v5811, 0.1
        %v5914 = vmul.f32 %v5816, 0.1
        %v5915 = vmul.f32 %v5821, 0.1
        %v5916 = vmul.f32 %v5826, 0.1
        %v5917 = vmul.f32 %v5831, 0.1
        %v5918 = vmul.f32 %v5836, 0.1
        %v5919 = vmul.f32 %v5841, 0.1
        %v5920 = vmul.f32 %v5846, 0.1
        %v5921 = vmul.f32 %v5851, 0.1
        %v5922 = vmul.f32 %v5856, 0.1
        %v5923 = vsel %vm5859, %v5701, %v5891
        %v5924 = vsel %vm5860, %v5706, %v5892
        %v5925 = vsel %vm5861, %v5711, %v5893
        %v5926 = vsel %vm5862, %v5716, %v5894
        %v5927 = vsel %vm5863, %v5721, %v5895
        %v5928 = vsel %vm5864, %v5726, %v5896
        %v5929 = vsel %vm5865, %v5731, %v5897
        %v5930 = vsel %vm5866, %v5736, %v5898
        %v5931 = vsel %vm5867, %v5741, %v5899
        %v5932 = vsel %vm5868, %v5746, %v5900
        %v5933 = vsel %vm5869, %v5751, %v5901
        %v5934 = vsel %vm5870, %v5756, %v5902
        %v5935 = vsel %vm5871, %v5761, %v5903
        %v5936 = vsel %vm5872, %v5766, %v5904
        %v5937 = vsel %vm5873, %v5771, %v5905
        %v5938 = vsel %vm5874, %v5776, %v5906
        %v5939 = vsel %vm5875, %v5781, %v5907
        %v5940 = vsel %vm5876, %v5786, %v5908
        %v5941 = vsel %vm5877, %v5791, %v5909
        %v5942 = vsel %vm5878, %v5796, %v5910
        %v5943 = vsel %vm5879, %v5801, %v5911
        %v5944 = vsel %vm5880, %v5806, %v5912
        %v5945 = vsel %vm5881, %v5811, %v5913
        %v5946 = vsel %vm5882, %v5816, %v5914
        %v5947 = vsel %vm5883, %v5821, %v5915
        %v5948 = vsel %vm5884, %v5826, %v5916
        %v5949 = vsel %vm5885, %v5831, %v5917
        %v5950 = vsel %vm5886, %v5836, %v5918
        %v5951 = vsel %vm5887, %v5841, %v5919
        %v5952 = vsel %vm5888, %v5846, %v5920
        %v5953 = vsel %vm5889, %v5851, %v5921
        %v5954 = vsel %vm5890, %v5856, %v5922
        %5955 = vst.msk [vmem:[%s1070 + $0x1] sm:$0xff] %vm553, %v5923
        %5956 = vst.msk [vmem:[%s1070 + $0x9] sm:$0xff] %vm553, %v5924
        %5957 = vst.msk [vmem:[%s1070 + $0x19] sm:$0xff] %vm553, %v5925
        %5958 = vst.msk [vmem:[%s1070 + $0x21] sm:$0xff] %vm553, %v5926
        %5959 = vst.msk [vmem:[%s1070 + $0x31] sm:$0xff] %vm553, %v5927
        %5960 = vst.msk [vmem:[%s1070 + $0x39] sm:$0xff] %vm553, %v5928
        %5961 = vst.msk [vmem:[%s1070 + $0x49] sm:$0xff] %vm553, %v5929
        %5962 = vst.msk [vmem:[%s1070 + $0x51] sm:$0xff] %vm553, %v5930
        %5963 = vst.msk [vmem:[%s1070 + $0x61] sm:$0xff] %vm553, %v5931
        %5964 = vst.msk [vmem:[%s1070 + $0x69] sm:$0xff] %vm553, %v5932
        %5965 = vst.msk [vmem:[%s1070 + $0x79] sm:$0xff] %vm553, %v5933
        %5966 = vst.msk [vmem:[%s1070 + $0x81] sm:$0xff] %vm553, %v5934
        %5967 = vst.msk [vmem:[%s1070 + $0x91] sm:$0xff] %vm553, %v5935
        %5968 = vst.msk [vmem:[%s1070 + $0x99] sm:$0xff] %vm553, %v5936
        %5969 = vst.msk [vmem:[%s1070 + $0xa9] sm:$0xff] %vm553, %v5937
        %5970 = vst.msk [vmem:[%s1070 + $0xb1] sm:$0xff] %vm553, %v5938
        %5971 = vst.msk [vmem:[%s1070 + $0xc1] sm:$0xff] %vm553, %v5939
        %5972 = vst.msk [vmem:[%s1070 + $0xc9] sm:$0xff] %vm553, %v5940
        %5973 = vst.msk [vmem:[%s1070 + $0xd9] sm:$0xff] %vm553, %v5941
        %5974 = vst.msk [vmem:[%s1070 + $0xe1] sm:$0xff] %vm553, %v5942
        %5975 = vst.msk [vmem:[%s1070 + $0xf1] sm:$0xff] %vm553, %v5943
        %5976 = vst.msk [vmem:[%s1070 + $0xf9] sm:$0xff] %vm553, %v5944
        %5977 = vst.msk [vmem:[%s1070 + $0x109] sm:$0xff] %vm553, %v5945
        %5978 = vst.msk [vmem:[%s1070 + $0x111] sm:$0xff] %vm553, %v5946
        %5979 = vst.msk [vmem:[%s1070 + $0x121] sm:$0xff] %vm553, %v5947
        %5980 = vst.msk [vmem:[%s1070 + $0x129] sm:$0xff] %vm553, %v5948
        %5981 = vst.msk [vmem:[%s1070 + $0x139] sm:$0xff] %vm553, %v5949
        %5982 = vst.msk [vmem:[%s1070 + $0x141] sm:$0xff] %vm553, %v5950
        %5983 = vst.msk [vmem:[%s1070 + $0x151] sm:$0xff] %vm553, %v5951
        %5984 = vst.msk [vmem:[%s1070 + $0x159] sm:$0xff] %vm553, %v5952
        %5985 = vst.msk [vmem:[%s1070 + $0x169] sm:$0xff] %vm553, %v5953
        %5986 = vst.msk [vmem:[%s1070 + $0x171] sm:$0xff] %vm553, %v5954
        %v5987 = vld [vmem:[#allocation2] sm:$0xff]
        %v5988 = vld [vmem:[#allocation2 + $0x8] sm:$0xff]
        %v5989 = vld [vmem:[#allocation2 + $0x18] sm:$0xff]
        %v5990 = vld [vmem:[#allocation2 + $0x20] sm:$0xff]
        %v5991 = vld [vmem:[#allocation2 + $0x30] sm:$0xff]
        %v5992 = vld [vmem:[#allocation2 + $0x38] sm:$0xff]
        %v5993 = vld [vmem:[#allocation2 + $0x48] sm:$0xff]
        %v5994 = vld [vmem:[#allocation2 + $0x50] sm:$0xff]
        %v5995 = vld [vmem:[#allocation2 + $0x60] sm:$0xff]
        %v5996 = vld [vmem:[#allocation2 + $0x68] sm:$0xff]
        %v5997 = vld [vmem:[#allocation2 + $0x78] sm:$0xff]
        %v5998 = vld [vmem:[#allocation2 + $0x80] sm:$0xff]
        %v5999 = vld [vmem:[#allocation2 + $0x90] sm:$0xff]
        %v6000 = vld [vmem:[#allocation2 + $0x98] sm:$0xff]
        %v6001 = vld [vmem:[#allocation2 + $0xa8] sm:$0xff]
        %v6002 = vld [vmem:[#allocation2 + $0xb0] sm:$0xff]
        %v6003 = vld [vmem:[#allocation2 + $0xc0] sm:$0xff]
        %v6004 = vld [vmem:[#allocation2 + $0xc8] sm:$0xff]
        %v6005 = vld [vmem:[#allocation2 + $0xd8] sm:$0xff]
        %v6006 = vld [vmem:[#allocation2 + $0xe0] sm:$0xff]
        %v6007 = vld [vmem:[#allocation2 + $0xf0] sm:$0xff]
        %v6008 = vld [vmem:[#allocation2 + $0xf8] sm:$0xff]
        %v6009 = vld [vmem:[#allocation2 + $0x108] sm:$0xff]
        %v6010 = vld [vmem:[#allocation2 + $0x110] sm:$0xff]
        %v6011 = vld [vmem:[#allocation2 + $0x120] sm:$0xff]
        %v6012 = vld [vmem:[#allocation2 + $0x128] sm:$0xff]
        %v6013 = vld [vmem:[#allocation2 + $0x138] sm:$0xff]
        %v6014 = vld [vmem:[#allocation2 + $0x140] sm:$0xff]
        %v6015 = vld [vmem:[#allocation2 + $0x150] sm:$0xff]
        %v6016 = vld [vmem:[#allocation2 + $0x158] sm:$0xff]
        %v6017 = vld [vmem:[#allocation2 + $0x168] sm:$0xff]
        %v6018 = vld [vmem:[#allocation2 + $0x170] sm:$0xff]
        %6019 = vst.msk [vmem:[#allocation3] sm:$0xff] %vm553, %v5987
        %6020 = vst.msk [vmem:[#allocation3 + $0x10] sm:$0xff] %vm553, %v5988
        %6021 = vst.msk [vmem:[#allocation3 + $0x20] sm:$0xff] %vm553, %v5989
        %6022 = vst.msk [vmem:[#allocation3 + $0x30] sm:$0xff] %vm553, %v5990
        %6023 = vst.msk [vmem:[#allocation3 + $0x40] sm:$0xff] %vm553, %v5991
        %6024 = vst.msk [vmem:[#allocation3 + $0x50] sm:$0xff] %vm553, %v5992
        %6025 = vst.msk [vmem:[#allocation3 + $0x60] sm:$0xff] %vm553, %v5993
        %6026 = vst.msk [vmem:[#allocation3 + $0x70] sm:$0xff] %vm553, %v5994
        %6027 = vst.msk [vmem:[#allocation3 + $0x80] sm:$0xff] %vm553, %v5995
        %6028 = vst.msk [vmem:[#allocation3 + $0x90] sm:$0xff] %vm553, %v5996
        %6029 = vst.msk [vmem:[#allocation3 + $0xa0] sm:$0xff] %vm553, %v5997
        %6030 = vst.msk [vmem:[#allocation3 + $0xb0] sm:$0xff] %vm553, %v5998
        %6031 = vst.msk [vmem:[#allocation3 + $0xc0] sm:$0xff] %vm553, %v5999
        %6032 = vst.msk [vmem:[#allocation3 + $0xd0] sm:$0xff] %vm553, %v6000
        %6033 = vst.msk [vmem:[#allocation3 + $0xe0] sm:$0xff] %vm553, %v6001
        %6034 = vst.msk [vmem:[#allocation3 + $0xf0] sm:$0xff] %vm553, %v6002
        %6035 = vst.msk [vmem:[#allocation3 + $0x100] sm:$0xff] %vm553, %v6003
        %6036 = vst.msk [vmem:[#allocation3 + $0x110] sm:$0xff] %vm553, %v6004
        %6037 = vst.msk [vmem:[#allocation3 + $0x120] sm:$0xff] %vm553, %v6005
        %6038 = vst.msk [vmem:[#allocation3 + $0x130] sm:$0xff] %vm553, %v6006
        %6039 = vst.msk [vmem:[#allocation3 + $0x140] sm:$0xff] %vm553, %v6007
        %6040 = vst.msk [vmem:[#allocation3 + $0x150] sm:$0xff] %vm553, %v6008
        %6041 = vst.msk [vmem:[#allocation3 + $0x160] sm:$0xff] %vm553, %v6009
        %6042 = vst.msk [vmem:[#allocation3 + $0x170] sm:$0xff] %vm553, %v6010
        %6043 = vst.msk [vmem:[#allocation3 + $0x180] sm:$0xff] %vm553, %v6011
        %6044 = vst.msk [vmem:[#allocation3 + $0x190] sm:$0xff] %vm553, %v6012
        %6045 = vst.msk [vmem:[#allocation3 + $0x1a0] sm:$0xff] %vm553, %v6013
        %6046 = vst.msk [vmem:[#allocation3 + $0x1b0] sm:$0xff] %vm553, %v6014
        %6047 = vst.msk [vmem:[#allocation3 + $0x1c0] sm:$0xff] %vm553, %v6015
        %6048 = vst.msk [vmem:[#allocation3 + $0x1d0] sm:$0xff] %vm553, %v6016
        %6049 = vst.msk [vmem:[#allocation3 + $0x1e0] sm:$0xff] %vm553, %v6017
        %6050 = vst.msk [vmem:[#allocation3 + $0x1f0] sm:$0xff] %vm553, %v6018
        %v6051 = vld [vmem:[#allocation2 + $0x1] sm:$0xff]
        %v6052 = vld [vmem:[#allocation2 + $0x9] sm:$0xff]
        %v6053 = vld [vmem:[#allocation2 + $0x19] sm:$0xff]
        %v6054 = vld [vmem:[#allocation2 + $0x21] sm:$0xff]
        %v6055 = vld [vmem:[#allocation2 + $0x31] sm:$0xff]
        %v6056 = vld [vmem:[#allocation2 + $0x39] sm:$0xff]
        %v6057 = vld [vmem:[#allocation2 + $0x49] sm:$0xff]
        %v6058 = vld [vmem:[#allocation2 + $0x51] sm:$0xff]
        %v6059 = vld [vmem:[#allocation2 + $0x61] sm:$0xff]
        %v6060 = vld [vmem:[#allocation2 + $0x69] sm:$0xff]
        %v6061 = vld [vmem:[#allocation2 + $0x79] sm:$0xff]
        %v6062 = vld [vmem:[#allocation2 + $0x81] sm:$0xff]
        %v6063 = vld [vmem:[#allocation2 + $0x91] sm:$0xff]
        %v6064 = vld [vmem:[#allocation2 + $0x99] sm:$0xff]
        %v6065 = vld [vmem:[#allocation2 + $0xa9] sm:$0xff]
        %v6066 = vld [vmem:[#allocation2 + $0xb1] sm:$0xff]
        %v6067 = vld [vmem:[#allocation2 + $0xc1] sm:$0xff]
        %v6068 = vld [vmem:[#allocation2 + $0xc9] sm:$0xff]
        %v6069 = vld [vmem:[#allocation2 + $0xd9] sm:$0xff]
        %v6070 = vld [vmem:[#allocation2 + $0xe1] sm:$0xff]
        %v6071 = vld [vmem:[#allocation2 + $0xf1] sm:$0xff]
        %v6072 = vld [vmem:[#allocation2 + $0xf9] sm:$0xff]
        %v6073 = vld [vmem:[#allocation2 + $0x109] sm:$0xff]
        %v6074 = vld [vmem:[#allocation2 + $0x111] sm:$0xff]
        %v6075 = vld [vmem:[#allocation2 + $0x121] sm:$0xff]
        %v6076 = vld [vmem:[#allocation2 + $0x129] sm:$0xff]
        %v6077 = vld [vmem:[#allocation2 + $0x139] sm:$0xff]
        %v6078 = vld [vmem:[#allocation2 + $0x141] sm:$0xff]
        %v6079 = vld [vmem:[#allocation2 + $0x151] sm:$0xff]
        %v6080 = vld [vmem:[#allocation2 + $0x159] sm:$0xff]
        %v6081 = vld [vmem:[#allocation2 + $0x169] sm:$0xff]
        %v6082 = vld [vmem:[#allocation2 + $0x171] sm:$0xff]
        %6115 = vrot.lane.b32.xlu0 %v6051, 16
        %v6116 = vpop.permute.xlu0 %6115
        %6117 = vrot.lane.b32.xlu0 %v6052, 16
        %v6118 = vpop.permute.xlu0 %6117
        %6119 = vrot.lane.b32.xlu0 %v6053, 16
        %v6120 = vpop.permute.xlu0 %6119
        %6121 = vrot.lane.b32.xlu0 %v6054, 16
        %v6122 = vpop.permute.xlu0 %6121
        %6123 = vrot.lane.b32.xlu0 %v6055, 16
        %v6124 = vpop.permute.xlu0 %6123
        %6125 = vrot.lane.b32.xlu0 %v6056, 16
        %v6126 = vpop.permute.xlu0 %6125
        %6127 = vrot.lane.b32.xlu0 %v6057, 16
        %v6128 = vpop.permute.xlu0 %6127
        %6129 = vrot.lane.b32.xlu0 %v6058, 16
        %v6130 = vpop.permute.xlu0 %6129
        %6131 = vrot.lane.b32.xlu0 %v6059, 16
        %v6132 = vpop.permute.xlu0 %6131
        %6133 = vrot.lane.b32.xlu0 %v6060, 16
        %v6134 = vpop.permute.xlu0 %6133
        %6135 = vrot.lane.b32.xlu0 %v6061, 16
        %v6136 = vpop.permute.xlu0 %6135
        %6137 = vrot.lane.b32.xlu0 %v6062, 16
        %v6138 = vpop.permute.xlu0 %6137
        %6139 = vrot.lane.b32.xlu0 %v6063, 16
        %v6140 = vpop.permute.xlu0 %6139
        %6141 = vrot.lane.b32.xlu0 %v6064, 16
        %v6142 = vpop.permute.xlu0 %6141
        %6143 = vrot.lane.b32.xlu0 %v6065, 16
        %v6144 = vpop.permute.xlu0 %6143
        %6145 = vrot.lane.b32.xlu0 %v6066, 16
        %v6146 = vpop.permute.xlu0 %6145
        %6147 = vrot.lane.b32.xlu0 %v6067, 16
        %v6148 = vpop.permute.xlu0 %6147
        %6149 = vrot.lane.b32.xlu0 %v6068, 16
        %v6150 = vpop.permute.xlu0 %6149
        %6151 = vrot.lane.b32.xlu0 %v6069, 16
        %v6152 = vpop.permute.xlu0 %6151
        %6153 = vrot.lane.b32.xlu0 %v6070, 16
        %v6154 = vpop.permute.xlu0 %6153
        %6155 = vrot.lane.b32.xlu0 %v6071, 16
        %v6156 = vpop.permute.xlu0 %6155
        %6157 = vrot.lane.b32.xlu0 %v6072, 16
        %v6158 = vpop.permute.xlu0 %6157
        %6159 = vrot.lane.b32.xlu0 %v6073, 16
        %v6160 = vpop.permute.xlu0 %6159
        %6161 = vrot.lane.b32.xlu0 %v6074, 16
        %v6162 = vpop.permute.xlu0 %6161
        %6163 = vrot.lane.b32.xlu0 %v6075, 16
        %v6164 = vpop.permute.xlu0 %6163
        %6165 = vrot.lane.b32.xlu0 %v6076, 16
        %v6166 = vpop.permute.xlu0 %6165
        %6167 = vrot.lane.b32.xlu0 %v6077, 16
        %v6168 = vpop.permute.xlu0 %6167
        %6169 = vrot.lane.b32.xlu0 %v6078, 16
        %v6170 = vpop.permute.xlu0 %6169
        %6171 = vrot.lane.b32.xlu0 %v6079, 16
        %v6172 = vpop.permute.xlu0 %6171
        %6173 = vrot.lane.b32.xlu0 %v6080, 16
        %v6174 = vpop.permute.xlu0 %6173
        %6175 = vrot.lane.b32.xlu0 %v6081, 16
        %v6176 = vpop.permute.xlu0 %6175
        %6177 = vrot.lane.b32.xlu0 %v6082, 16
        %v6178 = vpop.permute.xlu0 %6177
        %6211 = vst.msk [vmem:[#allocation3] sm:$0xff] %vm1327, %v6116
        %6212 = vst.msk [vmem:[#allocation3 + $0x10] sm:$0xff] %vm1327, %v6118
        %6213 = vst.msk [vmem:[#allocation3 + $0x20] sm:$0xff] %vm1327, %v6120
        %6214 = vst.msk [vmem:[#allocation3 + $0x30] sm:$0xff] %vm1327, %v6122
        %6215 = vst.msk [vmem:[#allocation3 + $0x40] sm:$0xff] %vm1327, %v6124
        %6216 = vst.msk [vmem:[#allocation3 + $0x50] sm:$0xff] %vm1327, %v6126
        %6217 = vst.msk [vmem:[#allocation3 + $0x60] sm:$0xff] %vm1327, %v6128
        %6218 = vst.msk [vmem:[#allocation3 + $0x70] sm:$0xff] %vm1327, %v6130
        %6219 = vst.msk [vmem:[#allocation3 + $0x80] sm:$0xff] %vm1327, %v6132
        %6220 = vst.msk [vmem:[#allocation3 + $0x90] sm:$0xff] %vm1327, %v6134
        %6221 = vst.msk [vmem:[#allocation3 + $0xa0] sm:$0xff] %vm1327, %v6136
        %6222 = vst.msk [vmem:[#allocation3 + $0xb0] sm:$0xff] %vm1327, %v6138
        %6223 = vst.msk [vmem:[#allocation3 + $0xc0] sm:$0xff] %vm1327, %v6140
        %6224 = vst.msk [vmem:[#allocation3 + $0xd0] sm:$0xff] %vm1327, %v6142
        %6225 = vst.msk [vmem:[#allocation3 + $0xe0] sm:$0xff] %vm1327, %v6144
        %6226 = vst.msk [vmem:[#allocation3 + $0xf0] sm:$0xff] %vm1327, %v6146
        %6227 = vst.msk [vmem:[#allocation3 + $0x100] sm:$0xff] %vm1327, %v6148
        %6228 = vst.msk [vmem:[#allocation3 + $0x110] sm:$0xff] %vm1327, %v6150
        %6229 = vst.msk [vmem:[#allocation3 + $0x120] sm:$0xff] %vm1327, %v6152
        %6230 = vst.msk [vmem:[#allocation3 + $0x130] sm:$0xff] %vm1327, %v6154
        %6231 = vst.msk [vmem:[#allocation3 + $0x140] sm:$0xff] %vm1327, %v6156
        %6232 = vst.msk [vmem:[#allocation3 + $0x150] sm:$0xff] %vm1327, %v6158
        %6233 = vst.msk [vmem:[#allocation3 + $0x160] sm:$0xff] %vm1327, %v6160
        %6234 = vst.msk [vmem:[#allocation3 + $0x170] sm:$0xff] %vm1327, %v6162
        %6235 = vst.msk [vmem:[#allocation3 + $0x180] sm:$0xff] %vm1327, %v6164
        %6236 = vst.msk [vmem:[#allocation3 + $0x190] sm:$0xff] %vm1327, %v6166
        %6237 = vst.msk [vmem:[#allocation3 + $0x1a0] sm:$0xff] %vm1327, %v6168
        %6238 = vst.msk [vmem:[#allocation3 + $0x1b0] sm:$0xff] %vm1327, %v6170
        %6239 = vst.msk [vmem:[#allocation3 + $0x1c0] sm:$0xff] %vm1327, %v6172
        %6240 = vst.msk [vmem:[#allocation3 + $0x1d0] sm:$0xff] %vm1327, %v6174
        %6241 = vst.msk [vmem:[#allocation3 + $0x1e0] sm:$0xff] %vm1327, %v6176
        %6242 = vst.msk [vmem:[#allocation3 + $0x1f0] sm:$0xff] %vm1327, %v6178
        %v6243 = vld [vmem:[#allocation2 + $0x2] sm:$0xff]
        %v6244 = vld [vmem:[#allocation2 + $0xa] sm:$0xff]
        %v6245 = vld [vmem:[#allocation2 + $0x1a] sm:$0xff]
        %v6246 = vld [vmem:[#allocation2 + $0x22] sm:$0xff]
        %v6247 = vld [vmem:[#allocation2 + $0x32] sm:$0xff]
        %v6248 = vld [vmem:[#allocation2 + $0x3a] sm:$0xff]
        %v6249 = vld [vmem:[#allocation2 + $0x4a] sm:$0xff]
        %v6250 = vld [vmem:[#allocation2 + $0x52] sm:$0xff]
        %v6251 = vld [vmem:[#allocation2 + $0x62] sm:$0xff]
        %v6252 = vld [vmem:[#allocation2 + $0x6a] sm:$0xff]
        %v6253 = vld [vmem:[#allocation2 + $0x7a] sm:$0xff]
        %v6254 = vld [vmem:[#allocation2 + $0x82] sm:$0xff]
        %v6255 = vld [vmem:[#allocation2 + $0x92] sm:$0xff]
        %v6256 = vld [vmem:[#allocation2 + $0x9a] sm:$0xff]
        %v6257 = vld [vmem:[#allocation2 + $0xaa] sm:$0xff]
        %v6258 = vld [vmem:[#allocation2 + $0xb2] sm:$0xff]
        %v6259 = vld [vmem:[#allocation2 + $0xc2] sm:$0xff]
        %v6260 = vld [vmem:[#allocation2 + $0xca] sm:$0xff]
        %v6261 = vld [vmem:[#allocation2 + $0xda] sm:$0xff]
        %v6262 = vld [vmem:[#allocation2 + $0xe2] sm:$0xff]
        %v6263 = vld [vmem:[#allocation2 + $0xf2] sm:$0xff]
        %v6264 = vld [vmem:[#allocation2 + $0xfa] sm:$0xff]
        %v6265 = vld [vmem:[#allocation2 + $0x10a] sm:$0xff]
        %v6266 = vld [vmem:[#allocation2 + $0x112] sm:$0xff]
        %v6267 = vld [vmem:[#allocation2 + $0x122] sm:$0xff]
        %v6268 = vld [vmem:[#allocation2 + $0x12a] sm:$0xff]
        %v6269 = vld [vmem:[#allocation2 + $0x13a] sm:$0xff]
        %v6270 = vld [vmem:[#allocation2 + $0x142] sm:$0xff]
        %v6271 = vld [vmem:[#allocation2 + $0x152] sm:$0xff]
        %v6272 = vld [vmem:[#allocation2 + $0x15a] sm:$0xff]
        %v6273 = vld [vmem:[#allocation2 + $0x16a] sm:$0xff]
        %v6274 = vld [vmem:[#allocation2 + $0x172] sm:$0xff]
        %6307 = vrot.lane.b32.xlu0 %v6243, 32
        %v6308 = vpop.permute.xlu0 %6307
        %6309 = vrot.lane.b32.xlu0 %v6244, 32
        %v6310 = vpop.permute.xlu0 %6309
        %6311 = vrot.lane.b32.xlu0 %v6245, 32
        %v6312 = vpop.permute.xlu0 %6311
        %6313 = vrot.lane.b32.xlu0 %v6246, 32
        %v6314 = vpop.permute.xlu0 %6313
        %6315 = vrot.lane.b32.xlu0 %v6247, 32
        %v6316 = vpop.permute.xlu0 %6315
        %6317 = vrot.lane.b32.xlu0 %v6248, 32
        %v6318 = vpop.permute.xlu0 %6317
        %6319 = vrot.lane.b32.xlu0 %v6249, 32
        %v6320 = vpop.permute.xlu0 %6319
        %6321 = vrot.lane.b32.xlu0 %v6250, 32
        %v6322 = vpop.permute.xlu0 %6321
        %6323 = vrot.lane.b32.xlu0 %v6251, 32
        %v6324 = vpop.permute.xlu0 %6323
        %6325 = vrot.lane.b32.xlu0 %v6252, 32
        %v6326 = vpop.permute.xlu0 %6325
        %6327 = vrot.lane.b32.xlu0 %v6253, 32
        %v6328 = vpop.permute.xlu0 %6327
        %6329 = vrot.lane.b32.xlu0 %v6254, 32
        %v6330 = vpop.permute.xlu0 %6329
        %6331 = vrot.lane.b32.xlu0 %v6255, 32
        %v6332 = vpop.permute.xlu0 %6331
        %6333 = vrot.lane.b32.xlu0 %v6256, 32
        %v6334 = vpop.permute.xlu0 %6333
        %6335 = vrot.lane.b32.xlu0 %v6257, 32
        %v6336 = vpop.permute.xlu0 %6335
        %6337 = vrot.lane.b32.xlu0 %v6258, 32
        %v6338 = vpop.permute.xlu0 %6337
        %6339 = vrot.lane.b32.xlu0 %v6259, 32
        %v6340 = vpop.permute.xlu0 %6339
        %6341 = vrot.lane.b32.xlu0 %v6260, 32
        %v6342 = vpop.permute.xlu0 %6341
        %6343 = vrot.lane.b32.xlu0 %v6261, 32
        %v6344 = vpop.permute.xlu0 %6343
        %6345 = vrot.lane.b32.xlu0 %v6262, 32
        %v6346 = vpop.permute.xlu0 %6345
        %6347 = vrot.lane.b32.xlu0 %v6263, 32
        %v6348 = vpop.permute.xlu0 %6347
        %6349 = vrot.lane.b32.xlu0 %v6264, 32
        %v6350 = vpop.permute.xlu0 %6349
        %6351 = vrot.lane.b32.xlu0 %v6265, 32
        %v6352 = vpop.permute.xlu0 %6351
        %6353 = vrot.lane.b32.xlu0 %v6266, 32
        %v6354 = vpop.permute.xlu0 %6353
        %6355 = vrot.lane.b32.xlu0 %v6267, 32
        %v6356 = vpop.permute.xlu0 %6355
        %6357 = vrot.lane.b32.xlu0 %v6268, 32
        %v6358 = vpop.permute.xlu0 %6357
        %6359 = vrot.lane.b32.xlu0 %v6269, 32
        %v6360 = vpop.permute.xlu0 %6359
        %6361 = vrot.lane.b32.xlu0 %v6270, 32
        %v6362 = vpop.permute.xlu0 %6361
        %6363 = vrot.lane.b32.xlu0 %v6271, 32
        %v6364 = vpop.permute.xlu0 %6363
        %6365 = vrot.lane.b32.xlu0 %v6272, 32
        %v6366 = vpop.permute.xlu0 %6365
        %6367 = vrot.lane.b32.xlu0 %v6273, 32
        %v6368 = vpop.permute.xlu0 %6367
        %6369 = vrot.lane.b32.xlu0 %v6274, 32
        %v6370 = vpop.permute.xlu0 %6369
        %6403 = vst.msk [vmem:[#allocation3] sm:$0xff] %vm1520, %v6308
        %6404 = vst.msk [vmem:[#allocation3 + $0x10] sm:$0xff] %vm1520, %v6310
        %6405 = vst.msk [vmem:[#allocation3 + $0x20] sm:$0xff] %vm1520, %v6312
        %6406 = vst.msk [vmem:[#allocation3 + $0x30] sm:$0xff] %vm1520, %v6314
        %6407 = vst.msk [vmem:[#allocation3 + $0x40] sm:$0xff] %vm1520, %v6316
        %6408 = vst.msk [vmem:[#allocation3 + $0x50] sm:$0xff] %vm1520, %v6318
        %6409 = vst.msk [vmem:[#allocation3 + $0x60] sm:$0xff] %vm1520, %v6320
        %6410 = vst.msk [vmem:[#allocation3 + $0x70] sm:$0xff] %vm1520, %v6322
        %6411 = vst.msk [vmem:[#allocation3 + $0x80] sm:$0xff] %vm1520, %v6324
        %6412 = vst.msk [vmem:[#allocation3 + $0x90] sm:$0xff] %vm1520, %v6326
        %6413 = vst.msk [vmem:[#allocation3 + $0xa0] sm:$0xff] %vm1520, %v6328
        %6414 = vst.msk [vmem:[#allocation3 + $0xb0] sm:$0xff] %vm1520, %v6330
        %6415 = vst.msk [vmem:[#allocation3 + $0xc0] sm:$0xff] %vm1520, %v6332
        %6416 = vst.msk [vmem:[#allocation3 + $0xd0] sm:$0xff] %vm1520, %v6334
        %6417 = vst.msk [vmem:[#allocation3 + $0xe0] sm:$0xff] %vm1520, %v6336
        %6418 = vst.msk [vmem:[#allocation3 + $0xf0] sm:$0xff] %vm1520, %v6338
        %6419 = vst.msk [vmem:[#allocation3 + $0x100] sm:$0xff] %vm1520, %v6340
        %6420 = vst.msk [vmem:[#allocation3 + $0x110] sm:$0xff] %vm1520, %v6342
        %6421 = vst.msk [vmem:[#allocation3 + $0x120] sm:$0xff] %vm1520, %v6344
        %6422 = vst.msk [vmem:[#allocation3 + $0x130] sm:$0xff] %vm1520, %v6346
        %6423 = vst.msk [vmem:[#allocation3 + $0x140] sm:$0xff] %vm1520, %v6348
        %6424 = vst.msk [vmem:[#allocation3 + $0x150] sm:$0xff] %vm1520, %v6350
        %6425 = vst.msk [vmem:[#allocation3 + $0x160] sm:$0xff] %vm1520, %v6352
        %6426 = vst.msk [vmem:[#allocation3 + $0x170] sm:$0xff] %vm1520, %v6354
        %6427 = vst.msk [vmem:[#allocation3 + $0x180] sm:$0xff] %vm1520, %v6356
        %6428 = vst.msk [vmem:[#allocation3 + $0x190] sm:$0xff] %vm1520, %v6358
        %6429 = vst.msk [vmem:[#allocation3 + $0x1a0] sm:$0xff] %vm1520, %v6360
        %6430 = vst.msk [vmem:[#allocation3 + $0x1b0] sm:$0xff] %vm1520, %v6362
        %6431 = vst.msk [vmem:[#allocation3 + $0x1c0] sm:$0xff] %vm1520, %v6364
        %6432 = vst.msk [vmem:[#allocation3 + $0x1d0] sm:$0xff] %vm1520, %v6366
        %6433 = vst.msk [vmem:[#allocation3 + $0x1e0] sm:$0xff] %vm1520, %v6368
        %6434 = vst.msk [vmem:[#allocation3 + $0x1f0] sm:$0xff] %vm1520, %v6370
        %v6435 = vld [vmem:[%s1070] sm:$0xff]
        %v6436 = vld [vmem:[%s1070 + $0x8] sm:$0xff]
        %v6437 = vld [vmem:[%s1070 + $0x18] sm:$0xff]
        %v6438 = vld [vmem:[%s1070 + $0x20] sm:$0xff]
        %v6439 = vld [vmem:[%s1070 + $0x30] sm:$0xff]
        %v6440 = vld [vmem:[%s1070 + $0x38] sm:$0xff]
        %v6441 = vld [vmem:[%s1070 + $0x48] sm:$0xff]
        %v6442 = vld [vmem:[%s1070 + $0x50] sm:$0xff]
        %v6443 = vld [vmem:[%s1070 + $0x60] sm:$0xff]
        %v6444 = vld [vmem:[%s1070 + $0x68] sm:$0xff]
        %v6445 = vld [vmem:[%s1070 + $0x78] sm:$0xff]
        %v6446 = vld [vmem:[%s1070 + $0x80] sm:$0xff]
        %v6447 = vld [vmem:[%s1070 + $0x90] sm:$0xff]
        %v6448 = vld [vmem:[%s1070 + $0x98] sm:$0xff]
        %v6449 = vld [vmem:[%s1070 + $0xa8] sm:$0xff]
        %v6450 = vld [vmem:[%s1070 + $0xb0] sm:$0xff]
        %v6451 = vld [vmem:[%s1070 + $0xc0] sm:$0xff]
        %v6452 = vld [vmem:[%s1070 + $0xc8] sm:$0xff]
        %v6453 = vld [vmem:[%s1070 + $0xd8] sm:$0xff]
        %v6454 = vld [vmem:[%s1070 + $0xe0] sm:$0xff]
        %v6455 = vld [vmem:[%s1070 + $0xf0] sm:$0xff]
        %v6456 = vld [vmem:[%s1070 + $0xf8] sm:$0xff]
        %v6457 = vld [vmem:[%s1070 + $0x108] sm:$0xff]
        %v6458 = vld [vmem:[%s1070 + $0x110] sm:$0xff]
        %v6459 = vld [vmem:[%s1070 + $0x120] sm:$0xff]
        %v6460 = vld [vmem:[%s1070 + $0x128] sm:$0xff]
        %v6461 = vld [vmem:[%s1070 + $0x138] sm:$0xff]
        %v6462 = vld [vmem:[%s1070 + $0x140] sm:$0xff]
        %v6463 = vld [vmem:[%s1070 + $0x150] sm:$0xff]
        %v6464 = vld [vmem:[%s1070 + $0x158] sm:$0xff]
        %v6465 = vld [vmem:[%s1070 + $0x168] sm:$0xff]
        %v6466 = vld [vmem:[%s1070 + $0x170] sm:$0xff]
        %6499 = vrot.lane.b32.xlu0 %v6435, 48
        %v6500 = vpop.permute.xlu0 %6499
        %6501 = vrot.lane.b32.xlu0 %v6436, 48
        %v6502 = vpop.permute.xlu0 %6501
        %6503 = vrot.lane.b32.xlu0 %v6437, 48
        %v6504 = vpop.permute.xlu0 %6503
        %6505 = vrot.lane.b32.xlu0 %v6438, 48
        %v6506 = vpop.permute.xlu0 %6505
        %6507 = vrot.lane.b32.xlu0 %v6439, 48
        %v6508 = vpop.permute.xlu0 %6507
        %6509 = vrot.lane.b32.xlu0 %v6440, 48
        %v6510 = vpop.permute.xlu0 %6509
        %6511 = vrot.lane.b32.xlu0 %v6441, 48
        %v6512 = vpop.permute.xlu0 %6511
        %6513 = vrot.lane.b32.xlu0 %v6442, 48
        %v6514 = vpop.permute.xlu0 %6513
        %6515 = vrot.lane.b32.xlu0 %v6443, 48
        %v6516 = vpop.permute.xlu0 %6515
        %6517 = vrot.lane.b32.xlu0 %v6444, 48
        %v6518 = vpop.permute.xlu0 %6517
        %6519 = vrot.lane.b32.xlu0 %v6445, 48
        %v6520 = vpop.permute.xlu0 %6519
        %6521 = vrot.lane.b32.xlu0 %v6446, 48
        %v6522 = vpop.permute.xlu0 %6521
        %6523 = vrot.lane.b32.xlu0 %v6447, 48
        %v6524 = vpop.permute.xlu0 %6523
        %6525 = vrot.lane.b32.xlu0 %v6448, 48
        %v6526 = vpop.permute.xlu0 %6525
        %6527 = vrot.lane.b32.xlu0 %v6449, 48
        %v6528 = vpop.permute.xlu0 %6527
        %6529 = vrot.lane.b32.xlu0 %v6450, 48
        %v6530 = vpop.permute.xlu0 %6529
        %6531 = vrot.lane.b32.xlu0 %v6451, 48
        %v6532 = vpop.permute.xlu0 %6531
        %6533 = vrot.lane.b32.xlu0 %v6452, 48
        %v6534 = vpop.permute.xlu0 %6533
        %6535 = vrot.lane.b32.xlu0 %v6453, 48
        %v6536 = vpop.permute.xlu0 %6535
        %6537 = vrot.lane.b32.xlu0 %v6454, 48
        %v6538 = vpop.permute.xlu0 %6537
        %6539 = vrot.lane.b32.xlu0 %v6455, 48
        %v6540 = vpop.permute.xlu0 %6539
        %6541 = vrot.lane.b32.xlu0 %v6456, 48
        %v6542 = vpop.permute.xlu0 %6541
        %6543 = vrot.lane.b32.xlu0 %v6457, 48
        %v6544 = vpop.permute.xlu0 %6543
        %6545 = vrot.lane.b32.xlu0 %v6458, 48
        %v6546 = vpop.permute.xlu0 %6545
        %6547 = vrot.lane.b32.xlu0 %v6459, 48
        %v6548 = vpop.permute.xlu0 %6547
        %6549 = vrot.lane.b32.xlu0 %v6460, 48
        %v6550 = vpop.permute.xlu0 %6549
        %6551 = vrot.lane.b32.xlu0 %v6461, 48
        %v6552 = vpop.permute.xlu0 %6551
        %6553 = vrot.lane.b32.xlu0 %v6462, 48
        %v6554 = vpop.permute.xlu0 %6553
        %6555 = vrot.lane.b32.xlu0 %v6463, 48
        %v6556 = vpop.permute.xlu0 %6555
        %6557 = vrot.lane.b32.xlu0 %v6464, 48
        %v6558 = vpop.permute.xlu0 %6557
        %6559 = vrot.lane.b32.xlu0 %v6465, 48
        %v6560 = vpop.permute.xlu0 %6559
        %6561 = vrot.lane.b32.xlu0 %v6466, 48
        %v6562 = vpop.permute.xlu0 %6561
        %6595 = vst.msk [vmem:[#allocation3] sm:$0xff] %vm1713, %v6500
        %6596 = vst.msk [vmem:[#allocation3 + $0x10] sm:$0xff] %vm1713, %v6502
        %6597 = vst.msk [vmem:[#allocation3 + $0x20] sm:$0xff] %vm1713, %v6504
        %6598 = vst.msk [vmem:[#allocation3 + $0x30] sm:$0xff] %vm1713, %v6506
        %6599 = vst.msk [vmem:[#allocation3 + $0x40] sm:$0xff] %vm1713, %v6508
        %6600 = vst.msk [vmem:[#allocation3 + $0x50] sm:$0xff] %vm1713, %v6510
        %6601 = vst.msk [vmem:[#allocation3 + $0x60] sm:$0xff] %vm1713, %v6512
        %6602 = vst.msk [vmem:[#allocation3 + $0x70] sm:$0xff] %vm1713, %v6514
        %6603 = vst.msk [vmem:[#allocation3 + $0x80] sm:$0xff] %vm1713, %v6516
        %6604 = vst.msk [vmem:[#allocation3 + $0x90] sm:$0xff] %vm1713, %v6518
        %6605 = vst.msk [vmem:[#allocation3 + $0xa0] sm:$0xff] %vm1713, %v6520
        %6606 = vst.msk [vmem:[#allocation3 + $0xb0] sm:$0xff] %vm1713, %v6522
        %6607 = vst.msk [vmem:[#allocation3 + $0xc0] sm:$0xff] %vm1713, %v6524
        %6608 = vst.msk [vmem:[#allocation3 + $0xd0] sm:$0xff] %vm1713, %v6526
        %6609 = vst.msk [vmem:[#allocation3 + $0xe0] sm:$0xff] %vm1713, %v6528
        %6610 = vst.msk [vmem:[#allocation3 + $0xf0] sm:$0xff] %vm1713, %v6530
        %6611 = vst.msk [vmem:[#allocation3 + $0x100] sm:$0xff] %vm1713, %v6532
        %6612 = vst.msk [vmem:[#allocation3 + $0x110] sm:$0xff] %vm1713, %v6534
        %6613 = vst.msk [vmem:[#allocation3 + $0x120] sm:$0xff] %vm1713, %v6536
        %6614 = vst.msk [vmem:[#allocation3 + $0x130] sm:$0xff] %vm1713, %v6538
        %6615 = vst.msk [vmem:[#allocation3 + $0x140] sm:$0xff] %vm1713, %v6540
        %6616 = vst.msk [vmem:[#allocation3 + $0x150] sm:$0xff] %vm1713, %v6542
        %6617 = vst.msk [vmem:[#allocation3 + $0x160] sm:$0xff] %vm1713, %v6544
        %6618 = vst.msk [vmem:[#allocation3 + $0x170] sm:$0xff] %vm1713, %v6546
        %6619 = vst.msk [vmem:[#allocation3 + $0x180] sm:$0xff] %vm1713, %v6548
        %6620 = vst.msk [vmem:[#allocation3 + $0x190] sm:$0xff] %vm1713, %v6550
        %6621 = vst.msk [vmem:[#allocation3 + $0x1a0] sm:$0xff] %vm1713, %v6552
        %6622 = vst.msk [vmem:[#allocation3 + $0x1b0] sm:$0xff] %vm1713, %v6554
        %6623 = vst.msk [vmem:[#allocation3 + $0x1c0] sm:$0xff] %vm1713, %v6556
        %6624 = vst.msk [vmem:[#allocation3 + $0x1d0] sm:$0xff] %vm1713, %v6558
        %6625 = vst.msk [vmem:[#allocation3 + $0x1e0] sm:$0xff] %vm1713, %v6560
        %6626 = vst.msk [vmem:[#allocation3 + $0x1f0] sm:$0xff] %vm1713, %v6562
        %v6627 = vld [vmem:[%s1070 + $0x1] sm:$0xff]
        %v6628 = vld [vmem:[%s1070 + $0x9] sm:$0xff]
        %v6629 = vld [vmem:[%s1070 + $0x19] sm:$0xff]
        %v6630 = vld [vmem:[%s1070 + $0x21] sm:$0xff]
        %v6631 = vld [vmem:[%s1070 + $0x31] sm:$0xff]
        %v6632 = vld [vmem:[%s1070 + $0x39] sm:$0xff]
        %v6633 = vld [vmem:[%s1070 + $0x49] sm:$0xff]
        %v6634 = vld [vmem:[%s1070 + $0x51] sm:$0xff]
        %v6635 = vld [vmem:[%s1070 + $0x61] sm:$0xff]
        %v6636 = vld [vmem:[%s1070 + $0x69] sm:$0xff]
        %v6637 = vld [vmem:[%s1070 + $0x79] sm:$0xff]
        %v6638 = vld [vmem:[%s1070 + $0x81] sm:$0xff]
        %v6639 = vld [vmem:[%s1070 + $0x91] sm:$0xff]
        %v6640 = vld [vmem:[%s1070 + $0x99] sm:$0xff]
        %v6641 = vld [vmem:[%s1070 + $0xa9] sm:$0xff]
        %v6642 = vld [vmem:[%s1070 + $0xb1] sm:$0xff]
        %v6643 = vld [vmem:[%s1070 + $0xc1] sm:$0xff]
        %v6644 = vld [vmem:[%s1070 + $0xc9] sm:$0xff]
        %v6645 = vld [vmem:[%s1070 + $0xd9] sm:$0xff]
        %v6646 = vld [vmem:[%s1070 + $0xe1] sm:$0xff]
        %v6647 = vld [vmem:[%s1070 + $0xf1] sm:$0xff]
        %v6648 = vld [vmem:[%s1070 + $0xf9] sm:$0xff]
        %v6649 = vld [vmem:[%s1070 + $0x109] sm:$0xff]
        %v6650 = vld [vmem:[%s1070 + $0x111] sm:$0xff]
        %v6651 = vld [vmem:[%s1070 + $0x121] sm:$0xff]
        %v6652 = vld [vmem:[%s1070 + $0x129] sm:$0xff]
        %v6653 = vld [vmem:[%s1070 + $0x139] sm:$0xff]
        %v6654 = vld [vmem:[%s1070 + $0x141] sm:$0xff]
        %v6655 = vld [vmem:[%s1070 + $0x151] sm:$0xff]
        %v6656 = vld [vmem:[%s1070 + $0x159] sm:$0xff]
        %v6657 = vld [vmem:[%s1070 + $0x169] sm:$0xff]
        %v6658 = vld [vmem:[%s1070 + $0x171] sm:$0xff]
        %6691 = vrot.lane.b32.xlu0 %v6627, 64
        %v6692 = vpop.permute.xlu0 %6691
        %6693 = vrot.lane.b32.xlu0 %v6628, 64
        %v6694 = vpop.permute.xlu0 %6693
        %6695 = vrot.lane.b32.xlu0 %v6629, 64
        %v6696 = vpop.permute.xlu0 %6695
        %6697 = vrot.lane.b32.xlu0 %v6630, 64
        %v6698 = vpop.permute.xlu0 %6697
        %6699 = vrot.lane.b32.xlu0 %v6631, 64
        %v6700 = vpop.permute.xlu0 %6699
        %6701 = vrot.lane.b32.xlu0 %v6632, 64
        %v6702 = vpop.permute.xlu0 %6701
        %6703 = vrot.lane.b32.xlu0 %v6633, 64
        %v6704 = vpop.permute.xlu0 %6703
        %6705 = vrot.lane.b32.xlu0 %v6634, 64
        %v6706 = vpop.permute.xlu0 %6705
        %6707 = vrot.lane.b32.xlu0 %v6635, 64
        %v6708 = vpop.permute.xlu0 %6707
        %6709 = vrot.lane.b32.xlu0 %v6636, 64
        %v6710 = vpop.permute.xlu0 %6709
        %6711 = vrot.lane.b32.xlu0 %v6637, 64
        %v6712 = vpop.permute.xlu0 %6711
        %6713 = vrot.lane.b32.xlu0 %v6638, 64
        %v6714 = vpop.permute.xlu0 %6713
        %6715 = vrot.lane.b32.xlu0 %v6639, 64
        %v6716 = vpop.permute.xlu0 %6715
        %6717 = vrot.lane.b32.xlu0 %v6640, 64
        %v6718 = vpop.permute.xlu0 %6717
        %6719 = vrot.lane.b32.xlu0 %v6641, 64
        %v6720 = vpop.permute.xlu0 %6719
        %6721 = vrot.lane.b32.xlu0 %v6642, 64
        %v6722 = vpop.permute.xlu0 %6721
        %6723 = vrot.lane.b32.xlu0 %v6643, 64
        %v6724 = vpop.permute.xlu0 %6723
        %6725 = vrot.lane.b32.xlu0 %v6644, 64
        %v6726 = vpop.permute.xlu0 %6725
        %6727 = vrot.lane.b32.xlu0 %v6645, 64
        %v6728 = vpop.permute.xlu0 %6727
        %6729 = vrot.lane.b32.xlu0 %v6646, 64
        %v6730 = vpop.permute.xlu0 %6729
        %6731 = vrot.lane.b32.xlu0 %v6647, 64
        %v6732 = vpop.permute.xlu0 %6731
        %6733 = vrot.lane.b32.xlu0 %v6648, 64
        %v6734 = vpop.permute.xlu0 %6733
        %6735 = vrot.lane.b32.xlu0 %v6649, 64
        %v6736 = vpop.permute.xlu0 %6735
        %6737 = vrot.lane.b32.xlu0 %v6650, 64
        %v6738 = vpop.permute.xlu0 %6737
        %6739 = vrot.lane.b32.xlu0 %v6651, 64
        %v6740 = vpop.permute.xlu0 %6739
        %6741 = vrot.lane.b32.xlu0 %v6652, 64
        %v6742 = vpop.permute.xlu0 %6741
        %6743 = vrot.lane.b32.xlu0 %v6653, 64
        %v6744 = vpop.permute.xlu0 %6743
        %6745 = vrot.lane.b32.xlu0 %v6654, 64
        %v6746 = vpop.permute.xlu0 %6745
        %6747 = vrot.lane.b32.xlu0 %v6655, 64
        %v6748 = vpop.permute.xlu0 %6747
        %6749 = vrot.lane.b32.xlu0 %v6656, 64
        %v6750 = vpop.permute.xlu0 %6749
        %6751 = vrot.lane.b32.xlu0 %v6657, 64
        %v6752 = vpop.permute.xlu0 %6751
        %6753 = vrot.lane.b32.xlu0 %v6658, 64
        %v6754 = vpop.permute.xlu0 %6753
        %6787 = vst.msk [vmem:[#allocation3] sm:$0xff] %vm1906, %v6692
        %6788 = vst.msk [vmem:[#allocation3 + $0x10] sm:$0xff] %vm1906, %v6694
        %6789 = vst.msk [vmem:[#allocation3 + $0x20] sm:$0xff] %vm1906, %v6696
        %6790 = vst.msk [vmem:[#allocation3 + $0x30] sm:$0xff] %vm1906, %v6698
        %6791 = vst.msk [vmem:[#allocation3 + $0x40] sm:$0xff] %vm1906, %v6700
        %6792 = vst.msk [vmem:[#allocation3 + $0x50] sm:$0xff] %vm1906, %v6702
        %6793 = vst.msk [vmem:[#allocation3 + $0x60] sm:$0xff] %vm1906, %v6704
        %6794 = vst.msk [vmem:[#allocation3 + $0x70] sm:$0xff] %vm1906, %v6706
        %6795 = vst.msk [vmem:[#allocation3 + $0x80] sm:$0xff] %vm1906, %v6708
        %6796 = vst.msk [vmem:[#allocation3 + $0x90] sm:$0xff] %vm1906, %v6710
        %6797 = vst.msk [vmem:[#allocation3 + $0xa0] sm:$0xff] %vm1906, %v6712
        %6798 = vst.msk [vmem:[#allocation3 + $0xb0] sm:$0xff] %vm1906, %v6714
        %6799 = vst.msk [vmem:[#allocation3 + $0xc0] sm:$0xff] %vm1906, %v6716
        %6800 = vst.msk [vmem:[#allocation3 + $0xd0] sm:$0xff] %vm1906, %v6718
        %6801 = vst.msk [vmem:[#allocation3 + $0xe0] sm:$0xff] %vm1906, %v6720
        %6802 = vst.msk [vmem:[#allocation3 + $0xf0] sm:$0xff] %vm1906, %v6722
        %6803 = vst.msk [vmem:[#allocation3 + $0x100] sm:$0xff] %vm1906, %v6724
        %6804 = vst.msk [vmem:[#allocation3 + $0x110] sm:$0xff] %vm1906, %v6726
        %6805 = vst.msk [vmem:[#allocation3 + $0x120] sm:$0xff] %vm1906, %v6728
        %6806 = vst.msk [vmem:[#allocation3 + $0x130] sm:$0xff] %vm1906, %v6730
        %6807 = vst.msk [vmem:[#allocation3 + $0x140] sm:$0xff] %vm1906, %v6732
        %6808 = vst.msk [vmem:[#allocation3 + $0x150] sm:$0xff] %vm1906, %v6734
        %6809 = vst.msk [vmem:[#allocation3 + $0x160] sm:$0xff] %vm1906, %v6736
        %6810 = vst.msk [vmem:[#allocation3 + $0x170] sm:$0xff] %vm1906, %v6738
        %6811 = vst.msk [vmem:[#allocation3 + $0x180] sm:$0xff] %vm1906, %v6740
        %6812 = vst.msk [vmem:[#allocation3 + $0x190] sm:$0xff] %vm1906, %v6742
        %6813 = vst.msk [vmem:[#allocation3 + $0x1a0] sm:$0xff] %vm1906, %v6744
        %6814 = vst.msk [vmem:[#allocation3 + $0x1b0] sm:$0xff] %vm1906, %v6746
        %6815 = vst.msk [vmem:[#allocation3 + $0x1c0] sm:$0xff] %vm1906, %v6748
        %6816 = vst.msk [vmem:[#allocation3 + $0x1d0] sm:$0xff] %vm1906, %v6750
        %6817 = vst.msk [vmem:[#allocation3 + $0x1e0] sm:$0xff] %vm1906, %v6752
        %6818 = vst.msk [vmem:[#allocation3 + $0x1f0] sm:$0xff] %vm1906, %v6754
        %v6819 = vld [vmem:[%s1070 + $0x2] sm:$0xff]
        %v6820 = vld [vmem:[%s1070 + $0xa] sm:$0xff]
        %v6821 = vld [vmem:[%s1070 + $0x1a] sm:$0xff]
        %v6822 = vld [vmem:[%s1070 + $0x22] sm:$0xff]
        %v6823 = vld [vmem:[%s1070 + $0x32] sm:$0xff]
        %v6824 = vld [vmem:[%s1070 + $0x3a] sm:$0xff]
        %v6825 = vld [vmem:[%s1070 + $0x4a] sm:$0xff]
        %v6826 = vld [vmem:[%s1070 + $0x52] sm:$0xff]
        %v6827 = vld [vmem:[%s1070 + $0x62] sm:$0xff]
        %v6828 = vld [vmem:[%s1070 + $0x6a] sm:$0xff]
        %v6829 = vld [vmem:[%s1070 + $0x7a] sm:$0xff]
        %v6830 = vld [vmem:[%s1070 + $0x82] sm:$0xff]
        %v6831 = vld [vmem:[%s1070 + $0x92] sm:$0xff]
        %v6832 = vld [vmem:[%s1070 + $0x9a] sm:$0xff]
        %v6833 = vld [vmem:[%s1070 + $0xaa] sm:$0xff]
        %v6834 = vld [vmem:[%s1070 + $0xb2] sm:$0xff]
        %v6835 = vld [vmem:[%s1070 + $0xc2] sm:$0xff]
        %v6836 = vld [vmem:[%s1070 + $0xca] sm:$0xff]
        %v6837 = vld [vmem:[%s1070 + $0xda] sm:$0xff]
        %v6838 = vld [vmem:[%s1070 + $0xe2] sm:$0xff]
        %v6839 = vld [vmem:[%s1070 + $0xf2] sm:$0xff]
        %v6840 = vld [vmem:[%s1070 + $0xfa] sm:$0xff]
        %v6841 = vld [vmem:[%s1070 + $0x10a] sm:$0xff]
        %v6842 = vld [vmem:[%s1070 + $0x112] sm:$0xff]
        %v6843 = vld [vmem:[%s1070 + $0x122] sm:$0xff]
        %v6844 = vld [vmem:[%s1070 + $0x12a] sm:$0xff]
        %v6845 = vld [vmem:[%s1070 + $0x13a] sm:$0xff]
        %v6846 = vld [vmem:[%s1070 + $0x142] sm:$0xff]
        %v6847 = vld [vmem:[%s1070 + $0x152] sm:$0xff]
        %v6848 = vld [vmem:[%s1070 + $0x15a] sm:$0xff]
        %v6849 = vld [vmem:[%s1070 + $0x16a] sm:$0xff]
        %v6850 = vld [vmem:[%s1070 + $0x172] sm:$0xff]
        %6883 = vrot.lane.b32.xlu0 %v6819, 80
        %v6884 = vpop.permute.xlu0 %6883
        %6885 = vrot.lane.b32.xlu0 %v6820, 80
        %v6886 = vpop.permute.xlu0 %6885
        %6887 = vrot.lane.b32.xlu0 %v6821, 80
        %v6888 = vpop.permute.xlu0 %6887
        %6889 = vrot.lane.b32.xlu0 %v6822, 80
        %v6890 = vpop.permute.xlu0 %6889
        %6891 = vrot.lane.b32.xlu0 %v6823, 80
        %v6892 = vpop.permute.xlu0 %6891
        %6893 = vrot.lane.b32.xlu0 %v6824, 80
        %v6894 = vpop.permute.xlu0 %6893
        %6895 = vrot.lane.b32.xlu0 %v6825, 80
        %v6896 = vpop.permute.xlu0 %6895
        %6897 = vrot.lane.b32.xlu0 %v6826, 80
        %v6898 = vpop.permute.xlu0 %6897
        %6899 = vrot.lane.b32.xlu0 %v6827, 80
        %v6900 = vpop.permute.xlu0 %6899
        %6901 = vrot.lane.b32.xlu0 %v6828, 80
        %v6902 = vpop.permute.xlu0 %6901
        %6903 = vrot.lane.b32.xlu0 %v6829, 80
        %v6904 = vpop.permute.xlu0 %6903
        %6905 = vrot.lane.b32.xlu0 %v6830, 80
        %v6906 = vpop.permute.xlu0 %6905
        %6907 = vrot.lane.b32.xlu0 %v6831, 80
        %v6908 = vpop.permute.xlu0 %6907
        %6909 = vrot.lane.b32.xlu0 %v6832, 80
        %v6910 = vpop.permute.xlu0 %6909
        %6911 = vrot.lane.b32.xlu0 %v6833, 80
        %v6912 = vpop.permute.xlu0 %6911
        %6913 = vrot.lane.b32.xlu0 %v6834, 80
        %v6914 = vpop.permute.xlu0 %6913
        %6915 = vrot.lane.b32.xlu0 %v6835, 80
        %v6916 = vpop.permute.xlu0 %6915
        %6917 = vrot.lane.b32.xlu0 %v6836, 80
        %v6918 = vpop.permute.xlu0 %6917
        %6919 = vrot.lane.b32.xlu0 %v6837, 80
        %v6920 = vpop.permute.xlu0 %6919
        %6921 = vrot.lane.b32.xlu0 %v6838, 80
        %v6922 = vpop.permute.xlu0 %6921
        %6923 = vrot.lane.b32.xlu0 %v6839, 80
        %v6924 = vpop.permute.xlu0 %6923
        %6925 = vrot.lane.b32.xlu0 %v6840, 80
        %v6926 = vpop.permute.xlu0 %6925
        %6927 = vrot.lane.b32.xlu0 %v6841, 80
        %v6928 = vpop.permute.xlu0 %6927
        %6929 = vrot.lane.b32.xlu0 %v6842, 80
        %v6930 = vpop.permute.xlu0 %6929
        %6931 = vrot.lane.b32.xlu0 %v6843, 80
        %v6932 = vpop.permute.xlu0 %6931
        %6933 = vrot.lane.b32.xlu0 %v6844, 80
        %v6934 = vpop.permute.xlu0 %6933
        %6935 = vrot.lane.b32.xlu0 %v6845, 80
        %v6936 = vpop.permute.xlu0 %6935
        %6937 = vrot.lane.b32.xlu0 %v6846, 80
        %v6938 = vpop.permute.xlu0 %6937
        %6939 = vrot.lane.b32.xlu0 %v6847, 80
        %v6940 = vpop.permute.xlu0 %6939
        %6941 = vrot.lane.b32.xlu0 %v6848, 80
        %v6942 = vpop.permute.xlu0 %6941
        %6943 = vrot.lane.b32.xlu0 %v6849, 80
        %v6944 = vpop.permute.xlu0 %6943
        %6945 = vrot.lane.b32.xlu0 %v6850, 80
        %v6946 = vpop.permute.xlu0 %6945
        %6979 = vst.msk [vmem:[#allocation3] sm:$0xff] %vm2099, %v6884
        %6980 = vst.msk [vmem:[#allocation3 + $0x10] sm:$0xff] %vm2099, %v6886
        %6981 = vst.msk [vmem:[#allocation3 + $0x20] sm:$0xff] %vm2099, %v6888
        %6982 = vst.msk [vmem:[#allocation3 + $0x30] sm:$0xff] %vm2099, %v6890
        %6983 = vst.msk [vmem:[#allocation3 + $0x40] sm:$0xff] %vm2099, %v6892
        %6984 = vst.msk [vmem:[#allocation3 + $0x50] sm:$0xff] %vm2099, %v6894
        %6985 = vst.msk [vmem:[#allocation3 + $0x60] sm:$0xff] %vm2099, %v6896
        %6986 = vst.msk [vmem:[#allocation3 + $0x70] sm:$0xff] %vm2099, %v6898
        %6987 = vst.msk [vmem:[#allocation3 + $0x80] sm:$0xff] %vm2099, %v6900
        %6988 = vst.msk [vmem:[#allocation3 + $0x90] sm:$0xff] %vm2099, %v6902
        %6989 = vst.msk [vmem:[#allocation3 + $0xa0] sm:$0xff] %vm2099, %v6904
        %6990 = vst.msk [vmem:[#allocation3 + $0xb0] sm:$0xff] %vm2099, %v6906
        %6991 = vst.msk [vmem:[#allocation3 + $0xc0] sm:$0xff] %vm2099, %v6908
        %6992 = vst.msk [vmem:[#allocation3 + $0xd0] sm:$0xff] %vm2099, %v6910
        %6993 = vst.msk [vmem:[#allocation3 + $0xe0] sm:$0xff] %vm2099, %v6912
        %6994 = vst.msk [vmem:[#allocation3 + $0xf0] sm:$0xff] %vm2099, %v6914
        %6995 = vst.msk [vmem:[#allocation3 + $0x100] sm:$0xff] %vm2099, %v6916
        %6996 = vst.msk [vmem:[#allocation3 + $0x110] sm:$0xff] %vm2099, %v6918
        %6997 = vst.msk [vmem:[#allocation3 + $0x120] sm:$0xff] %vm2099, %v6920
        %6998 = vst.msk [vmem:[#allocation3 + $0x130] sm:$0xff] %vm2099, %v6922
        %6999 = vst.msk [vmem:[#allocation3 + $0x140] sm:$0xff] %vm2099, %v6924
        %7000 = vst.msk [vmem:[#allocation3 + $0x150] sm:$0xff] %vm2099, %v6926
        %7001 = vst.msk [vmem:[#allocation3 + $0x160] sm:$0xff] %vm2099, %v6928
        %7002 = vst.msk [vmem:[#allocation3 + $0x170] sm:$0xff] %vm2099, %v6930
        %7003 = vst.msk [vmem:[#allocation3 + $0x180] sm:$0xff] %vm2099, %v6932
        %7004 = vst.msk [vmem:[#allocation3 + $0x190] sm:$0xff] %vm2099, %v6934
        %7005 = vst.msk [vmem:[#allocation3 + $0x1a0] sm:$0xff] %vm2099, %v6936
        %7006 = vst.msk [vmem:[#allocation3 + $0x1b0] sm:$0xff] %vm2099, %v6938
        %7007 = vst.msk [vmem:[#allocation3 + $0x1c0] sm:$0xff] %vm2099, %v6940
        %7008 = vst.msk [vmem:[#allocation3 + $0x1d0] sm:$0xff] %vm2099, %v6942
        %7009 = vst.msk [vmem:[#allocation3 + $0x1e0] sm:$0xff] %vm2099, %v6944
        %7010 = vst.msk [vmem:[#allocation3 + $0x1f0] sm:$0xff] %vm2099, %v6946
        %v7011 = vld [vmem:[%s2132] sm:$0xff]
        %v7012 = vld [vmem:[%s2132 + $0x8] sm:$0xff]
        %v7013 = vld [vmem:[%s2132 + $0x18] sm:$0xff]
        %v7014 = vld [vmem:[%s2132 + $0x20] sm:$0xff]
        %v7015 = vld [vmem:[%s2132 + $0x30] sm:$0xff]
        %v7016 = vld [vmem:[%s2132 + $0x38] sm:$0xff]
        %v7017 = vld [vmem:[%s2132 + $0x48] sm:$0xff]
        %v7018 = vld [vmem:[%s2132 + $0x50] sm:$0xff]
        %v7019 = vld [vmem:[%s2132 + $0x60] sm:$0xff]
        %v7020 = vld [vmem:[%s2132 + $0x68] sm:$0xff]
        %v7021 = vld [vmem:[%s2132 + $0x78] sm:$0xff]
        %v7022 = vld [vmem:[%s2132 + $0x80] sm:$0xff]
        %v7023 = vld [vmem:[%s2132 + $0x90] sm:$0xff]
        %v7024 = vld [vmem:[%s2132 + $0x98] sm:$0xff]
        %v7025 = vld [vmem:[%s2132 + $0xa8] sm:$0xff]
        %v7026 = vld [vmem:[%s2132 + $0xb0] sm:$0xff]
        %v7027 = vld [vmem:[%s2132 + $0xc0] sm:$0xff]
        %v7028 = vld [vmem:[%s2132 + $0xc8] sm:$0xff]
        %v7029 = vld [vmem:[%s2132 + $0xd8] sm:$0xff]
        %v7030 = vld [vmem:[%s2132 + $0xe0] sm:$0xff]
        %v7031 = vld [vmem:[%s2132 + $0xf0] sm:$0xff]
        %v7032 = vld [vmem:[%s2132 + $0xf8] sm:$0xff]
        %v7033 = vld [vmem:[%s2132 + $0x108] sm:$0xff]
        %v7034 = vld [vmem:[%s2132 + $0x110] sm:$0xff]
        %v7035 = vld [vmem:[%s2132 + $0x120] sm:$0xff]
        %v7036 = vld [vmem:[%s2132 + $0x128] sm:$0xff]
        %v7037 = vld [vmem:[%s2132 + $0x138] sm:$0xff]
        %v7038 = vld [vmem:[%s2132 + $0x140] sm:$0xff]
        %v7039 = vld [vmem:[%s2132 + $0x150] sm:$0xff]
        %v7040 = vld [vmem:[%s2132 + $0x158] sm:$0xff]
        %v7041 = vld [vmem:[%s2132 + $0x168] sm:$0xff]
        %v7042 = vld [vmem:[%s2132 + $0x170] sm:$0xff]
        %7075 = vrot.lane.b32.xlu0 %v7011, 96
        %v7076 = vpop.permute.xlu0 %7075
        %7077 = vrot.lane.b32.xlu0 %v7012, 96
        %v7078 = vpop.permute.xlu0 %7077
        %7079 = vrot.lane.b32.xlu0 %v7013, 96
        %v7080 = vpop.permute.xlu0 %7079
        %7081 = vrot.lane.b32.xlu0 %v7014, 96
        %v7082 = vpop.permute.xlu0 %7081
        %7083 = vrot.lane.b32.xlu0 %v7015, 96
        %v7084 = vpop.permute.xlu0 %7083
        %7085 = vrot.lane.b32.xlu0 %v7016, 96
        %v7086 = vpop.permute.xlu0 %7085
        %7087 = vrot.lane.b32.xlu0 %v7017, 96
        %v7088 = vpop.permute.xlu0 %7087
        %7089 = vrot.lane.b32.xlu0 %v7018, 96
        %v7090 = vpop.permute.xlu0 %7089
        %7091 = vrot.lane.b32.xlu0 %v7019, 96
        %v7092 = vpop.permute.xlu0 %7091
        %7093 = vrot.lane.b32.xlu0 %v7020, 96
        %v7094 = vpop.permute.xlu0 %7093
        %7095 = vrot.lane.b32.xlu0 %v7021, 96
        %v7096 = vpop.permute.xlu0 %7095
        %7097 = vrot.lane.b32.xlu0 %v7022, 96
        %v7098 = vpop.permute.xlu0 %7097
        %7099 = vrot.lane.b32.xlu0 %v7023, 96
        %v7100 = vpop.permute.xlu0 %7099
        %7101 = vrot.lane.b32.xlu0 %v7024, 96
        %v7102 = vpop.permute.xlu0 %7101
        %7103 = vrot.lane.b32.xlu0 %v7025, 96
        %v7104 = vpop.permute.xlu0 %7103
        %7105 = vrot.lane.b32.xlu0 %v7026, 96
        %v7106 = vpop.permute.xlu0 %7105
        %7107 = vrot.lane.b32.xlu0 %v7027, 96
        %v7108 = vpop.permute.xlu0 %7107
        %7109 = vrot.lane.b32.xlu0 %v7028, 96
        %v7110 = vpop.permute.xlu0 %7109
        %7111 = vrot.lane.b32.xlu0 %v7029, 96
        %v7112 = vpop.permute.xlu0 %7111
        %7113 = vrot.lane.b32.xlu0 %v7030, 96
        %v7114 = vpop.permute.xlu0 %7113
        %7115 = vrot.lane.b32.xlu0 %v7031, 96
        %v7116 = vpop.permute.xlu0 %7115
        %7117 = vrot.lane.b32.xlu0 %v7032, 96
        %v7118 = vpop.permute.xlu0 %7117
        %7119 = vrot.lane.b32.xlu0 %v7033, 96
        %v7120 = vpop.permute.xlu0 %7119
        %7121 = vrot.lane.b32.xlu0 %v7034, 96
        %v7122 = vpop.permute.xlu0 %7121
        %7123 = vrot.lane.b32.xlu0 %v7035, 96
        %v7124 = vpop.permute.xlu0 %7123
        %7125 = vrot.lane.b32.xlu0 %v7036, 96
        %v7126 = vpop.permute.xlu0 %7125
        %7127 = vrot.lane.b32.xlu0 %v7037, 96
        %v7128 = vpop.permute.xlu0 %7127
        %7129 = vrot.lane.b32.xlu0 %v7038, 96
        %v7130 = vpop.permute.xlu0 %7129
        %7131 = vrot.lane.b32.xlu0 %v7039, 96
        %v7132 = vpop.permute.xlu0 %7131
        %7133 = vrot.lane.b32.xlu0 %v7040, 96
        %v7134 = vpop.permute.xlu0 %7133
        %7135 = vrot.lane.b32.xlu0 %v7041, 96
        %v7136 = vpop.permute.xlu0 %7135
        %7137 = vrot.lane.b32.xlu0 %v7042, 96
        %v7138 = vpop.permute.xlu0 %7137
        %7171 = vst.msk [vmem:[#allocation3] sm:$0xff] %vm2293, %v7076
        %7172 = vst.msk [vmem:[#allocation3 + $0x10] sm:$0xff] %vm2293, %v7078
        %7173 = vst.msk [vmem:[#allocation3 + $0x20] sm:$0xff] %vm2293, %v7080
        %7174 = vst.msk [vmem:[#allocation3 + $0x30] sm:$0xff] %vm2293, %v7082
        %7175 = vst.msk [vmem:[#allocation3 + $0x40] sm:$0xff] %vm2293, %v7084
        %7176 = vst.msk [vmem:[#allocation3 + $0x50] sm:$0xff] %vm2293, %v7086
        %7177 = vst.msk [vmem:[#allocation3 + $0x60] sm:$0xff] %vm2293, %v7088
        %7178 = vst.msk [vmem:[#allocation3 + $0x70] sm:$0xff] %vm2293, %v7090
        %7179 = vst.msk [vmem:[#allocation3 + $0x80] sm:$0xff] %vm2293, %v7092
        %7180 = vst.msk [vmem:[#allocation3 + $0x90] sm:$0xff] %vm2293, %v7094
        %7181 = vst.msk [vmem:[#allocation3 + $0xa0] sm:$0xff] %vm2293, %v7096
        %7182 = vst.msk [vmem:[#allocation3 + $0xb0] sm:$0xff] %vm2293, %v7098
        %7183 = vst.msk [vmem:[#allocation3 + $0xc0] sm:$0xff] %vm2293, %v7100
        %7184 = vst.msk [vmem:[#allocation3 + $0xd0] sm:$0xff] %vm2293, %v7102
        %7185 = vst.msk [vmem:[#allocation3 + $0xe0] sm:$0xff] %vm2293, %v7104
        %7186 = vst.msk [vmem:[#allocation3 + $0xf0] sm:$0xff] %vm2293, %v7106
        %7187 = vst.msk [vmem:[#allocation3 + $0x100] sm:$0xff] %vm2293, %v7108
        %7188 = vst.msk [vmem:[#allocation3 + $0x110] sm:$0xff] %vm2293, %v7110
        %7189 = vst.msk [vmem:[#allocation3 + $0x120] sm:$0xff] %vm2293, %v7112
        %7190 = vst.msk [vmem:[#allocation3 + $0x130] sm:$0xff] %vm2293, %v7114
        %7191 = vst.msk [vmem:[#allocation3 + $0x140] sm:$0xff] %vm2293, %v7116
        %7192 = vst.msk [vmem:[#allocation3 + $0x150] sm:$0xff] %vm2293, %v7118
        %7193 = vst.msk [vmem:[#allocation3 + $0x160] sm:$0xff] %vm2293, %v7120
        %7194 = vst.msk [vmem:[#allocation3 + $0x170] sm:$0xff] %vm2293, %v7122
        %7195 = vst.msk [vmem:[#allocation3 + $0x180] sm:$0xff] %vm2293, %v7124
        %7196 = vst.msk [vmem:[#allocation3 + $0x190] sm:$0xff] %vm2293, %v7126
        %7197 = vst.msk [vmem:[#allocation3 + $0x1a0] sm:$0xff] %vm2293, %v7128
        %7198 = vst.msk [vmem:[#allocation3 + $0x1b0] sm:$0xff] %vm2293, %v7130
        %7199 = vst.msk [vmem:[#allocation3 + $0x1c0] sm:$0xff] %vm2293, %v7132
        %7200 = vst.msk [vmem:[#allocation3 + $0x1d0] sm:$0xff] %vm2293, %v7134
        %7201 = vst.msk [vmem:[#allocation3 + $0x1e0] sm:$0xff] %vm2293, %v7136
        %7202 = vst.msk [vmem:[#allocation3 + $0x1f0] sm:$0xff] %vm2293, %v7138
        %v7203 = vld [vmem:[%s2132 + $0x1] sm:$0xff]
        %v7204 = vld [vmem:[%s2132 + $0x9] sm:$0xff]
        %v7205 = vld [vmem:[%s2132 + $0x19] sm:$0xff]
        %v7206 = vld [vmem:[%s2132 + $0x21] sm:$0xff]
        %v7207 = vld [vmem:[%s2132 + $0x31] sm:$0xff]
        %v7208 = vld [vmem:[%s2132 + $0x39] sm:$0xff]
        %v7209 = vld [vmem:[%s2132 + $0x49] sm:$0xff]
        %v7210 = vld [vmem:[%s2132 + $0x51] sm:$0xff]
        %v7211 = vld [vmem:[%s2132 + $0x61] sm:$0xff]
        %v7212 = vld [vmem:[%s2132 + $0x69] sm:$0xff]
        %v7213 = vld [vmem:[%s2132 + $0x79] sm:$0xff]
        %v7214 = vld [vmem:[%s2132 + $0x81] sm:$0xff]
        %v7215 = vld [vmem:[%s2132 + $0x91] sm:$0xff]
        %v7216 = vld [vmem:[%s2132 + $0x99] sm:$0xff]
        %v7217 = vld [vmem:[%s2132 + $0xa9] sm:$0xff]
        %v7218 = vld [vmem:[%s2132 + $0xb1] sm:$0xff]
        %v7219 = vld [vmem:[%s2132 + $0xc1] sm:$0xff]
        %v7220 = vld [vmem:[%s2132 + $0xc9] sm:$0xff]
        %v7221 = vld [vmem:[%s2132 + $0xd9] sm:$0xff]
        %v7222 = vld [vmem:[%s2132 + $0xe1] sm:$0xff]
        %v7223 = vld [vmem:[%s2132 + $0xf1] sm:$0xff]
        %v7224 = vld [vmem:[%s2132 + $0xf9] sm:$0xff]
        %v7225 = vld [vmem:[%s2132 + $0x109] sm:$0xff]
        %v7226 = vld [vmem:[%s2132 + $0x111] sm:$0xff]
        %v7227 = vld [vmem:[%s2132 + $0x121] sm:$0xff]
        %v7228 = vld [vmem:[%s2132 + $0x129] sm:$0xff]
        %v7229 = vld [vmem:[%s2132 + $0x139] sm:$0xff]
        %v7230 = vld [vmem:[%s2132 + $0x141] sm:$0xff]
        %v7231 = vld [vmem:[%s2132 + $0x151] sm:$0xff]
        %v7232 = vld [vmem:[%s2132 + $0x159] sm:$0xff]
        %v7233 = vld [vmem:[%s2132 + $0x169] sm:$0xff]
        %v7234 = vld [vmem:[%s2132 + $0x171] sm:$0xff]
        %7267 = vrot.lane.b32.xlu0 %v7203, 112
        %v7268 = vpop.permute.xlu0 %7267
        %7269 = vrot.lane.b32.xlu0 %v7204, 112
        %v7270 = vpop.permute.xlu0 %7269
        %7271 = vrot.lane.b32.xlu0 %v7205, 112
        %v7272 = vpop.permute.xlu0 %7271
        %7273 = vrot.lane.b32.xlu0 %v7206, 112
        %v7274 = vpop.permute.xlu0 %7273
        %7275 = vrot.lane.b32.xlu0 %v7207, 112
        %v7276 = vpop.permute.xlu0 %7275
        %7277 = vrot.lane.b32.xlu0 %v7208, 112
        %v7278 = vpop.permute.xlu0 %7277
        %7279 = vrot.lane.b32.xlu0 %v7209, 112
        %v7280 = vpop.permute.xlu0 %7279
        %7281 = vrot.lane.b32.xlu0 %v7210, 112
        %v7282 = vpop.permute.xlu0 %7281
        %7283 = vrot.lane.b32.xlu0 %v7211, 112
        %v7284 = vpop.permute.xlu0 %7283
        %7285 = vrot.lane.b32.xlu0 %v7212, 112
        %v7286 = vpop.permute.xlu0 %7285
        %7287 = vrot.lane.b32.xlu0 %v7213, 112
        %v7288 = vpop.permute.xlu0 %7287
        %7289 = vrot.lane.b32.xlu0 %v7214, 112
        %v7290 = vpop.permute.xlu0 %7289
        %7291 = vrot.lane.b32.xlu0 %v7215, 112
        %v7292 = vpop.permute.xlu0 %7291
        %7293 = vrot.lane.b32.xlu0 %v7216, 112
        %v7294 = vpop.permute.xlu0 %7293
        %7295 = vrot.lane.b32.xlu0 %v7217, 112
        %v7296 = vpop.permute.xlu0 %7295
        %7297 = vrot.lane.b32.xlu0 %v7218, 112
        %v7298 = vpop.permute.xlu0 %7297
        %7299 = vrot.lane.b32.xlu0 %v7219, 112
        %v7300 = vpop.permute.xlu0 %7299
        %7301 = vrot.lane.b32.xlu0 %v7220, 112
        %v7302 = vpop.permute.xlu0 %7301
        %7303 = vrot.lane.b32.xlu0 %v7221, 112
        %v7304 = vpop.permute.xlu0 %7303
        %7305 = vrot.lane.b32.xlu0 %v7222, 112
        %v7306 = vpop.permute.xlu0 %7305
        %7307 = vrot.lane.b32.xlu0 %v7223, 112
        %v7308 = vpop.permute.xlu0 %7307
        %7309 = vrot.lane.b32.xlu0 %v7224, 112
        %v7310 = vpop.permute.xlu0 %7309
        %7311 = vrot.lane.b32.xlu0 %v7225, 112
        %v7312 = vpop.permute.xlu0 %7311
        %7313 = vrot.lane.b32.xlu0 %v7226, 112
        %v7314 = vpop.permute.xlu0 %7313
        %7315 = vrot.lane.b32.xlu0 %v7227, 112
        %v7316 = vpop.permute.xlu0 %7315
        %7317 = vrot.lane.b32.xlu0 %v7228, 112
        %v7318 = vpop.permute.xlu0 %7317
        %7319 = vrot.lane.b32.xlu0 %v7229, 112
        %v7320 = vpop.permute.xlu0 %7319
        %7321 = vrot.lane.b32.xlu0 %v7230, 112
        %v7322 = vpop.permute.xlu0 %7321
        %7323 = vrot.lane.b32.xlu0 %v7231, 112
        %v7324 = vpop.permute.xlu0 %7323
        %7325 = vrot.lane.b32.xlu0 %v7232, 112
        %v7326 = vpop.permute.xlu0 %7325
        %7327 = vrot.lane.b32.xlu0 %v7233, 112
        %v7328 = vpop.permute.xlu0 %7327
        %7329 = vrot.lane.b32.xlu0 %v7234, 112
        %v7330 = vpop.permute.xlu0 %7329
        %7363 = vst.msk [vmem:[#allocation3] sm:$0xff] %vm2486, %v7268
        %7364 = vst.msk [vmem:[#allocation3 + $0x10] sm:$0xff] %vm2486, %v7270
        %7365 = vst.msk [vmem:[#allocation3 + $0x20] sm:$0xff] %vm2486, %v7272
        %7366 = vst.msk [vmem:[#allocation3 + $0x30] sm:$0xff] %vm2486, %v7274
        %7367 = vst.msk [vmem:[#allocation3 + $0x40] sm:$0xff] %vm2486, %v7276
        %7368 = vst.msk [vmem:[#allocation3 + $0x50] sm:$0xff] %vm2486, %v7278
        %7369 = vst.msk [vmem:[#allocation3 + $0x60] sm:$0xff] %vm2486, %v7280
        %7370 = vst.msk [vmem:[#allocation3 + $0x70] sm:$0xff] %vm2486, %v7282
        %7371 = vst.msk [vmem:[#allocation3 + $0x80] sm:$0xff] %vm2486, %v7284
        %7372 = vst.msk [vmem:[#allocation3 + $0x90] sm:$0xff] %vm2486, %v7286
        %7373 = vst.msk [vmem:[#allocation3 + $0xa0] sm:$0xff] %vm2486, %v7288
        %7374 = vst.msk [vmem:[#allocation3 + $0xb0] sm:$0xff] %vm2486, %v7290
        %7375 = vst.msk [vmem:[#allocation3 + $0xc0] sm:$0xff] %vm2486, %v7292
        %7376 = vst.msk [vmem:[#allocation3 + $0xd0] sm:$0xff] %vm2486, %v7294
        %7377 = vst.msk [vmem:[#allocation3 + $0xe0] sm:$0xff] %vm2486, %v7296
        %7378 = vst.msk [vmem:[#allocation3 + $0xf0] sm:$0xff] %vm2486, %v7298
        %7379 = vst.msk [vmem:[#allocation3 + $0x100] sm:$0xff] %vm2486, %v7300
        %7380 = vst.msk [vmem:[#allocation3 + $0x110] sm:$0xff] %vm2486, %v7302
        %7381 = vst.msk [vmem:[#allocation3 + $0x120] sm:$0xff] %vm2486, %v7304
        %7382 = vst.msk [vmem:[#allocation3 + $0x130] sm:$0xff] %vm2486, %v7306
        %7383 = vst.msk [vmem:[#allocation3 + $0x140] sm:$0xff] %vm2486, %v7308
        %7384 = vst.msk [vmem:[#allocation3 + $0x150] sm:$0xff] %vm2486, %v7310
        %7385 = vst.msk [vmem:[#allocation3 + $0x160] sm:$0xff] %vm2486, %v7312
        %7386 = vst.msk [vmem:[#allocation3 + $0x170] sm:$0xff] %vm2486, %v7314
        %7387 = vst.msk [vmem:[#allocation3 + $0x180] sm:$0xff] %vm2486, %v7316
        %7388 = vst.msk [vmem:[#allocation3 + $0x190] sm:$0xff] %vm2486, %v7318
        %7389 = vst.msk [vmem:[#allocation3 + $0x1a0] sm:$0xff] %vm2486, %v7320
        %7390 = vst.msk [vmem:[#allocation3 + $0x1b0] sm:$0xff] %vm2486, %v7322
        %7391 = vst.msk [vmem:[#allocation3 + $0x1c0] sm:$0xff] %vm2486, %v7324
        %7392 = vst.msk [vmem:[#allocation3 + $0x1d0] sm:$0xff] %vm2486, %v7326
        %7393 = vst.msk [vmem:[#allocation3 + $0x1e0] sm:$0xff] %vm2486, %v7328
        %7394 = vst.msk [vmem:[#allocation3 + $0x1f0] sm:$0xff] %vm2486, %v7330
        %v7395 = vld [vmem:[%s2132 + $0x2] sm:$0xff]
        %v7396 = vld [vmem:[%s2132 + $0xa] sm:$0xff]
        %v7397 = vld [vmem:[%s2132 + $0x1a] sm:$0xff]
        %v7398 = vld [vmem:[%s2132 + $0x22] sm:$0xff]
        %v7399 = vld [vmem:[%s2132 + $0x32] sm:$0xff]
        %v7400 = vld [vmem:[%s2132 + $0x3a] sm:$0xff]
        %v7401 = vld [vmem:[%s2132 + $0x4a] sm:$0xff]
        %v7402 = vld [vmem:[%s2132 + $0x52] sm:$0xff]
        %v7403 = vld [vmem:[%s2132 + $0x62] sm:$0xff]
        %v7404 = vld [vmem:[%s2132 + $0x6a] sm:$0xff]
        %v7405 = vld [vmem:[%s2132 + $0x7a] sm:$0xff]
        %v7406 = vld [vmem:[%s2132 + $0x82] sm:$0xff]
        %v7407 = vld [vmem:[%s2132 + $0x92] sm:$0xff]
        %v7408 = vld [vmem:[%s2132 + $0x9a] sm:$0xff]
        %v7409 = vld [vmem:[%s2132 + $0xaa] sm:$0xff]
        %v7410 = vld [vmem:[%s2132 + $0xb2] sm:$0xff]
        %v7411 = vld [vmem:[%s2132 + $0xc2] sm:$0xff]
        %v7412 = vld [vmem:[%s2132 + $0xca] sm:$0xff]
        %v7413 = vld [vmem:[%s2132 + $0xda] sm:$0xff]
        %v7414 = vld [vmem:[%s2132 + $0xe2] sm:$0xff]
        %v7415 = vld [vmem:[%s2132 + $0xf2] sm:$0xff]
        %v7416 = vld [vmem:[%s2132 + $0xfa] sm:$0xff]
        %v7417 = vld [vmem:[%s2132 + $0x10a] sm:$0xff]
        %v7418 = vld [vmem:[%s2132 + $0x112] sm:$0xff]
        %v7419 = vld [vmem:[%s2132 + $0x122] sm:$0xff]
        %v7420 = vld [vmem:[%s2132 + $0x12a] sm:$0xff]
        %v7421 = vld [vmem:[%s2132 + $0x13a] sm:$0xff]
        %v7422 = vld [vmem:[%s2132 + $0x142] sm:$0xff]
        %v7423 = vld [vmem:[%s2132 + $0x152] sm:$0xff]
        %v7424 = vld [vmem:[%s2132 + $0x15a] sm:$0xff]
        %v7425 = vld [vmem:[%s2132 + $0x16a] sm:$0xff]
        %v7426 = vld [vmem:[%s2132 + $0x172] sm:$0xff]
        %7427 = vst.msk [vmem:[#allocation3 + $0x8] sm:$0xff] %vm553, %v7395
        %7428 = vst.msk [vmem:[#allocation3 + $0x18] sm:$0xff] %vm553, %v7396
        %7429 = vst.msk [vmem:[#allocation3 + $0x28] sm:$0xff] %vm553, %v7397
        %7430 = vst.msk [vmem:[#allocation3 + $0x38] sm:$0xff] %vm553, %v7398
        %7431 = vst.msk [vmem:[#allocation3 + $0x48] sm:$0xff] %vm553, %v7399
        %7432 = vst.msk [vmem:[#allocation3 + $0x58] sm:$0xff] %vm553, %v7400
        %7433 = vst.msk [vmem:[#allocation3 + $0x68] sm:$0xff] %vm553, %v7401
        %7434 = vst.msk [vmem:[#allocation3 + $0x78] sm:$0xff] %vm553, %v7402
        %7435 = vst.msk [vmem:[#allocation3 + $0x88] sm:$0xff] %vm553, %v7403
        %7436 = vst.msk [vmem:[#allocation3 + $0x98] sm:$0xff] %vm553, %v7404
        %7437 = vst.msk [vmem:[#allocation3 + $0xa8] sm:$0xff] %vm553, %v7405
        %7438 = vst.msk [vmem:[#allocation3 + $0xb8] sm:$0xff] %vm553, %v7406
        %7439 = vst.msk [vmem:[#allocation3 + $0xc8] sm:$0xff] %vm553, %v7407
        %7440 = vst.msk [vmem:[#allocation3 + $0xd8] sm:$0xff] %vm553, %v7408
        %7441 = vst.msk [vmem:[#allocation3 + $0xe8] sm:$0xff] %vm553, %v7409
        %7442 = vst.msk [vmem:[#allocation3 + $0xf8] sm:$0xff] %vm553, %v7410
        %7443 = vst.msk [vmem:[#allocation3 + $0x108] sm:$0xff] %vm553, %v7411
        %7444 = vst.msk [vmem:[#allocation3 + $0x118] sm:$0xff] %vm553, %v7412
        %7445 = vst.msk [vmem:[#allocation3 + $0x128] sm:$0xff] %vm553, %v7413
        %7446 = vst.msk [vmem:[#allocation3 + $0x138] sm:$0xff] %vm553, %v7414
        %7447 = vst.msk [vmem:[#allocation3 + $0x148] sm:$0xff] %vm553, %v7415
        %7448 = vst.msk [vmem:[#allocation3 + $0x158] sm:$0xff] %vm553, %v7416
        %7449 = vst.msk [vmem:[#allocation3 + $0x168] sm:$0xff] %vm553, %v7417
        %7450 = vst.msk [vmem:[#allocation3 + $0x178] sm:$0xff] %vm553, %v7418
        %7451 = vst.msk [vmem:[#allocation3 + $0x188] sm:$0xff] %vm553, %v7419
        %7452 = vst.msk [vmem:[#allocation3 + $0x198] sm:$0xff] %vm553, %v7420
        %7453 = vst.msk [vmem:[#allocation3 + $0x1a8] sm:$0xff] %vm553, %v7421
        %7454 = vst.msk [vmem:[#allocation3 + $0x1b8] sm:$0xff] %vm553, %v7422
        %7455 = vst.msk [vmem:[#allocation3 + $0x1c8] sm:$0xff] %vm553, %v7423
        %7456 = vst.msk [vmem:[#allocation3 + $0x1d8] sm:$0xff] %vm553, %v7424
        %7457 = vst.msk [vmem:[#allocation3 + $0x1e8] sm:$0xff] %vm553, %v7425
        %7458 = vst.msk [vmem:[#allocation3 + $0x1f8] sm:$0xff] %vm553, %v7426
        %v7459 = vld [vmem:[#allocation3] sm:$0xff]
        %v7460 = vld [vmem:[#allocation3 + $0x8] sm:$0xff]
        %v7461 = vld [vmem:[#allocation3 + $0x10] sm:$0xff]
        %v7462 = vld [vmem:[#allocation3 + $0x18] sm:$0xff]
        %v7463 = vld [vmem:[#allocation3 + $0x20] sm:$0xff]
        %v7464 = vld [vmem:[#allocation3 + $0x28] sm:$0xff]
        %v7465 = vld [vmem:[#allocation3 + $0x30] sm:$0xff]
        %v7466 = vld [vmem:[#allocation3 + $0x38] sm:$0xff]
        %v7467 = vld [vmem:[#allocation3 + $0x40] sm:$0xff]
        %v7468 = vld [vmem:[#allocation3 + $0x48] sm:$0xff]
        %v7469 = vld [vmem:[#allocation3 + $0x50] sm:$0xff]
        %v7470 = vld [vmem:[#allocation3 + $0x58] sm:$0xff]
        %v7471 = vld [vmem:[#allocation3 + $0x60] sm:$0xff]
        %v7472 = vld [vmem:[#allocation3 + $0x68] sm:$0xff]
        %v7473 = vld [vmem:[#allocation3 + $0x70] sm:$0xff]
        %v7474 = vld [vmem:[#allocation3 + $0x78] sm:$0xff]
        %v7475 = vld [vmem:[#allocation3 + $0x80] sm:$0xff]
        %v7476 = vld [vmem:[#allocation3 + $0x88] sm:$0xff]
        %v7477 = vld [vmem:[#allocation3 + $0x90] sm:$0xff]
        %v7478 = vld [vmem:[#allocation3 + $0x98] sm:$0xff]
        %v7479 = vld [vmem:[#allocation3 + $0xa0] sm:$0xff]
        %v7480 = vld [vmem:[#allocation3 + $0xa8] sm:$0xff]
        %v7481 = vld [vmem:[#allocation3 + $0xb0] sm:$0xff]
        %v7482 = vld [vmem:[#allocation3 + $0xb8] sm:$0xff]
        %v7483 = vld [vmem:[#allocation3 + $0xc0] sm:$0xff]
        %v7484 = vld [vmem:[#allocation3 + $0xc8] sm:$0xff]
        %v7485 = vld [vmem:[#allocation3 + $0xd0] sm:$0xff]
        %v7486 = vld [vmem:[#allocation3 + $0xd8] sm:$0xff]
        %v7487 = vld [vmem:[#allocation3 + $0xe0] sm:$0xff]
        %v7488 = vld [vmem:[#allocation3 + $0xe8] sm:$0xff]
        %v7489 = vld [vmem:[#allocation3 + $0xf0] sm:$0xff]
        %v7490 = vld [vmem:[#allocation3 + $0xf8] sm:$0xff]
        %v7491 = vld [vmem:[#allocation3 + $0x100] sm:$0xff]
        %v7492 = vld [vmem:[#allocation3 + $0x108] sm:$0xff]
        %v7493 = vld [vmem:[#allocation3 + $0x110] sm:$0xff]
        %v7494 = vld [vmem:[#allocation3 + $0x118] sm:$0xff]
        %v7495 = vld [vmem:[#allocation3 + $0x120] sm:$0xff]
        %v7496 = vld [vmem:[#allocation3 + $0x128] sm:$0xff]
        %v7497 = vld [vmem:[#allocation3 + $0x130] sm:$0xff]
        %v7498 = vld [vmem:[#allocation3 + $0x138] sm:$0xff]
        %v7499 = vld [vmem:[#allocation3 + $0x140] sm:$0xff]
        %v7500 = vld [vmem:[#allocation3 + $0x148] sm:$0xff]
        %v7501 = vld [vmem:[#allocation3 + $0x150] sm:$0xff]
        %v7502 = vld [vmem:[#allocation3 + $0x158] sm:$0xff]
        %v7503 = vld [vmem:[#allocation3 + $0x160] sm:$0xff]
        %v7504 = vld [vmem:[#allocation3 + $0x168] sm:$0xff]
        %v7505 = vld [vmem:[#allocation3 + $0x170] sm:$0xff]
        %v7506 = vld [vmem:[#allocation3 + $0x178] sm:$0xff]
        %v7507 = vld [vmem:[#allocation3 + $0x180] sm:$0xff]
        %v7508 = vld [vmem:[#allocation3 + $0x188] sm:$0xff]
        %v7509 = vld [vmem:[#allocation3 + $0x190] sm:$0xff]
        %v7510 = vld [vmem:[#allocation3 + $0x198] sm:$0xff]
        %v7511 = vld [vmem:[#allocation3 + $0x1a0] sm:$0xff]
        %v7512 = vld [vmem:[#allocation3 + $0x1a8] sm:$0xff]
        %v7513 = vld [vmem:[#allocation3 + $0x1b0] sm:$0xff]
        %v7514 = vld [vmem:[#allocation3 + $0x1b8] sm:$0xff]
        %v7515 = vld [vmem:[#allocation3 + $0x1c0] sm:$0xff]
        %v7516 = vld [vmem:[#allocation3 + $0x1c8] sm:$0xff]
        %v7517 = vld [vmem:[#allocation3 + $0x1d0] sm:$0xff]
        %v7518 = vld [vmem:[#allocation3 + $0x1d8] sm:$0xff]
        %v7519 = vld [vmem:[#allocation3 + $0x1e0] sm:$0xff]
        %v7520 = vld [vmem:[#allocation3 + $0x1e8] sm:$0xff]
        %v7521 = vld [vmem:[#allocation3 + $0x1f0] sm:$0xff]
        %v7522 = vld [vmem:[#allocation3 + $0x1f8] sm:$0xff]
        %v7523 = vld [vmem:[%s11] sm:$0xff]
        %v7524 = vld [vmem:[%s11 + $0x8] sm:$0xff]
        %v7525 = vld [vmem:[%s11 + $0x10] sm:$0xff]
        %v7526 = vld [vmem:[%s11 + $0x18] sm:$0xff]
        %v7527 = vld [vmem:[%s11 + $0x20] sm:$0xff]
        %v7528 = vld [vmem:[%s11 + $0x28] sm:$0xff]
        %v7529 = vld [vmem:[%s11 + $0x30] sm:$0xff]
        %v7530 = vld [vmem:[%s11 + $0x38] sm:$0xff]
        %v7531 = vld [vmem:[%s11 + $0x40] sm:$0xff]
        %v7532 = vld [vmem:[%s11 + $0x48] sm:$0xff]
        %v7533 = vld [vmem:[%s11 + $0x50] sm:$0xff]
        %v7534 = vld [vmem:[%s11 + $0x58] sm:$0xff]
        %v7535 = vld [vmem:[%s11 + $0x60] sm:$0xff]
        %v7536 = vld [vmem:[%s11 + $0x68] sm:$0xff]
        %v7537 = vld [vmem:[%s11 + $0x70] sm:$0xff]
        %v7538 = vld [vmem:[%s11 + $0x78] sm:$0xff]
        %v7539 = vld [vmem:[%s11 + $0x80] sm:$0xff]
        %v7540 = vld [vmem:[%s11 + $0x88] sm:$0xff]
        %v7541 = vld [vmem:[%s12] sm:$0x1]
        %v7543 = vlaneseq
        %v7544 = vshrl.u32 %v7543, 7
        %v7545 = vsub.s32 0, %v7544
        %v7546 = vrot.slane %v7541, %v7545
        %v7549 = vsel %vm553, %v7460, 0
        %v7552 = vsel %vm553, %v7462, 0
        %v7555 = vsel %vm553, %v7464, 0
        %v7558 = vsel %vm553, %v7466, 0
        %v7561 = vsel %vm553, %v7468, 0
        %v7564 = vsel %vm553, %v7470, 0
        %v7567 = vsel %vm553, %v7472, 0
        %v7570 = vsel %vm553, %v7474, 0
        %v7573 = vsel %vm553, %v7476, 0
        %v7576 = vsel %vm553, %v7478, 0
        %v7579 = vsel %vm553, %v7480, 0
        %v7582 = vsel %vm553, %v7482, 0
        %v7585 = vsel %vm553, %v7484, 0
        %v7588 = vsel %vm553, %v7486, 0
        %v7591 = vsel %vm553, %v7488, 0
        %v7594 = vsel %vm553, %v7490, 0
        %v7597 = vsel %vm553, %v7492, 0
        %v7600 = vsel %vm553, %v7494, 0
        %v7603 = vsel %vm553, %v7496, 0
        %v7606 = vsel %vm553, %v7498, 0
        %v7609 = vsel %vm553, %v7500, 0
        %v7612 = vsel %vm553, %v7502, 0
        %v7615 = vsel %vm553, %v7504, 0
        %v7618 = vsel %vm553, %v7506, 0
        %v7621 = vsel %vm553, %v7508, 0
        %v7624 = vsel %vm553, %v7510, 0
        %v7627 = vsel %vm553, %v7512, 0
        %v7630 = vsel %vm553, %v7514, 0
        %v7633 = vsel %vm553, %v7516, 0
        %v7636 = vsel %vm553, %v7518, 0
        %v7639 = vsel %vm553, %v7520, 0
        %v7642 = vsel %vm553, %v7522, 0
        %7644 = vmatprep.subr.mxu0 0.0
        %7645 = vmatpush1.msra.mxu0 %v7523
        %7646 = vmatprep.subr.mxu0 0.0
        %7647 = vmatpush1.msra.mxu0 %v7524
        %7648 = vmatprep.subr.mxu0 0.0
        %7649 = vmatpush1.msra.mxu0 %v7525
        %7650 = vmatprep.subr.mxu0 0.0
        %7651 = vmatpush1.msra.mxu0 %v7526
        %7652 = vmatprep.subr.mxu0 0.0
        %7653 = vmatpush1.msra.mxu0 %v7527
        %7654 = vmatprep.subr.mxu0 0.0
        %7655 = vmatpush1.msra.mxu0 %v7528
        %7656 = vmatprep.subr.mxu0 0.0
        %7657 = vmatpush1.msra.mxu0 %v7529
        %7658 = vmatprep.subr.mxu0 0.0
        %7659 = vmatpush1.msra.mxu0 %v7530
        %7660 = vmatprep.subr.mxu0 0.0
        %7661 = vmatpush1.msra.mxu0 %v7531
        %7662 = vmatprep.subr.mxu0 0.0
        %7663 = vmatpush1.msra.mxu0 %v7532
        %7664 = vmatprep.subr.mxu0 0.0
        %7665 = vmatpush1.msra.mxu0 %v7533
        %7666 = vmatprep.subr.mxu0 0.0
        %7667 = vmatpush1.msra.mxu0 %v7534
        %7668 = vmatprep.subr.mxu0 0.0
        %7669 = vmatpush1.msra.mxu0 %v7535
        %7670 = vmatprep.subr.mxu0 0.0
        %7671 = vmatpush1.msra.mxu0 %v7536
        %7672 = vmatprep.subr.mxu0 0.0
        %7673 = vmatpush1.msra.mxu0 %v7537
        %7674 = vmatprep.subr.mxu0 0.0
        %7675 = vmatpush1.msra.mxu0 %v7538
        %7676 = vmatprep.subr.mxu0 0.0
        %7677 = vmatpush1.msra.mxu0 %v7539
        %7678 = vmatprep.subr.mxu0 0.0
        %7679 = vmatpush1.msra.mxu0 %v7540
        %7680 = vmatprep.subr.mxu0 0.0
        %7681 = vmatpush1.msra.mxu0 0.0
        %7682 = vmatprep.subr.mxu0 0.0
        %7683 = vmatpush1.msra.mxu0 0.0
        %7684 = vmatprep.subr.mxu0 0.0
        %7685 = vmatpush1.msra.mxu0 0.0
        %7686 = vmatprep.subr.mxu0 0.0
        %7687 = vmatpush1.msra.mxu0 0.0
        %7688 = vmatprep.subr.mxu0 0.0
        %7689 = vmatpush1.msra.mxu0 0.0
        %7690 = vmatprep.subr.mxu0 0.0
        %7691 = vmatpush1.msra.mxu0 0.0
        %7692 = vmatprep.subr.mxu0 0.0
        %7693 = vmatpush1.msra.mxu0 0.0
        %7694 = vmatprep.subr.mxu0 0.0
        %7695 = vmatpush1.msra.mxu0 0.0
        %7696 = vmatprep.subr.mxu0 0.0
        %7697 = vmatpush1.msra.mxu0 0.0
        %7698 = vmatprep.subr.mxu0 0.0
        %7699 = vmatpush1.msra.mxu0 0.0
        %7700 = vmatprep.subr.mxu0 0.0
        %7701 = vmatpush1.msra.mxu0 0.0
        %7702 = vmatprep.subr.mxu0 0.0
        %7703 = vmatpush1.msra.mxu0 0.0
        %7704 = vmatprep.subr.mxu0 0.0
        %7705 = vmatpush1.msra.mxu0 0.0
        %7706 = vmatprep.subr.mxu0 0.0
        %7707 = vmatpush1.msra.mxu0 0.0
        %7708 = vmatprep.mubr.f32.mxu0 %v7549
        %7709 = vmatmul.mubr.f32.gmra.mrb[0].mxu0 %v7459
        %v7710 = vpop.f32.mrb[0].mxu0
        %v7711 = vadd.f32 %v7546, %v7710
        %v7712 = vpop.f32.mrb[0].mxu0
        %7713 = vmatprep.mubr.f32.mxu0 %v7552
        %7714 = vmatmul.mubr.f32.gmra.mrb[0].mxu0 %v7461
        %v7715 = vpop.f32.mrb[0].mxu0
        %v7716 = vadd.f32 %v7546, %v7715
        %v7717 = vpop.f32.mrb[0].mxu0
        %7718 = vmatprep.mubr.f32.mxu0 %v7555
        %7719 = vmatmul.mubr.f32.gmra.mrb[0].mxu0 %v7463
        %v7720 = vpop.f32.mrb[0].mxu0
        %v7721 = vadd.f32 %v7546, %v7720
        %v7722 = vpop.f32.mrb[0].mxu0
        %7723 = vmatprep.mubr.f32.mxu0 %v7558
        %7724 = vmatmul.mubr.f32.gmra.mrb[0].mxu0 %v7465
        %v7725 = vpop.f32.mrb[0].mxu0
        %v7726 = vadd.f32 %v7546, %v7725
        %v7727 = vpop.f32.mrb[0].mxu0
        %7728 = vmatprep.mubr.f32.mxu0 %v7561
        %7729 = vmatmul.mubr.f32.gmra.mrb[0].mxu0 %v7467
        %v7730 = vpop.f32.mrb[0].mxu0
        %v7731 = vadd.f32 %v7546, %v7730
        %v7732 = vpop.f32.mrb[0].mxu0
        %7733 = vmatprep.mubr.f32.mxu0 %v7564
        %7734 = vmatmul.mubr.f32.gmra.mrb[0].mxu0 %v7469
        %v7735 = vpop.f32.mrb[0].mxu0
        %v7736 = vadd.f32 %v7546, %v7735
        %v7737 = vpop.f32.mrb[0].mxu0
        %7738 = vmatprep.mubr.f32.mxu0 %v7567
        %7739 = vmatmul.mubr.f32.gmra.mrb[0].mxu0 %v7471
        %v7740 = vpop.f32.mrb[0].mxu0
        %v7741 = vadd.f32 %v7546, %v7740
        %v7742 = vpop.f32.mrb[0].mxu0
        %7743 = vmatprep.mubr.f32.mxu0 %v7570
        %7744 = vmatmul.mubr.f32.gmra.mrb[0].mxu0 %v7473
        %v7745 = vpop.f32.mrb[0].mxu0
        %v7746 = vadd.f32 %v7546, %v7745
        %v7747 = vpop.f32.mrb[0].mxu0
        %7748 = vmatprep.mubr.f32.mxu0 %v7573
        %7749 = vmatmul.mubr.f32.gmra.mrb[0].mxu0 %v7475
        %v7750 = vpop.f32.mrb[0].mxu0
        %v7751 = vadd.f32 %v7546, %v7750
        %v7752 = vpop.f32.mrb[0].mxu0
        %7753 = vmatprep.mubr.f32.mxu0 %v7576
        %7754 = vmatmul.mubr.f32.gmra.mrb[0].mxu0 %v7477
        %v7755 = vpop.f32.mrb[0].mxu0
        %v7756 = vadd.f32 %v7546, %v7755
        %v7757 = vpop.f32.mrb[0].mxu0
        %7758 = vmatprep.mubr.f32.mxu0 %v7579
        %7759 = vmatmul.mubr.f32.gmra.mrb[0].mxu0 %v7479
        %v7760 = vpop.f32.mrb[0].mxu0
        %v7761 = vadd.f32 %v7546, %v7760
        %v7762 = vpop.f32.mrb[0].mxu0
        %7763 = vmatprep.mubr.f32.mxu0 %v7582
        %7764 = vmatmul.mubr.f32.gmra.mrb[0].mxu0 %v7481
        %v7765 = vpop.f32.mrb[0].mxu0
        %v7766 = vadd.f32 %v7546, %v7765
        %v7767 = vpop.f32.mrb[0].mxu0
        %7768 = vmatprep.mubr.f32.mxu0 %v7585
        %7769 = vmatmul.mubr.f32.gmra.mrb[0].mxu0 %v7483
        %v7770 = vpop.f32.mrb[0].mxu0
        %v7771 = vadd.f32 %v7546, %v7770
        %v7772 = vpop.f32.mrb[0].mxu0
        %7773 = vmatprep.mubr.f32.mxu0 %v7588
        %7774 = vmatmul.mubr.f32.gmra.mrb[0].mxu0 %v7485
        %v7775 = vpop.f32.mrb[0].mxu0
        %v7776 = vadd.f32 %v7546, %v7775
        %v7777 = vpop.f32.mrb[0].mxu0
        %7778 = vmatprep.mubr.f32.mxu0 %v7591
        %7779 = vmatmul.mubr.f32.gmra.mrb[0].mxu0 %v7487
        %v7780 = vpop.f32.mrb[0].mxu0
        %v7781 = vadd.f32 %v7546, %v7780
        %v7782 = vpop.f32.mrb[0].mxu0
        %7783 = vmatprep.mubr.f32.mxu0 %v7594
        %7784 = vmatmul.mubr.f32.gmra.mrb[0].mxu0 %v7489
        %v7785 = vpop.f32.mrb[0].mxu0
        %v7786 = vadd.f32 %v7546, %v7785
        %v7787 = vpop.f32.mrb[0].mxu0
        %7788 = vmatprep.mubr.f32.mxu0 %v7597
        %7789 = vmatmul.mubr.f32.gmra.mrb[0].mxu0 %v7491
        %v7790 = vpop.f32.mrb[0].mxu0
        %v7791 = vadd.f32 %v7546, %v7790
        %v7792 = vpop.f32.mrb[0].mxu0
        %7793 = vmatprep.mubr.f32.mxu0 %v7600
        %7794 = vmatmul.mubr.f32.gmra.mrb[0].mxu0 %v7493
        %v7795 = vpop.f32.mrb[0].mxu0
        %v7796 = vadd.f32 %v7546, %v7795
        %v7797 = vpop.f32.mrb[0].mxu0
        %7798 = vmatprep.mubr.f32.mxu0 %v7603
        %7799 = vmatmul.mubr.f32.gmra.mrb[0].mxu0 %v7495
        %v7800 = vpop.f32.mrb[0].mxu0
        %v7801 = vadd.f32 %v7546, %v7800
        %v7802 = vpop.f32.mrb[0].mxu0
        %7803 = vmatprep.mubr.f32.mxu0 %v7606
        %7804 = vmatmul.mubr.f32.gmra.mrb[0].mxu0 %v7497
        %v7805 = vpop.f32.mrb[0].mxu0
        %v7806 = vadd.f32 %v7546, %v7805
        %v7807 = vpop.f32.mrb[0].mxu0
        %7808 = vmatprep.mubr.f32.mxu0 %v7609
        %7809 = vmatmul.mubr.f32.gmra.mrb[0].mxu0 %v7499
        %v7810 = vpop.f32.mrb[0].mxu0
        %v7811 = vadd.f32 %v7546, %v7810
        %v7812 = vpop.f32.mrb[0].mxu0
        %7813 = vmatprep.mubr.f32.mxu0 %v7612
        %7814 = vmatmul.mubr.f32.gmra.mrb[0].mxu0 %v7501
        %v7815 = vpop.f32.mrb[0].mxu0
        %v7816 = vadd.f32 %v7546, %v7815
        %v7817 = vpop.f32.mrb[0].mxu0
        %7818 = vmatprep.mubr.f32.mxu0 %v7615
        %7819 = vmatmul.mubr.f32.gmra.mrb[0].mxu0 %v7503
        %v7820 = vpop.f32.mrb[0].mxu0
        %v7821 = vadd.f32 %v7546, %v7820
        %v7822 = vpop.f32.mrb[0].mxu0
        %7823 = vmatprep.mubr.f32.mxu0 %v7618
        %7824 = vmatmul.mubr.f32.gmra.mrb[0].mxu0 %v7505
        %v7825 = vpop.f32.mrb[0].mxu0
        %v7826 = vadd.f32 %v7546, %v7825
        %v7827 = vpop.f32.mrb[0].mxu0
        %7828 = vmatprep.mubr.f32.mxu0 %v7621
        %7829 = vmatmul.mubr.f32.gmra.mrb[0].mxu0 %v7507
        %v7830 = vpop.f32.mrb[0].mxu0
        %v7831 = vadd.f32 %v7546, %v7830
        %v7832 = vpop.f32.mrb[0].mxu0
        %7833 = vmatprep.mubr.f32.mxu0 %v7624
        %7834 = vmatmul.mubr.f32.gmra.mrb[0].mxu0 %v7509
        %v7835 = vpop.f32.mrb[0].mxu0
        %v7836 = vadd.f32 %v7546, %v7835
        %v7837 = vpop.f32.mrb[0].mxu0
        %7838 = vmatprep.mubr.f32.mxu0 %v7627
        %7839 = vmatmul.mubr.f32.gmra.mrb[0].mxu0 %v7511
        %v7840 = vpop.f32.mrb[0].mxu0
        %v7841 = vadd.f32 %v7546, %v7840
        %v7842 = vpop.f32.mrb[0].mxu0
        %7843 = vmatprep.mubr.f32.mxu0 %v7630
        %7844 = vmatmul.mubr.f32.gmra.mrb[0].mxu0 %v7513
        %v7845 = vpop.f32.mrb[0].mxu0
        %v7846 = vadd.f32 %v7546, %v7845
        %v7847 = vpop.f32.mrb[0].mxu0
        %7848 = vmatprep.mubr.f32.mxu0 %v7633
        %7849 = vmatmul.mubr.f32.gmra.mrb[0].mxu0 %v7515
        %v7850 = vpop.f32.mrb[0].mxu0
        %v7851 = vadd.f32 %v7546, %v7850
        %v7852 = vpop.f32.mrb[0].mxu0
        %7853 = vmatprep.mubr.f32.mxu0 %v7636
        %7854 = vmatmul.mubr.f32.gmra.mrb[0].mxu0 %v7517
        %v7855 = vpop.f32.mrb[0].mxu0
        %v7856 = vadd.f32 %v7546, %v7855
        %v7857 = vpop.f32.mrb[0].mxu0
        %7858 = vmatprep.mubr.f32.mxu0 %v7639
        %7859 = vmatmul.mubr.f32.gmra.mrb[0].mxu0 %v7519
        %v7860 = vpop.f32.mrb[0].mxu0
        %v7861 = vadd.f32 %v7546, %v7860
        %v7862 = vpop.f32.mrb[0].mxu0
        %7863 = vmatprep.mubr.f32.mxu0 %v7642
        %7864 = vmatmul.mubr.f32.gmra.mrb[0].mxu0 %v7521
        %v7865 = vpop.f32.mrb[0].mxu0
        %v7866 = vadd.f32 %v7546, %v7865
        %v7867 = vpop.f32.mrb[0].mxu0
        %7868 = vdwg.mxu0
        %vm7869 = vcmp.gt.f32.partialorder %v7711, 0.0
        %vm7870 = vcmp.gt.f32.partialorder %v7716, 0.0
        %vm7871 = vcmp.gt.f32.partialorder %v7721, 0.0
        %vm7872 = vcmp.gt.f32.partialorder %v7726, 0.0
        %vm7873 = vcmp.gt.f32.partialorder %v7731, 0.0
        %vm7874 = vcmp.gt.f32.partialorder %v7736, 0.0
        %vm7875 = vcmp.gt.f32.partialorder %v7741, 0.0
        %vm7876 = vcmp.gt.f32.partialorder %v7746, 0.0
        %vm7877 = vcmp.gt.f32.partialorder %v7751, 0.0
        %vm7878 = vcmp.gt.f32.partialorder %v7756, 0.0
        %vm7879 = vcmp.gt.f32.partialorder %v7761, 0.0
        %vm7880 = vcmp.gt.f32.partialorder %v7766, 0.0
        %vm7881 = vcmp.gt.f32.partialorder %v7771, 0.0
        %vm7882 = vcmp.gt.f32.partialorder %v7776, 0.0
        %vm7883 = vcmp.gt.f32.partialorder %v7781, 0.0
        %vm7884 = vcmp.gt.f32.partialorder %v7786, 0.0
        %vm7885 = vcmp.gt.f32.partialorder %v7791, 0.0
        %vm7886 = vcmp.gt.f32.partialorder %v7796, 0.0
        %vm7887 = vcmp.gt.f32.partialorder %v7801, 0.0
        %vm7888 = vcmp.gt.f32.partialorder %v7806, 0.0
        %vm7889 = vcmp.gt.f32.partialorder %v7811, 0.0
        %vm7890 = vcmp.gt.f32.partialorder %v7816, 0.0
        %vm7891 = vcmp.gt.f32.partialorder %v7821, 0.0
        %vm7892 = vcmp.gt.f32.partialorder %v7826, 0.0
        %vm7893 = vcmp.gt.f32.partialorder %v7831, 0.0
        %vm7894 = vcmp.gt.f32.partialorder %v7836, 0.0
        %vm7895 = vcmp.gt.f32.partialorder %v7841, 0.0
        %vm7896 = vcmp.gt.f32.partialorder %v7846, 0.0
        %vm7897 = vcmp.gt.f32.partialorder %v7851, 0.0
        %vm7898 = vcmp.gt.f32.partialorder %v7856, 0.0
        %vm7899 = vcmp.gt.f32.partialorder %v7861, 0.0
        %vm7900 = vcmp.gt.f32.partialorder %v7866, 0.0
        %v7901 = vmul.f32 %v7711, 0.1
        %v7902 = vmul.f32 %v7716, 0.1
        %v7903 = vmul.f32 %v7721, 0.1
        %v7904 = vmul.f32 %v7726, 0.1
        %v7905 = vmul.f32 %v7731, 0.1
        %v7906 = vmul.f32 %v7736, 0.1
        %v7907 = vmul.f32 %v7741, 0.1
        %v7908 = vmul.f32 %v7746, 0.1
        %v7909 = vmul.f32 %v7751, 0.1
        %v7910 = vmul.f32 %v7756, 0.1
        %v7911 = vmul.f32 %v7761, 0.1
        %v7912 = vmul.f32 %v7766, 0.1
        %v7913 = vmul.f32 %v7771, 0.1
        %v7914 = vmul.f32 %v7776, 0.1
        %v7915 = vmul.f32 %v7781, 0.1
        %v7916 = vmul.f32 %v7786, 0.1
        %v7917 = vmul.f32 %v7791, 0.1
        %v7918 = vmul.f32 %v7796, 0.1
        %v7919 = vmul.f32 %v7801, 0.1
        %v7920 = vmul.f32 %v7806, 0.1
        %v7921 = vmul.f32 %v7811, 0.1
        %v7922 = vmul.f32 %v7816, 0.1
        %v7923 = vmul.f32 %v7821, 0.1
        %v7924 = vmul.f32 %v7826, 0.1
        %v7925 = vmul.f32 %v7831, 0.1
        %v7926 = vmul.f32 %v7836, 0.1
        %v7927 = vmul.f32 %v7841, 0.1
        %v7928 = vmul.f32 %v7846, 0.1
        %v7929 = vmul.f32 %v7851, 0.1
        %v7930 = vmul.f32 %v7856, 0.1
        %v7931 = vmul.f32 %v7861, 0.1
        %v7932 = vmul.f32 %v7866, 0.1
        %v7933 = vsel %vm7869, %v7711, %v7901
        %v7934 = vsel %vm7870, %v7716, %v7902
        %v7935 = vsel %vm7871, %v7721, %v7903
        %v7936 = vsel %vm7872, %v7726, %v7904
        %v7937 = vsel %vm7873, %v7731, %v7905
        %v7938 = vsel %vm7874, %v7736, %v7906
        %v7939 = vsel %vm7875, %v7741, %v7907
        %v7940 = vsel %vm7876, %v7746, %v7908
        %v7941 = vsel %vm7877, %v7751, %v7909
        %v7942 = vsel %vm7878, %v7756, %v7910
        %v7943 = vsel %vm7879, %v7761, %v7911
        %v7944 = vsel %vm7880, %v7766, %v7912
        %v7945 = vsel %vm7881, %v7771, %v7913
        %v7946 = vsel %vm7882, %v7776, %v7914
        %v7947 = vsel %vm7883, %v7781, %v7915
        %v7948 = vsel %vm7884, %v7786, %v7916
        %v7949 = vsel %vm7885, %v7791, %v7917
        %v7950 = vsel %vm7886, %v7796, %v7918
        %v7951 = vsel %vm7887, %v7801, %v7919
        %v7952 = vsel %vm7888, %v7806, %v7920
        %v7953 = vsel %vm7889, %v7811, %v7921
        %v7954 = vsel %vm7890, %v7816, %v7922
        %v7955 = vsel %vm7891, %v7821, %v7923
        %v7956 = vsel %vm7892, %v7826, %v7924
        %v7957 = vsel %vm7893, %v7831, %v7925
        %v7958 = vsel %vm7894, %v7836, %v7926
        %v7959 = vsel %vm7895, %v7841, %v7927
        %v7960 = vsel %vm7896, %v7846, %v7928
        %v7961 = vsel %vm7897, %v7851, %v7929
        %v7962 = vsel %vm7898, %v7856, %v7930
        %v7963 = vsel %vm7899, %v7861, %v7931
        %v7964 = vsel %vm7900, %v7866, %v7932
        %v7965 = vld [vmem:[%s13] sm:$0xff]
        %v7966 = vld [vmem:[%s13 + $0x8] sm:$0xff]
        %v7967 = vld [vmem:[%s13 + $0x10] sm:$0xff]
        %v7968 = vld [vmem:[%s13 + $0x18] sm:$0xff]
        %v7969 = vld [vmem:[%s14] sm:$0x1]
        %v7971 = vlaneseq
        %v7972 = vshrl.u32 %v7971, 7
        %v7973 = vsub.s32 0, %v7972
        %v7974 = vrot.slane %v7969, %v7973
        %v7977 = vsel %vm652, %v7933, 0
        %v7980 = vsel %vm652, %v7934, 0
        %v7983 = vsel %vm652, %v7935, 0
        %v7986 = vsel %vm652, %v7936, 0
        %v7989 = vsel %vm652, %v7937, 0
        %v7992 = vsel %vm652, %v7938, 0
        %v7995 = vsel %vm652, %v7939, 0
        %v7998 = vsel %vm652, %v7940, 0
        %v8001 = vsel %vm652, %v7941, 0
        %v8004 = vsel %vm652, %v7942, 0
        %v8007 = vsel %vm652, %v7943, 0
        %v8010 = vsel %vm652, %v7944, 0
        %v8013 = vsel %vm652, %v7945, 0
        %v8016 = vsel %vm652, %v7946, 0
        %v8019 = vsel %vm652, %v7947, 0
        %v8022 = vsel %vm652, %v7948, 0
        %v8025 = vsel %vm652, %v7949, 0
        %v8028 = vsel %vm652, %v7950, 0
        %v8031 = vsel %vm652, %v7951, 0
        %v8034 = vsel %vm652, %v7952, 0
        %v8037 = vsel %vm652, %v7953, 0
        %v8040 = vsel %vm652, %v7954, 0
        %v8043 = vsel %vm652, %v7955, 0
        %v8046 = vsel %vm652, %v7956, 0
        %v8049 = vsel %vm652, %v7957, 0
        %v8052 = vsel %vm652, %v7958, 0
        %v8055 = vsel %vm652, %v7959, 0
        %v8058 = vsel %vm652, %v7960, 0
        %v8061 = vsel %vm652, %v7961, 0
        %v8064 = vsel %vm652, %v7962, 0
        %v8067 = vsel %vm652, %v7963, 0
        %v8070 = vsel %vm652, %v7964, 0
        %8072 = vmatprep.subr.mxu0 0.0
        %8073 = vmatpush1.msra.mxu0 %v7965
        %8074 = vmatprep.subr.mxu0 0.0
        %8075 = vmatpush1.msra.mxu0 %v7966
        %8076 = vmatprep.subr.mxu0 0.0
        %8077 = vmatpush1.msra.mxu0 %v7967
        %8078 = vmatprep.subr.mxu0 0.0
        %8079 = vmatpush1.msra.mxu0 %v7968
        %8080 = vmatprep.subr.mxu0 0.0
        %8081 = vmatpush1.msra.mxu0 0.0
        %8082 = vmatprep.subr.mxu0 0.0
        %8083 = vmatpush1.msra.mxu0 0.0
        %8084 = vmatprep.subr.mxu0 0.0
        %8085 = vmatpush1.msra.mxu0 0.0
        %8086 = vmatprep.subr.mxu0 0.0
        %8087 = vmatpush1.msra.mxu0 0.0
        %8088 = vmatprep.subr.mxu0 0.0
        %8089 = vmatpush1.msra.mxu0 0.0
        %8090 = vmatprep.subr.mxu0 0.0
        %8091 = vmatpush1.msra.mxu0 0.0
        %8092 = vmatprep.subr.mxu0 0.0
        %8093 = vmatpush1.msra.mxu0 0.0
        %8094 = vmatprep.subr.mxu0 0.0
        %8095 = vmatpush1.msra.mxu0 0.0
        %8096 = vmatprep.subr.mxu0 0.0
        %8097 = vmatpush1.msra.mxu0 0.0
        %8098 = vmatprep.subr.mxu0 0.0
        %8099 = vmatpush1.msra.mxu0 0.0
        %8100 = vmatprep.subr.mxu0 0.0
        %8101 = vmatpush1.msra.mxu0 0.0
        %8102 = vmatprep.subr.mxu0 0.0
        %8103 = vmatpush1.msra.mxu0 0.0
        %8104 = vmatprep.subr.mxu0 0.0
        %8105 = vmatpush1.msra.mxu0 0.0
        %8106 = vmatprep.subr.mxu0 0.0
        %8107 = vmatpush1.msra.mxu0 0.0
        %8108 = vmatprep.subr.mxu0 0.0
        %8109 = vmatpush1.msra.mxu0 0.0
        %8110 = vmatprep.subr.mxu0 0.0
        %8111 = vmatpush1.msra.mxu0 0.0
        %8112 = vmatprep.subr.mxu0 0.0
        %8113 = vmatpush1.msra.mxu0 0.0
        %8114 = vmatprep.subr.mxu0 0.0
        %8115 = vmatpush1.msra.mxu0 0.0
        %8116 = vmatprep.subr.mxu0 0.0
        %8117 = vmatpush1.msra.mxu0 0.0
        %8118 = vmatprep.subr.mxu0 0.0
        %8119 = vmatpush1.msra.mxu0 0.0
        %8120 = vmatprep.subr.mxu0 0.0
        %8121 = vmatpush1.msra.mxu0 0.0
        %8122 = vmatprep.subr.mxu0 0.0
        %8123 = vmatpush1.msra.mxu0 0.0
        %8124 = vmatprep.subr.mxu0 0.0
        %8125 = vmatpush1.msra.mxu0 0.0
        %8126 = vmatprep.subr.mxu0 0.0
        %8127 = vmatpush1.msra.mxu0 0.0
        %8128 = vmatprep.subr.mxu0 0.0
        %8129 = vmatpush1.msra.mxu0 0.0
        %8130 = vmatprep.subr.mxu0 0.0
        %8131 = vmatpush1.msra.mxu0 0.0
        %8132 = vmatprep.subr.mxu0 0.0
        %8133 = vmatpush1.msra.mxu0 0.0
        %8134 = vmatprep.subr.mxu0 0.0
        %8135 = vmatpush1.msra.mxu0 0.0
        %8136 = vmatprep.mubr.f32.mxu0 0.0
        %8137 = vmatmul.mubr.f32.gmra.mrb[0].mxu0 %v7977
        %v8138 = vpop.f32.mrb[0].mxu0
        %v8139 = vadd.f32 %v7974, %v8138
        %v8140 = vpop.f32.mrb[0].mxu0
        %8141 = vmatprep.mubr.f32.mxu0 0.0
        %8142 = vmatmul.mubr.f32.gmra.mrb[0].mxu0 %v7980
        %v8143 = vpop.f32.mrb[0].mxu0
        %v8144 = vadd.f32 %v7974, %v8143
        %v8145 = vpop.f32.mrb[0].mxu0
        %8146 = vmatprep.mubr.f32.mxu0 0.0
        %8147 = vmatmul.mubr.f32.gmra.mrb[0].mxu0 %v7983
        %v8148 = vpop.f32.mrb[0].mxu0
        %v8149 = vadd.f32 %v7974, %v8148
        %v8150 = vpop.f32.mrb[0].mxu0
        %8151 = vmatprep.mubr.f32.mxu0 0.0
        %8152 = vmatmul.mubr.f32.gmra.mrb[0].mxu0 %v7986
        %v8153 = vpop.f32.mrb[0].mxu0
        %v8154 = vadd.f32 %v7974, %v8153
        %v8155 = vpop.f32.mrb[0].mxu0
        %8156 = vmatprep.mubr.f32.mxu0 0.0
        %8157 = vmatmul.mubr.f32.gmra.mrb[0].mxu0 %v7989
        %v8158 = vpop.f32.mrb[0].mxu0
        %v8159 = vadd.f32 %v7974, %v8158
        %v8160 = vpop.f32.mrb[0].mxu0
        %8161 = vmatprep.mubr.f32.mxu0 0.0
        %8162 = vmatmul.mubr.f32.gmra.mrb[0].mxu0 %v7992
        %v8163 = vpop.f32.mrb[0].mxu0
        %v8164 = vadd.f32 %v7974, %v8163
        %v8165 = vpop.f32.mrb[0].mxu0
        %8166 = vmatprep.mubr.f32.mxu0 0.0
        %8167 = vmatmul.mubr.f32.gmra.mrb[0].mxu0 %v7995
        %v8168 = vpop.f32.mrb[0].mxu0
        %v8169 = vadd.f32 %v7974, %v8168
        %v8170 = vpop.f32.mrb[0].mxu0
        %8171 = vmatprep.mubr.f32.mxu0 0.0
        %8172 = vmatmul.mubr.f32.gmra.mrb[0].mxu0 %v7998
        %v8173 = vpop.f32.mrb[0].mxu0
        %v8174 = vadd.f32 %v7974, %v8173
        %v8175 = vpop.f32.mrb[0].mxu0
        %8176 = vmatprep.mubr.f32.mxu0 0.0
        %8177 = vmatmul.mubr.f32.gmra.mrb[0].mxu0 %v8001
        %v8178 = vpop.f32.mrb[0].mxu0
        %v8179 = vadd.f32 %v7974, %v8178
        %v8180 = vpop.f32.mrb[0].mxu0
        %8181 = vmatprep.mubr.f32.mxu0 0.0
        %8182 = vmatmul.mubr.f32.gmra.mrb[0].mxu0 %v8004
        %v8183 = vpop.f32.mrb[0].mxu0
        %v8184 = vadd.f32 %v7974, %v8183
        %v8185 = vpop.f32.mrb[0].mxu0
        %8186 = vmatprep.mubr.f32.mxu0 0.0
        %8187 = vmatmul.mubr.f32.gmra.mrb[0].mxu0 %v8007
        %v8188 = vpop.f32.mrb[0].mxu0
        %v8189 = vadd.f32 %v7974, %v8188
        %v8190 = vpop.f32.mrb[0].mxu0
        %8191 = vmatprep.mubr.f32.mxu0 0.0
        %8192 = vmatmul.mubr.f32.gmra.mrb[0].mxu0 %v8010
        %v8193 = vpop.f32.mrb[0].mxu0
        %v8194 = vadd.f32 %v7974, %v8193
        %v8195 = vpop.f32.mrb[0].mxu0
        %8196 = vmatprep.mubr.f32.mxu0 0.0
        %8197 = vmatmul.mubr.f32.gmra.mrb[0].mxu0 %v8013
        %v8198 = vpop.f32.mrb[0].mxu0
        %v8199 = vadd.f32 %v7974, %v8198
        %v8200 = vpop.f32.mrb[0].mxu0
        %8201 = vmatprep.mubr.f32.mxu0 0.0
        %8202 = vmatmul.mubr.f32.gmra.mrb[0].mxu0 %v8016
        %v8203 = vpop.f32.mrb[0].mxu0
        %v8204 = vadd.f32 %v7974, %v8203
        %v8205 = vpop.f32.mrb[0].mxu0
        %8206 = vmatprep.mubr.f32.mxu0 0.0
        %8207 = vmatmul.mubr.f32.gmra.mrb[0].mxu0 %v8019
        %v8208 = vpop.f32.mrb[0].mxu0
        %v8209 = vadd.f32 %v7974, %v8208
        %v8210 = vpop.f32.mrb[0].mxu0
        %8211 = vmatprep.mubr.f32.mxu0 0.0
        %8212 = vmatmul.mubr.f32.gmra.mrb[0].mxu0 %v8022
        %v8213 = vpop.f32.mrb[0].mxu0
        %v8214 = vadd.f32 %v7974, %v8213
        %v8215 = vpop.f32.mrb[0].mxu0
        %8216 = vmatprep.mubr.f32.mxu0 0.0
        %8217 = vmatmul.mubr.f32.gmra.mrb[0].mxu0 %v8025
        %v8218 = vpop.f32.mrb[0].mxu0
        %v8219 = vadd.f32 %v7974, %v8218
        %v8220 = vpop.f32.mrb[0].mxu0
        %8221 = vmatprep.mubr.f32.mxu0 0.0
        %8222 = vmatmul.mubr.f32.gmra.mrb[0].mxu0 %v8028
        %v8223 = vpop.f32.mrb[0].mxu0
        %v8224 = vadd.f32 %v7974, %v8223
        %v8225 = vpop.f32.mrb[0].mxu0
        %8226 = vmatprep.mubr.f32.mxu0 0.0
        %8227 = vmatmul.mubr.f32.gmra.mrb[0].mxu0 %v8031
        %v8228 = vpop.f32.mrb[0].mxu0
        %v8229 = vadd.f32 %v7974, %v8228
        %v8230 = vpop.f32.mrb[0].mxu0
        %8231 = vmatprep.mubr.f32.mxu0 0.0
        %8232 = vmatmul.mubr.f32.gmra.mrb[0].mxu0 %v8034
        %v8233 = vpop.f32.mrb[0].mxu0
        %v8234 = vadd.f32 %v7974, %v8233
        %v8235 = vpop.f32.mrb[0].mxu0
        %8236 = vmatprep.mubr.f32.mxu0 0.0
        %8237 = vmatmul.mubr.f32.gmra.mrb[0].mxu0 %v8037
        %v8238 = vpop.f32.mrb[0].mxu0
        %v8239 = vadd.f32 %v7974, %v8238
        %v8240 = vpop.f32.mrb[0].mxu0
        %8241 = vmatprep.mubr.f32.mxu0 0.0
        %8242 = vmatmul.mubr.f32.gmra.mrb[0].mxu0 %v8040
        %v8243 = vpop.f32.mrb[0].mxu0
        %v8244 = vadd.f32 %v7974, %v8243
        %v8245 = vpop.f32.mrb[0].mxu0
        %8246 = vmatprep.mubr.f32.mxu0 0.0
        %8247 = vmatmul.mubr.f32.gmra.mrb[0].mxu0 %v8043
        %v8248 = vpop.f32.mrb[0].mxu0
        %v8249 = vadd.f32 %v7974, %v8248
        %v8250 = vpop.f32.mrb[0].mxu0
        %8251 = vmatprep.mubr.f32.mxu0 0.0
        %8252 = vmatmul.mubr.f32.gmra.mrb[0].mxu0 %v8046
        %v8253 = vpop.f32.mrb[0].mxu0
        %v8254 = vadd.f32 %v7974, %v8253
        %v8255 = vpop.f32.mrb[0].mxu0
        %8256 = vmatprep.mubr.f32.mxu0 0.0
        %8257 = vmatmul.mubr.f32.gmra.mrb[0].mxu0 %v8049
        %v8258 = vpop.f32.mrb[0].mxu0
        %v8259 = vadd.f32 %v7974, %v8258
        %v8260 = vpop.f32.mrb[0].mxu0
        %8261 = vmatprep.mubr.f32.mxu0 0.0
        %8262 = vmatmul.mubr.f32.gmra.mrb[0].mxu0 %v8052
        %v8263 = vpop.f32.mrb[0].mxu0
        %v8264 = vadd.f32 %v7974, %v8263
        %v8265 = vpop.f32.mrb[0].mxu0
        %8266 = vmatprep.mubr.f32.mxu0 0.0
        %8267 = vmatmul.mubr.f32.gmra.mrb[0].mxu0 %v8055
        %v8268 = vpop.f32.mrb[0].mxu0
        %v8269 = vadd.f32 %v7974, %v8268
        %v8270 = vpop.f32.mrb[0].mxu0
        %8271 = vmatprep.mubr.f32.mxu0 0.0
        %8272 = vmatmul.mubr.f32.gmra.mrb[0].mxu0 %v8058
        %v8273 = vpop.f32.mrb[0].mxu0
        %v8274 = vadd.f32 %v7974, %v8273
        %v8275 = vpop.f32.mrb[0].mxu0
        %8276 = vmatprep.mubr.f32.mxu0 0.0
        %8277 = vmatmul.mubr.f32.gmra.mrb[0].mxu0 %v8061
        %v8278 = vpop.f32.mrb[0].mxu0
        %v8279 = vadd.f32 %v7974, %v8278
        %v8280 = vpop.f32.mrb[0].mxu0
        %8281 = vmatprep.mubr.f32.mxu0 0.0
        %8282 = vmatmul.mubr.f32.gmra.mrb[0].mxu0 %v8064
        %v8283 = vpop.f32.mrb[0].mxu0
        %v8284 = vadd.f32 %v7974, %v8283
        %v8285 = vpop.f32.mrb[0].mxu0
        %8286 = vmatprep.mubr.f32.mxu0 0.0
        %8287 = vmatmul.mubr.f32.gmra.mrb[0].mxu0 %v8067
        %v8288 = vpop.f32.mrb[0].mxu0
        %v8289 = vadd.f32 %v7974, %v8288
        %v8290 = vpop.f32.mrb[0].mxu0
        %8291 = vmatprep.mubr.f32.mxu0 0.0
        %8292 = vmatmul.mubr.f32.gmra.mrb[0].mxu0 %v8070
        %v8293 = vpop.f32.mrb[0].mxu0
        %v8294 = vadd.f32 %v7974, %v8293
        %v8295 = vpop.f32.mrb[0].mxu0
        %8296 = vdwg.mxu0
        %v8297 = vsub.f32 0.0, %v8139
        %v8298 = vsub.f32 0.0, %v8144
        %v8299 = vsub.f32 0.0, %v8149
        %v8300 = vsub.f32 0.0, %v8154
        %v8301 = vsub.f32 0.0, %v8159
        %v8302 = vsub.f32 0.0, %v8164
        %v8303 = vsub.f32 0.0, %v8169
        %v8304 = vsub.f32 0.0, %v8174
        %v8305 = vsub.f32 0.0, %v8179
        %v8306 = vsub.f32 0.0, %v8184
        %v8307 = vsub.f32 0.0, %v8189
        %v8308 = vsub.f32 0.0, %v8194
        %v8309 = vsub.f32 0.0, %v8199
        %v8310 = vsub.f32 0.0, %v8204
        %v8311 = vsub.f32 0.0, %v8209
        %v8312 = vsub.f32 0.0, %v8214
        %v8313 = vsub.f32 0.0, %v8219
        %v8314 = vsub.f32 0.0, %v8224
        %v8315 = vsub.f32 0.0, %v8229
        %v8316 = vsub.f32 0.0, %v8234
        %v8317 = vsub.f32 0.0, %v8239
        %v8318 = vsub.f32 0.0, %v8244
        %v8319 = vsub.f32 0.0, %v8249
        %v8320 = vsub.f32 0.0, %v8254
        %v8321 = vsub.f32 0.0, %v8259
        %v8322 = vsub.f32 0.0, %v8264
        %v8323 = vsub.f32 0.0, %v8269
        %v8324 = vsub.f32 0.0, %v8274
        %v8325 = vsub.f32 0.0, %v8279
        %v8326 = vsub.f32 0.0, %v8284
        %v8327 = vsub.f32 0.0, %v8289
        %v8328 = vsub.f32 0.0, %v8294
        %v8329 = vmul.f32 %v8297, 1.442695
        %v8330 = vpow.pop %v8329
        %v8331 = vmul.f32 %v8298, 1.442695
        %v8332 = vpow.pop %v8331
        %v8333 = vmul.f32 %v8299, 1.442695
        %v8334 = vpow.pop %v8333
        %v8335 = vmul.f32 %v8300, 1.442695
        %v8336 = vpow.pop %v8335
        %v8337 = vmul.f32 %v8301, 1.442695
        %v8338 = vpow.pop %v8337
        %v8339 = vmul.f32 %v8302, 1.442695
        %v8340 = vpow.pop %v8339
        %v8341 = vmul.f32 %v8303, 1.442695
        %v8342 = vpow.pop %v8341
        %v8343 = vmul.f32 %v8304, 1.442695
        %v8344 = vpow.pop %v8343
        %v8345 = vmul.f32 %v8305, 1.442695
        %v8346 = vpow.pop %v8345
        %v8347 = vmul.f32 %v8306, 1.442695
        %v8348 = vpow.pop %v8347
        %v8349 = vmul.f32 %v8307, 1.442695
        %v8350 = vpow.pop %v8349
        %v8351 = vmul.f32 %v8308, 1.442695
        %v8352 = vpow.pop %v8351
        %v8353 = vmul.f32 %v8309, 1.442695
        %v8354 = vpow.pop %v8353
        %v8355 = vmul.f32 %v8310, 1.442695
        %v8356 = vpow.pop %v8355
        %v8357 = vmul.f32 %v8311, 1.442695
        %v8358 = vpow.pop %v8357
        %v8359 = vmul.f32 %v8312, 1.442695
        %v8360 = vpow.pop %v8359
        %v8361 = vmul.f32 %v8313, 1.442695
        %v8362 = vpow.pop %v8361
        %v8363 = vmul.f32 %v8314, 1.442695
        %v8364 = vpow.pop %v8363
        %v8365 = vmul.f32 %v8315, 1.442695
        %v8366 = vpow.pop %v8365
        %v8367 = vmul.f32 %v8316, 1.442695
        %v8368 = vpow.pop %v8367
        %v8369 = vmul.f32 %v8317, 1.442695
        %v8370 = vpow.pop %v8369
        %v8371 = vmul.f32 %v8318, 1.442695
        %v8372 = vpow.pop %v8371
        %v8373 = vmul.f32 %v8319, 1.442695
        %v8374 = vpow.pop %v8373
        %v8375 = vmul.f32 %v8320, 1.442695
        %v8376 = vpow.pop %v8375
        %v8377 = vmul.f32 %v8321, 1.442695
        %v8378 = vpow.pop %v8377
        %v8379 = vmul.f32 %v8322, 1.442695
        %v8380 = vpow.pop %v8379
        %v8381 = vmul.f32 %v8323, 1.442695
        %v8382 = vpow.pop %v8381
        %v8383 = vmul.f32 %v8324, 1.442695
        %v8384 = vpow.pop %v8383
        %v8385 = vmul.f32 %v8325, 1.442695
        %v8386 = vpow.pop %v8385
        %v8387 = vmul.f32 %v8326, 1.442695
        %v8388 = vpow.pop %v8387
        %v8389 = vmul.f32 %v8327, 1.442695
        %v8390 = vpow.pop %v8389
        %v8391 = vmul.f32 %v8328, 1.442695
        %v8392 = vpow.pop %v8391
        %v8393 = vadd.f32 %v8330, 1.0
        %v8394 = vadd.f32 %v8332, 1.0
        %v8395 = vadd.f32 %v8334, 1.0
        %v8396 = vadd.f32 %v8336, 1.0
        %v8397 = vadd.f32 %v8338, 1.0
        %v8398 = vadd.f32 %v8340, 1.0
        %v8399 = vadd.f32 %v8342, 1.0
        %v8400 = vadd.f32 %v8344, 1.0
        %v8401 = vadd.f32 %v8346, 1.0
        %v8402 = vadd.f32 %v8348, 1.0
        %v8403 = vadd.f32 %v8350, 1.0
        %v8404 = vadd.f32 %v8352, 1.0
        %v8405 = vadd.f32 %v8354, 1.0
        %v8406 = vadd.f32 %v8356, 1.0
        %v8407 = vadd.f32 %v8358, 1.0
        %v8408 = vadd.f32 %v8360, 1.0
        %v8409 = vadd.f32 %v8362, 1.0
        %v8410 = vadd.f32 %v8364, 1.0
        %v8411 = vadd.f32 %v8366, 1.0
        %v8412 = vadd.f32 %v8368, 1.0
        %v8413 = vadd.f32 %v8370, 1.0
        %v8414 = vadd.f32 %v8372, 1.0
        %v8415 = vadd.f32 %v8374, 1.0
        %v8416 = vadd.f32 %v8376, 1.0
        %v8417 = vadd.f32 %v8378, 1.0
        %v8418 = vadd.f32 %v8380, 1.0
        %v8419 = vadd.f32 %v8382, 1.0
        %v8420 = vadd.f32 %v8384, 1.0
        %v8421 = vadd.f32 %v8386, 1.0
        %v8422 = vadd.f32 %v8388, 1.0
        %v8423 = vadd.f32 %v8390, 1.0
        %v8424 = vadd.f32 %v8392, 1.0
        %v8425 = vrcp.pop %v8393
        %v8426 = vmul.f32 1.0, %v8425
        %v8427 = vrcp.pop %v8394
        %v8428 = vmul.f32 1.0, %v8427
        %v8429 = vrcp.pop %v8395
        %v8430 = vmul.f32 1.0, %v8429
        %v8431 = vrcp.pop %v8396
        %v8432 = vmul.f32 1.0, %v8431
        %v8433 = vrcp.pop %v8397
        %v8434 = vmul.f32 1.0, %v8433
        %v8435 = vrcp.pop %v8398
        %v8436 = vmul.f32 1.0, %v8435
        %v8437 = vrcp.pop %v8399
        %v8438 = vmul.f32 1.0, %v8437
        %v8439 = vrcp.pop %v8400
        %v8440 = vmul.f32 1.0, %v8439
        %v8441 = vrcp.pop %v8401
        %v8442 = vmul.f32 1.0, %v8441
        %v8443 = vrcp.pop %v8402
        %v8444 = vmul.f32 1.0, %v8443
        %v8445 = vrcp.pop %v8403
        %v8446 = vmul.f32 1.0, %v8445
        %v8447 = vrcp.pop %v8404
        %v8448 = vmul.f32 1.0, %v8447
        %v8449 = vrcp.pop %v8405
        %v8450 = vmul.f32 1.0, %v8449
        %v8451 = vrcp.pop %v8406
        %v8452 = vmul.f32 1.0, %v8451
        %v8453 = vrcp.pop %v8407
        %v8454 = vmul.f32 1.0, %v8453
        %v8455 = vrcp.pop %v8408
        %v8456 = vmul.f32 1.0, %v8455
        %v8457 = vrcp.pop %v8409
        %v8458 = vmul.f32 1.0, %v8457
        %v8459 = vrcp.pop %v8410
        %v8460 = vmul.f32 1.0, %v8459
        %v8461 = vrcp.pop %v8411
        %v8462 = vmul.f32 1.0, %v8461
        %v8463 = vrcp.pop %v8412
        %v8464 = vmul.f32 1.0, %v8463
        %v8465 = vrcp.pop %v8413
        %v8466 = vmul.f32 1.0, %v8465
        %v8467 = vrcp.pop %v8414
        %v8468 = vmul.f32 1.0, %v8467
        %v8469 = vrcp.pop %v8415
        %v8470 = vmul.f32 1.0, %v8469
        %v8471 = vrcp.pop %v8416
        %v8472 = vmul.f32 1.0, %v8471
        %v8473 = vrcp.pop %v8417
        %v8474 = vmul.f32 1.0, %v8473
        %v8475 = vrcp.pop %v8418
        %v8476 = vmul.f32 1.0, %v8475
        %v8477 = vrcp.pop %v8419
        %v8478 = vmul.f32 1.0, %v8477
        %v8479 = vrcp.pop %v8420
        %v8480 = vmul.f32 1.0, %v8479
        %v8481 = vrcp.pop %v8421
        %v8482 = vmul.f32 1.0, %v8481
        %v8483 = vrcp.pop %v8422
        %v8484 = vmul.f32 1.0, %v8483
        %v8485 = vrcp.pop %v8423
        %v8486 = vmul.f32 1.0, %v8485
        %v8487 = vrcp.pop %v8424
        %v8488 = vmul.f32 1.0, %v8487
        %vm8489 = vcmask 171008
        %8490 = vst.msk [vmem:[%s552] sm:$0xff] %vm8489, %v8426
        %8491 = vst.msk [vmem:[%s552 + $0x8] sm:$0xff] %vm8489, %v8428
        %8492 = vst.msk [vmem:[%s552 + $0x10] sm:$0xff] %vm8489, %v8430
        %8493 = vst.msk [vmem:[%s552 + $0x18] sm:$0xff] %vm8489, %v8432
        %8494 = vst.msk [vmem:[%s552 + $0x20] sm:$0xff] %vm8489, %v8434
        %8495 = vst.msk [vmem:[%s552 + $0x28] sm:$0xff] %vm8489, %v8436
        %8496 = vst.msk [vmem:[%s552 + $0x30] sm:$0xff] %vm8489, %v8438
        %8497 = vst.msk [vmem:[%s552 + $0x38] sm:$0xff] %vm8489, %v8440
        %8498 = vst.msk [vmem:[%s552 + $0x40] sm:$0xff] %vm8489, %v8442
        %8499 = vst.msk [vmem:[%s552 + $0x48] sm:$0xff] %vm8489, %v8444
        %8500 = vst.msk [vmem:[%s552 + $0x50] sm:$0xff] %vm8489, %v8446
        %8501 = vst.msk [vmem:[%s552 + $0x58] sm:$0xff] %vm8489, %v8448
        %8502 = vst.msk [vmem:[%s552 + $0x60] sm:$0xff] %vm8489, %v8450
        %8503 = vst.msk [vmem:[%s552 + $0x68] sm:$0xff] %vm8489, %v8452
        %8504 = vst.msk [vmem:[%s552 + $0x70] sm:$0xff] %vm8489, %v8454
        %8505 = vst.msk [vmem:[%s552 + $0x78] sm:$0xff] %vm8489, %v8456
        %8506 = vst.msk [vmem:[%s552 + $0x80] sm:$0xff] %vm8489, %v8458
        %8507 = vst.msk [vmem:[%s552 + $0x88] sm:$0xff] %vm8489, %v8460
        %8508 = vst.msk [vmem:[%s552 + $0x90] sm:$0xff] %vm8489, %v8462
        %8509 = vst.msk [vmem:[%s552 + $0x98] sm:$0xff] %vm8489, %v8464
        %8510 = vst.msk [vmem:[%s552 + $0xa0] sm:$0xff] %vm8489, %v8466
        %8511 = vst.msk [vmem:[%s552 + $0xa8] sm:$0xff] %vm8489, %v8468
        %8512 = vst.msk [vmem:[%s552 + $0xb0] sm:$0xff] %vm8489, %v8470
        %8513 = vst.msk [vmem:[%s552 + $0xb8] sm:$0xff] %vm8489, %v8472
        %8514 = vst.msk [vmem:[%s552 + $0xc0] sm:$0xff] %vm8489, %v8474
        %8515 = vst.msk [vmem:[%s552 + $0xc8] sm:$0xff] %vm8489, %v8476
        %8516 = vst.msk [vmem:[%s552 + $0xd0] sm:$0xff] %vm8489, %v8478
        %8517 = vst.msk [vmem:[%s552 + $0xd8] sm:$0xff] %vm8489, %v8480
        %8518 = vst.msk [vmem:[%s552 + $0xe0] sm:$0xff] %vm8489, %v8482
        %8519 = vst.msk [vmem:[%s552 + $0xe8] sm:$0xff] %vm8489, %v8484
        %8520 = vst.msk [vmem:[%s552 + $0xf0] sm:$0xff] %vm8489, %v8486
        %8521 = vst.msk [vmem:[%s552 + $0xf8] sm:$0xff] %vm8489, %v8488
        %s8522 = sand.u32 %s362, 1
        %s8523 = scalar_lea.sflag [#allocation6], %s8522
        %s8524 = sand.u32 %s362, 1
        %s8525 = smul.addr %s8524, 256
        %s8526 = scalar_lea.vmem [#allocation12], %s8525
        // Predicated region
        $region97: #{v3head_forward.1} parent=79 // pred_check
          %p8527 = pneg %p372
        $region98: #{v3head_forward.1} parent=79 // pred_check_branch
          %8529 = sbr.rel (%p8527) target = $region100
        $region99: #{v3head_forward.1} parent=79 // pred_region
          %s8531 = ssub.s32 4096, 4096
          %8532 = vsyncadd %s8523, %s8531
          %s8533 = smul.addr %s34, 32
          %s8534 = smul.addr %s8533, 128
          %s8535 = scalar_lea.hbm %s15, %s8534
          %s8536 = sshll.u32 %s8526, 4
          %s8537 = int_to_ptr.vmem [resolvable:$true] %s8536
          %8542 = dma.vmem_to_hbm [thread:$0]  %s8537, 4096, %s8535, %s8523, 128, 128, 8
        $region100: #{v3head_forward.1} parent=79 // pred_fallthru
          _
      $region80: #{v3head_forward.1} parent=5 // pred_fallthru
        _
      %p8543 = scmp.le.s32.totalorder 2, %s29
      // Predicated region
      $region101: #{v3head_forward.1} parent=5 // pred_check
        %p8544 = pneg %p8543
      $region102: #{v3head_forward.1} parent=5 // pred_check_branch
        %8546 = sbr.rel (%p8544) target = $region104
      $region103: #{v3head_forward.1} parent=5 // pred_region
        %s8547 = ssub.s32 %s29, 2
        // Predicated region
        $region105: #{v3head_forward.1} parent=103 // pred_check
          %p8548 = pneg %p378
        $region106: #{v3head_forward.1} parent=103 // pred_check_branch
          %8550 = sbr.rel (%p8548) target = $region108
        $region107: #{v3head_forward.1} parent=103 // pred_region
          %s8551 = sand.u32 %s363, 1
          %s8552 = scalar_lea.sflag [#allocation6], %s8551
          %s8553 = sand.u32 %s363, 1
          %s8554 = smul.addr %s8553, 256
          %s8555 = scalar_lea.vmem [#allocation12], %s8554
          %8556 = dma.done %s8552, 4096
        $region108: #{v3head_forward.1} parent=103 // pred_fallthru
          _
      $region104: #{v3head_forward.1} parent=5 // pred_fallthru
        _
    $region6: #{v3head_forward.1} parent=1 // loop_footer
      %s33 = sadd.s32 1, %s29
    $region7: #{v3head_forward.1} parent=1 // loop_footer_branch
      %28 = sbr.rel target = $region3
    $region8: #{v3head_forward.1} parent=1 // loop_exit
      _
    %8557 = vsyncpa [#allocation5], 1
    %s8558 = scalar_lea.sflag [#allocation5], 1
    %8559 = vsyncpa %s8558, 1
    %8560 = vsyncpa [#allocation8], 1
    %8561 = vsyncpa [#allocation11], 1
    %8562 = vsyncpa [#allocation6], 1
    %s8563 = scalar_lea.sflag [#allocation6], 1
    %8564 = vsyncpa %s8563, 1

</llo_original>
